<compile_context>
chip_gen: v7x
topology: tpu7x:2x2x1
jax: 0.10.0
libtpu: 0.0.40
codegen_flags: <defaults>
</compile_context>

<pallas_src>
import functools

import jax
import jax.numpy as jnp
from jax.experimental import pallas as pl
from jax.experimental.pallas import tpu as pltpu

NEG_SLOPE = 0.01   # nn.LeakyReLU default
BN_EPS = 1e-5      # nn.BatchNorm2d default
LANES = 128


# ----------------------------- Pallas kernel ------------------------------ #
def _fused_matmul_kernel(p_ref, w_ref, shift_ref, o_ref, *, leaky):
    # bf16 x bf16 -> f32 on the MXU; shift + LeakyReLU epilogue in f32 on the VPU.
    acc = jnp.dot(p_ref[...], w_ref[...], preferred_element_type=jnp.float32)
    y = acc + shift_ref[...]
    if leaky:
        y = jnp.where(y >= 0, y, NEG_SLOPE * y)
    o_ref[...] = y.astype(o_ref.dtype)


def fused_matmul(p, w, shift, *, leaky):
    """Compute (p @ w) + shift (+ optional LeakyReLU) with one Pallas call.

    p: [M, K] bf16   w: [K, N] bf16   shift: [1, N] f32   returns [M, N] f32.
    N is zero-padded to a multiple of 128 lanes internally (unmasked stores) and
    sliced back; M is never padded (row blocks divide M exactly).
    """
    M, K = p.shape
    N = w.shape[1]
    N_pad = max(LANES, ((N + LANES - 1) // LANES) * LANES)
    if N_pad != N:
        w = jnp.pad(w, ((0, 0), (0, N_pad - N)))
        shift = jnp.pad(shift, ((0, 0), (0, N_pad - N)))

    # 2 parallel row blocks when M is large and cleanly splittable (sublane-aligned),
    # otherwise a single full-array block (covers the tiny conv3/conv4/linear cases).
    G = 2 if (M >= 512 and M % 16 == 0) else 1
    TM = M // G

    out = pl.pallas_call(
        functools.partial(_fused_matmul_kernel, leaky=leaky),
        out_shape=jax.ShapeDtypeStruct((M, N_pad), jnp.float32),
        grid=(G,),
        in_specs=[
            pl.BlockSpec((TM, K), lambda i: (i, 0)),      # patch rows, tiled over M
            pl.BlockSpec((K, N_pad), lambda i: (0, 0)),   # folded weights, resident
            pl.BlockSpec((1, N_pad), lambda i: (0, 0)),   # per-channel shift
        ],
        out_specs=pl.BlockSpec((TM, N_pad), lambda i: (i, 0)),
        compiler_params=pltpu.CompilerParams(dimension_semantics=("parallel",)),
    )(p, w, shift)
    return out[:, :N] if N_pad != N else out


# ------------------------------- JAX glue --------------------------------- #
def im2col(x, kh, kw):
    """x: [B, H, W, C] -> patches [B*Ho*Wo, kh*kw*C] (K ordered as (kh, kw, C))."""
    B, H, W, C = x.shape
    Ho, Wo = H - kh + 1, W - kw + 1
    cols = []
    for i in range(kh):
        for j in range(kw):
            cols.append(x[:, i:i + Ho, j:j + Wo, :])
    p = jnp.stack(cols, axis=3)                       # [B, Ho, Wo, kh*kw, C]
    return p.reshape(B * Ho * Wo, kh * kw * C), (B, Ho, Wo)


def conv_bn_lrelu(x, w_hwio, b_conv, gamma, beta, mean, var):
    """Conv2d(valid, stride 1) + BatchNorm2d(eval) + LeakyReLU via the Pallas matmul."""
    kh, kw, cin, cout = w_hwio.shape
    patches, (B, Ho, Wo) = im2col(x, kh, kw)
    s = gamma / jnp.sqrt(var + BN_EPS)
    # Fold the BN scale into the weights; only a shift remains for the epilogue.
    w_folded = (w_hwio.reshape(kh * kw * cin, cout) * s[None, :]).astype(jnp.bfloat16)
    shift = ((b_conv - mean) * s + beta).reshape(1, cout).astype(jnp.float32)
    y = fused_matmul(patches.astype(jnp.bfloat16), w_folded, shift, leaky=True)
    return y.reshape(B, Ho, Wo, cout)


def maxpool2x2(x):  # NHWC, kernel=2, stride=2 (layout-local glue, fuses under jit)
    B, H, W, C = x.shape
    return x.reshape(B, H // 2, 2, W // 2, 2, C).max(axis=(2, 4))


# ------------------------------- parameters ------------------------------- #
def init_params(key):
    convs = [(5, 5, 3, 12), (5, 5, 12, 60), (3, 3, 60, 80), (3, 3, 80, 120)]
    params = {}
    for li, (kh, kw, cin, cout) in enumerate(convs, start=1):
        key, kw_, kb, kg, kbe, km, kv = jax.random.split(key, 7)
        fan_in = kh * kw * cin
        params[f"c{li}"] = (
            jax.random.normal(kw_, (kh, kw, cin, cout), jnp.float32) / jnp.sqrt(fan_in),
            jax.random.normal(kb, (cout,), jnp.float32) * 0.05,          # conv bias
            jax.random.uniform(kg, (cout,), jnp.float32, 0.5, 1.5),      # BN gamma
            jax.random.normal(kbe, (cout,), jnp.float32) * 0.05,         # BN beta
            jax.random.normal(km, (cout,), jnp.float32) * 0.05,          # BN running_mean
            jax.random.uniform(kv, (cout,), jnp.float32, 0.5, 1.5),      # BN running_var
        )
    key, kwl, kbl = jax.random.split(key, 3)
    params["lin"] = (
        jax.random.normal(kwl, (1920, 10), jnp.float32) / jnp.sqrt(1920.0),
        jax.random.normal(kbl, (10,), jnp.float32) * 0.05,
    )
    return params


# ------------------------------- forward ---------------------------------- #
@jax.jit
def other_net_forward(x_nchw, params):
    x = jnp.transpose(x_nchw, (0, 2, 3, 1))           # NCHW -> NHWC
    x = conv_bn_lrelu(x, *params["c1"])               # 32 -> 28
    x = conv_bn_lrelu(x, *params["c2"])               # 28 -> 24
    x = maxpool2x2(x)                                 # 24 -> 12
    x = conv_bn_lrelu(x, *params["c3"])               # 12 -> 10
    x = conv_bn_lrelu(x, *params["c4"])               # 10 -> 8
    x = maxpool2x2(x)                                 # 8  -> 4   (B, 4, 4, 120)
    # PyTorch x.view(B, -1) flattens NCHW, i.e. (C, H, W) order:
    x_flat = jnp.transpose(x, (0, 3, 1, 2)).reshape(x.shape[0], -1)  # [B, 1920] f32
    w_lin, b_lin = params["lin"]
    out = fused_matmul(
        x_flat.astype(jnp.bfloat16),
        w_lin.astype(jnp.bfloat16),
        b_lin.reshape(1, 10).astype(jnp.float32),
        leaky=False,
    )
    return out, x_flat


# --------------------------- pure-JAX reference ---------------------------- #
def reference_forward(x_nchw, params):
    def conv_ref(x, w, b, g, be, m, v):
        y = jax.lax.conv_general_dilated(
            x, w, window_strides=(1, 1), padding="VALID",
            dimension_numbers=("NHWC", "HWIO", "NHWC"))
        y = y + b
        s = g / jnp.sqrt(v + BN_EPS)
        y = (y - m) * s + be
        return jnp.where(y >= 0, y, NEG_SLOPE * y)

    x = jnp.transpose(x_nchw, (0, 2, 3, 1))
    x = conv_ref(x, *params["c1"])
    x = conv_ref(x, *params["c2"])
    x = maxpool2x2(x)
    x = conv_ref(x, *params["c3"])
    x = conv_ref(x, *params["c4"])
    x = maxpool2x2(x)
    x_flat = jnp.transpose(x, (0, 3, 1, 2)).reshape(x.shape[0], -1)
    w_lin, b_lin = params["lin"]
    out = x_flat @ w_lin + b_lin
    return out, x_flat


# --------------------------------- main ------------------------------------ #
if __name__ == "__main__":
    key = jax.random.PRNGKey(0)
    kx, kp = jax.random.split(key)
    x = jax.random.normal(kx, (2, 3, 32, 32), jnp.float32)   # NCHW like PyTorch
    params = init_params(kp)

    out, feat = jax.block_until_ready(other_net_forward(x, params))
    assert out.shape == (2, 10) and feat.shape == (2, 1920)

    ref_out, ref_feat = reference_forward(x, params)
    assert jnp.allclose(out, ref_out, rtol=5e-2, atol=5e-2), "logits mismatch"
    assert jnp.allclose(feat, ref_feat, rtol=5e-2, atol=5e-2), "features mismatch"

    print("KERNEL_OK")
</pallas_src>

<mosaic_0001>
module attributes {stable_mosaic.version = 11 : i64} {
  func.func @_fused_matmul_kernel(%arg0: i32, %arg1: memref<784x75xbf16, #tpu.memory_space<vmem>>, %arg2: memref<75x128xbf16, #tpu.memory_space<vmem>>, %arg3: memref<1x128xf32, #tpu.memory_space<vmem>>, %arg4: memref<784x128xf32, #tpu.memory_space<vmem>>) attributes {dimension_semantics = [#tpu.dimension_semantics<parallel>], iteration_bounds = array<i64: 2>, scalar_prefetch = 0 : i64, scratch_operands = 0 : i64, tpu.core_type = #tpu.core_type<tc>, window_params = [{transform_indices = @transform_0, window_bounds = array<i64: 784, 75>}, {pipeline_mode = #tpu.pipeline_mode<synchronous>, transform_indices = @transform_1, window_bounds = array<i64: 75, 128>}, {pipeline_mode = #tpu.pipeline_mode<synchronous>, transform_indices = @transform_2, window_bounds = array<i64: 1, 128>}, {transform_indices = @transform_3, window_bounds = array<i64: 784, 128>}]} {
    %c0 = arith.constant 0 : index
    %c0_0 = arith.constant 0 : index
    %0 = vector.load %arg1[%c0, %c0_0] : memref<784x75xbf16, #tpu.memory_space<vmem>>, vector<784x75xbf16>
    %c0_1 = arith.constant 0 : index
    %c0_2 = arith.constant 0 : index
    %1 = vector.load %arg2[%c0_1, %c0_2] : memref<75x128xbf16, #tpu.memory_space<vmem>>, vector<75x128xbf16>
    %cst = arith.constant dense<0.000000e+00> : vector<784x128xf32>
    %2 = tpu.matmul %0, %1, %cst {dimension_numbers = #tpu.dot_dimension_numbers<[1], [0], [0], [1], [0, 0, 1, 1], [], []>} : vector<784x75xbf16>, vector<75x128xbf16>, vector<784x128xf32> -> vector<784x128xf32>
    %c0_3 = arith.constant 0 : index
    %c0_4 = arith.constant 0 : index
    %3 = vector.load %arg3[%c0_3, %c0_4] : memref<1x128xf32, #tpu.memory_space<vmem>>, vector<1x128xf32>
    %4 = vector.broadcast %3 : vector<1x128xf32> to vector<784x128xf32>
    %5 = arith.addf %2, %4 : vector<784x128xf32>
    %cst_5 = arith.constant 0.000000e+00 : f32
    %6 = vector.broadcast %cst_5 : f32 to vector<784x128xf32>
    %7 = arith.cmpf oge, %5, %6 : vector<784x128xf32>
    %cst_6 = arith.constant 0.00999999977 : f32
    %8 = vector.broadcast %cst_6 : f32 to vector<784x128xf32>
    %9 = arith.mulf %8, %5 : vector<784x128xf32>
    %10 = arith.select %7, %5, %9 : vector<784x128xi1>, vector<784x128xf32>
    %c0_7 = arith.constant 0 : index
    %c0_8 = arith.constant 0 : index
    %11 = vector.load %arg4[%c0_7, %c0_8] : memref<784x128xf32, #tpu.memory_space<vmem>>, vector<784x128xf32>
    tpu.vector_store %arg4[%c0_7, %c0_8], %10 {strides = array<i32>} : memref<784x128xf32, #tpu.memory_space<vmem>>, vector<784x128xf32>,
    return
  }
  func.func @transform_0(%arg0: i32) -> (i32, i32) {
    %c0_i32 = arith.constant 0 : i32
    %c0_i32_0 = arith.constant 0 : i32
    return %arg0, %c0_i32 : i32, i32
  }
  func.func @transform_1(%arg0: i32) -> (i32, i32) {
    %c0_i32 = arith.constant 0 : i32
    %c0_i32_0 = arith.constant 0 : i32
    %c0_i32_1 = arith.constant 0 : i32
    return %c0_i32, %c0_i32_0 : i32, i32
  }
  func.func @transform_2(%arg0: i32) -> (i32, i32) {
    %c0_i32 = arith.constant 0 : i32
    %c0_i32_0 = arith.constant 0 : i32
    %c0_i32_1 = arith.constant 0 : i32
    return %c0_i32, %c0_i32_0 : i32, i32
  }
  func.func @transform_3(%arg0: i32) -> (i32, i32) {
    %c0_i32 = arith.constant 0 : i32
    %c0_i32_0 = arith.constant 0 : i32
    return %arg0, %c0_i32 : i32, i32
  }
}

module attributes {stable_mosaic.version = 11 : i64} {
  func.func @_fused_matmul_kernel(%arg0: i32, %arg1: memref<576x300xbf16, #tpu.memory_space<vmem>>, %arg2: memref<300x128xbf16, #tpu.memory_space<vmem>>, %arg3: memref<1x128xf32, #tpu.memory_space<vmem>>, %arg4: memref<576x128xf32, #tpu.memory_space<vmem>>) attributes {dimension_semantics = [#tpu.dimension_semantics<parallel>], iteration_bounds = array<i64: 2>, scalar_prefetch = 0 : i64, scratch_operands = 0 : i64, tpu.core_type = #tpu.core_type<tc>, window_params = [{transform_indices = @transform_0, window_bounds = array<i64: 576, 300>}, {pipeline_mode = #tpu.pipeline_mode<synchronous>, transform_indices = @transform_1, window_bounds = array<i64: 300, 128>}, {pipeline_mode = #tpu.pipeline_mode<synchronous>, transform_indices = @transform_2, window_bounds = array<i64: 1, 128>}, {transform_indices = @transform_3, window_bounds = array<i64: 576, 128>}]} {
    %c0 = arith.constant 0 : index
    %c0_0 = arith.constant 0 : index
    %0 = vector.load %arg1[%c0, %c0_0] : memref<576x300xbf16, #tpu.memory_space<vmem>>, vector<576x300xbf16>
    %c0_1 = arith.constant 0 : index
    %c0_2 = arith.constant 0 : index
    %1 = vector.load %arg2[%c0_1, %c0_2] : memref<300x128xbf16, #tpu.memory_space<vmem>>, vector<300x128xbf16>
    %cst = arith.constant dense<0.000000e+00> : vector<576x128xf32>
    %2 = tpu.matmul %0, %1, %cst {dimension_numbers = #tpu.dot_dimension_numbers<[1], [0], [0], [1], [0, 0, 1, 1], [], []>} : vector<576x300xbf16>, vector<300x128xbf16>, vector<576x128xf32> -> vector<576x128xf32>
    %c0_3 = arith.constant 0 : index
    %c0_4 = arith.constant 0 : index
    %3 = vector.load %arg3[%c0_3, %c0_4] : memref<1x128xf32, #tpu.memory_space<vmem>>, vector<1x128xf32>
    %4 = vector.broadcast %3 : vector<1x128xf32> to vector<576x128xf32>
    %5 = arith.addf %2, %4 : vector<576x128xf32>
    %cst_5 = arith.constant 0.000000e+00 : f32
    %6 = vector.broadcast %cst_5 : f32 to vector<576x128xf32>
    %7 = arith.cmpf oge, %5, %6 : vector<576x128xf32>
    %cst_6 = arith.constant 0.00999999977 : f32
    %8 = vector.broadcast %cst_6 : f32 to vector<576x128xf32>
    %9 = arith.mulf %8, %5 : vector<576x128xf32>
    %10 = arith.select %7, %5, %9 : vector<576x128xi1>, vector<576x128xf32>
    %c0_7 = arith.constant 0 : index
    %c0_8 = arith.constant 0 : index
    %11 = vector.load %arg4[%c0_7, %c0_8] : memref<576x128xf32, #tpu.memory_space<vmem>>, vector<576x128xf32>
    tpu.vector_store %arg4[%c0_7, %c0_8], %10 {strides = array<i32>} : memref<576x128xf32, #tpu.memory_space<vmem>>, vector<576x128xf32>,
    return
  }
  func.func @transform_0(%arg0: i32) -> (i32, i32) {
    %c0_i32 = arith.constant 0 : i32
    %c0_i32_0 = arith.constant 0 : i32
    return %arg0, %c0_i32 : i32, i32
  }
  func.func @transform_1(%arg0: i32) -> (i32, i32) {
    %c0_i32 = arith.constant 0 : i32
    %c0_i32_0 = arith.constant 0 : i32
    %c0_i32_1 = arith.constant 0 : i32
    return %c0_i32, %c0_i32_0 : i32, i32
  }
  func.func @transform_2(%arg0: i32) -> (i32, i32) {
    %c0_i32 = arith.constant 0 : i32
    %c0_i32_0 = arith.constant 0 : i32
    %c0_i32_1 = arith.constant 0 : i32
    return %c0_i32, %c0_i32_0 : i32, i32
  }
  func.func @transform_3(%arg0: i32) -> (i32, i32) {
    %c0_i32 = arith.constant 0 : i32
    %c0_i32_0 = arith.constant 0 : i32
    return %arg0, %c0_i32 : i32, i32
  }
}

module attributes {stable_mosaic.version = 11 : i64} {
  func.func @_fused_matmul_kernel(%arg0: i32, %arg1: memref<200x540xbf16, #tpu.memory_space<vmem>>, %arg2: memref<540x128xbf16, #tpu.memory_space<vmem>>, %arg3: memref<1x128xf32, #tpu.memory_space<vmem>>, %arg4: memref<200x128xf32, #tpu.memory_space<vmem>>) attributes {dimension_semantics = [#tpu.dimension_semantics<parallel>], iteration_bounds = array<i64: 1>, scalar_prefetch = 0 : i64, scratch_operands = 0 : i64, tpu.core_type = #tpu.core_type<tc>, window_params = [{transform_indices = @transform_0, window_bounds = array<i64: 200, 540>}, {pipeline_mode = #tpu.pipeline_mode<synchronous>, transform_indices = @transform_1, window_bounds = array<i64: 540, 128>}, {pipeline_mode = #tpu.pipeline_mode<synchronous>, transform_indices = @transform_2, window_bounds = array<i64: 1, 128>}, {transform_indices = @transform_3, window_bounds = array<i64: 200, 128>}]} {
    %c0 = arith.constant 0 : index
    %c0_0 = arith.constant 0 : index
    %0 = vector.load %arg1[%c0, %c0_0] : memref<200x540xbf16, #tpu.memory_space<vmem>>, vector<200x540xbf16>
    %c0_1 = arith.constant 0 : index
    %c0_2 = arith.constant 0 : index
    %1 = vector.load %arg2[%c0_1, %c0_2] : memref<540x128xbf16, #tpu.memory_space<vmem>>, vector<540x128xbf16>
    %cst = arith.constant dense<0.000000e+00> : vector<200x128xf32>
    %2 = tpu.matmul %0, %1, %cst {dimension_numbers = #tpu.dot_dimension_numbers<[1], [0], [0], [1], [0, 0, 1, 1], [], []>} : vector<200x540xbf16>, vector<540x128xbf16>, vector<200x128xf32> -> vector<200x128xf32>
    %c0_3 = arith.constant 0 : index
    %c0_4 = arith.constant 0 : index
    %3 = vector.load %arg3[%c0_3, %c0_4] : memref<1x128xf32, #tpu.memory_space<vmem>>, vector<1x128xf32>
    %4 = vector.broadcast %3 : vector<1x128xf32> to vector<200x128xf32>
    %5 = arith.addf %2, %4 : vector<200x128xf32>
    %cst_5 = arith.constant 0.000000e+00 : f32
    %6 = vector.broadcast %cst_5 : f32 to vector<200x128xf32>
    %7 = arith.cmpf oge, %5, %6 : vector<200x128xf32>
    %cst_6 = arith.constant 0.00999999977 : f32
    %8 = vector.broadcast %cst_6 : f32 to vector<200x128xf32>
    %9 = arith.mulf %8, %5 : vector<200x128xf32>
    %10 = arith.select %7, %5, %9 : vector<200x128xi1>, vector<200x128xf32>
    %c0_7 = arith.constant 0 : index
    %c0_8 = arith.constant 0 : index
    %11 = vector.load %arg4[%c0_7, %c0_8] : memref<200x128xf32, #tpu.memory_space<vmem>>, vector<200x128xf32>
    tpu.vector_store %arg4[%c0_7, %c0_8], %10 {strides = array<i32>} : memref<200x128xf32, #tpu.memory_space<vmem>>, vector<200x128xf32>,
    return
  }
  func.func @transform_0(%arg0: i32) -> (i32, i32) {
    %c0_i32 = arith.constant 0 : i32
    %c0_i32_0 = arith.constant 0 : i32
    return %arg0, %c0_i32 : i32, i32
  }
  func.func @transform_1(%arg0: i32) -> (i32, i32) {
    %c0_i32 = arith.constant 0 : i32
    %c0_i32_0 = arith.constant 0 : i32
    %c0_i32_1 = arith.constant 0 : i32
    return %c0_i32, %c0_i32_0 : i32, i32
  }
  func.func @transform_2(%arg0: i32) -> (i32, i32) {
    %c0_i32 = arith.constant 0 : i32
    %c0_i32_0 = arith.constant 0 : i32
    %c0_i32_1 = arith.constant 0 : i32
    return %c0_i32, %c0_i32_0 : i32, i32
  }
  func.func @transform_3(%arg0: i32) -> (i32, i32) {
    %c0_i32 = arith.constant 0 : i32
    %c0_i32_0 = arith.constant 0 : i32
    return %arg0, %c0_i32 : i32, i32
  }
}

module attributes {stable_mosaic.version = 11 : i64} {
  func.func @_fused_matmul_kernel(%arg0: i32, %arg1: memref<128x720xbf16, #tpu.memory_space<vmem>>, %arg2: memref<720x128xbf16, #tpu.memory_space<vmem>>, %arg3: memref<1x128xf32, #tpu.memory_space<vmem>>, %arg4: memref<128x128xf32, #tpu.memory_space<vmem>>) attributes {dimension_semantics = [#tpu.dimension_semantics<parallel>], iteration_bounds = array<i64: 1>, scalar_prefetch = 0 : i64, scratch_operands = 0 : i64, tpu.core_type = #tpu.core_type<tc>, window_params = [{transform_indices = @transform_0, window_bounds = array<i64: 128, 720>}, {pipeline_mode = #tpu.pipeline_mode<synchronous>, transform_indices = @transform_1, window_bounds = array<i64: 720, 128>}, {pipeline_mode = #tpu.pipeline_mode<synchronous>, transform_indices = @transform_2, window_bounds = array<i64: 1, 128>}, {transform_indices = @transform_3, window_bounds = array<i64: 128, 128>}]} {
    %c0 = arith.constant 0 : index
    %c0_0 = arith.constant 0 : index
    %0 = vector.load %arg1[%c0, %c0_0] : memref<128x720xbf16, #tpu.memory_space<vmem>>, vector<128x720xbf16>
    %c0_1 = arith.constant 0 : index
    %c0_2 = arith.constant 0 : index
    %1 = vector.load %arg2[%c0_1, %c0_2] : memref<720x128xbf16, #tpu.memory_space<vmem>>, vector<720x128xbf16>
    %cst = arith.constant dense<0.000000e+00> : vector<128x128xf32>
    %2 = tpu.matmul %0, %1, %cst {dimension_numbers = #tpu.dot_dimension_numbers<[1], [0], [0], [1], [0, 0, 1, 1], [], []>} : vector<128x720xbf16>, vector<720x128xbf16>, vector<128x128xf32> -> vector<128x128xf32>
    %c0_3 = arith.constant 0 : index
    %c0_4 = arith.constant 0 : index
    %3 = vector.load %arg3[%c0_3, %c0_4] : memref<1x128xf32, #tpu.memory_space<vmem>>, vector<1x128xf32>
    %4 = vector.broadcast %3 : vector<1x128xf32> to vector<128x128xf32>
    %5 = arith.addf %2, %4 : vector<128x128xf32>
    %cst_5 = arith.constant 0.000000e+00 : f32
    %6 = vector.broadcast %cst_5 : f32 to vector<128x128xf32>
    %7 = arith.cmpf oge, %5, %6 : vector<128x128xf32>
    %cst_6 = arith.constant 0.00999999977 : f32
    %8 = vector.broadcast %cst_6 : f32 to vector<128x128xf32>
    %9 = arith.mulf %8, %5 : vector<128x128xf32>
    %10 = arith.select %7, %5, %9 : vector<128x128xi1>, vector<128x128xf32>
    %c0_7 = arith.constant 0 : index
    %c0_8 = arith.constant 0 : index
    %11 = vector.load %arg4[%c0_7, %c0_8] : memref<128x128xf32, #tpu.memory_space<vmem>>, vector<128x128xf32>
    tpu.vector_store %arg4[%c0_7, %c0_8], %10 {strides = array<i32>} : memref<128x128xf32, #tpu.memory_space<vmem>>, vector<128x128xf32>,
    return
  }
  func.func @transform_0(%arg0: i32) -> (i32, i32) {
    %c0_i32 = arith.constant 0 : i32
    %c0_i32_0 = arith.constant 0 : i32
    return %arg0, %c0_i32 : i32, i32
  }
  func.func @transform_1(%arg0: i32) -> (i32, i32) {
    %c0_i32 = arith.constant 0 : i32
    %c0_i32_0 = arith.constant 0 : i32
    %c0_i32_1 = arith.constant 0 : i32
    return %c0_i32, %c0_i32_0 : i32, i32
  }
  func.func @transform_2(%arg0: i32) -> (i32, i32) {
    %c0_i32 = arith.constant 0 : i32
    %c0_i32_0 = arith.constant 0 : i32
    %c0_i32_1 = arith.constant 0 : i32
    return %c0_i32, %c0_i32_0 : i32, i32
  }
  func.func @transform_3(%arg0: i32) -> (i32, i32) {
    %c0_i32 = arith.constant 0 : i32
    %c0_i32_0 = arith.constant 0 : i32
    return %arg0, %c0_i32 : i32, i32
  }
}

module attributes {stable_mosaic.version = 11 : i64} {
  func.func @_fused_matmul_kernel(%arg0: i32, %arg1: memref<2x1920xbf16, #tpu.memory_space<vmem>>, %arg2: memref<1920x128xbf16, #tpu.memory_space<vmem>>, %arg3: memref<1x128xf32, #tpu.memory_space<vmem>>, %arg4: memref<2x128xf32, #tpu.memory_space<vmem>>) attributes {dimension_semantics = [#tpu.dimension_semantics<parallel>], iteration_bounds = array<i64: 1>, scalar_prefetch = 0 : i64, scratch_operands = 0 : i64, tpu.core_type = #tpu.core_type<tc>, window_params = [{transform_indices = @transform_0, window_bounds = array<i64: 2, 1920>}, {pipeline_mode = #tpu.pipeline_mode<synchronous>, transform_indices = @transform_1, window_bounds = array<i64: 1920, 128>}, {pipeline_mode = #tpu.pipeline_mode<synchronous>, transform_indices = @transform_2, window_bounds = array<i64: 1, 128>}, {transform_indices = @transform_3, window_bounds = array<i64: 2, 128>}]} {
    %c0 = arith.constant 0 : index
    %c0_0 = arith.constant 0 : index
    %0 = vector.load %arg1[%c0, %c0_0] : memref<2x1920xbf16, #tpu.memory_space<vmem>>, vector<2x1920xbf16>
    %c0_1 = arith.constant 0 : index
    %c0_2 = arith.constant 0 : index
    %1 = vector.load %arg2[%c0_1, %c0_2] : memref<1920x128xbf16, #tpu.memory_space<vmem>>, vector<1920x128xbf16>
    %cst = arith.constant dense<0.000000e+00> : vector<2x128xf32>
    %2 = tpu.matmul %0, %1, %cst {dimension_numbers = #tpu.dot_dimension_numbers<[1], [0], [0], [1], [0, 0, 1, 1], [], []>} : vector<2x1920xbf16>, vector<1920x128xbf16>, vector<2x128xf32> -> vector<2x128xf32>
    %c0_3 = arith.constant 0 : index
    %c0_4 = arith.constant 0 : index
    %3 = vector.load %arg3[%c0_3, %c0_4] : memref<1x128xf32, #tpu.memory_space<vmem>>, vector<1x128xf32>
    %4 = vector.broadcast %3 : vector<1x128xf32> to vector<2x128xf32>
    %5 = arith.addf %2, %4 : vector<2x128xf32>
    %c0_5 = arith.constant 0 : index
    %c0_6 = arith.constant 0 : index
    %6 = vector.load %arg4[%c0_5, %c0_6] : memref<2x128xf32, #tpu.memory_space<vmem>>, vector<2x128xf32>
    tpu.vector_store %arg4[%c0_5, %c0_6], %5 {strides = array<i32>} : memref<2x128xf32, #tpu.memory_space<vmem>>, vector<2x128xf32>,
    return
  }
  func.func @transform_0(%arg0: i32) -> (i32, i32) {
    %c0_i32 = arith.constant 0 : i32
    %c0_i32_0 = arith.constant 0 : i32
    return %arg0, %c0_i32 : i32, i32
  }
  func.func @transform_1(%arg0: i32) -> (i32, i32) {
    %c0_i32 = arith.constant 0 : i32
    %c0_i32_0 = arith.constant 0 : i32
    %c0_i32_1 = arith.constant 0 : i32
    return %c0_i32, %c0_i32_0 : i32, i32
  }
  func.func @transform_2(%arg0: i32) -> (i32, i32) {
    %c0_i32 = arith.constant 0 : i32
    %c0_i32_0 = arith.constant 0 : i32
    %c0_i32_1 = arith.constant 0 : i32
    return %c0_i32, %c0_i32_0 : i32, i32
  }
  func.func @transform_3(%arg0: i32) -> (i32, i32) {
    %c0_i32 = arith.constant 0 : i32
    %c0_i32_0 = arith.constant 0 : i32
    return %arg0, %c0_i32 : i32, i32
  }
}

</mosaic_0001>

<llo_original>
// kernel: other_net_forward.5
$region0: #{other_net_forward.5}
  #allocation0 [shape = 'u32[]', space=smem, size = 0x4, offset = 0x4, fixed_abs, tag = 'smem constant byte address 0x4 - core index']
  #allocation1 [shape = 'u32[144,128]{1,0:T(1,128)}', space=vmem, size = 0x12000, scoped, tag = 'internal scratch']
  %s0 = inlined_call_operand.vmem [shape: bf16[1568,75], index: 0, kind: input, shape index: {}]
  %s1 = inlined_call_operand.vmem [shape: bf16[75,128], index: 1, kind: input, shape index: {}]
  %s2 = inlined_call_operand.vmem [shape: f32[1,128], index: 2, kind: input, shape index: {}]
  %s3 = inlined_call_operand.vmem [shape: f32[1568,128], index: 3, kind: output, shape index: {}]
  %s4 = sld [smem:[#allocation0]]
  $region45: #{other_net_forward.5} parent=0
    _
  %s6 = ssub.s32 1, %s4
  %s7 = scalar_select 0, %s6, %s4
  loop: start=0, step=1, limit=4
  $region2: #{other_net_forward.5} parent=0 // loop_pre_header
    _
  $region3: #{other_net_forward.5} parent=0 // loop_header
    %s9 = sphi 0, %s13
    %p10 = scmp.ge.s32.totalorder %s9, 4
    %s19 = sphi 0, %s21
    %s22 = sphi 0, %s19
    %s23 = sphi 0, %s22
    %s39 = sphi 0, %s23
    %s43 = sphi 0, %s43
    %s45 = sphi 0, %s43
    %s46 = sphi 0, %s45
    %s60 = sphi 0, %s46
    %s64 = sphi 0, %s64
    %s66 = sphi 0, %s64
    %s67 = sphi 0, %s66
    %s81 = sphi 0, %s67
    %s87 = sphi 0, %s89
    %s90 = sphi 0, %s87
    %s91 = sphi 0, %s90
    %s107 = sphi 0, %s91
  $region4: #{other_net_forward.5} parent=0 // loop_header_branch
    %12 = sbr.rel (%p10) target = $region8
  $region5: #{other_net_forward.5} parent=0 // loop_body
    %s14 = ssub.s32 %s9, 1
    %s15 = ssub.s32 %s9, 2
    %s16 = sadd.s32 %s9, 1
    %s17 = ssub.s32 %s9, %s16
    %p18 = scmp.eq.s32.totalorder %s17, 0
    %s20 = sadd.s32 %s19, 1
    %s21 = scalar_select %p18, %s19, %s20
    %p24 = pneg %p18
    %p25 = scmp.eq.s32.totalorder %s9, 1
    %p26 = por %p24, %p25
    %p27 = scmp.ne.s32.totalorder %s19, %s22
    %p28 = scmp.eq.s32.totalorder %s9, 0
    %p29 = por %p27, %p28
    %p30 = scmp.ne.s32.totalorder %s19, %s22
    %p31 = scmp.eq.s32.totalorder %s14, 1
    %p32 = por %p30, %p31
    %p33 = scmp.ne.s32.totalorder %s22, %s23
    %p34 = scmp.eq.s32.totalorder %s14, 0
    %p35 = por %p33, %p34
    %p36 = scmp.ne.s32.totalorder %s22, %s23
    %p37 = scmp.eq.s32.totalorder %s15, 1
    %p38 = por %p36, %p37
    %p40 = scmp.ne.s32.totalorder %s23, %s39
    %p41 = scmp.eq.s32.totalorder %s15, 0
    %p42 = por %p40, %p41
    %s44 = sadd.s32 %s43, 1
    %p47 = scmp.eq.s32.totalorder %s9, 1
    %p48 = scmp.ne.s32.totalorder %s43, %s45
    %p49 = scmp.eq.s32.totalorder %s9, 0
    %p50 = por %p48, %p49
    %p51 = scmp.ne.s32.totalorder %s43, %s45
    %p52 = scmp.eq.s32.totalorder %s14, 1
    %p53 = por %p51, %p52
    %p54 = scmp.ne.s32.totalorder %s45, %s46
    %p55 = scmp.eq.s32.totalorder %s14, 0
    %p56 = por %p54, %p55
    %p57 = scmp.ne.s32.totalorder %s45, %s46
    %p58 = scmp.eq.s32.totalorder %s15, 1
    %p59 = por %p57, %p58
    %p61 = scmp.ne.s32.totalorder %s46, %s60
    %p62 = scmp.eq.s32.totalorder %s15, 0
    %p63 = por %p61, %p62
    %s65 = sadd.s32 %s64, 1
    %p68 = scmp.eq.s32.totalorder %s9, 1
    %p69 = scmp.ne.s32.totalorder %s64, %s66
    %p70 = scmp.eq.s32.totalorder %s9, 0
    %p71 = por %p69, %p70
    %p72 = scmp.ne.s32.totalorder %s64, %s66
    %p73 = scmp.eq.s32.totalorder %s14, 1
    %p74 = por %p72, %p73
    %p75 = scmp.ne.s32.totalorder %s66, %s67
    %p76 = scmp.eq.s32.totalorder %s14, 0
    %p77 = por %p75, %p76
    %p78 = scmp.ne.s32.totalorder %s66, %s67
    %p79 = scmp.eq.s32.totalorder %s15, 1
    %p80 = por %p78, %p79
    %p82 = scmp.ne.s32.totalorder %s67, %s81
    %p83 = scmp.eq.s32.totalorder %s15, 0
    %p84 = por %p82, %p83
    %s85 = ssub.s32 %s9, %s16
    %p86 = scmp.eq.s32.totalorder %s85, 0
    %s88 = sadd.s32 %s87, 1
    %s89 = scalar_select %p86, %s87, %s88
    %p92 = pneg %p86
    %p93 = scmp.eq.s32.totalorder %s9, 1
    %p94 = por %p92, %p93
    %p95 = scmp.ne.s32.totalorder %s87, %s90
    %p96 = scmp.eq.s32.totalorder %s9, 0
    %p97 = por %p95, %p96
    %p98 = scmp.ne.s32.totalorder %s87, %s90
    %p99 = scmp.eq.s32.totalorder %s14, 1
    %p100 = por %p98, %p99
    %p101 = scmp.ne.s32.totalorder %s90, %s91
    %p102 = scmp.eq.s32.totalorder %s14, 0
    %p103 = por %p101, %p102
    %p104 = scmp.ne.s32.totalorder %s90, %s91
    %p105 = scmp.eq.s32.totalorder %s15, 1
    %p106 = por %p104, %p105
    %p108 = scmp.ne.s32.totalorder %s91, %s107
    %p109 = scmp.eq.s32.totalorder %s15, 0
    %p110 = por %p108, %p109
    %p111 = scmp.le.s32.totalorder 1, %s9
    %p112 = scmp.lt.s32.totalorder %s9, 3
    %p113 = pnand %p111, %p112
    %p114 = pneg %p113
    // Predicated region
    $region9: #{other_net_forward.5} parent=5 // pred_check
      _
    $region10: #{other_net_forward.5} parent=5 // pred_check_branch
      %116 = sbr.rel (%p113) target = $region12
    $region11: #{other_net_forward.5} parent=5 // pred_region
      %s117 = ssub.s32 %s9, 1
      // Predicated region
      $region13: #{other_net_forward.5} parent=11 // pred_check
        %p118 = pneg %p56
      $region14: #{other_net_forward.5} parent=11 // pred_check_branch
        %120 = sbr.rel (%p118) target = $region16
      $region15: #{other_net_forward.5} parent=11 // pred_region
        _
      $region16: #{other_net_forward.5} parent=11 // pred_fallthru
        _
      // Predicated region
      $region17: #{other_net_forward.5} parent=11 // pred_check
        %p121 = pneg %p77
      $region18: #{other_net_forward.5} parent=11 // pred_check_branch
        %123 = sbr.rel (%p121) target = $region20
      $region19: #{other_net_forward.5} parent=11 // pred_region
        _
      $region20: #{other_net_forward.5} parent=11 // pred_fallthru
        _
    $region12: #{other_net_forward.5} parent=5 // pred_fallthru
      _
    %p124 = scmp.lt.s32.totalorder %s9, 2
    // Predicated region
    $region21: #{other_net_forward.5} parent=5 // pred_check
      %p125 = pneg %p124
    $region22: #{other_net_forward.5} parent=5 // pred_check_branch
      %127 = sbr.rel (%p125) target = $region24
    $region23: #{other_net_forward.5} parent=5 // pred_region
      // Predicated region
      $region25: #{other_net_forward.5} parent=23 // pred_check
        %p128 = pneg %p29
      $region26: #{other_net_forward.5} parent=23 // pred_check_branch
        %130 = sbr.rel (%p128) target = $region28
      $region27: #{other_net_forward.5} parent=23 // pred_region
        %s131 = smul.u32 98, %s9
        %p132 = scmp.lt.s32.totalorder %s131, 195
        %s133 = scalar_select %p132, %s131, 195
        %s134 = smul.addr %s133, 4
        %s135 = scalar_lea.vmem %s0, %s134
        %s136 = smul.u32 98, %s9
      $region28: #{other_net_forward.5} parent=23 // pred_fallthru
        _
    $region24: #{other_net_forward.5} parent=5 // pred_fallthru
      _
    %p137 = scmp.le.s32.totalorder 1, %s9
    %p138 = scmp.lt.s32.totalorder %s9, 3
    %p139 = pnand %p137, %p138
    %p140 = pneg %p139
    // Predicated region
    $region29: #{other_net_forward.5} parent=5 // pred_check
      _
    $region30: #{other_net_forward.5} parent=5 // pred_check_branch
      %142 = sbr.rel (%p139) target = $region32
    $region31: #{other_net_forward.5} parent=5 // pred_region
      %s143 = ssub.s32 %s9, 1
      %s144 = smul.u32 98, %s14
      %p145 = scmp.lt.s32.totalorder %s144, 195
      %s146 = scalar_select %p145, %s144, 195
      %s147 = smul.addr %s146, 4
      %s148 = scalar_lea.vmem %s0, %s147
      %p149 = pneg %p35
      %p150 = pneg %p32
      %p151 = pneg %p56
      %p152 = pneg %p53
      %p153 = pneg %p77
      %p154 = pneg %p74
      %p155 = pneg %p103
      %p156 = pneg %p100
      %s157 = smul.u32 98, %s14
      %p158 = scmp.lt.s32.totalorder %s157, 195
      %s159 = scalar_select %p158, %s157, 195
      %s160 = smul.addr %s159, 8
      %s161 = scalar_lea.vmem %s3, %s160
      %s162 = smul.u32 98, %s14
      %p163 = scmp.lt.s32.totalorder %s162, 195
      %s164 = scalar_select %p163, %s162, 195
      %s165 = smul.addr %s164, 4
      %s166 = scalar_lea.vmem %s0, %s165
      %s167 = smul.u32 98, %s14
      %s168 = smul.u32 98, %s14
      %p169 = scmp.lt.s32.totalorder %s168, 195
      %s170 = scalar_select %p169, %s168, 195
      %s171 = smul.addr %s170, 8
      %s172 = scalar_lea.vmem %s3, %s171
      %s173 = smul.u32 98, %s14
      %v175 = vld [vmem:[%s166] sm:$0xf]
      %v176 = vld [vmem:[%s166 + $0x4] sm:$0xf]
      %v177 = vld [vmem:[%s166 + $0x8] sm:$0xf]
      %v178 = vld [vmem:[%s166 + $0xc] sm:$0xf]
      %v179 = vld [vmem:[%s166 + $0x10] sm:$0xf]
      %v180 = vld [vmem:[%s166 + $0x14] sm:$0xf]
      %v181 = vld [vmem:[%s166 + $0x18] sm:$0xf]
      %v182 = vld [vmem:[%s166 + $0x1c] sm:$0xf]
      %v183 = vld [vmem:[%s166 + $0x20] sm:$0xf]
      %v184 = vld [vmem:[%s166 + $0x24] sm:$0xf]
      %v185 = vld [vmem:[%s166 + $0x28] sm:$0xf]
      %v186 = vld [vmem:[%s166 + $0x2c] sm:$0xf]
      %v187 = vld [vmem:[%s166 + $0x30] sm:$0xf]
      %v188 = vld [vmem:[%s166 + $0x34] sm:$0xf]
      %v189 = vld [vmem:[%s166 + $0x38] sm:$0xf]
      %v190 = vld [vmem:[%s166 + $0x3c] sm:$0xf]
      %v191 = vld [vmem:[%s166 + $0x40] sm:$0xf]
      %v192 = vld [vmem:[%s166 + $0x44] sm:$0xf]
      %v193 = vld [vmem:[%s166 + $0x48] sm:$0xf]
      %v194 = vld [vmem:[%s166 + $0x4c] sm:$0xf]
      %v195 = vld [vmem:[%s166 + $0x50] sm:$0xf]
      %v196 = vld [vmem:[%s166 + $0x54] sm:$0xf]
      %v197 = vld [vmem:[%s166 + $0x58] sm:$0xf]
      %v198 = vld [vmem:[%s166 + $0x5c] sm:$0xf]
      %v199 = vld [vmem:[%s166 + $0x60] sm:$0xf]
      %v200 = vld [vmem:[%s166 + $0x64] sm:$0xf]
      %v201 = vld [vmem:[%s166 + $0x68] sm:$0xf]
      %v202 = vld [vmem:[%s166 + $0x6c] sm:$0xf]
      %v203 = vld [vmem:[%s166 + $0x70] sm:$0xf]
      %v204 = vld [vmem:[%s166 + $0x74] sm:$0xf]
      %v205 = vld [vmem:[%s166 + $0x78] sm:$0xf]
      %v206 = vld [vmem:[%s166 + $0x7c] sm:$0xf]
      %v207 = vld [vmem:[%s166 + $0x80] sm:$0xf]
      %v208 = vld [vmem:[%s166 + $0x84] sm:$0xf]
      %v209 = vld [vmem:[%s166 + $0x88] sm:$0xf]
      %v210 = vld [vmem:[%s166 + $0x8c] sm:$0xf]
      %v211 = vld [vmem:[%s166 + $0x90] sm:$0xf]
      %v212 = vld [vmem:[%s166 + $0x94] sm:$0xf]
      %v213 = vld [vmem:[%s166 + $0x98] sm:$0xf]
      %v214 = vld [vmem:[%s166 + $0x9c] sm:$0xf]
      %v215 = vld [vmem:[%s166 + $0xa0] sm:$0xf]
      %v216 = vld [vmem:[%s166 + $0xa4] sm:$0xf]
      %v217 = vld [vmem:[%s166 + $0xa8] sm:$0xf]
      %v218 = vld [vmem:[%s166 + $0xac] sm:$0xf]
      %v219 = vld [vmem:[%s166 + $0xb0] sm:$0xf]
      %v220 = vld [vmem:[%s166 + $0xb4] sm:$0xf]
      %v221 = vld [vmem:[%s166 + $0xb8] sm:$0xf]
      %v222 = vld [vmem:[%s166 + $0xbc] sm:$0xf]
      %v223 = vld [vmem:[%s166 + $0xc0] sm:$0xf]
      %v224 = vld [vmem:[%s166 + $0xc4] sm:$0xf]
      %v225 = vld [vmem:[%s166 + $0xc8] sm:$0xf]
      %v226 = vld [vmem:[%s166 + $0xcc] sm:$0xf]
      %v227 = vld [vmem:[%s166 + $0xd0] sm:$0xf]
      %v228 = vld [vmem:[%s166 + $0xd4] sm:$0xf]
      %v229 = vld [vmem:[%s166 + $0xd8] sm:$0xf]
      %v230 = vld [vmem:[%s166 + $0xdc] sm:$0xf]
      %v231 = vld [vmem:[%s166 + $0xe0] sm:$0xf]
      %v232 = vld [vmem:[%s166 + $0xe4] sm:$0xf]
      %v233 = vld [vmem:[%s166 + $0xe8] sm:$0xf]
      %v234 = vld [vmem:[%s166 + $0xec] sm:$0xf]
      %v235 = vld [vmem:[%s166 + $0xf0] sm:$0xf]
      %v236 = vld [vmem:[%s166 + $0xf4] sm:$0xf]
      %v237 = vld [vmem:[%s166 + $0xf8] sm:$0xf]
      %v238 = vld [vmem:[%s166 + $0xfc] sm:$0xf]
      %v239 = vld [vmem:[%s166 + $0x100] sm:$0xf]
      %v240 = vld [vmem:[%s166 + $0x104] sm:$0xf]
      %v241 = vld [vmem:[%s166 + $0x108] sm:$0xf]
      %v242 = vld [vmem:[%s166 + $0x10c] sm:$0xf]
      %v243 = vld [vmem:[%s166 + $0x110] sm:$0xf]
      %v244 = vld [vmem:[%s166 + $0x114] sm:$0xf]
      %v245 = vld [vmem:[%s166 + $0x118] sm:$0xf]
      %v246 = vld [vmem:[%s166 + $0x11c] sm:$0xf]
      %v247 = vld [vmem:[%s166 + $0x120] sm:$0xf]
      %v248 = vld [vmem:[%s166 + $0x124] sm:$0xf]
      %v249 = vld [vmem:[%s166 + $0x128] sm:$0xf]
      %v250 = vld [vmem:[%s166 + $0x12c] sm:$0xf]
      %v251 = vld [vmem:[%s166 + $0x130] sm:$0xf]
      %v252 = vld [vmem:[%s166 + $0x134] sm:$0xf]
      %v253 = vld [vmem:[%s166 + $0x138] sm:$0xf]
      %v254 = vld [vmem:[%s166 + $0x13c] sm:$0xf]
      %v255 = vld [vmem:[%s166 + $0x140] sm:$0xf]
      %v256 = vld [vmem:[%s166 + $0x144] sm:$0xf]
      %v257 = vld [vmem:[%s166 + $0x148] sm:$0xf]
      %v258 = vld [vmem:[%s166 + $0x14c] sm:$0xf]
      %v259 = vld [vmem:[%s166 + $0x150] sm:$0xf]
      %v260 = vld [vmem:[%s166 + $0x154] sm:$0xf]
      %v261 = vld [vmem:[%s166 + $0x158] sm:$0xf]
      %v262 = vld [vmem:[%s166 + $0x15c] sm:$0xf]
      %v263 = vld [vmem:[%s166 + $0x160] sm:$0xf]
      %v264 = vld [vmem:[%s166 + $0x164] sm:$0xf]
      %v265 = vld [vmem:[%s166 + $0x168] sm:$0xf]
      %v266 = vld [vmem:[%s166 + $0x16c] sm:$0xf]
      %v267 = vld [vmem:[%s166 + $0x170] sm:$0xf]
      %v268 = vld [vmem:[%s166 + $0x174] sm:$0xf]
      %v269 = vld [vmem:[%s166 + $0x178] sm:$0xf]
      %v270 = vld [vmem:[%s166 + $0x17c] sm:$0xf]
      %v271 = vld [vmem:[%s166 + $0x180] sm:$0xf]
      %v272 = vld [vmem:[%s166 + $0x184] sm:$0xf]
      %v273 = vld [vmem:[%s1] sm:$0xf]
      %v274 = vld [vmem:[%s1 + $0x4] sm:$0xf]
      %v275 = vld [vmem:[%s1 + $0x8] sm:$0xf]
      %v276 = vld [vmem:[%s1 + $0xc] sm:$0xf]
      %v277 = vld [vmem:[%s1 + $0x10] sm:$0xf]
      %v278 = vld [vmem:[%s1 + $0x14] sm:$0xf]
      %v279 = vld [vmem:[%s1 + $0x18] sm:$0xf]
      %v280 = vld [vmem:[%s1 + $0x1c] sm:$0xf]
      %v281 = vld [vmem:[%s1 + $0x20] sm:$0xf]
      %v282 = vld [vmem:[%s1 + $0x24] sm:$0x3]
      %v283 = vld [vmem:[%s2] sm:$0x1]
      %v285 = vlaneseq
      %v286 = vshrl.u32 %v285, 7
      %v287 = vsub.s32 0, %v286
      %v288 = vrot.slane %v283, %v287
      %v388 = vunpack.c.l.b16 %v175
      %v389 = vunpack.c.l.b16 %v176
      %v390 = vunpack.c.l.b16 %v177
      %v391 = vunpack.c.l.b16 %v178
      %v392 = vunpack.c.l.b16 %v179
      %v393 = vunpack.c.l.b16 %v180
      %v394 = vunpack.c.l.b16 %v181
      %v395 = vunpack.c.l.b16 %v182
      %v396 = vunpack.c.l.b16 %v183
      %v397 = vunpack.c.l.b16 %v184
      %v398 = vunpack.c.l.b16 %v185
      %v399 = vunpack.c.l.b16 %v186
      %v400 = vunpack.c.l.b16 %v187
      %v401 = vunpack.c.l.b16 %v188
      %v402 = vunpack.c.l.b16 %v189
      %v403 = vunpack.c.l.b16 %v190
      %v404 = vunpack.c.l.b16 %v191
      %v405 = vunpack.c.l.b16 %v192
      %v406 = vunpack.c.l.b16 %v193
      %v407 = vunpack.c.l.b16 %v194
      %v408 = vunpack.c.l.b16 %v195
      %v409 = vunpack.c.l.b16 %v196
      %v410 = vunpack.c.l.b16 %v197
      %v411 = vunpack.c.l.b16 %v198
      %v412 = vunpack.c.l.b16 %v199
      %v413 = vunpack.c.l.b16 %v200
      %v414 = vunpack.c.l.b16 %v201
      %v415 = vunpack.c.l.b16 %v202
      %v416 = vunpack.c.l.b16 %v203
      %v417 = vunpack.c.l.b16 %v204
      %v418 = vunpack.c.l.b16 %v205
      %v419 = vunpack.c.l.b16 %v206
      %v420 = vunpack.c.l.b16 %v207
      %v421 = vunpack.c.l.b16 %v208
      %v422 = vunpack.c.l.b16 %v209
      %v423 = vunpack.c.l.b16 %v210
      %v424 = vunpack.c.l.b16 %v211
      %v425 = vunpack.c.l.b16 %v212
      %v426 = vunpack.c.l.b16 %v213
      %v427 = vunpack.c.l.b16 %v214
      %v428 = vunpack.c.l.b16 %v215
      %v429 = vunpack.c.l.b16 %v216
      %v430 = vunpack.c.l.b16 %v217
      %v431 = vunpack.c.l.b16 %v218
      %v432 = vunpack.c.l.b16 %v219
      %v433 = vunpack.c.l.b16 %v220
      %v434 = vunpack.c.l.b16 %v221
      %v435 = vunpack.c.l.b16 %v222
      %v436 = vunpack.c.l.b16 %v223
      %v437 = vunpack.c.l.b16 %v224
      %v438 = vunpack.c.l.b16 %v225
      %v439 = vunpack.c.l.b16 %v226
      %v440 = vunpack.c.l.b16 %v227
      %v441 = vunpack.c.l.b16 %v228
      %v442 = vunpack.c.l.b16 %v229
      %v443 = vunpack.c.l.b16 %v230
      %v444 = vunpack.c.l.b16 %v231
      %v445 = vunpack.c.l.b16 %v232
      %v446 = vunpack.c.l.b16 %v233
      %v447 = vunpack.c.l.b16 %v234
      %v448 = vunpack.c.l.b16 %v235
      %v449 = vunpack.c.l.b16 %v236
      %v450 = vunpack.c.l.b16 %v237
      %v451 = vunpack.c.l.b16 %v238
      %v452 = vunpack.c.l.b16 %v239
      %v453 = vunpack.c.l.b16 %v240
      %v454 = vunpack.c.l.b16 %v241
      %v455 = vunpack.c.l.b16 %v242
      %v456 = vunpack.c.l.b16 %v243
      %v457 = vunpack.c.l.b16 %v244
      %v458 = vunpack.c.l.b16 %v245
      %v459 = vunpack.c.l.b16 %v246
      %v460 = vunpack.c.l.b16 %v247
      %v461 = vunpack.c.l.b16 %v248
      %v462 = vunpack.c.l.b16 %v249
      %v463 = vunpack.c.l.b16 %v250
      %v464 = vunpack.c.l.b16 %v251
      %v465 = vunpack.c.l.b16 %v252
      %v466 = vunpack.c.l.b16 %v253
      %v467 = vunpack.c.l.b16 %v254
      %v468 = vunpack.c.l.b16 %v255
      %v469 = vunpack.c.l.b16 %v256
      %v470 = vunpack.c.l.b16 %v257
      %v471 = vunpack.c.l.b16 %v258
      %v472 = vunpack.c.l.b16 %v259
      %v473 = vunpack.c.l.b16 %v260
      %v474 = vunpack.c.l.b16 %v261
      %v475 = vunpack.c.l.b16 %v262
      %v476 = vunpack.c.l.b16 %v263
      %v477 = vunpack.c.l.b16 %v264
      %v478 = vunpack.c.l.b16 %v265
      %v479 = vunpack.c.l.b16 %v266
      %v480 = vunpack.c.l.b16 %v267
      %v481 = vunpack.c.l.b16 %v268
      %v482 = vunpack.c.l.b16 %v269
      %v483 = vunpack.c.l.b16 %v270
      %v484 = vunpack.c.l.b16 %v271
      %v485 = vunpack.c.l.b16 %v272
      %v486 = vpack.c.b16 %v389, %v388
      %v487 = vpack.c.b16 %v391, %v390
      %v488 = vpack.c.b16 %v393, %v392
      %v489 = vpack.c.b16 %v395, %v394
      %v490 = vpack.c.b16 %v397, %v396
      %v491 = vpack.c.b16 %v399, %v398
      %v492 = vpack.c.b16 %v401, %v400
      %v493 = vpack.c.b16 %v403, %v402
      %v494 = vpack.c.b16 %v405, %v404
      %v495 = vpack.c.b16 %v407, %v406
      %v496 = vpack.c.b16 %v409, %v408
      %v497 = vpack.c.b16 %v411, %v410
      %v498 = vpack.c.b16 %v413, %v412
      %v499 = vpack.c.b16 %v415, %v414
      %v500 = vpack.c.b16 %v417, %v416
      %v501 = vpack.c.b16 %v419, %v418
      %v502 = vpack.c.b16 %v421, %v420
      %v503 = vpack.c.b16 %v423, %v422
      %v504 = vpack.c.b16 %v425, %v424
      %v505 = vpack.c.b16 %v427, %v426
      %v506 = vpack.c.b16 %v429, %v428
      %v507 = vpack.c.b16 %v431, %v430
      %v508 = vpack.c.b16 %v433, %v432
      %v509 = vpack.c.b16 %v435, %v434
      %v510 = vpack.c.b16 %v437, %v436
      %v511 = vpack.c.b16 %v439, %v438
      %v512 = vpack.c.b16 %v441, %v440
      %v513 = vpack.c.b16 %v443, %v442
      %v514 = vpack.c.b16 %v445, %v444
      %v515 = vpack.c.b16 %v447, %v446
      %v516 = vpack.c.b16 %v449, %v448
      %v517 = vpack.c.b16 %v451, %v450
      %v518 = vpack.c.b16 %v453, %v452
      %v519 = vpack.c.b16 %v455, %v454
      %v520 = vpack.c.b16 %v457, %v456
      %v521 = vpack.c.b16 %v459, %v458
      %v522 = vpack.c.b16 %v461, %v460
      %v523 = vpack.c.b16 %v463, %v462
      %v524 = vpack.c.b16 %v465, %v464
      %v525 = vpack.c.b16 %v467, %v466
      %v526 = vpack.c.b16 %v469, %v468
      %v527 = vpack.c.b16 %v471, %v470
      %v528 = vpack.c.b16 %v473, %v472
      %v529 = vpack.c.b16 %v475, %v474
      %v530 = vpack.c.b16 %v477, %v476
      %v531 = vpack.c.b16 %v479, %v478
      %v532 = vpack.c.b16 %v481, %v480
      %v533 = vpack.c.b16 %v483, %v482
      %v534 = vpack.c.b16 %v485, %v484
      %v545 = vunpack.c.l.b16 %v273
      %v546 = vunpack.c.l.b16 %v274
      %v547 = vunpack.c.l.b16 %v275
      %v548 = vunpack.c.l.b16 %v276
      %v549 = vunpack.c.l.b16 %v277
      %v550 = vunpack.c.l.b16 %v278
      %v551 = vunpack.c.l.b16 %v279
      %v552 = vunpack.c.l.b16 %v280
      %v553 = vunpack.c.l.b16 %v281
      %v554 = vunpack.c.l.b16 %v282
      %v555 = vpack.c.b16 %v546, %v545
      %v556 = vpack.c.b16 %v548, %v547
      %v557 = vpack.c.b16 %v550, %v549
      %v558 = vpack.c.b16 %v552, %v551
      %v559 = vpack.c.b16 %v554, %v553
      %vm564 = vcmask 613376
      %v566 = vsel %vm564, %v486, 0
      %v569 = vsel %vm564, %v487, 0
      %v572 = vsel %vm564, %v488, 0
      %v575 = vsel %vm564, %v489, 0
      %v578 = vsel %vm564, %v490, 0
      %v581 = vsel %vm564, %v491, 0
      %v584 = vsel %vm564, %v492, 0
      %v587 = vsel %vm564, %v493, 0
      %v590 = vsel %vm564, %v494, 0
      %v593 = vsel %vm564, %v495, 0
      %v596 = vsel %vm564, %v496, 0
      %v599 = vsel %vm564, %v497, 0
      %v602 = vsel %vm564, %v498, 0
      %v605 = vsel %vm564, %v499, 0
      %v608 = vsel %vm564, %v500, 0
      %v611 = vsel %vm564, %v501, 0
      %v614 = vsel %vm564, %v502, 0
      %v617 = vsel %vm564, %v503, 0
      %v620 = vsel %vm564, %v504, 0
      %v623 = vsel %vm564, %v505, 0
      %v626 = vsel %vm564, %v506, 0
      %v629 = vsel %vm564, %v507, 0
      %v632 = vsel %vm564, %v508, 0
      %v635 = vsel %vm564, %v509, 0
      %v638 = vsel %vm564, %v510, 0
      %v641 = vsel %vm564, %v511, 0
      %v644 = vsel %vm564, %v512, 0
      %v647 = vsel %vm564, %v513, 0
      %v650 = vsel %vm564, %v514, 0
      %v653 = vsel %vm564, %v515, 0
      %v656 = vsel %vm564, %v516, 0
      %v659 = vsel %vm564, %v517, 0
      %v662 = vsel %vm564, %v518, 0
      %v665 = vsel %vm564, %v519, 0
      %v668 = vsel %vm564, %v520, 0
      %v671 = vsel %vm564, %v521, 0
      %v674 = vsel %vm564, %v522, 0
      %v677 = vsel %vm564, %v523, 0
      %v680 = vsel %vm564, %v524, 0
      %v683 = vsel %vm564, %v525, 0
      %v686 = vsel %vm564, %v526, 0
      %v689 = vsel %vm564, %v527, 0
      %v692 = vsel %vm564, %v528, 0
      %v695 = vsel %vm564, %v529, 0
      %v698 = vsel %vm564, %v530, 0
      %v701 = vsel %vm564, %v531, 0
      %v704 = vsel %vm564, %v532, 0
      %v707 = vsel %vm564, %v533, 0
      %v710 = vsel %vm564, %v534, 0
      %vm712 = vcmask 1044480
      %vm713 = vcmask 1045504
      %v714 = vsel %vm712, 4294967295, 65535
      %v715 = vsel %vm713, %v714, 0
      %v717 = vand.u32 %v559, %v715
      %719 = vmatprep.subr.bf16.mxu0 0
      %720 = vmatpush1.bf16.msra.mxu0 %v555
      %721 = vmatprep.subr.bf16.mxu0 0
      %722 = vmatpush1.bf16.msra.mxu0 %v556
      %723 = vmatprep.subr.bf16.mxu0 0
      %724 = vmatpush1.bf16.msra.mxu0 %v557
      %725 = vmatprep.subr.bf16.mxu0 0
      %726 = vmatpush1.bf16.msra.mxu0 %v558
      %727 = vmatprep.subr.bf16.mxu0 0
      %728 = vmatpush1.bf16.msra.mxu0 %v717
      %729 = vmatprep.subr.bf16.mxu0 0
      %730 = vmatpush1.bf16.msra.mxu0 0
      %731 = vmatprep.subr.bf16.mxu0 0
      %732 = vmatpush1.bf16.msra.mxu0 0
      %733 = vmatprep.subr.bf16.mxu0 0
      %734 = vmatpush1.bf16.msra.mxu0 0
      %735 = vmatprep.subr.bf16.mxu0 0
      %736 = vmatpush1.bf16.msra.mxu0 0
      %737 = vmatprep.subr.bf16.mxu0 0
      %738 = vmatpush1.bf16.msra.mxu0 0
      %739 = vmatprep.subr.bf16.mxu0 0
      %740 = vmatpush1.bf16.msra.mxu0 0
      %741 = vmatprep.subr.bf16.mxu0 0
      %742 = vmatpush1.bf16.msra.mxu0 0
      %743 = vmatprep.subr.bf16.mxu0 0
      %744 = vmatpush1.bf16.msra.mxu0 0
      %745 = vmatprep.subr.bf16.mxu0 0
      %746 = vmatpush1.bf16.msra.mxu0 0
      %747 = vmatprep.subr.bf16.mxu0 0
      %748 = vmatpush1.bf16.msra.mxu0 0
      %749 = vmatprep.subr.bf16.mxu0 0
      %750 = vmatpush1.bf16.msra.mxu0 0
      %751 = vmatprep.mubr.bf16.mxu0 0
      %752 = vmatmul.mubr.bf16.gmra.mrb[0].mxu0 %v566
      %v753 = vpop.f32.mrb[0].mxu0
      %v754 = vadd.f32 %v288, %v753
      %v755 = vpop.f32.mrb[0].mxu0
      %v756 = vpop.f32.mrb[0].mxu0
      %v757 = vadd.f32 %v288, %v756
      %v758 = vpop.f32.mrb[0].mxu0
      %759 = vmatprep.mubr.bf16.mxu0 0
      %760 = vmatmul.mubr.bf16.gmra.mrb[0].mxu0 %v569
      %v761 = vpop.f32.mrb[0].mxu0
      %v762 = vadd.f32 %v288, %v761
      %v763 = vpop.f32.mrb[0].mxu0
      %v764 = vpop.f32.mrb[0].mxu0
      %v765 = vadd.f32 %v288, %v764
      %v766 = vpop.f32.mrb[0].mxu0
      %767 = vmatprep.mubr.bf16.mxu0 0
      %768 = vmatmul.mubr.bf16.gmra.mrb[0].mxu0 %v572
      %v769 = vpop.f32.mrb[0].mxu0
      %v770 = vadd.f32 %v288, %v769
      %v771 = vpop.f32.mrb[0].mxu0
      %v772 = vpop.f32.mrb[0].mxu0
      %v773 = vadd.f32 %v288, %v772
      %v774 = vpop.f32.mrb[0].mxu0
      %775 = vmatprep.mubr.bf16.mxu0 0
      %776 = vmatmul.mubr.bf16.gmra.mrb[0].mxu0 %v575
      %v777 = vpop.f32.mrb[0].mxu0
      %v778 = vadd.f32 %v288, %v777
      %v779 = vpop.f32.mrb[0].mxu0
      %v780 = vpop.f32.mrb[0].mxu0
      %v781 = vadd.f32 %v288, %v780
      %v782 = vpop.f32.mrb[0].mxu0
      %783 = vmatprep.mubr.bf16.mxu0 0
      %784 = vmatmul.mubr.bf16.gmra.mrb[0].mxu0 %v578
      %v785 = vpop.f32.mrb[0].mxu0
      %v786 = vadd.f32 %v288, %v785
      %v787 = vpop.f32.mrb[0].mxu0
      %v788 = vpop.f32.mrb[0].mxu0
      %v789 = vadd.f32 %v288, %v788
      %v790 = vpop.f32.mrb[0].mxu0
      %791 = vmatprep.mubr.bf16.mxu0 0
      %792 = vmatmul.mubr.bf16.gmra.mrb[0].mxu0 %v581
      %v793 = vpop.f32.mrb[0].mxu0
      %v794 = vadd.f32 %v288, %v793
      %v795 = vpop.f32.mrb[0].mxu0
      %v796 = vpop.f32.mrb[0].mxu0
      %v797 = vadd.f32 %v288, %v796
      %v798 = vpop.f32.mrb[0].mxu0
      %799 = vmatprep.mubr.bf16.mxu0 0
      %800 = vmatmul.mubr.bf16.gmra.mrb[0].mxu0 %v584
      %v801 = vpop.f32.mrb[0].mxu0
      %v802 = vadd.f32 %v288, %v801
      %v803 = vpop.f32.mrb[0].mxu0
      %v804 = vpop.f32.mrb[0].mxu0
      %v805 = vadd.f32 %v288, %v804
      %v806 = vpop.f32.mrb[0].mxu0
      %807 = vmatprep.mubr.bf16.mxu0 0
      %808 = vmatmul.mubr.bf16.gmra.mrb[0].mxu0 %v587
      %v809 = vpop.f32.mrb[0].mxu0
      %v810 = vadd.f32 %v288, %v809
      %v811 = vpop.f32.mrb[0].mxu0
      %v812 = vpop.f32.mrb[0].mxu0
      %v813 = vadd.f32 %v288, %v812
      %v814 = vpop.f32.mrb[0].mxu0
      %815 = vmatprep.mubr.bf16.mxu0 0
      %816 = vmatmul.mubr.bf16.gmra.mrb[0].mxu0 %v590
      %v817 = vpop.f32.mrb[0].mxu0
      %v818 = vadd.f32 %v288, %v817
      %v819 = vpop.f32.mrb[0].mxu0
      %v820 = vpop.f32.mrb[0].mxu0
      %v821 = vadd.f32 %v288, %v820
      %v822 = vpop.f32.mrb[0].mxu0
      %823 = vmatprep.mubr.bf16.mxu0 0
      %824 = vmatmul.mubr.bf16.gmra.mrb[0].mxu0 %v593
      %v825 = vpop.f32.mrb[0].mxu0
      %v826 = vadd.f32 %v288, %v825
      %v827 = vpop.f32.mrb[0].mxu0
      %v828 = vpop.f32.mrb[0].mxu0
      %v829 = vadd.f32 %v288, %v828
      %v830 = vpop.f32.mrb[0].mxu0
      %831 = vmatprep.mubr.bf16.mxu0 0
      %832 = vmatmul.mubr.bf16.gmra.mrb[0].mxu0 %v596
      %v833 = vpop.f32.mrb[0].mxu0
      %v834 = vadd.f32 %v288, %v833
      %v835 = vpop.f32.mrb[0].mxu0
      %v836 = vpop.f32.mrb[0].mxu0
      %v837 = vadd.f32 %v288, %v836
      %v838 = vpop.f32.mrb[0].mxu0
      %839 = vmatprep.mubr.bf16.mxu0 0
      %840 = vmatmul.mubr.bf16.gmra.mrb[0].mxu0 %v599
      %v841 = vpop.f32.mrb[0].mxu0
      %v842 = vadd.f32 %v288, %v841
      %v843 = vpop.f32.mrb[0].mxu0
      %v844 = vpop.f32.mrb[0].mxu0
      %v845 = vadd.f32 %v288, %v844
      %v846 = vpop.f32.mrb[0].mxu0
      %847 = vmatprep.mubr.bf16.mxu0 0
      %848 = vmatmul.mubr.bf16.gmra.mrb[0].mxu0 %v602
      %v849 = vpop.f32.mrb[0].mxu0
      %v850 = vadd.f32 %v288, %v849
      %v851 = vpop.f32.mrb[0].mxu0
      %v852 = vpop.f32.mrb[0].mxu0
      %v853 = vadd.f32 %v288, %v852
      %v854 = vpop.f32.mrb[0].mxu0
      %855 = vmatprep.mubr.bf16.mxu0 0
      %856 = vmatmul.mubr.bf16.gmra.mrb[0].mxu0 %v605
      %v857 = vpop.f32.mrb[0].mxu0
      %v858 = vadd.f32 %v288, %v857
      %v859 = vpop.f32.mrb[0].mxu0
      %v860 = vpop.f32.mrb[0].mxu0
      %v861 = vadd.f32 %v288, %v860
      %v862 = vpop.f32.mrb[0].mxu0
      %863 = vmatprep.mubr.bf16.mxu0 0
      %864 = vmatmul.mubr.bf16.gmra.mrb[0].mxu0 %v608
      %v865 = vpop.f32.mrb[0].mxu0
      %v866 = vadd.f32 %v288, %v865
      %v867 = vpop.f32.mrb[0].mxu0
      %v868 = vpop.f32.mrb[0].mxu0
      %v869 = vadd.f32 %v288, %v868
      %v870 = vpop.f32.mrb[0].mxu0
      %871 = vmatprep.mubr.bf16.mxu0 0
      %872 = vmatmul.mubr.bf16.gmra.mrb[0].mxu0 %v611
      %v873 = vpop.f32.mrb[0].mxu0
      %v874 = vadd.f32 %v288, %v873
      %v875 = vpop.f32.mrb[0].mxu0
      %v876 = vpop.f32.mrb[0].mxu0
      %v877 = vadd.f32 %v288, %v876
      %v878 = vpop.f32.mrb[0].mxu0
      %879 = vmatprep.mubr.bf16.mxu0 0
      %880 = vmatmul.mubr.bf16.gmra.mrb[0].mxu0 %v614
      %v881 = vpop.f32.mrb[0].mxu0
      %v882 = vadd.f32 %v288, %v881
      %v883 = vpop.f32.mrb[0].mxu0
      %v884 = vpop.f32.mrb[0].mxu0
      %v885 = vadd.f32 %v288, %v884
      %v886 = vpop.f32.mrb[0].mxu0
      %887 = vmatprep.mubr.bf16.mxu0 0
      %888 = vmatmul.mubr.bf16.gmra.mrb[0].mxu0 %v617
      %v889 = vpop.f32.mrb[0].mxu0
      %v890 = vadd.f32 %v288, %v889
      %v891 = vpop.f32.mrb[0].mxu0
      %v892 = vpop.f32.mrb[0].mxu0
      %v893 = vadd.f32 %v288, %v892
      %v894 = vpop.f32.mrb[0].mxu0
      %895 = vmatprep.mubr.bf16.mxu0 0
      %896 = vmatmul.mubr.bf16.gmra.mrb[0].mxu0 %v620
      %v897 = vpop.f32.mrb[0].mxu0
      %v898 = vadd.f32 %v288, %v897
      %v899 = vpop.f32.mrb[0].mxu0
      %v900 = vpop.f32.mrb[0].mxu0
      %v901 = vadd.f32 %v288, %v900
      %v902 = vpop.f32.mrb[0].mxu0
      %903 = vmatprep.mubr.bf16.mxu0 0
      %904 = vmatmul.mubr.bf16.gmra.mrb[0].mxu0 %v623
      %v905 = vpop.f32.mrb[0].mxu0
      %v906 = vadd.f32 %v288, %v905
      %v907 = vpop.f32.mrb[0].mxu0
      %v908 = vpop.f32.mrb[0].mxu0
      %v909 = vadd.f32 %v288, %v908
      %v910 = vpop.f32.mrb[0].mxu0
      %911 = vmatprep.mubr.bf16.mxu0 0
      %912 = vmatmul.mubr.bf16.gmra.mrb[0].mxu0 %v626
      %v913 = vpop.f32.mrb[0].mxu0
      %v914 = vadd.f32 %v288, %v913
      %v915 = vpop.f32.mrb[0].mxu0
      %v916 = vpop.f32.mrb[0].mxu0
      %v917 = vadd.f32 %v288, %v916
      %v918 = vpop.f32.mrb[0].mxu0
      %919 = vmatprep.mubr.bf16.mxu0 0
      %920 = vmatmul.mubr.bf16.gmra.mrb[0].mxu0 %v629
      %v921 = vpop.f32.mrb[0].mxu0
      %v922 = vadd.f32 %v288, %v921
      %v923 = vpop.f32.mrb[0].mxu0
      %v924 = vpop.f32.mrb[0].mxu0
      %v925 = vadd.f32 %v288, %v924
      %v926 = vpop.f32.mrb[0].mxu0
      %927 = vmatprep.mubr.bf16.mxu0 0
      %928 = vmatmul.mubr.bf16.gmra.mrb[0].mxu0 %v632
      %v929 = vpop.f32.mrb[0].mxu0
      %v930 = vadd.f32 %v288, %v929
      %v931 = vpop.f32.mrb[0].mxu0
      %v932 = vpop.f32.mrb[0].mxu0
      %v933 = vadd.f32 %v288, %v932
      %v934 = vpop.f32.mrb[0].mxu0
      %935 = vmatprep.mubr.bf16.mxu0 0
      %936 = vmatmul.mubr.bf16.gmra.mrb[0].mxu0 %v635
      %v937 = vpop.f32.mrb[0].mxu0
      %v938 = vadd.f32 %v288, %v937
      %v939 = vpop.f32.mrb[0].mxu0
      %v940 = vpop.f32.mrb[0].mxu0
      %v941 = vadd.f32 %v288, %v940
      %v942 = vpop.f32.mrb[0].mxu0
      %943 = vmatprep.mubr.bf16.mxu0 0
      %944 = vmatmul.mubr.bf16.gmra.mrb[0].mxu0 %v638
      %v945 = vpop.f32.mrb[0].mxu0
      %v946 = vadd.f32 %v288, %v945
      %v947 = vpop.f32.mrb[0].mxu0
      %v948 = vpop.f32.mrb[0].mxu0
      %v949 = vadd.f32 %v288, %v948
      %v950 = vpop.f32.mrb[0].mxu0
      %951 = vmatprep.mubr.bf16.mxu0 0
      %952 = vmatmul.mubr.bf16.gmra.mrb[0].mxu0 %v641
      %v953 = vpop.f32.mrb[0].mxu0
      %v954 = vadd.f32 %v288, %v953
      %v955 = vpop.f32.mrb[0].mxu0
      %v956 = vpop.f32.mrb[0].mxu0
      %v957 = vadd.f32 %v288, %v956
      %v958 = vpop.f32.mrb[0].mxu0
      %959 = vmatprep.mubr.bf16.mxu0 0
      %960 = vmatmul.mubr.bf16.gmra.mrb[0].mxu0 %v644
      %v961 = vpop.f32.mrb[0].mxu0
      %v962 = vadd.f32 %v288, %v961
      %v963 = vpop.f32.mrb[0].mxu0
      %v964 = vpop.f32.mrb[0].mxu0
      %v965 = vadd.f32 %v288, %v964
      %v966 = vpop.f32.mrb[0].mxu0
      %967 = vmatprep.mubr.bf16.mxu0 0
      %968 = vmatmul.mubr.bf16.gmra.mrb[0].mxu0 %v647
      %v969 = vpop.f32.mrb[0].mxu0
      %v970 = vadd.f32 %v288, %v969
      %v971 = vpop.f32.mrb[0].mxu0
      %v972 = vpop.f32.mrb[0].mxu0
      %v973 = vadd.f32 %v288, %v972
      %v974 = vpop.f32.mrb[0].mxu0
      %975 = vmatprep.mubr.bf16.mxu0 0
      %976 = vmatmul.mubr.bf16.gmra.mrb[0].mxu0 %v650
      %v977 = vpop.f32.mrb[0].mxu0
      %v978 = vadd.f32 %v288, %v977
      %v979 = vpop.f32.mrb[0].mxu0
      %v980 = vpop.f32.mrb[0].mxu0
      %v981 = vadd.f32 %v288, %v980
      %v982 = vpop.f32.mrb[0].mxu0
      %983 = vmatprep.mubr.bf16.mxu0 0
      %984 = vmatmul.mubr.bf16.gmra.mrb[0].mxu0 %v653
      %v985 = vpop.f32.mrb[0].mxu0
      %v986 = vadd.f32 %v288, %v985
      %v987 = vpop.f32.mrb[0].mxu0
      %v988 = vpop.f32.mrb[0].mxu0
      %v989 = vadd.f32 %v288, %v988
      %v990 = vpop.f32.mrb[0].mxu0
      %991 = vmatprep.mubr.bf16.mxu0 0
      %992 = vmatmul.mubr.bf16.gmra.mrb[0].mxu0 %v656
      %v993 = vpop.f32.mrb[0].mxu0
      %v994 = vadd.f32 %v288, %v993
      %v995 = vpop.f32.mrb[0].mxu0
      %v996 = vpop.f32.mrb[0].mxu0
      %v997 = vadd.f32 %v288, %v996
      %v998 = vpop.f32.mrb[0].mxu0
      %999 = vmatprep.mubr.bf16.mxu0 0
      %1000 = vmatmul.mubr.bf16.gmra.mrb[0].mxu0 %v659
      %v1001 = vpop.f32.mrb[0].mxu0
      %v1002 = vadd.f32 %v288, %v1001
      %v1003 = vpop.f32.mrb[0].mxu0
      %v1004 = vpop.f32.mrb[0].mxu0
      %v1005 = vadd.f32 %v288, %v1004
      %v1006 = vpop.f32.mrb[0].mxu0
      %1007 = vmatprep.mubr.bf16.mxu0 0
      %1008 = vmatmul.mubr.bf16.gmra.mrb[0].mxu0 %v662
      %v1009 = vpop.f32.mrb[0].mxu0
      %v1010 = vadd.f32 %v288, %v1009
      %v1011 = vpop.f32.mrb[0].mxu0
      %v1012 = vpop.f32.mrb[0].mxu0
      %v1013 = vadd.f32 %v288, %v1012
      %v1014 = vpop.f32.mrb[0].mxu0
      %1015 = vmatprep.mubr.bf16.mxu0 0
      %1016 = vmatmul.mubr.bf16.gmra.mrb[0].mxu0 %v665
      %v1017 = vpop.f32.mrb[0].mxu0
      %v1018 = vadd.f32 %v288, %v1017
      %v1019 = vpop.f32.mrb[0].mxu0
      %v1020 = vpop.f32.mrb[0].mxu0
      %v1021 = vadd.f32 %v288, %v1020
      %v1022 = vpop.f32.mrb[0].mxu0
      %1023 = vmatprep.mubr.bf16.mxu0 0
      %1024 = vmatmul.mubr.bf16.gmra.mrb[0].mxu0 %v668
      %v1025 = vpop.f32.mrb[0].mxu0
      %v1026 = vadd.f32 %v288, %v1025
      %v1027 = vpop.f32.mrb[0].mxu0
      %v1028 = vpop.f32.mrb[0].mxu0
      %v1029 = vadd.f32 %v288, %v1028
      %v1030 = vpop.f32.mrb[0].mxu0
      %1031 = vmatprep.mubr.bf16.mxu0 0
      %1032 = vmatmul.mubr.bf16.gmra.mrb[0].mxu0 %v671
      %v1033 = vpop.f32.mrb[0].mxu0
      %v1034 = vadd.f32 %v288, %v1033
      %v1035 = vpop.f32.mrb[0].mxu0
      %v1036 = vpop.f32.mrb[0].mxu0
      %v1037 = vadd.f32 %v288, %v1036
      %v1038 = vpop.f32.mrb[0].mxu0
      %1039 = vmatprep.mubr.bf16.mxu0 0
      %1040 = vmatmul.mubr.bf16.gmra.mrb[0].mxu0 %v674
      %v1041 = vpop.f32.mrb[0].mxu0
      %v1042 = vadd.f32 %v288, %v1041
      %v1043 = vpop.f32.mrb[0].mxu0
      %v1044 = vpop.f32.mrb[0].mxu0
      %v1045 = vadd.f32 %v288, %v1044
      %v1046 = vpop.f32.mrb[0].mxu0
      %1047 = vmatprep.mubr.bf16.mxu0 0
      %1048 = vmatmul.mubr.bf16.gmra.mrb[0].mxu0 %v677
      %v1049 = vpop.f32.mrb[0].mxu0
      %v1050 = vadd.f32 %v288, %v1049
      %v1051 = vpop.f32.mrb[0].mxu0
      %v1052 = vpop.f32.mrb[0].mxu0
      %v1053 = vadd.f32 %v288, %v1052
      %v1054 = vpop.f32.mrb[0].mxu0
      %1055 = vmatprep.mubr.bf16.mxu0 0
      %1056 = vmatmul.mubr.bf16.gmra.mrb[0].mxu0 %v680
      %v1057 = vpop.f32.mrb[0].mxu0
      %v1058 = vadd.f32 %v288, %v1057
      %v1059 = vpop.f32.mrb[0].mxu0
      %v1060 = vpop.f32.mrb[0].mxu0
      %v1061 = vadd.f32 %v288, %v1060
      %v1062 = vpop.f32.mrb[0].mxu0
      %1063 = vmatprep.mubr.bf16.mxu0 0
      %1064 = vmatmul.mubr.bf16.gmra.mrb[0].mxu0 %v683
      %v1065 = vpop.f32.mrb[0].mxu0
      %v1066 = vadd.f32 %v288, %v1065
      %v1067 = vpop.f32.mrb[0].mxu0
      %v1068 = vpop.f32.mrb[0].mxu0
      %v1069 = vadd.f32 %v288, %v1068
      %v1070 = vpop.f32.mrb[0].mxu0
      %1071 = vmatprep.mubr.bf16.mxu0 0
      %1072 = vmatmul.mubr.bf16.gmra.mrb[0].mxu0 %v686
      %v1073 = vpop.f32.mrb[0].mxu0
      %v1074 = vadd.f32 %v288, %v1073
      %v1075 = vpop.f32.mrb[0].mxu0
      %v1076 = vpop.f32.mrb[0].mxu0
      %v1077 = vadd.f32 %v288, %v1076
      %v1078 = vpop.f32.mrb[0].mxu0
      %1079 = vmatprep.mubr.bf16.mxu0 0
      %1080 = vmatmul.mubr.bf16.gmra.mrb[0].mxu0 %v689
      %v1081 = vpop.f32.mrb[0].mxu0
      %v1082 = vadd.f32 %v288, %v1081
      %v1083 = vpop.f32.mrb[0].mxu0
      %v1084 = vpop.f32.mrb[0].mxu0
      %v1085 = vadd.f32 %v288, %v1084
      %v1086 = vpop.f32.mrb[0].mxu0
      %1087 = vmatprep.mubr.bf16.mxu0 0
      %1088 = vmatmul.mubr.bf16.gmra.mrb[0].mxu0 %v692
      %v1089 = vpop.f32.mrb[0].mxu0
      %v1090 = vadd.f32 %v288, %v1089
      %v1091 = vpop.f32.mrb[0].mxu0
      %v1092 = vpop.f32.mrb[0].mxu0
      %v1093 = vadd.f32 %v288, %v1092
      %v1094 = vpop.f32.mrb[0].mxu0
      %1095 = vmatprep.mubr.bf16.mxu0 0
      %1096 = vmatmul.mubr.bf16.gmra.mrb[0].mxu0 %v695
      %v1097 = vpop.f32.mrb[0].mxu0
      %v1098 = vadd.f32 %v288, %v1097
      %v1099 = vpop.f32.mrb[0].mxu0
      %v1100 = vpop.f32.mrb[0].mxu0
      %v1101 = vadd.f32 %v288, %v1100
      %v1102 = vpop.f32.mrb[0].mxu0
      %1103 = vmatprep.mubr.bf16.mxu0 0
      %1104 = vmatmul.mubr.bf16.gmra.mrb[0].mxu0 %v698
      %v1105 = vpop.f32.mrb[0].mxu0
      %v1106 = vadd.f32 %v288, %v1105
      %v1107 = vpop.f32.mrb[0].mxu0
      %v1108 = vpop.f32.mrb[0].mxu0
      %v1109 = vadd.f32 %v288, %v1108
      %v1110 = vpop.f32.mrb[0].mxu0
      %1111 = vmatprep.mubr.bf16.mxu0 0
      %1112 = vmatmul.mubr.bf16.gmra.mrb[0].mxu0 %v701
      %v1113 = vpop.f32.mrb[0].mxu0
      %v1114 = vadd.f32 %v288, %v1113
      %v1115 = vpop.f32.mrb[0].mxu0
      %v1116 = vpop.f32.mrb[0].mxu0
      %v1117 = vadd.f32 %v288, %v1116
      %v1118 = vpop.f32.mrb[0].mxu0
      %1119 = vmatprep.mubr.bf16.mxu0 0
      %1120 = vmatmul.mubr.bf16.gmra.mrb[0].mxu0 %v704
      %v1121 = vpop.f32.mrb[0].mxu0
      %v1122 = vadd.f32 %v288, %v1121
      %v1123 = vpop.f32.mrb[0].mxu0
      %v1124 = vpop.f32.mrb[0].mxu0
      %v1125 = vadd.f32 %v288, %v1124
      %v1126 = vpop.f32.mrb[0].mxu0
      %1127 = vmatprep.mubr.bf16.mxu0 0
      %1128 = vmatmul.mubr.bf16.gmra.mrb[0].mxu0 %v707
      %v1129 = vpop.f32.mrb[0].mxu0
      %v1130 = vadd.f32 %v288, %v1129
      %v1131 = vpop.f32.mrb[0].mxu0
      %v1132 = vpop.f32.mrb[0].mxu0
      %v1133 = vadd.f32 %v288, %v1132
      %v1134 = vpop.f32.mrb[0].mxu0
      %1135 = vmatprep.mubr.bf16.mxu0 0
      %1136 = vmatmul.mubr.bf16.gmra.mrb[0].mxu0 %v710
      %v1137 = vpop.f32.mrb[0].mxu0
      %v1138 = vadd.f32 %v288, %v1137
      %v1139 = vpop.f32.mrb[0].mxu0
      %v1140 = vpop.f32.mrb[0].mxu0
      %v1141 = vadd.f32 %v288, %v1140
      %v1142 = vpop.f32.mrb[0].mxu0
      %1143 = vdwg.mxu0
      %vm1144 = vcmp.ge.f32.partialorder %v754, 0.0
      %vm1145 = vcmp.ge.f32.partialorder %v757, 0.0
      %vm1146 = vcmp.ge.f32.partialorder %v762, 0.0
      %vm1147 = vcmp.ge.f32.partialorder %v765, 0.0
      %vm1148 = vcmp.ge.f32.partialorder %v770, 0.0
      %vm1149 = vcmp.ge.f32.partialorder %v773, 0.0
      %vm1150 = vcmp.ge.f32.partialorder %v778, 0.0
      %vm1151 = vcmp.ge.f32.partialorder %v781, 0.0
      %vm1152 = vcmp.ge.f32.partialorder %v786, 0.0
      %vm1153 = vcmp.ge.f32.partialorder %v789, 0.0
      %vm1154 = vcmp.ge.f32.partialorder %v794, 0.0
      %vm1155 = vcmp.ge.f32.partialorder %v797, 0.0
      %vm1156 = vcmp.ge.f32.partialorder %v802, 0.0
      %vm1157 = vcmp.ge.f32.partialorder %v805, 0.0
      %vm1158 = vcmp.ge.f32.partialorder %v810, 0.0
      %vm1159 = vcmp.ge.f32.partialorder %v813, 0.0
      %vm1160 = vcmp.ge.f32.partialorder %v818, 0.0
      %vm1161 = vcmp.ge.f32.partialorder %v821, 0.0
      %vm1162 = vcmp.ge.f32.partialorder %v826, 0.0
      %vm1163 = vcmp.ge.f32.partialorder %v829, 0.0
      %vm1164 = vcmp.ge.f32.partialorder %v834, 0.0
      %vm1165 = vcmp.ge.f32.partialorder %v837, 0.0
      %vm1166 = vcmp.ge.f32.partialorder %v842, 0.0
      %vm1167 = vcmp.ge.f32.partialorder %v845, 0.0
      %vm1168 = vcmp.ge.f32.partialorder %v850, 0.0
      %vm1169 = vcmp.ge.f32.partialorder %v853, 0.0
      %vm1170 = vcmp.ge.f32.partialorder %v858, 0.0
      %vm1171 = vcmp.ge.f32.partialorder %v861, 0.0
      %vm1172 = vcmp.ge.f32.partialorder %v866, 0.0
      %vm1173 = vcmp.ge.f32.partialorder %v869, 0.0
      %vm1174 = vcmp.ge.f32.partialorder %v874, 0.0
      %vm1175 = vcmp.ge.f32.partialorder %v877, 0.0
      %vm1176 = vcmp.ge.f32.partialorder %v882, 0.0
      %vm1177 = vcmp.ge.f32.partialorder %v885, 0.0
      %vm1178 = vcmp.ge.f32.partialorder %v890, 0.0
      %vm1179 = vcmp.ge.f32.partialorder %v893, 0.0
      %vm1180 = vcmp.ge.f32.partialorder %v898, 0.0
      %vm1181 = vcmp.ge.f32.partialorder %v901, 0.0
      %vm1182 = vcmp.ge.f32.partialorder %v906, 0.0
      %vm1183 = vcmp.ge.f32.partialorder %v909, 0.0
      %vm1184 = vcmp.ge.f32.partialorder %v914, 0.0
      %vm1185 = vcmp.ge.f32.partialorder %v917, 0.0
      %vm1186 = vcmp.ge.f32.partialorder %v922, 0.0
      %vm1187 = vcmp.ge.f32.partialorder %v925, 0.0
      %vm1188 = vcmp.ge.f32.partialorder %v930, 0.0
      %vm1189 = vcmp.ge.f32.partialorder %v933, 0.0
      %vm1190 = vcmp.ge.f32.partialorder %v938, 0.0
      %vm1191 = vcmp.ge.f32.partialorder %v941, 0.0
      %vm1192 = vcmp.ge.f32.partialorder %v946, 0.0
      %vm1193 = vcmp.ge.f32.partialorder %v949, 0.0
      %vm1194 = vcmp.ge.f32.partialorder %v954, 0.0
      %vm1195 = vcmp.ge.f32.partialorder %v957, 0.0
      %vm1196 = vcmp.ge.f32.partialorder %v962, 0.0
      %vm1197 = vcmp.ge.f32.partialorder %v965, 0.0
      %vm1198 = vcmp.ge.f32.partialorder %v970, 0.0
      %vm1199 = vcmp.ge.f32.partialorder %v973, 0.0
      %vm1200 = vcmp.ge.f32.partialorder %v978, 0.0
      %vm1201 = vcmp.ge.f32.partialorder %v981, 0.0
      %vm1202 = vcmp.ge.f32.partialorder %v986, 0.0
      %vm1203 = vcmp.ge.f32.partialorder %v989, 0.0
      %vm1204 = vcmp.ge.f32.partialorder %v994, 0.0
      %vm1205 = vcmp.ge.f32.partialorder %v997, 0.0
      %vm1206 = vcmp.ge.f32.partialorder %v1002, 0.0
      %vm1207 = vcmp.ge.f32.partialorder %v1005, 0.0
      %vm1208 = vcmp.ge.f32.partialorder %v1010, 0.0
      %vm1209 = vcmp.ge.f32.partialorder %v1013, 0.0
      %vm1210 = vcmp.ge.f32.partialorder %v1018, 0.0
      %vm1211 = vcmp.ge.f32.partialorder %v1021, 0.0
      %vm1212 = vcmp.ge.f32.partialorder %v1026, 0.0
      %vm1213 = vcmp.ge.f32.partialorder %v1029, 0.0
      %vm1214 = vcmp.ge.f32.partialorder %v1034, 0.0
      %vm1215 = vcmp.ge.f32.partialorder %v1037, 0.0
      %vm1216 = vcmp.ge.f32.partialorder %v1042, 0.0
      %vm1217 = vcmp.ge.f32.partialorder %v1045, 0.0
      %vm1218 = vcmp.ge.f32.partialorder %v1050, 0.0
      %vm1219 = vcmp.ge.f32.partialorder %v1053, 0.0
      %vm1220 = vcmp.ge.f32.partialorder %v1058, 0.0
      %vm1221 = vcmp.ge.f32.partialorder %v1061, 0.0
      %vm1222 = vcmp.ge.f32.partialorder %v1066, 0.0
      %vm1223 = vcmp.ge.f32.partialorder %v1069, 0.0
      %vm1224 = vcmp.ge.f32.partialorder %v1074, 0.0
      %vm1225 = vcmp.ge.f32.partialorder %v1077, 0.0
      %vm1226 = vcmp.ge.f32.partialorder %v1082, 0.0
      %vm1227 = vcmp.ge.f32.partialorder %v1085, 0.0
      %vm1228 = vcmp.ge.f32.partialorder %v1090, 0.0
      %vm1229 = vcmp.ge.f32.partialorder %v1093, 0.0
      %vm1230 = vcmp.ge.f32.partialorder %v1098, 0.0
      %vm1231 = vcmp.ge.f32.partialorder %v1101, 0.0
      %vm1232 = vcmp.ge.f32.partialorder %v1106, 0.0
      %vm1233 = vcmp.ge.f32.partialorder %v1109, 0.0
      %vm1234 = vcmp.ge.f32.partialorder %v1114, 0.0
      %vm1235 = vcmp.ge.f32.partialorder %v1117, 0.0
      %vm1236 = vcmp.ge.f32.partialorder %v1122, 0.0
      %vm1237 = vcmp.ge.f32.partialorder %v1125, 0.0
      %vm1238 = vcmp.ge.f32.partialorder %v1130, 0.0
      %vm1239 = vcmp.ge.f32.partialorder %v1133, 0.0
      %vm1240 = vcmp.ge.f32.partialorder %v1138, 0.0
      %vm1241 = vcmp.ge.f32.partialorder %v1141, 0.0
      %v1242 = vmul.f32 %v754, 0.01
      %v1243 = vmul.f32 %v757, 0.01
      %v1244 = vmul.f32 %v762, 0.01
      %v1245 = vmul.f32 %v765, 0.01
      %v1246 = vmul.f32 %v770, 0.01
      %v1247 = vmul.f32 %v773, 0.01
      %v1248 = vmul.f32 %v778, 0.01
      %v1249 = vmul.f32 %v781, 0.01
      %v1250 = vmul.f32 %v786, 0.01
      %v1251 = vmul.f32 %v789, 0.01
      %v1252 = vmul.f32 %v794, 0.01
      %v1253 = vmul.f32 %v797, 0.01
      %v1254 = vmul.f32 %v802, 0.01
      %v1255 = vmul.f32 %v805, 0.01
      %v1256 = vmul.f32 %v810, 0.01
      %v1257 = vmul.f32 %v813, 0.01
      %v1258 = vmul.f32 %v818, 0.01
      %v1259 = vmul.f32 %v821, 0.01
      %v1260 = vmul.f32 %v826, 0.01
      %v1261 = vmul.f32 %v829, 0.01
      %v1262 = vmul.f32 %v834, 0.01
      %v1263 = vmul.f32 %v837, 0.01
      %v1264 = vmul.f32 %v842, 0.01
      %v1265 = vmul.f32 %v845, 0.01
      %v1266 = vmul.f32 %v850, 0.01
      %v1267 = vmul.f32 %v853, 0.01
      %v1268 = vmul.f32 %v858, 0.01
      %v1269 = vmul.f32 %v861, 0.01
      %v1270 = vmul.f32 %v866, 0.01
      %v1271 = vmul.f32 %v869, 0.01
      %v1272 = vmul.f32 %v874, 0.01
      %v1273 = vmul.f32 %v877, 0.01
      %v1274 = vmul.f32 %v882, 0.01
      %v1275 = vmul.f32 %v885, 0.01
      %v1276 = vmul.f32 %v890, 0.01
      %v1277 = vmul.f32 %v893, 0.01
      %v1278 = vmul.f32 %v898, 0.01
      %v1279 = vmul.f32 %v901, 0.01
      %v1280 = vmul.f32 %v906, 0.01
      %v1281 = vmul.f32 %v909, 0.01
      %v1282 = vmul.f32 %v914, 0.01
      %v1283 = vmul.f32 %v917, 0.01
      %v1284 = vmul.f32 %v922, 0.01
      %v1285 = vmul.f32 %v925, 0.01
      %v1286 = vmul.f32 %v930, 0.01
      %v1287 = vmul.f32 %v933, 0.01
      %v1288 = vmul.f32 %v938, 0.01
      %v1289 = vmul.f32 %v941, 0.01
      %v1290 = vmul.f32 %v946, 0.01
      %v1291 = vmul.f32 %v949, 0.01
      %v1292 = vmul.f32 %v954, 0.01
      %v1293 = vmul.f32 %v957, 0.01
      %v1294 = vmul.f32 %v962, 0.01
      %v1295 = vmul.f32 %v965, 0.01
      %v1296 = vmul.f32 %v970, 0.01
      %v1297 = vmul.f32 %v973, 0.01
      %v1298 = vmul.f32 %v978, 0.01
      %v1299 = vmul.f32 %v981, 0.01
      %v1300 = vmul.f32 %v986, 0.01
      %v1301 = vmul.f32 %v989, 0.01
      %v1302 = vmul.f32 %v994, 0.01
      %v1303 = vmul.f32 %v997, 0.01
      %v1304 = vmul.f32 %v1002, 0.01
      %v1305 = vmul.f32 %v1005, 0.01
      %v1306 = vmul.f32 %v1010, 0.01
      %v1307 = vmul.f32 %v1013, 0.01
      %v1308 = vmul.f32 %v1018, 0.01
      %v1309 = vmul.f32 %v1021, 0.01
      %v1310 = vmul.f32 %v1026, 0.01
      %v1311 = vmul.f32 %v1029, 0.01
      %v1312 = vmul.f32 %v1034, 0.01
      %v1313 = vmul.f32 %v1037, 0.01
      %v1314 = vmul.f32 %v1042, 0.01
      %v1315 = vmul.f32 %v1045, 0.01
      %v1316 = vmul.f32 %v1050, 0.01
      %v1317 = vmul.f32 %v1053, 0.01
      %v1318 = vmul.f32 %v1058, 0.01
      %v1319 = vmul.f32 %v1061, 0.01
      %v1320 = vmul.f32 %v1066, 0.01
      %v1321 = vmul.f32 %v1069, 0.01
      %v1322 = vmul.f32 %v1074, 0.01
      %v1323 = vmul.f32 %v1077, 0.01
      %v1324 = vmul.f32 %v1082, 0.01
      %v1325 = vmul.f32 %v1085, 0.01
      %v1326 = vmul.f32 %v1090, 0.01
      %v1327 = vmul.f32 %v1093, 0.01
      %v1328 = vmul.f32 %v1098, 0.01
      %v1329 = vmul.f32 %v1101, 0.01
      %v1330 = vmul.f32 %v1106, 0.01
      %v1331 = vmul.f32 %v1109, 0.01
      %v1332 = vmul.f32 %v1114, 0.01
      %v1333 = vmul.f32 %v1117, 0.01
      %v1334 = vmul.f32 %v1122, 0.01
      %v1335 = vmul.f32 %v1125, 0.01
      %v1336 = vmul.f32 %v1130, 0.01
      %v1337 = vmul.f32 %v1133, 0.01
      %v1338 = vmul.f32 %v1138, 0.01
      %v1339 = vmul.f32 %v1141, 0.01
      %v1340 = vsel %vm1144, %v754, %v1242
      %v1341 = vsel %vm1145, %v757, %v1243
      %v1342 = vsel %vm1146, %v762, %v1244
      %v1343 = vsel %vm1147, %v765, %v1245
      %v1344 = vsel %vm1148, %v770, %v1246
      %v1345 = vsel %vm1149, %v773, %v1247
      %v1346 = vsel %vm1150, %v778, %v1248
      %v1347 = vsel %vm1151, %v781, %v1249
      %v1348 = vsel %vm1152, %v786, %v1250
      %v1349 = vsel %vm1153, %v789, %v1251
      %v1350 = vsel %vm1154, %v794, %v1252
      %v1351 = vsel %vm1155, %v797, %v1253
      %v1352 = vsel %vm1156, %v802, %v1254
      %v1353 = vsel %vm1157, %v805, %v1255
      %v1354 = vsel %vm1158, %v810, %v1256
      %v1355 = vsel %vm1159, %v813, %v1257
      %v1356 = vsel %vm1160, %v818, %v1258
      %v1357 = vsel %vm1161, %v821, %v1259
      %v1358 = vsel %vm1162, %v826, %v1260
      %v1359 = vsel %vm1163, %v829, %v1261
      %v1360 = vsel %vm1164, %v834, %v1262
      %v1361 = vsel %vm1165, %v837, %v1263
      %v1362 = vsel %vm1166, %v842, %v1264
      %v1363 = vsel %vm1167, %v845, %v1265
      %v1364 = vsel %vm1168, %v850, %v1266
      %v1365 = vsel %vm1169, %v853, %v1267
      %v1366 = vsel %vm1170, %v858, %v1268
      %v1367 = vsel %vm1171, %v861, %v1269
      %v1368 = vsel %vm1172, %v866, %v1270
      %v1369 = vsel %vm1173, %v869, %v1271
      %v1370 = vsel %vm1174, %v874, %v1272
      %v1371 = vsel %vm1175, %v877, %v1273
      %v1372 = vsel %vm1176, %v882, %v1274
      %v1373 = vsel %vm1177, %v885, %v1275
      %v1374 = vsel %vm1178, %v890, %v1276
      %v1375 = vsel %vm1179, %v893, %v1277
      %v1376 = vsel %vm1180, %v898, %v1278
      %v1377 = vsel %vm1181, %v901, %v1279
      %v1378 = vsel %vm1182, %v906, %v1280
      %v1379 = vsel %vm1183, %v909, %v1281
      %v1380 = vsel %vm1184, %v914, %v1282
      %v1381 = vsel %vm1185, %v917, %v1283
      %v1382 = vsel %vm1186, %v922, %v1284
      %v1383 = vsel %vm1187, %v925, %v1285
      %v1384 = vsel %vm1188, %v930, %v1286
      %v1385 = vsel %vm1189, %v933, %v1287
      %v1386 = vsel %vm1190, %v938, %v1288
      %v1387 = vsel %vm1191, %v941, %v1289
      %v1388 = vsel %vm1192, %v946, %v1290
      %v1389 = vsel %vm1193, %v949, %v1291
      %v1390 = vsel %vm1194, %v954, %v1292
      %v1391 = vsel %vm1195, %v957, %v1293
      %v1392 = vsel %vm1196, %v962, %v1294
      %v1393 = vsel %vm1197, %v965, %v1295
      %v1394 = vsel %vm1198, %v970, %v1296
      %v1395 = vsel %vm1199, %v973, %v1297
      %v1396 = vsel %vm1200, %v978, %v1298
      %v1397 = vsel %vm1201, %v981, %v1299
      %v1398 = vsel %vm1202, %v986, %v1300
      %v1399 = vsel %vm1203, %v989, %v1301
      %v1400 = vsel %vm1204, %v994, %v1302
      %v1401 = vsel %vm1205, %v997, %v1303
      %v1402 = vsel %vm1206, %v1002, %v1304
      %v1403 = vsel %vm1207, %v1005, %v1305
      %v1404 = vsel %vm1208, %v1010, %v1306
      %v1405 = vsel %vm1209, %v1013, %v1307
      %v1406 = vsel %vm1210, %v1018, %v1308
      %v1407 = vsel %vm1211, %v1021, %v1309
      %v1408 = vsel %vm1212, %v1026, %v1310
      %v1409 = vsel %vm1213, %v1029, %v1311
      %v1410 = vsel %vm1214, %v1034, %v1312
      %v1411 = vsel %vm1215, %v1037, %v1313
      %v1412 = vsel %vm1216, %v1042, %v1314
      %v1413 = vsel %vm1217, %v1045, %v1315
      %v1414 = vsel %vm1218, %v1050, %v1316
      %v1415 = vsel %vm1219, %v1053, %v1317
      %v1416 = vsel %vm1220, %v1058, %v1318
      %v1417 = vsel %vm1221, %v1061, %v1319
      %v1418 = vsel %vm1222, %v1066, %v1320
      %v1419 = vsel %vm1223, %v1069, %v1321
      %v1420 = vsel %vm1224, %v1074, %v1322
      %v1421 = vsel %vm1225, %v1077, %v1323
      %v1422 = vsel %vm1226, %v1082, %v1324
      %v1423 = vsel %vm1227, %v1085, %v1325
      %v1424 = vsel %vm1228, %v1090, %v1326
      %v1425 = vsel %vm1229, %v1093, %v1327
      %v1426 = vsel %vm1230, %v1098, %v1328
      %v1427 = vsel %vm1231, %v1101, %v1329
      %v1428 = vsel %vm1232, %v1106, %v1330
      %v1429 = vsel %vm1233, %v1109, %v1331
      %v1430 = vsel %vm1234, %v1114, %v1332
      %v1431 = vsel %vm1235, %v1117, %v1333
      %v1432 = vsel %vm1236, %v1122, %v1334
      %v1433 = vsel %vm1237, %v1125, %v1335
      %v1434 = vsel %vm1238, %v1130, %v1336
      %v1435 = vsel %vm1239, %v1133, %v1337
      %v1436 = vsel %vm1240, %v1138, %v1338
      %v1437 = vsel %vm1241, %v1141, %v1339
      %1438 = vst [vmem:[%s172] sm:$0xff] %v1340
      %1439 = vst [vmem:[%s172 + $0x8] sm:$0xff] %v1341
      %1440 = vst [vmem:[%s172 + $0x10] sm:$0xff] %v1342
      %1441 = vst [vmem:[%s172 + $0x18] sm:$0xff] %v1343
      %1442 = vst [vmem:[%s172 + $0x20] sm:$0xff] %v1344
      %1443 = vst [vmem:[%s172 + $0x28] sm:$0xff] %v1345
      %1444 = vst [vmem:[%s172 + $0x30] sm:$0xff] %v1346
      %1445 = vst [vmem:[%s172 + $0x38] sm:$0xff] %v1347
      %1446 = vst [vmem:[%s172 + $0x40] sm:$0xff] %v1348
      %1447 = vst [vmem:[%s172 + $0x48] sm:$0xff] %v1349
      %1448 = vst [vmem:[%s172 + $0x50] sm:$0xff] %v1350
      %1449 = vst [vmem:[%s172 + $0x58] sm:$0xff] %v1351
      %1450 = vst [vmem:[%s172 + $0x60] sm:$0xff] %v1352
      %1451 = vst [vmem:[%s172 + $0x68] sm:$0xff] %v1353
      %1452 = vst [vmem:[%s172 + $0x70] sm:$0xff] %v1354
      %1453 = vst [vmem:[%s172 + $0x78] sm:$0xff] %v1355
      %1454 = vst [vmem:[%s172 + $0x80] sm:$0xff] %v1356
      %1455 = vst [vmem:[%s172 + $0x88] sm:$0xff] %v1357
      %1456 = vst [vmem:[%s172 + $0x90] sm:$0xff] %v1358
      %1457 = vst [vmem:[%s172 + $0x98] sm:$0xff] %v1359
      %1458 = vst [vmem:[%s172 + $0xa0] sm:$0xff] %v1360
      %1459 = vst [vmem:[%s172 + $0xa8] sm:$0xff] %v1361
      %1460 = vst [vmem:[%s172 + $0xb0] sm:$0xff] %v1362
      %1461 = vst [vmem:[%s172 + $0xb8] sm:$0xff] %v1363
      %1462 = vst [vmem:[%s172 + $0xc0] sm:$0xff] %v1364
      %1463 = vst [vmem:[%s172 + $0xc8] sm:$0xff] %v1365
      %1464 = vst [vmem:[%s172 + $0xd0] sm:$0xff] %v1366
      %1465 = vst [vmem:[%s172 + $0xd8] sm:$0xff] %v1367
      %1466 = vst [vmem:[%s172 + $0xe0] sm:$0xff] %v1368
      %1467 = vst [vmem:[%s172 + $0xe8] sm:$0xff] %v1369
      %1468 = vst [vmem:[%s172 + $0xf0] sm:$0xff] %v1370
      %1469 = vst [vmem:[%s172 + $0xf8] sm:$0xff] %v1371
      %1470 = vst [vmem:[%s172 + $0x100] sm:$0xff] %v1372
      %1471 = vst [vmem:[%s172 + $0x108] sm:$0xff] %v1373
      %1472 = vst [vmem:[%s172 + $0x110] sm:$0xff] %v1374
      %1473 = vst [vmem:[%s172 + $0x118] sm:$0xff] %v1375
      %1474 = vst [vmem:[%s172 + $0x120] sm:$0xff] %v1376
      %1475 = vst [vmem:[%s172 + $0x128] sm:$0xff] %v1377
      %1476 = vst [vmem:[%s172 + $0x130] sm:$0xff] %v1378
      %1477 = vst [vmem:[%s172 + $0x138] sm:$0xff] %v1379
      %1478 = vst [vmem:[%s172 + $0x140] sm:$0xff] %v1380
      %1479 = vst [vmem:[%s172 + $0x148] sm:$0xff] %v1381
      %1480 = vst [vmem:[%s172 + $0x150] sm:$0xff] %v1382
      %1481 = vst [vmem:[%s172 + $0x158] sm:$0xff] %v1383
      %1482 = vst [vmem:[%s172 + $0x160] sm:$0xff] %v1384
      %1483 = vst [vmem:[%s172 + $0x168] sm:$0xff] %v1385
      %1484 = vst [vmem:[%s172 + $0x170] sm:$0xff] %v1386
      %1485 = vst [vmem:[%s172 + $0x178] sm:$0xff] %v1387
      %1486 = vst [vmem:[%s172 + $0x180] sm:$0xff] %v1388
      %1487 = vst [vmem:[%s172 + $0x188] sm:$0xff] %v1389
      %1488 = vst [vmem:[%s172 + $0x190] sm:$0xff] %v1390
      %1489 = vst [vmem:[%s172 + $0x198] sm:$0xff] %v1391
      %1490 = vst [vmem:[%s172 + $0x1a0] sm:$0xff] %v1392
      %1491 = vst [vmem:[%s172 + $0x1a8] sm:$0xff] %v1393
      %1492 = vst [vmem:[%s172 + $0x1b0] sm:$0xff] %v1394
      %1493 = vst [vmem:[%s172 + $0x1b8] sm:$0xff] %v1395
      %1494 = vst [vmem:[%s172 + $0x1c0] sm:$0xff] %v1396
      %1495 = vst [vmem:[%s172 + $0x1c8] sm:$0xff] %v1397
      %1496 = vst [vmem:[%s172 + $0x1d0] sm:$0xff] %v1398
      %1497 = vst [vmem:[%s172 + $0x1d8] sm:$0xff] %v1399
      %1498 = vst [vmem:[%s172 + $0x1e0] sm:$0xff] %v1400
      %1499 = vst [vmem:[%s172 + $0x1e8] sm:$0xff] %v1401
      %1500 = vst [vmem:[%s172 + $0x1f0] sm:$0xff] %v1402
      %1501 = vst [vmem:[%s172 + $0x1f8] sm:$0xff] %v1403
      %1502 = vst [vmem:[%s172 + $0x200] sm:$0xff] %v1404
      %1503 = vst [vmem:[%s172 + $0x208] sm:$0xff] %v1405
      %1504 = vst [vmem:[%s172 + $0x210] sm:$0xff] %v1406
      %1505 = vst [vmem:[%s172 + $0x218] sm:$0xff] %v1407
      %1506 = vst [vmem:[%s172 + $0x220] sm:$0xff] %v1408
      %1507 = vst [vmem:[%s172 + $0x228] sm:$0xff] %v1409
      %1508 = vst [vmem:[%s172 + $0x230] sm:$0xff] %v1410
      %1509 = vst [vmem:[%s172 + $0x238] sm:$0xff] %v1411
      %1510 = vst [vmem:[%s172 + $0x240] sm:$0xff] %v1412
      %1511 = vst [vmem:[%s172 + $0x248] sm:$0xff] %v1413
      %1512 = vst [vmem:[%s172 + $0x250] sm:$0xff] %v1414
      %1513 = vst [vmem:[%s172 + $0x258] sm:$0xff] %v1415
      %1514 = vst [vmem:[%s172 + $0x260] sm:$0xff] %v1416
      %1515 = vst [vmem:[%s172 + $0x268] sm:$0xff] %v1417
      %1516 = vst [vmem:[%s172 + $0x270] sm:$0xff] %v1418
      %1517 = vst [vmem:[%s172 + $0x278] sm:$0xff] %v1419
      %1518 = vst [vmem:[%s172 + $0x280] sm:$0xff] %v1420
      %1519 = vst [vmem:[%s172 + $0x288] sm:$0xff] %v1421
      %1520 = vst [vmem:[%s172 + $0x290] sm:$0xff] %v1422
      %1521 = vst [vmem:[%s172 + $0x298] sm:$0xff] %v1423
      %1522 = vst [vmem:[%s172 + $0x2a0] sm:$0xff] %v1424
      %1523 = vst [vmem:[%s172 + $0x2a8] sm:$0xff] %v1425
      %1524 = vst [vmem:[%s172 + $0x2b0] sm:$0xff] %v1426
      %1525 = vst [vmem:[%s172 + $0x2b8] sm:$0xff] %v1427
      %1526 = vst [vmem:[%s172 + $0x2c0] sm:$0xff] %v1428
      %1527 = vst [vmem:[%s172 + $0x2c8] sm:$0xff] %v1429
      %1528 = vst [vmem:[%s172 + $0x2d0] sm:$0xff] %v1430
      %1529 = vst [vmem:[%s172 + $0x2d8] sm:$0xff] %v1431
      %1530 = vst [vmem:[%s172 + $0x2e0] sm:$0xff] %v1432
      %1531 = vst [vmem:[%s172 + $0x2e8] sm:$0xff] %v1433
      %1532 = vst [vmem:[%s172 + $0x2f0] sm:$0xff] %v1434
      %1533 = vst [vmem:[%s172 + $0x2f8] sm:$0xff] %v1435
      %1534 = vst [vmem:[%s172 + $0x300] sm:$0xff] %v1436
      %1535 = vst [vmem:[%s172 + $0x308] sm:$0xff] %v1437
      %s1536 = smul.u32 98, %s14
      %p1537 = scmp.lt.s32.totalorder %s1536, 195
      %s1538 = scalar_select %p1537, %s1536, 195
      %s1539 = smul.addr %s1538, 8
      %s1540 = scalar_lea.vmem %s3, %s1539
      // Predicated region
      $region33: #{other_net_forward.5} parent=31 // pred_check
        %p1541 = pneg %p100
      $region34: #{other_net_forward.5} parent=31 // pred_check_branch
        %1543 = sbr.rel (%p1541) target = $region36
      $region35: #{other_net_forward.5} parent=31 // pred_region
        %s1544 = smul.u32 98, %s14
      $region36: #{other_net_forward.5} parent=31 // pred_fallthru
        _
    $region32: #{other_net_forward.5} parent=5 // pred_fallthru
      _
    %p1545 = scmp.le.s32.totalorder 2, %s9
    // Predicated region
    $region37: #{other_net_forward.5} parent=5 // pred_check
      %p1546 = pneg %p1545
    $region38: #{other_net_forward.5} parent=5 // pred_check_branch
      %1548 = sbr.rel (%p1546) target = $region40
    $region39: #{other_net_forward.5} parent=5 // pred_region
      %s1549 = ssub.s32 %s9, 2
      // Predicated region
      $region41: #{other_net_forward.5} parent=39 // pred_check
        %p1550 = pneg %p106
      $region42: #{other_net_forward.5} parent=39 // pred_check_branch
        %1552 = sbr.rel (%p1550) target = $region44
      $region43: #{other_net_forward.5} parent=39 // pred_region
        %s1553 = smul.u32 98, %s15
        %p1554 = scmp.lt.s32.totalorder %s1553, 195
        %s1555 = scalar_select %p1554, %s1553, 195
        %s1556 = smul.addr %s1555, 8
        %s1557 = scalar_lea.vmem %s3, %s1556
      $region44: #{other_net_forward.5} parent=39 // pred_fallthru
        _
    $region40: #{other_net_forward.5} parent=5 // pred_fallthru
      _
  $region6: #{other_net_forward.5} parent=0 // loop_footer
    %s13 = sadd.s32 1, %s9
  $region7: #{other_net_forward.5} parent=0 // loop_footer_branch
    %8 = sbr.rel target = $region3
  $region8: #{other_net_forward.5} parent=0 // loop_exit
    _

// kernel: other_net_forward.6
$region0: #{other_net_forward.6}
  #allocation0 [shape = 'u32[]', space=smem, size = 0x4, offset = 0x4, fixed_abs, tag = 'smem constant byte address 0x4 - core index']
  #allocation1 [shape = 'u32[144,128]{1,0:T(1,128)}', space=vmem, size = 0x12000, scoped, tag = 'internal scratch']
  %s0 = inlined_call_operand.vmem [shape: bf16[1152,300], index: 0, kind: input, shape index: {}]
  %s1 = inlined_call_operand.vmem [shape: bf16[300,128], index: 1, kind: input, shape index: {}]
  %s2 = inlined_call_operand.vmem [shape: f32[1,128], index: 2, kind: input, shape index: {}]
  %s3 = inlined_call_operand.vmem [shape: f32[1152,128], index: 3, kind: output, shape index: {}]
  %s4 = sld [smem:[#allocation0]]
  $region45: #{other_net_forward.6} parent=0
    _
  %s6 = ssub.s32 1, %s4
  %s7 = scalar_select 0, %s6, %s4
  loop: start=0, step=1, limit=4
  $region2: #{other_net_forward.6} parent=0 // loop_pre_header
    _
  $region3: #{other_net_forward.6} parent=0 // loop_header
    %s9 = sphi 0, %s13
    %p10 = scmp.ge.s32.totalorder %s9, 4
    %s19 = sphi 0, %s21
    %s22 = sphi 0, %s19
    %s23 = sphi 0, %s22
    %s39 = sphi 0, %s23
    %s43 = sphi 0, %s43
    %s45 = sphi 0, %s43
    %s46 = sphi 0, %s45
    %s60 = sphi 0, %s46
    %s64 = sphi 0, %s64
    %s66 = sphi 0, %s64
    %s67 = sphi 0, %s66
    %s81 = sphi 0, %s67
    %s87 = sphi 0, %s89
    %s90 = sphi 0, %s87
    %s91 = sphi 0, %s90
    %s107 = sphi 0, %s91
  $region4: #{other_net_forward.6} parent=0 // loop_header_branch
    %12 = sbr.rel (%p10) target = $region8
  $region5: #{other_net_forward.6} parent=0 // loop_body
    %s14 = ssub.s32 %s9, 1
    %s15 = ssub.s32 %s9, 2
    %s16 = sadd.s32 %s9, 1
    %s17 = ssub.s32 %s9, %s16
    %p18 = scmp.eq.s32.totalorder %s17, 0
    %s20 = sadd.s32 %s19, 1
    %s21 = scalar_select %p18, %s19, %s20
    %p24 = pneg %p18
    %p25 = scmp.eq.s32.totalorder %s9, 1
    %p26 = por %p24, %p25
    %p27 = scmp.ne.s32.totalorder %s19, %s22
    %p28 = scmp.eq.s32.totalorder %s9, 0
    %p29 = por %p27, %p28
    %p30 = scmp.ne.s32.totalorder %s19, %s22
    %p31 = scmp.eq.s32.totalorder %s14, 1
    %p32 = por %p30, %p31
    %p33 = scmp.ne.s32.totalorder %s22, %s23
    %p34 = scmp.eq.s32.totalorder %s14, 0
    %p35 = por %p33, %p34
    %p36 = scmp.ne.s32.totalorder %s22, %s23
    %p37 = scmp.eq.s32.totalorder %s15, 1
    %p38 = por %p36, %p37
    %p40 = scmp.ne.s32.totalorder %s23, %s39
    %p41 = scmp.eq.s32.totalorder %s15, 0
    %p42 = por %p40, %p41
    %s44 = sadd.s32 %s43, 1
    %p47 = scmp.eq.s32.totalorder %s9, 1
    %p48 = scmp.ne.s32.totalorder %s43, %s45
    %p49 = scmp.eq.s32.totalorder %s9, 0
    %p50 = por %p48, %p49
    %p51 = scmp.ne.s32.totalorder %s43, %s45
    %p52 = scmp.eq.s32.totalorder %s14, 1
    %p53 = por %p51, %p52
    %p54 = scmp.ne.s32.totalorder %s45, %s46
    %p55 = scmp.eq.s32.totalorder %s14, 0
    %p56 = por %p54, %p55
    %p57 = scmp.ne.s32.totalorder %s45, %s46
    %p58 = scmp.eq.s32.totalorder %s15, 1
    %p59 = por %p57, %p58
    %p61 = scmp.ne.s32.totalorder %s46, %s60
    %p62 = scmp.eq.s32.totalorder %s15, 0
    %p63 = por %p61, %p62
    %s65 = sadd.s32 %s64, 1
    %p68 = scmp.eq.s32.totalorder %s9, 1
    %p69 = scmp.ne.s32.totalorder %s64, %s66
    %p70 = scmp.eq.s32.totalorder %s9, 0
    %p71 = por %p69, %p70
    %p72 = scmp.ne.s32.totalorder %s64, %s66
    %p73 = scmp.eq.s32.totalorder %s14, 1
    %p74 = por %p72, %p73
    %p75 = scmp.ne.s32.totalorder %s66, %s67
    %p76 = scmp.eq.s32.totalorder %s14, 0
    %p77 = por %p75, %p76
    %p78 = scmp.ne.s32.totalorder %s66, %s67
    %p79 = scmp.eq.s32.totalorder %s15, 1
    %p80 = por %p78, %p79
    %p82 = scmp.ne.s32.totalorder %s67, %s81
    %p83 = scmp.eq.s32.totalorder %s15, 0
    %p84 = por %p82, %p83
    %s85 = ssub.s32 %s9, %s16
    %p86 = scmp.eq.s32.totalorder %s85, 0
    %s88 = sadd.s32 %s87, 1
    %s89 = scalar_select %p86, %s87, %s88
    %p92 = pneg %p86
    %p93 = scmp.eq.s32.totalorder %s9, 1
    %p94 = por %p92, %p93
    %p95 = scmp.ne.s32.totalorder %s87, %s90
    %p96 = scmp.eq.s32.totalorder %s9, 0
    %p97 = por %p95, %p96
    %p98 = scmp.ne.s32.totalorder %s87, %s90
    %p99 = scmp.eq.s32.totalorder %s14, 1
    %p100 = por %p98, %p99
    %p101 = scmp.ne.s32.totalorder %s90, %s91
    %p102 = scmp.eq.s32.totalorder %s14, 0
    %p103 = por %p101, %p102
    %p104 = scmp.ne.s32.totalorder %s90, %s91
    %p105 = scmp.eq.s32.totalorder %s15, 1
    %p106 = por %p104, %p105
    %p108 = scmp.ne.s32.totalorder %s91, %s107
    %p109 = scmp.eq.s32.totalorder %s15, 0
    %p110 = por %p108, %p109
    %p111 = scmp.le.s32.totalorder 1, %s9
    %p112 = scmp.lt.s32.totalorder %s9, 3
    %p113 = pnand %p111, %p112
    %p114 = pneg %p113
    // Predicated region
    $region9: #{other_net_forward.6} parent=5 // pred_check
      _
    $region10: #{other_net_forward.6} parent=5 // pred_check_branch
      %116 = sbr.rel (%p113) target = $region12
    $region11: #{other_net_forward.6} parent=5 // pred_region
      %s117 = ssub.s32 %s9, 1
      // Predicated region
      $region13: #{other_net_forward.6} parent=11 // pred_check
        %p118 = pneg %p56
      $region14: #{other_net_forward.6} parent=11 // pred_check_branch
        %120 = sbr.rel (%p118) target = $region16
      $region15: #{other_net_forward.6} parent=11 // pred_region
        _
      $region16: #{other_net_forward.6} parent=11 // pred_fallthru
        _
      // Predicated region
      $region17: #{other_net_forward.6} parent=11 // pred_check
        %p121 = pneg %p77
      $region18: #{other_net_forward.6} parent=11 // pred_check_branch
        %123 = sbr.rel (%p121) target = $region20
      $region19: #{other_net_forward.6} parent=11 // pred_region
        _
      $region20: #{other_net_forward.6} parent=11 // pred_fallthru
        _
    $region12: #{other_net_forward.6} parent=5 // pred_fallthru
      _
    %p124 = scmp.lt.s32.totalorder %s9, 2
    // Predicated region
    $region21: #{other_net_forward.6} parent=5 // pred_check
      %p125 = pneg %p124
    $region22: #{other_net_forward.6} parent=5 // pred_check_branch
      %127 = sbr.rel (%p125) target = $region24
    $region23: #{other_net_forward.6} parent=5 // pred_region
      // Predicated region
      $region25: #{other_net_forward.6} parent=23 // pred_check
        %p128 = pneg %p29
      $region26: #{other_net_forward.6} parent=23 // pred_check_branch
        %130 = sbr.rel (%p128) target = $region28
      $region27: #{other_net_forward.6} parent=23 // pred_region
        %s131 = smul.u32 72, %s9
        %p132 = scmp.lt.s32.totalorder %s131, 143
        %s133 = scalar_select %p132, %s131, 143
        %s134 = smul.addr %s133, 3
        %s135 = smul.addr %s134, 4
        %s136 = scalar_lea.vmem %s0, %s135
        %s137 = smul.u32 72, %s9
      $region28: #{other_net_forward.6} parent=23 // pred_fallthru
        _
    $region24: #{other_net_forward.6} parent=5 // pred_fallthru
      _
    %p138 = scmp.le.s32.totalorder 1, %s9
    %p139 = scmp.lt.s32.totalorder %s9, 3
    %p140 = pnand %p138, %p139
    %p141 = pneg %p140
    // Predicated region
    $region29: #{other_net_forward.6} parent=5 // pred_check
      _
    $region30: #{other_net_forward.6} parent=5 // pred_check_branch
      %143 = sbr.rel (%p140) target = $region32
    $region31: #{other_net_forward.6} parent=5 // pred_region
      %s144 = ssub.s32 %s9, 1
      %s145 = smul.u32 72, %s14
      %p146 = scmp.lt.s32.totalorder %s145, 143
      %s147 = scalar_select %p146, %s145, 143
      %s148 = smul.addr %s147, 3
      %s149 = smul.addr %s148, 4
      %s150 = scalar_lea.vmem %s0, %s149
      %p151 = pneg %p35
      %p152 = pneg %p32
      %p153 = pneg %p56
      %p154 = pneg %p53
      %p155 = pneg %p77
      %p156 = pneg %p74
      %p157 = pneg %p103
      %p158 = pneg %p100
      %s159 = smul.u32 72, %s14
      %p160 = scmp.lt.s32.totalorder %s159, 143
      %s161 = scalar_select %p160, %s159, 143
      %s162 = smul.addr %s161, 8
      %s163 = scalar_lea.vmem %s3, %s162
      %s164 = smul.u32 72, %s14
      %p165 = scmp.lt.s32.totalorder %s164, 143
      %s166 = scalar_select %p165, %s164, 143
      %s167 = smul.addr %s166, 3
      %s168 = smul.addr %s167, 4
      %s169 = scalar_lea.vmem %s0, %s168
      %s170 = smul.u32 72, %s14
      %s171 = smul.u32 72, %s14
      %p172 = scmp.lt.s32.totalorder %s171, 143
      %s173 = scalar_select %p172, %s171, 143
      %s174 = smul.addr %s173, 8
      %s175 = scalar_lea.vmem %s3, %s174
      %s176 = smul.u32 72, %s14
      %v178 = vld [vmem:[%s169] sm:$0xff]
      %v179 = vld [vmem:[%s169 + $0x8] sm:$0xf]
      %v180 = vld [vmem:[%s169 + $0xc] sm:$0xff]
      %v181 = vld [vmem:[%s169 + $0x14] sm:$0xf]
      %v182 = vld [vmem:[%s169 + $0x18] sm:$0xff]
      %v183 = vld [vmem:[%s169 + $0x20] sm:$0xf]
      %v184 = vld [vmem:[%s169 + $0x24] sm:$0xff]
      %v185 = vld [vmem:[%s169 + $0x2c] sm:$0xf]
      %v186 = vld [vmem:[%s169 + $0x30] sm:$0xff]
      %v187 = vld [vmem:[%s169 + $0x38] sm:$0xf]
      %v188 = vld [vmem:[%s169 + $0x3c] sm:$0xff]
      %v189 = vld [vmem:[%s169 + $0x44] sm:$0xf]
      %v190 = vld [vmem:[%s169 + $0x48] sm:$0xff]
      %v191 = vld [vmem:[%s169 + $0x50] sm:$0xf]
      %v192 = vld [vmem:[%s169 + $0x54] sm:$0xff]
      %v193 = vld [vmem:[%s169 + $0x5c] sm:$0xf]
      %v194 = vld [vmem:[%s169 + $0x60] sm:$0xff]
      %v195 = vld [vmem:[%s169 + $0x68] sm:$0xf]
      %v196 = vld [vmem:[%s169 + $0x6c] sm:$0xff]
      %v197 = vld [vmem:[%s169 + $0x74] sm:$0xf]
      %v198 = vld [vmem:[%s169 + $0x78] sm:$0xff]
      %v199 = vld [vmem:[%s169 + $0x80] sm:$0xf]
      %v200 = vld [vmem:[%s169 + $0x84] sm:$0xff]
      %v201 = vld [vmem:[%s169 + $0x8c] sm:$0xf]
      %v202 = vld [vmem:[%s169 + $0x90] sm:$0xff]
      %v203 = vld [vmem:[%s169 + $0x98] sm:$0xf]
      %v204 = vld [vmem:[%s169 + $0x9c] sm:$0xff]
      %v205 = vld [vmem:[%s169 + $0xa4] sm:$0xf]
      %v206 = vld [vmem:[%s169 + $0xa8] sm:$0xff]
      %v207 = vld [vmem:[%s169 + $0xb0] sm:$0xf]
      %v208 = vld [vmem:[%s169 + $0xb4] sm:$0xff]
      %v209 = vld [vmem:[%s169 + $0xbc] sm:$0xf]
      %v210 = vld [vmem:[%s169 + $0xc0] sm:$0xff]
      %v211 = vld [vmem:[%s169 + $0xc8] sm:$0xf]
      %v212 = vld [vmem:[%s169 + $0xcc] sm:$0xff]
      %v213 = vld [vmem:[%s169 + $0xd4] sm:$0xf]
      %v214 = vld [vmem:[%s169 + $0xd8] sm:$0xff]
      %v215 = vld [vmem:[%s169 + $0xe0] sm:$0xf]
      %v216 = vld [vmem:[%s169 + $0xe4] sm:$0xff]
      %v217 = vld [vmem:[%s169 + $0xec] sm:$0xf]
      %v218 = vld [vmem:[%s169 + $0xf0] sm:$0xff]
      %v219 = vld [vmem:[%s169 + $0xf8] sm:$0xf]
      %v220 = vld [vmem:[%s169 + $0xfc] sm:$0xff]
      %v221 = vld [vmem:[%s169 + $0x104] sm:$0xf]
      %v222 = vld [vmem:[%s169 + $0x108] sm:$0xff]
      %v223 = vld [vmem:[%s169 + $0x110] sm:$0xf]
      %v224 = vld [vmem:[%s169 + $0x114] sm:$0xff]
      %v225 = vld [vmem:[%s169 + $0x11c] sm:$0xf]
      %v226 = vld [vmem:[%s169 + $0x120] sm:$0xff]
      %v227 = vld [vmem:[%s169 + $0x128] sm:$0xf]
      %v228 = vld [vmem:[%s169 + $0x12c] sm:$0xff]
      %v229 = vld [vmem:[%s169 + $0x134] sm:$0xf]
      %v230 = vld [vmem:[%s169 + $0x138] sm:$0xff]
      %v231 = vld [vmem:[%s169 + $0x140] sm:$0xf]
      %v232 = vld [vmem:[%s169 + $0x144] sm:$0xff]
      %v233 = vld [vmem:[%s169 + $0x14c] sm:$0xf]
      %v234 = vld [vmem:[%s169 + $0x150] sm:$0xff]
      %v235 = vld [vmem:[%s169 + $0x158] sm:$0xf]
      %v236 = vld [vmem:[%s169 + $0x15c] sm:$0xff]
      %v237 = vld [vmem:[%s169 + $0x164] sm:$0xf]
      %v238 = vld [vmem:[%s169 + $0x168] sm:$0xff]
      %v239 = vld [vmem:[%s169 + $0x170] sm:$0xf]
      %v240 = vld [vmem:[%s169 + $0x174] sm:$0xff]
      %v241 = vld [vmem:[%s169 + $0x17c] sm:$0xf]
      %v242 = vld [vmem:[%s169 + $0x180] sm:$0xff]
      %v243 = vld [vmem:[%s169 + $0x188] sm:$0xf]
      %v244 = vld [vmem:[%s169 + $0x18c] sm:$0xff]
      %v245 = vld [vmem:[%s169 + $0x194] sm:$0xf]
      %v246 = vld [vmem:[%s169 + $0x198] sm:$0xff]
      %v247 = vld [vmem:[%s169 + $0x1a0] sm:$0xf]
      %v248 = vld [vmem:[%s169 + $0x1a4] sm:$0xff]
      %v249 = vld [vmem:[%s169 + $0x1ac] sm:$0xf]
      %v250 = vld [vmem:[%s169 + $0x1b0] sm:$0xff]
      %v251 = vld [vmem:[%s169 + $0x1b8] sm:$0xf]
      %v252 = vld [vmem:[%s169 + $0x1bc] sm:$0xff]
      %v253 = vld [vmem:[%s169 + $0x1c4] sm:$0xf]
      %v254 = vld [vmem:[%s169 + $0x1c8] sm:$0xff]
      %v255 = vld [vmem:[%s169 + $0x1d0] sm:$0xf]
      %v256 = vld [vmem:[%s169 + $0x1d4] sm:$0xff]
      %v257 = vld [vmem:[%s169 + $0x1dc] sm:$0xf]
      %v258 = vld [vmem:[%s169 + $0x1e0] sm:$0xff]
      %v259 = vld [vmem:[%s169 + $0x1e8] sm:$0xf]
      %v260 = vld [vmem:[%s169 + $0x1ec] sm:$0xff]
      %v261 = vld [vmem:[%s169 + $0x1f4] sm:$0xf]
      %v262 = vld [vmem:[%s169 + $0x1f8] sm:$0xff]
      %v263 = vld [vmem:[%s169 + $0x200] sm:$0xf]
      %v264 = vld [vmem:[%s169 + $0x204] sm:$0xff]
      %v265 = vld [vmem:[%s169 + $0x20c] sm:$0xf]
      %v266 = vld [vmem:[%s169 + $0x210] sm:$0xff]
      %v267 = vld [vmem:[%s169 + $0x218] sm:$0xf]
      %v268 = vld [vmem:[%s169 + $0x21c] sm:$0xff]
      %v269 = vld [vmem:[%s169 + $0x224] sm:$0xf]
      %v270 = vld [vmem:[%s169 + $0x228] sm:$0xff]
      %v271 = vld [vmem:[%s169 + $0x230] sm:$0xf]
      %v272 = vld [vmem:[%s169 + $0x234] sm:$0xff]
      %v273 = vld [vmem:[%s169 + $0x23c] sm:$0xf]
      %v274 = vld [vmem:[%s169 + $0x240] sm:$0xff]
      %v275 = vld [vmem:[%s169 + $0x248] sm:$0xf]
      %v276 = vld [vmem:[%s169 + $0x24c] sm:$0xff]
      %v277 = vld [vmem:[%s169 + $0x254] sm:$0xf]
      %v278 = vld [vmem:[%s169 + $0x258] sm:$0xff]
      %v279 = vld [vmem:[%s169 + $0x260] sm:$0xf]
      %v280 = vld [vmem:[%s169 + $0x264] sm:$0xff]
      %v281 = vld [vmem:[%s169 + $0x26c] sm:$0xf]
      %v282 = vld [vmem:[%s169 + $0x270] sm:$0xff]
      %v283 = vld [vmem:[%s169 + $0x278] sm:$0xf]
      %v284 = vld [vmem:[%s169 + $0x27c] sm:$0xff]
      %v285 = vld [vmem:[%s169 + $0x284] sm:$0xf]
      %v286 = vld [vmem:[%s169 + $0x288] sm:$0xff]
      %v287 = vld [vmem:[%s169 + $0x290] sm:$0xf]
      %v288 = vld [vmem:[%s169 + $0x294] sm:$0xff]
      %v289 = vld [vmem:[%s169 + $0x29c] sm:$0xf]
      %v290 = vld [vmem:[%s169 + $0x2a0] sm:$0xff]
      %v291 = vld [vmem:[%s169 + $0x2a8] sm:$0xf]
      %v292 = vld [vmem:[%s169 + $0x2ac] sm:$0xff]
      %v293 = vld [vmem:[%s169 + $0x2b4] sm:$0xf]
      %v294 = vld [vmem:[%s169 + $0x2b8] sm:$0xff]
      %v295 = vld [vmem:[%s169 + $0x2c0] sm:$0xf]
      %v296 = vld [vmem:[%s169 + $0x2c4] sm:$0xff]
      %v297 = vld [vmem:[%s169 + $0x2cc] sm:$0xf]
      %v298 = vld [vmem:[%s169 + $0x2d0] sm:$0xff]
      %v299 = vld [vmem:[%s169 + $0x2d8] sm:$0xf]
      %v300 = vld [vmem:[%s169 + $0x2dc] sm:$0xff]
      %v301 = vld [vmem:[%s169 + $0x2e4] sm:$0xf]
      %v302 = vld [vmem:[%s169 + $0x2e8] sm:$0xff]
      %v303 = vld [vmem:[%s169 + $0x2f0] sm:$0xf]
      %v304 = vld [vmem:[%s169 + $0x2f4] sm:$0xff]
      %v305 = vld [vmem:[%s169 + $0x2fc] sm:$0xf]
      %v306 = vld [vmem:[%s169 + $0x300] sm:$0xff]
      %v307 = vld [vmem:[%s169 + $0x308] sm:$0xf]
      %v308 = vld [vmem:[%s169 + $0x30c] sm:$0xff]
      %v309 = vld [vmem:[%s169 + $0x314] sm:$0xf]
      %v310 = vld [vmem:[%s169 + $0x318] sm:$0xff]
      %v311 = vld [vmem:[%s169 + $0x320] sm:$0xf]
      %v312 = vld [vmem:[%s169 + $0x324] sm:$0xff]
      %v313 = vld [vmem:[%s169 + $0x32c] sm:$0xf]
      %v314 = vld [vmem:[%s169 + $0x330] sm:$0xff]
      %v315 = vld [vmem:[%s169 + $0x338] sm:$0xf]
      %v316 = vld [vmem:[%s169 + $0x33c] sm:$0xff]
      %v317 = vld [vmem:[%s169 + $0x344] sm:$0xf]
      %v318 = vld [vmem:[%s169 + $0x348] sm:$0xff]
      %v319 = vld [vmem:[%s169 + $0x350] sm:$0xf]
      %v320 = vld [vmem:[%s169 + $0x354] sm:$0xff]
      %v321 = vld [vmem:[%s169 + $0x35c] sm:$0xf]
      %v322 = vld [vmem:[%s1] sm:$0xf]
      %v323 = vld [vmem:[%s1 + $0x4] sm:$0xf]
      %v324 = vld [vmem:[%s1 + $0x8] sm:$0xf]
      %v325 = vld [vmem:[%s1 + $0xc] sm:$0xf]
      %v326 = vld [vmem:[%s1 + $0x10] sm:$0xf]
      %v327 = vld [vmem:[%s1 + $0x14] sm:$0xf]
      %v328 = vld [vmem:[%s1 + $0x18] sm:$0xf]
      %v329 = vld [vmem:[%s1 + $0x1c] sm:$0xf]
      %v330 = vld [vmem:[%s1 + $0x20] sm:$0xf]
      %v331 = vld [vmem:[%s1 + $0x24] sm:$0xf]
      %v332 = vld [vmem:[%s1 + $0x28] sm:$0xf]
      %v333 = vld [vmem:[%s1 + $0x2c] sm:$0xf]
      %v334 = vld [vmem:[%s1 + $0x30] sm:$0xf]
      %v335 = vld [vmem:[%s1 + $0x34] sm:$0xf]
      %v336 = vld [vmem:[%s1 + $0x38] sm:$0xf]
      %v337 = vld [vmem:[%s1 + $0x3c] sm:$0xf]
      %v338 = vld [vmem:[%s1 + $0x40] sm:$0xf]
      %v339 = vld [vmem:[%s1 + $0x44] sm:$0xf]
      %v340 = vld [vmem:[%s1 + $0x48] sm:$0xf]
      %v341 = vld [vmem:[%s1 + $0x4c] sm:$0xf]
      %v342 = vld [vmem:[%s1 + $0x50] sm:$0xf]
      %v343 = vld [vmem:[%s1 + $0x54] sm:$0xf]
      %v344 = vld [vmem:[%s1 + $0x58] sm:$0xf]
      %v345 = vld [vmem:[%s1 + $0x5c] sm:$0xf]
      %v346 = vld [vmem:[%s1 + $0x60] sm:$0xf]
      %v347 = vld [vmem:[%s1 + $0x64] sm:$0xf]
      %v348 = vld [vmem:[%s1 + $0x68] sm:$0xf]
      %v349 = vld [vmem:[%s1 + $0x6c] sm:$0xf]
      %v350 = vld [vmem:[%s1 + $0x70] sm:$0xf]
      %v351 = vld [vmem:[%s1 + $0x74] sm:$0xf]
      %v352 = vld [vmem:[%s1 + $0x78] sm:$0xf]
      %v353 = vld [vmem:[%s1 + $0x7c] sm:$0xf]
      %v354 = vld [vmem:[%s1 + $0x80] sm:$0xf]
      %v355 = vld [vmem:[%s1 + $0x84] sm:$0xf]
      %v356 = vld [vmem:[%s1 + $0x88] sm:$0xf]
      %v357 = vld [vmem:[%s1 + $0x8c] sm:$0xf]
      %v358 = vld [vmem:[%s1 + $0x90] sm:$0xf]
      %v359 = vld [vmem:[%s1 + $0x94] sm:$0x3]
      %v360 = vld [vmem:[%s2] sm:$0x1]
      %v362 = vlaneseq
      %v363 = vshrl.u32 %v362, 7
      %v364 = vsub.s32 0, %v363
      %v365 = vrot.slane %v360, %v364
      %v511 = vunpack.c.l.b16 %v178
      %v512 = vunpack.c.h.b16 %v178
      %v513 = vunpack.c.l.b16 %v179
      %v514 = vunpack.c.l.b16 %v180
      %v515 = vunpack.c.h.b16 %v180
      %v516 = vunpack.c.l.b16 %v181
      %v517 = vunpack.c.l.b16 %v182
      %v518 = vunpack.c.h.b16 %v182
      %v519 = vunpack.c.l.b16 %v183
      %v520 = vunpack.c.l.b16 %v184
      %v521 = vunpack.c.h.b16 %v184
      %v522 = vunpack.c.l.b16 %v185
      %v523 = vunpack.c.l.b16 %v186
      %v524 = vunpack.c.h.b16 %v186
      %v525 = vunpack.c.l.b16 %v187
      %v526 = vunpack.c.l.b16 %v188
      %v527 = vunpack.c.h.b16 %v188
      %v528 = vunpack.c.l.b16 %v189
      %v529 = vunpack.c.l.b16 %v190
      %v530 = vunpack.c.h.b16 %v190
      %v531 = vunpack.c.l.b16 %v191
      %v532 = vunpack.c.l.b16 %v192
      %v533 = vunpack.c.h.b16 %v192
      %v534 = vunpack.c.l.b16 %v193
      %v535 = vunpack.c.l.b16 %v194
      %v536 = vunpack.c.h.b16 %v194
      %v537 = vunpack.c.l.b16 %v195
      %v538 = vunpack.c.l.b16 %v196
      %v539 = vunpack.c.h.b16 %v196
      %v540 = vunpack.c.l.b16 %v197
      %v541 = vunpack.c.l.b16 %v198
      %v542 = vunpack.c.h.b16 %v198
      %v543 = vunpack.c.l.b16 %v199
      %v544 = vunpack.c.l.b16 %v200
      %v545 = vunpack.c.h.b16 %v200
      %v546 = vunpack.c.l.b16 %v201
      %v547 = vunpack.c.l.b16 %v202
      %v548 = vunpack.c.h.b16 %v202
      %v549 = vunpack.c.l.b16 %v203
      %v550 = vunpack.c.l.b16 %v204
      %v551 = vunpack.c.h.b16 %v204
      %v552 = vunpack.c.l.b16 %v205
      %v553 = vunpack.c.l.b16 %v206
      %v554 = vunpack.c.h.b16 %v206
      %v555 = vunpack.c.l.b16 %v207
      %v556 = vunpack.c.l.b16 %v208
      %v557 = vunpack.c.h.b16 %v208
      %v558 = vunpack.c.l.b16 %v209
      %v559 = vunpack.c.l.b16 %v210
      %v560 = vunpack.c.h.b16 %v210
      %v561 = vunpack.c.l.b16 %v211
      %v562 = vunpack.c.l.b16 %v212
      %v563 = vunpack.c.h.b16 %v212
      %v564 = vunpack.c.l.b16 %v213
      %v565 = vunpack.c.l.b16 %v214
      %v566 = vunpack.c.h.b16 %v214
      %v567 = vunpack.c.l.b16 %v215
      %v568 = vunpack.c.l.b16 %v216
      %v569 = vunpack.c.h.b16 %v216
      %v570 = vunpack.c.l.b16 %v217
      %v571 = vunpack.c.l.b16 %v218
      %v572 = vunpack.c.h.b16 %v218
      %v573 = vunpack.c.l.b16 %v219
      %v574 = vunpack.c.l.b16 %v220
      %v575 = vunpack.c.h.b16 %v220
      %v576 = vunpack.c.l.b16 %v221
      %v577 = vunpack.c.l.b16 %v222
      %v578 = vunpack.c.h.b16 %v222
      %v579 = vunpack.c.l.b16 %v223
      %v580 = vunpack.c.l.b16 %v224
      %v581 = vunpack.c.h.b16 %v224
      %v582 = vunpack.c.l.b16 %v225
      %v583 = vunpack.c.l.b16 %v226
      %v584 = vunpack.c.h.b16 %v226
      %v585 = vunpack.c.l.b16 %v227
      %v586 = vunpack.c.l.b16 %v228
      %v587 = vunpack.c.h.b16 %v228
      %v588 = vunpack.c.l.b16 %v229
      %v589 = vunpack.c.l.b16 %v230
      %v590 = vunpack.c.h.b16 %v230
      %v591 = vunpack.c.l.b16 %v231
      %v592 = vunpack.c.l.b16 %v232
      %v593 = vunpack.c.h.b16 %v232
      %v594 = vunpack.c.l.b16 %v233
      %v595 = vunpack.c.l.b16 %v234
      %v596 = vunpack.c.h.b16 %v234
      %v597 = vunpack.c.l.b16 %v235
      %v598 = vunpack.c.l.b16 %v236
      %v599 = vunpack.c.h.b16 %v236
      %v600 = vunpack.c.l.b16 %v237
      %v601 = vunpack.c.l.b16 %v238
      %v602 = vunpack.c.h.b16 %v238
      %v603 = vunpack.c.l.b16 %v239
      %v604 = vunpack.c.l.b16 %v240
      %v605 = vunpack.c.h.b16 %v240
      %v606 = vunpack.c.l.b16 %v241
      %v607 = vunpack.c.l.b16 %v242
      %v608 = vunpack.c.h.b16 %v242
      %v609 = vunpack.c.l.b16 %v243
      %v610 = vunpack.c.l.b16 %v244
      %v611 = vunpack.c.h.b16 %v244
      %v612 = vunpack.c.l.b16 %v245
      %v613 = vunpack.c.l.b16 %v246
      %v614 = vunpack.c.h.b16 %v246
      %v615 = vunpack.c.l.b16 %v247
      %v616 = vunpack.c.l.b16 %v248
      %v617 = vunpack.c.h.b16 %v248
      %v618 = vunpack.c.l.b16 %v249
      %v619 = vunpack.c.l.b16 %v250
      %v620 = vunpack.c.h.b16 %v250
      %v621 = vunpack.c.l.b16 %v251
      %v622 = vunpack.c.l.b16 %v252
      %v623 = vunpack.c.h.b16 %v252
      %v624 = vunpack.c.l.b16 %v253
      %v625 = vunpack.c.l.b16 %v254
      %v626 = vunpack.c.h.b16 %v254
      %v627 = vunpack.c.l.b16 %v255
      %v628 = vunpack.c.l.b16 %v256
      %v629 = vunpack.c.h.b16 %v256
      %v630 = vunpack.c.l.b16 %v257
      %v631 = vunpack.c.l.b16 %v258
      %v632 = vunpack.c.h.b16 %v258
      %v633 = vunpack.c.l.b16 %v259
      %v634 = vunpack.c.l.b16 %v260
      %v635 = vunpack.c.h.b16 %v260
      %v636 = vunpack.c.l.b16 %v261
      %v637 = vunpack.c.l.b16 %v262
      %v638 = vunpack.c.h.b16 %v262
      %v639 = vunpack.c.l.b16 %v263
      %v640 = vunpack.c.l.b16 %v264
      %v641 = vunpack.c.h.b16 %v264
      %v642 = vunpack.c.l.b16 %v265
      %v643 = vunpack.c.l.b16 %v266
      %v644 = vunpack.c.h.b16 %v266
      %v645 = vunpack.c.l.b16 %v267
      %v646 = vunpack.c.l.b16 %v268
      %v647 = vunpack.c.h.b16 %v268
      %v648 = vunpack.c.l.b16 %v269
      %v649 = vunpack.c.l.b16 %v270
      %v650 = vunpack.c.h.b16 %v270
      %v651 = vunpack.c.l.b16 %v271
      %v652 = vunpack.c.l.b16 %v272
      %v653 = vunpack.c.h.b16 %v272
      %v654 = vunpack.c.l.b16 %v273
      %v655 = vunpack.c.l.b16 %v274
      %v656 = vunpack.c.h.b16 %v274
      %v657 = vunpack.c.l.b16 %v275
      %v658 = vunpack.c.l.b16 %v276
      %v659 = vunpack.c.h.b16 %v276
      %v660 = vunpack.c.l.b16 %v277
      %v661 = vunpack.c.l.b16 %v278
      %v662 = vunpack.c.h.b16 %v278
      %v663 = vunpack.c.l.b16 %v279
      %v664 = vunpack.c.l.b16 %v280
      %v665 = vunpack.c.h.b16 %v280
      %v666 = vunpack.c.l.b16 %v281
      %v667 = vunpack.c.l.b16 %v282
      %v668 = vunpack.c.h.b16 %v282
      %v669 = vunpack.c.l.b16 %v283
      %v670 = vunpack.c.l.b16 %v284
      %v671 = vunpack.c.h.b16 %v284
      %v672 = vunpack.c.l.b16 %v285
      %v673 = vunpack.c.l.b16 %v286
      %v674 = vunpack.c.h.b16 %v286
      %v675 = vunpack.c.l.b16 %v287
      %v676 = vunpack.c.l.b16 %v288
      %v677 = vunpack.c.h.b16 %v288
      %v678 = vunpack.c.l.b16 %v289
      %v679 = vunpack.c.l.b16 %v290
      %v680 = vunpack.c.h.b16 %v290
      %v681 = vunpack.c.l.b16 %v291
      %v682 = vunpack.c.l.b16 %v292
      %v683 = vunpack.c.h.b16 %v292
      %v684 = vunpack.c.l.b16 %v293
      %v685 = vunpack.c.l.b16 %v294
      %v686 = vunpack.c.h.b16 %v294
      %v687 = vunpack.c.l.b16 %v295
      %v688 = vunpack.c.l.b16 %v296
      %v689 = vunpack.c.h.b16 %v296
      %v690 = vunpack.c.l.b16 %v297
      %v691 = vunpack.c.l.b16 %v298
      %v692 = vunpack.c.h.b16 %v298
      %v693 = vunpack.c.l.b16 %v299
      %v694 = vunpack.c.l.b16 %v300
      %v695 = vunpack.c.h.b16 %v300
      %v696 = vunpack.c.l.b16 %v301
      %v697 = vunpack.c.l.b16 %v302
      %v698 = vunpack.c.h.b16 %v302
      %v699 = vunpack.c.l.b16 %v303
      %v700 = vunpack.c.l.b16 %v304
      %v701 = vunpack.c.h.b16 %v304
      %v702 = vunpack.c.l.b16 %v305
      %v703 = vunpack.c.l.b16 %v306
      %v704 = vunpack.c.h.b16 %v306
      %v705 = vunpack.c.l.b16 %v307
      %v706 = vunpack.c.l.b16 %v308
      %v707 = vunpack.c.h.b16 %v308
      %v708 = vunpack.c.l.b16 %v309
      %v709 = vunpack.c.l.b16 %v310
      %v710 = vunpack.c.h.b16 %v310
      %v711 = vunpack.c.l.b16 %v311
      %v712 = vunpack.c.l.b16 %v312
      %v713 = vunpack.c.h.b16 %v312
      %v714 = vunpack.c.l.b16 %v313
      %v715 = vunpack.c.l.b16 %v314
      %v716 = vunpack.c.h.b16 %v314
      %v717 = vunpack.c.l.b16 %v315
      %v718 = vunpack.c.l.b16 %v316
      %v719 = vunpack.c.h.b16 %v316
      %v720 = vunpack.c.l.b16 %v317
      %v721 = vunpack.c.l.b16 %v318
      %v722 = vunpack.c.h.b16 %v318
      %v723 = vunpack.c.l.b16 %v319
      %v724 = vunpack.c.l.b16 %v320
      %v725 = vunpack.c.h.b16 %v320
      %v726 = vunpack.c.l.b16 %v321
      %v727 = vpack.c.b16 %v514, %v511
      %v728 = vpack.c.b16 %v515, %v512
      %v729 = vpack.c.b16 %v516, %v513
      %v730 = vpack.c.b16 %v520, %v517
      %v731 = vpack.c.b16 %v521, %v518
      %v732 = vpack.c.b16 %v522, %v519
      %v733 = vpack.c.b16 %v526, %v523
      %v734 = vpack.c.b16 %v527, %v524
      %v735 = vpack.c.b16 %v528, %v525
      %v736 = vpack.c.b16 %v532, %v529
      %v737 = vpack.c.b16 %v533, %v530
      %v738 = vpack.c.b16 %v534, %v531
      %v739 = vpack.c.b16 %v538, %v535
      %v740 = vpack.c.b16 %v539, %v536
      %v741 = vpack.c.b16 %v540, %v537
      %v742 = vpack.c.b16 %v544, %v541
      %v743 = vpack.c.b16 %v545, %v542
      %v744 = vpack.c.b16 %v546, %v543
      %v745 = vpack.c.b16 %v550, %v547
      %v746 = vpack.c.b16 %v551, %v548
      %v747 = vpack.c.b16 %v552, %v549
      %v748 = vpack.c.b16 %v556, %v553
      %v749 = vpack.c.b16 %v557, %v554
      %v750 = vpack.c.b16 %v558, %v555
      %v751 = vpack.c.b16 %v562, %v559
      %v752 = vpack.c.b16 %v563, %v560
      %v753 = vpack.c.b16 %v564, %v561
      %v754 = vpack.c.b16 %v568, %v565
      %v755 = vpack.c.b16 %v569, %v566
      %v756 = vpack.c.b16 %v570, %v567
      %v757 = vpack.c.b16 %v574, %v571
      %v758 = vpack.c.b16 %v575, %v572
      %v759 = vpack.c.b16 %v576, %v573
      %v760 = vpack.c.b16 %v580, %v577
      %v761 = vpack.c.b16 %v581, %v578
      %v762 = vpack.c.b16 %v582, %v579
      %v763 = vpack.c.b16 %v586, %v583
      %v764 = vpack.c.b16 %v587, %v584
      %v765 = vpack.c.b16 %v588, %v585
      %v766 = vpack.c.b16 %v592, %v589
      %v767 = vpack.c.b16 %v593, %v590
      %v768 = vpack.c.b16 %v594, %v591
      %v769 = vpack.c.b16 %v598, %v595
      %v770 = vpack.c.b16 %v599, %v596
      %v771 = vpack.c.b16 %v600, %v597
      %v772 = vpack.c.b16 %v604, %v601
      %v773 = vpack.c.b16 %v605, %v602
      %v774 = vpack.c.b16 %v606, %v603
      %v775 = vpack.c.b16 %v610, %v607
      %v776 = vpack.c.b16 %v611, %v608
      %v777 = vpack.c.b16 %v612, %v609
      %v778 = vpack.c.b16 %v616, %v613
      %v779 = vpack.c.b16 %v617, %v614
      %v780 = vpack.c.b16 %v618, %v615
      %v781 = vpack.c.b16 %v622, %v619
      %v782 = vpack.c.b16 %v623, %v620
      %v783 = vpack.c.b16 %v624, %v621
      %v784 = vpack.c.b16 %v628, %v625
      %v785 = vpack.c.b16 %v629, %v626
      %v786 = vpack.c.b16 %v630, %v627
      %v787 = vpack.c.b16 %v634, %v631
      %v788 = vpack.c.b16 %v635, %v632
      %v789 = vpack.c.b16 %v636, %v633
      %v790 = vpack.c.b16 %v640, %v637
      %v791 = vpack.c.b16 %v641, %v638
      %v792 = vpack.c.b16 %v642, %v639
      %v793 = vpack.c.b16 %v646, %v643
      %v794 = vpack.c.b16 %v647, %v644
      %v795 = vpack.c.b16 %v648, %v645
      %v796 = vpack.c.b16 %v652, %v649
      %v797 = vpack.c.b16 %v653, %v650
      %v798 = vpack.c.b16 %v654, %v651
      %v799 = vpack.c.b16 %v658, %v655
      %v800 = vpack.c.b16 %v659, %v656
      %v801 = vpack.c.b16 %v660, %v657
      %v802 = vpack.c.b16 %v664, %v661
      %v803 = vpack.c.b16 %v665, %v662
      %v804 = vpack.c.b16 %v666, %v663
      %v805 = vpack.c.b16 %v670, %v667
      %v806 = vpack.c.b16 %v671, %v668
      %v807 = vpack.c.b16 %v672, %v669
      %v808 = vpack.c.b16 %v676, %v673
      %v809 = vpack.c.b16 %v677, %v674
      %v810 = vpack.c.b16 %v678, %v675
      %v811 = vpack.c.b16 %v682, %v679
      %v812 = vpack.c.b16 %v683, %v680
      %v813 = vpack.c.b16 %v684, %v681
      %v814 = vpack.c.b16 %v688, %v685
      %v815 = vpack.c.b16 %v689, %v686
      %v816 = vpack.c.b16 %v690, %v687
      %v817 = vpack.c.b16 %v694, %v691
      %v818 = vpack.c.b16 %v695, %v692
      %v819 = vpack.c.b16 %v696, %v693
      %v820 = vpack.c.b16 %v700, %v697
      %v821 = vpack.c.b16 %v701, %v698
      %v822 = vpack.c.b16 %v702, %v699
      %v823 = vpack.c.b16 %v706, %v703
      %v824 = vpack.c.b16 %v707, %v704
      %v825 = vpack.c.b16 %v708, %v705
      %v826 = vpack.c.b16 %v712, %v709
      %v827 = vpack.c.b16 %v713, %v710
      %v828 = vpack.c.b16 %v714, %v711
      %v829 = vpack.c.b16 %v718, %v715
      %v830 = vpack.c.b16 %v719, %v716
      %v831 = vpack.c.b16 %v720, %v717
      %v832 = vpack.c.b16 %v724, %v721
      %v833 = vpack.c.b16 %v725, %v722
      %v834 = vpack.c.b16 %v726, %v723
      %v945 = vunpack.c.l.b16 %v322
      %v946 = vunpack.c.l.b16 %v323
      %v947 = vunpack.c.l.b16 %v324
      %v948 = vunpack.c.l.b16 %v325
      %v949 = vunpack.c.l.b16 %v326
      %v950 = vunpack.c.l.b16 %v327
      %v951 = vunpack.c.l.b16 %v328
      %v952 = vunpack.c.l.b16 %v329
      %v953 = vunpack.c.l.b16 %v330
      %v954 = vunpack.c.l.b16 %v331
      %v955 = vunpack.c.l.b16 %v332
      %v956 = vunpack.c.l.b16 %v333
      %v957 = vunpack.c.l.b16 %v334
      %v958 = vunpack.c.l.b16 %v335
      %v959 = vunpack.c.l.b16 %v336
      %v960 = vunpack.c.l.b16 %v337
      %v961 = vunpack.c.l.b16 %v338
      %v962 = vunpack.c.l.b16 %v339
      %v963 = vunpack.c.l.b16 %v340
      %v964 = vunpack.c.l.b16 %v341
      %v965 = vunpack.c.l.b16 %v342
      %v966 = vunpack.c.l.b16 %v343
      %v967 = vunpack.c.l.b16 %v344
      %v968 = vunpack.c.l.b16 %v345
      %v969 = vunpack.c.l.b16 %v346
      %v970 = vunpack.c.l.b16 %v347
      %v971 = vunpack.c.l.b16 %v348
      %v972 = vunpack.c.l.b16 %v349
      %v973 = vunpack.c.l.b16 %v350
      %v974 = vunpack.c.l.b16 %v351
      %v975 = vunpack.c.l.b16 %v352
      %v976 = vunpack.c.l.b16 %v353
      %v977 = vunpack.c.l.b16 %v354
      %v978 = vunpack.c.l.b16 %v355
      %v979 = vunpack.c.l.b16 %v356
      %v980 = vunpack.c.l.b16 %v357
      %v981 = vunpack.c.l.b16 %v358
      %v982 = vunpack.c.l.b16 %v359
      %v983 = vpack.c.b16 %v946, %v945
      %v984 = vpack.c.b16 %v948, %v947
      %v985 = vpack.c.b16 %v950, %v949
      %v986 = vpack.c.b16 %v952, %v951
      %v987 = vpack.c.b16 %v954, %v953
      %v988 = vpack.c.b16 %v956, %v955
      %v989 = vpack.c.b16 %v958, %v957
      %v990 = vpack.c.b16 %v960, %v959
      %v991 = vpack.c.b16 %v962, %v961
      %v992 = vpack.c.b16 %v964, %v963
      %v993 = vpack.c.b16 %v966, %v965
      %v994 = vpack.c.b16 %v968, %v967
      %v995 = vpack.c.b16 %v970, %v969
      %v996 = vpack.c.b16 %v972, %v971
      %v997 = vpack.c.b16 %v974, %v973
      %v998 = vpack.c.b16 %v976, %v975
      %v999 = vpack.c.b16 %v978, %v977
      %v1000 = vpack.c.b16 %v980, %v979
      %v1001 = vpack.c.b16 %v982, %v981
      %vm1020 = vcmask 359424
      %v1022 = vsel %vm1020, %v729, 0
      %v1025 = vsel %vm1020, %v732, 0
      %v1028 = vsel %vm1020, %v735, 0
      %v1031 = vsel %vm1020, %v738, 0
      %v1034 = vsel %vm1020, %v741, 0
      %v1037 = vsel %vm1020, %v744, 0
      %v1040 = vsel %vm1020, %v747, 0
      %v1043 = vsel %vm1020, %v750, 0
      %v1046 = vsel %vm1020, %v753, 0
      %v1049 = vsel %vm1020, %v756, 0
      %v1052 = vsel %vm1020, %v759, 0
      %v1055 = vsel %vm1020, %v762, 0
      %v1058 = vsel %vm1020, %v765, 0
      %v1061 = vsel %vm1020, %v768, 0
      %v1064 = vsel %vm1020, %v771, 0
      %v1067 = vsel %vm1020, %v774, 0
      %v1070 = vsel %vm1020, %v777, 0
      %v1073 = vsel %vm1020, %v780, 0
      %v1076 = vsel %vm1020, %v783, 0
      %v1079 = vsel %vm1020, %v786, 0
      %v1082 = vsel %vm1020, %v789, 0
      %v1085 = vsel %vm1020, %v792, 0
      %v1088 = vsel %vm1020, %v795, 0
      %v1091 = vsel %vm1020, %v798, 0
      %v1094 = vsel %vm1020, %v801, 0
      %v1097 = vsel %vm1020, %v804, 0
      %v1100 = vsel %vm1020, %v807, 0
      %v1103 = vsel %vm1020, %v810, 0
      %v1106 = vsel %vm1020, %v813, 0
      %v1109 = vsel %vm1020, %v816, 0
      %v1112 = vsel %vm1020, %v819, 0
      %v1115 = vsel %vm1020, %v822, 0
      %v1118 = vsel %vm1020, %v825, 0
      %v1121 = vsel %vm1020, %v828, 0
      %v1124 = vsel %vm1020, %v831, 0
      %v1127 = vsel %vm1020, %v834, 0
      %vm1129 = vcmask 1045504
      %v1131 = vsel %vm1129, %v1001, 0
      %1133 = vmatprep.subr.bf16.mxu0 0
      %1134 = vmatpush1.bf16.msra.mxu0 %v983
      %1135 = vmatprep.subr.bf16.mxu0 0
      %1136 = vmatpush1.bf16.msra.mxu0 %v984
      %1137 = vmatprep.subr.bf16.mxu0 0
      %1138 = vmatpush1.bf16.msra.mxu0 %v985
      %1139 = vmatprep.subr.bf16.mxu0 0
      %1140 = vmatpush1.bf16.msra.mxu0 %v986
      %1141 = vmatprep.subr.bf16.mxu0 0
      %1142 = vmatpush1.bf16.msra.mxu0 %v987
      %1143 = vmatprep.subr.bf16.mxu0 0
      %1144 = vmatpush1.bf16.msra.mxu0 %v988
      %1145 = vmatprep.subr.bf16.mxu0 0
      %1146 = vmatpush1.bf16.msra.mxu0 %v989
      %1147 = vmatprep.subr.bf16.mxu0 0
      %1148 = vmatpush1.bf16.msra.mxu0 %v990
      %1149 = vmatprep.subr.bf16.mxu0 0
      %1150 = vmatpush1.bf16.msra.mxu0 %v991
      %1151 = vmatprep.subr.bf16.mxu0 0
      %1152 = vmatpush1.bf16.msra.mxu0 %v992
      %1153 = vmatprep.subr.bf16.mxu0 0
      %1154 = vmatpush1.bf16.msra.mxu0 %v993
      %1155 = vmatprep.subr.bf16.mxu0 0
      %1156 = vmatpush1.bf16.msra.mxu0 %v994
      %1157 = vmatprep.subr.bf16.mxu0 0
      %1158 = vmatpush1.bf16.msra.mxu0 %v995
      %1159 = vmatprep.subr.bf16.mxu0 0
      %1160 = vmatpush1.bf16.msra.mxu0 %v996
      %1161 = vmatprep.subr.bf16.mxu0 0
      %1162 = vmatpush1.bf16.msra.mxu0 %v997
      %1163 = vmatprep.subr.bf16.mxu0 0
      %1164 = vmatpush1.bf16.msra.mxu0 %v998
      %1165 = vmatprep.mubr.bf16.mxu0 %v728
      %1166 = vmatmul.mubr.bf16.gmra.mrb[0].mxu0 %v727
      %v1167 = vpop.f32.mrb[0].mxu0
      %v1168 = vadd.f32 %v365, %v1167
      %v1169 = vpop.f32.mrb[0].mxu0
      %v1170 = vpop.f32.mrb[0].mxu0
      %v1171 = vadd.f32 %v365, %v1170
      %v1172 = vpop.f32.mrb[0].mxu0
      %1173 = vmatprep.mubr.bf16.mxu0 %v731
      %1174 = vmatmul.mubr.bf16.gmra.mrb[0].mxu0 %v730
      %v1175 = vpop.f32.mrb[0].mxu0
      %v1176 = vadd.f32 %v365, %v1175
      %v1177 = vpop.f32.mrb[0].mxu0
      %v1178 = vpop.f32.mrb[0].mxu0
      %v1179 = vadd.f32 %v365, %v1178
      %v1180 = vpop.f32.mrb[0].mxu0
      %1181 = vmatprep.mubr.bf16.mxu0 %v734
      %1182 = vmatmul.mubr.bf16.gmra.mrb[0].mxu0 %v733
      %v1183 = vpop.f32.mrb[0].mxu0
      %v1184 = vadd.f32 %v365, %v1183
      %v1185 = vpop.f32.mrb[0].mxu0
      %v1186 = vpop.f32.mrb[0].mxu0
      %v1187 = vadd.f32 %v365, %v1186
      %v1188 = vpop.f32.mrb[0].mxu0
      %1189 = vmatprep.mubr.bf16.mxu0 %v737
      %1190 = vmatmul.mubr.bf16.gmra.mrb[0].mxu0 %v736
      %v1191 = vpop.f32.mrb[0].mxu0
      %v1192 = vadd.f32 %v365, %v1191
      %v1193 = vpop.f32.mrb[0].mxu0
      %v1194 = vpop.f32.mrb[0].mxu0
      %v1195 = vadd.f32 %v365, %v1194
      %v1196 = vpop.f32.mrb[0].mxu0
      %1197 = vmatprep.mubr.bf16.mxu0 %v740
      %1198 = vmatmul.mubr.bf16.gmra.mrb[0].mxu0 %v739
      %v1199 = vpop.f32.mrb[0].mxu0
      %v1200 = vadd.f32 %v365, %v1199
      %v1201 = vpop.f32.mrb[0].mxu0
      %v1202 = vpop.f32.mrb[0].mxu0
      %v1203 = vadd.f32 %v365, %v1202
      %v1204 = vpop.f32.mrb[0].mxu0
      %1205 = vmatprep.mubr.bf16.mxu0 %v743
      %1206 = vmatmul.mubr.bf16.gmra.mrb[0].mxu0 %v742
      %v1207 = vpop.f32.mrb[0].mxu0
      %v1208 = vadd.f32 %v365, %v1207
      %v1209 = vpop.f32.mrb[0].mxu0
      %v1210 = vpop.f32.mrb[0].mxu0
      %v1211 = vadd.f32 %v365, %v1210
      %v1212 = vpop.f32.mrb[0].mxu0
      %1213 = vmatprep.mubr.bf16.mxu0 %v746
      %1214 = vmatmul.mubr.bf16.gmra.mrb[0].mxu0 %v745
      %v1215 = vpop.f32.mrb[0].mxu0
      %v1216 = vadd.f32 %v365, %v1215
      %v1217 = vpop.f32.mrb[0].mxu0
      %v1218 = vpop.f32.mrb[0].mxu0
      %v1219 = vadd.f32 %v365, %v1218
      %v1220 = vpop.f32.mrb[0].mxu0
      %1221 = vmatprep.mubr.bf16.mxu0 %v749
      %1222 = vmatmul.mubr.bf16.gmra.mrb[0].mxu0 %v748
      %v1223 = vpop.f32.mrb[0].mxu0
      %v1224 = vadd.f32 %v365, %v1223
      %v1225 = vpop.f32.mrb[0].mxu0
      %v1226 = vpop.f32.mrb[0].mxu0
      %v1227 = vadd.f32 %v365, %v1226
      %v1228 = vpop.f32.mrb[0].mxu0
      %1229 = vmatprep.mubr.bf16.mxu0 %v752
      %1230 = vmatmul.mubr.bf16.gmra.mrb[0].mxu0 %v751
      %v1231 = vpop.f32.mrb[0].mxu0
      %v1232 = vadd.f32 %v365, %v1231
      %v1233 = vpop.f32.mrb[0].mxu0
      %v1234 = vpop.f32.mrb[0].mxu0
      %v1235 = vadd.f32 %v365, %v1234
      %v1236 = vpop.f32.mrb[0].mxu0
      %1237 = vmatprep.mubr.bf16.mxu0 %v755
      %1238 = vmatmul.mubr.bf16.gmra.mrb[0].mxu0 %v754
      %v1239 = vpop.f32.mrb[0].mxu0
      %v1240 = vadd.f32 %v365, %v1239
      %v1241 = vpop.f32.mrb[0].mxu0
      %v1242 = vpop.f32.mrb[0].mxu0
      %v1243 = vadd.f32 %v365, %v1242
      %v1244 = vpop.f32.mrb[0].mxu0
      %1245 = vmatprep.mubr.bf16.mxu0 %v758
      %1246 = vmatmul.mubr.bf16.gmra.mrb[0].mxu0 %v757
      %v1247 = vpop.f32.mrb[0].mxu0
      %v1248 = vadd.f32 %v365, %v1247
      %v1249 = vpop.f32.mrb[0].mxu0
      %v1250 = vpop.f32.mrb[0].mxu0
      %v1251 = vadd.f32 %v365, %v1250
      %v1252 = vpop.f32.mrb[0].mxu0
      %1253 = vmatprep.mubr.bf16.mxu0 %v761
      %1254 = vmatmul.mubr.bf16.gmra.mrb[0].mxu0 %v760
      %v1255 = vpop.f32.mrb[0].mxu0
      %v1256 = vadd.f32 %v365, %v1255
      %v1257 = vpop.f32.mrb[0].mxu0
      %v1258 = vpop.f32.mrb[0].mxu0
      %v1259 = vadd.f32 %v365, %v1258
      %v1260 = vpop.f32.mrb[0].mxu0
      %1261 = vmatprep.mubr.bf16.mxu0 %v764
      %1262 = vmatmul.mubr.bf16.gmra.mrb[0].mxu0 %v763
      %v1263 = vpop.f32.mrb[0].mxu0
      %v1264 = vadd.f32 %v365, %v1263
      %v1265 = vpop.f32.mrb[0].mxu0
      %v1266 = vpop.f32.mrb[0].mxu0
      %v1267 = vadd.f32 %v365, %v1266
      %v1268 = vpop.f32.mrb[0].mxu0
      %1269 = vmatprep.mubr.bf16.mxu0 %v767
      %1270 = vmatmul.mubr.bf16.gmra.mrb[0].mxu0 %v766
      %v1271 = vpop.f32.mrb[0].mxu0
      %v1272 = vadd.f32 %v365, %v1271
      %v1273 = vpop.f32.mrb[0].mxu0
      %v1274 = vpop.f32.mrb[0].mxu0
      %v1275 = vadd.f32 %v365, %v1274
      %v1276 = vpop.f32.mrb[0].mxu0
      %1277 = vmatprep.mubr.bf16.mxu0 %v770
      %1278 = vmatmul.mubr.bf16.gmra.mrb[0].mxu0 %v769
      %v1279 = vpop.f32.mrb[0].mxu0
      %v1280 = vadd.f32 %v365, %v1279
      %v1281 = vpop.f32.mrb[0].mxu0
      %v1282 = vpop.f32.mrb[0].mxu0
      %v1283 = vadd.f32 %v365, %v1282
      %v1284 = vpop.f32.mrb[0].mxu0
      %1285 = vmatprep.mubr.bf16.mxu0 %v773
      %1286 = vmatmul.mubr.bf16.gmra.mrb[0].mxu0 %v772
      %v1287 = vpop.f32.mrb[0].mxu0
      %v1288 = vadd.f32 %v365, %v1287
      %v1289 = vpop.f32.mrb[0].mxu0
      %v1290 = vpop.f32.mrb[0].mxu0
      %v1291 = vadd.f32 %v365, %v1290
      %v1292 = vpop.f32.mrb[0].mxu0
      %1293 = vmatprep.mubr.bf16.mxu0 %v776
      %1294 = vmatmul.mubr.bf16.gmra.mrb[0].mxu0 %v775
      %v1295 = vpop.f32.mrb[0].mxu0
      %v1296 = vadd.f32 %v365, %v1295
      %v1297 = vpop.f32.mrb[0].mxu0
      %v1298 = vpop.f32.mrb[0].mxu0
      %v1299 = vadd.f32 %v365, %v1298
      %v1300 = vpop.f32.mrb[0].mxu0
      %1301 = vmatprep.mubr.bf16.mxu0 %v779
      %1302 = vmatmul.mubr.bf16.gmra.mrb[0].mxu0 %v778
      %v1303 = vpop.f32.mrb[0].mxu0
      %v1304 = vadd.f32 %v365, %v1303
      %v1305 = vpop.f32.mrb[0].mxu0
      %v1306 = vpop.f32.mrb[0].mxu0
      %v1307 = vadd.f32 %v365, %v1306
      %v1308 = vpop.f32.mrb[0].mxu0
      %1309 = vmatprep.mubr.bf16.mxu0 %v782
      %1310 = vmatmul.mubr.bf16.gmra.mrb[0].mxu0 %v781
      %v1311 = vpop.f32.mrb[0].mxu0
      %v1312 = vadd.f32 %v365, %v1311
      %v1313 = vpop.f32.mrb[0].mxu0
      %v1314 = vpop.f32.mrb[0].mxu0
      %v1315 = vadd.f32 %v365, %v1314
      %v1316 = vpop.f32.mrb[0].mxu0
      %1317 = vmatprep.mubr.bf16.mxu0 %v785
      %1318 = vmatmul.mubr.bf16.gmra.mrb[0].mxu0 %v784
      %v1319 = vpop.f32.mrb[0].mxu0
      %v1320 = vadd.f32 %v365, %v1319
      %v1321 = vpop.f32.mrb[0].mxu0
      %v1322 = vpop.f32.mrb[0].mxu0
      %v1323 = vadd.f32 %v365, %v1322
      %v1324 = vpop.f32.mrb[0].mxu0
      %1325 = vmatprep.mubr.bf16.mxu0 %v788
      %1326 = vmatmul.mubr.bf16.gmra.mrb[0].mxu0 %v787
      %v1327 = vpop.f32.mrb[0].mxu0
      %v1328 = vadd.f32 %v365, %v1327
      %v1329 = vpop.f32.mrb[0].mxu0
      %v1330 = vpop.f32.mrb[0].mxu0
      %v1331 = vadd.f32 %v365, %v1330
      %v1332 = vpop.f32.mrb[0].mxu0
      %1333 = vmatprep.mubr.bf16.mxu0 %v791
      %1334 = vmatmul.mubr.bf16.gmra.mrb[0].mxu0 %v790
      %v1335 = vpop.f32.mrb[0].mxu0
      %v1336 = vadd.f32 %v365, %v1335
      %v1337 = vpop.f32.mrb[0].mxu0
      %v1338 = vpop.f32.mrb[0].mxu0
      %v1339 = vadd.f32 %v365, %v1338
      %v1340 = vpop.f32.mrb[0].mxu0
      %1341 = vmatprep.mubr.bf16.mxu0 %v794
      %1342 = vmatmul.mubr.bf16.gmra.mrb[0].mxu0 %v793
      %v1343 = vpop.f32.mrb[0].mxu0
      %v1344 = vadd.f32 %v365, %v1343
      %v1345 = vpop.f32.mrb[0].mxu0
      %v1346 = vpop.f32.mrb[0].mxu0
      %v1347 = vadd.f32 %v365, %v1346
      %v1348 = vpop.f32.mrb[0].mxu0
      %1349 = vmatprep.mubr.bf16.mxu0 %v797
      %1350 = vmatmul.mubr.bf16.gmra.mrb[0].mxu0 %v796
      %v1351 = vpop.f32.mrb[0].mxu0
      %v1352 = vadd.f32 %v365, %v1351
      %v1353 = vpop.f32.mrb[0].mxu0
      %v1354 = vpop.f32.mrb[0].mxu0
      %v1355 = vadd.f32 %v365, %v1354
      %v1356 = vpop.f32.mrb[0].mxu0
      %1357 = vmatprep.mubr.bf16.mxu0 %v800
      %1358 = vmatmul.mubr.bf16.gmra.mrb[0].mxu0 %v799
      %v1359 = vpop.f32.mrb[0].mxu0
      %v1360 = vadd.f32 %v365, %v1359
      %v1361 = vpop.f32.mrb[0].mxu0
      %v1362 = vpop.f32.mrb[0].mxu0
      %v1363 = vadd.f32 %v365, %v1362
      %v1364 = vpop.f32.mrb[0].mxu0
      %1365 = vmatprep.mubr.bf16.mxu0 %v803
      %1366 = vmatmul.mubr.bf16.gmra.mrb[0].mxu0 %v802
      %v1367 = vpop.f32.mrb[0].mxu0
      %v1368 = vadd.f32 %v365, %v1367
      %v1369 = vpop.f32.mrb[0].mxu0
      %v1370 = vpop.f32.mrb[0].mxu0
      %v1371 = vadd.f32 %v365, %v1370
      %v1372 = vpop.f32.mrb[0].mxu0
      %1373 = vmatprep.mubr.bf16.mxu0 %v806
      %1374 = vmatmul.mubr.bf16.gmra.mrb[0].mxu0 %v805
      %v1375 = vpop.f32.mrb[0].mxu0
      %v1376 = vadd.f32 %v365, %v1375
      %v1377 = vpop.f32.mrb[0].mxu0
      %v1378 = vpop.f32.mrb[0].mxu0
      %v1379 = vadd.f32 %v365, %v1378
      %v1380 = vpop.f32.mrb[0].mxu0
      %1381 = vmatprep.mubr.bf16.mxu0 %v809
      %1382 = vmatmul.mubr.bf16.gmra.mrb[0].mxu0 %v808
      %v1383 = vpop.f32.mrb[0].mxu0
      %v1384 = vadd.f32 %v365, %v1383
      %v1385 = vpop.f32.mrb[0].mxu0
      %v1386 = vpop.f32.mrb[0].mxu0
      %v1387 = vadd.f32 %v365, %v1386
      %v1388 = vpop.f32.mrb[0].mxu0
      %1389 = vmatprep.mubr.bf16.mxu0 %v812
      %1390 = vmatmul.mubr.bf16.gmra.mrb[0].mxu0 %v811
      %v1391 = vpop.f32.mrb[0].mxu0
      %v1392 = vadd.f32 %v365, %v1391
      %v1393 = vpop.f32.mrb[0].mxu0
      %v1394 = vpop.f32.mrb[0].mxu0
      %v1395 = vadd.f32 %v365, %v1394
      %v1396 = vpop.f32.mrb[0].mxu0
      %1397 = vmatprep.mubr.bf16.mxu0 %v815
      %1398 = vmatmul.mubr.bf16.gmra.mrb[0].mxu0 %v814
      %v1399 = vpop.f32.mrb[0].mxu0
      %v1400 = vadd.f32 %v365, %v1399
      %v1401 = vpop.f32.mrb[0].mxu0
      %v1402 = vpop.f32.mrb[0].mxu0
      %v1403 = vadd.f32 %v365, %v1402
      %v1404 = vpop.f32.mrb[0].mxu0
      %1405 = vmatprep.mubr.bf16.mxu0 %v818
      %1406 = vmatmul.mubr.bf16.gmra.mrb[0].mxu0 %v817
      %v1407 = vpop.f32.mrb[0].mxu0
      %v1408 = vadd.f32 %v365, %v1407
      %v1409 = vpop.f32.mrb[0].mxu0
      %v1410 = vpop.f32.mrb[0].mxu0
      %v1411 = vadd.f32 %v365, %v1410
      %v1412 = vpop.f32.mrb[0].mxu0
      %1413 = vmatprep.mubr.bf16.mxu0 %v821
      %1414 = vmatmul.mubr.bf16.gmra.mrb[0].mxu0 %v820
      %v1415 = vpop.f32.mrb[0].mxu0
      %v1416 = vadd.f32 %v365, %v1415
      %v1417 = vpop.f32.mrb[0].mxu0
      %v1418 = vpop.f32.mrb[0].mxu0
      %v1419 = vadd.f32 %v365, %v1418
      %v1420 = vpop.f32.mrb[0].mxu0
      %1421 = vmatprep.mubr.bf16.mxu0 %v824
      %1422 = vmatmul.mubr.bf16.gmra.mrb[0].mxu0 %v823
      %v1423 = vpop.f32.mrb[0].mxu0
      %v1424 = vadd.f32 %v365, %v1423
      %v1425 = vpop.f32.mrb[0].mxu0
      %v1426 = vpop.f32.mrb[0].mxu0
      %v1427 = vadd.f32 %v365, %v1426
      %v1428 = vpop.f32.mrb[0].mxu0
      %1429 = vmatprep.mubr.bf16.mxu0 %v827
      %1430 = vmatmul.mubr.bf16.gmra.mrb[0].mxu0 %v826
      %v1431 = vpop.f32.mrb[0].mxu0
      %v1432 = vadd.f32 %v365, %v1431
      %v1433 = vpop.f32.mrb[0].mxu0
      %v1434 = vpop.f32.mrb[0].mxu0
      %v1435 = vadd.f32 %v365, %v1434
      %v1436 = vpop.f32.mrb[0].mxu0
      %1437 = vmatprep.mubr.bf16.mxu0 %v830
      %1438 = vmatmul.mubr.bf16.gmra.mrb[0].mxu0 %v829
      %v1439 = vpop.f32.mrb[0].mxu0
      %v1440 = vadd.f32 %v365, %v1439
      %v1441 = vpop.f32.mrb[0].mxu0
      %v1442 = vpop.f32.mrb[0].mxu0
      %v1443 = vadd.f32 %v365, %v1442
      %v1444 = vpop.f32.mrb[0].mxu0
      %1445 = vmatprep.mubr.bf16.mxu0 %v833
      %1446 = vmatmul.mubr.bf16.gmra.mrb[0].mxu0 %v832
      %v1447 = vpop.f32.mrb[0].mxu0
      %v1448 = vadd.f32 %v365, %v1447
      %v1449 = vpop.f32.mrb[0].mxu0
      %v1450 = vpop.f32.mrb[0].mxu0
      %v1451 = vadd.f32 %v365, %v1450
      %v1452 = vpop.f32.mrb[0].mxu0
      %1453 = vdwg.mxu0
      %1454 = vmatprep.subr.bf16.mxu0 0
      %1455 = vmatpush1.bf16.msra.mxu0 %v999
      %1456 = vmatprep.subr.bf16.mxu0 0
      %1457 = vmatpush1.bf16.msra.mxu0 %v1000
      %1458 = vmatprep.subr.bf16.mxu0 0
      %1459 = vmatpush1.bf16.msra.mxu0 %v1131
      %1460 = vmatprep.subr.bf16.mxu0 0
      %1461 = vmatpush1.bf16.msra.mxu0 0
      %1462 = vmatprep.subr.bf16.mxu0 0
      %1463 = vmatpush1.bf16.msra.mxu0 0
      %1464 = vmatprep.subr.bf16.mxu0 0
      %1465 = vmatpush1.bf16.msra.mxu0 0
      %1466 = vmatprep.subr.bf16.mxu0 0
      %1467 = vmatpush1.bf16.msra.mxu0 0
      %1468 = vmatprep.subr.bf16.mxu0 0
      %1469 = vmatpush1.bf16.msra.mxu0 0
      %1470 = vmatprep.subr.bf16.mxu0 0
      %1471 = vmatpush1.bf16.msra.mxu0 0
      %1472 = vmatprep.subr.bf16.mxu0 0
      %1473 = vmatpush1.bf16.msra.mxu0 0
      %1474 = vmatprep.subr.bf16.mxu0 0
      %1475 = vmatpush1.bf16.msra.mxu0 0
      %1476 = vmatprep.subr.bf16.mxu0 0
      %1477 = vmatpush1.bf16.msra.mxu0 0
      %1478 = vmatprep.subr.bf16.mxu0 0
      %1479 = vmatpush1.bf16.msra.mxu0 0
      %1480 = vmatprep.subr.bf16.mxu0 0
      %1481 = vmatpush1.bf16.msra.mxu0 0
      %1482 = vmatprep.subr.bf16.mxu0 0
      %1483 = vmatpush1.bf16.msra.mxu0 0
      %1484 = vmatprep.subr.bf16.mxu0 0
      %1485 = vmatpush1.bf16.msra.mxu0 0
      %1486 = vmatprep.mubr.bf16.mxu0 0
      %1487 = vmatmul.mubr.bf16.gmra.mrb[0].mxu0 %v1022
      %v1488 = vpop.f32.mrb[0].mxu0
      %v1489 = vadd.f32 %v1168, %v1488
      %v1490 = vpop.f32.mrb[0].mxu0
      %v1491 = vpop.f32.mrb[0].mxu0
      %v1492 = vadd.f32 %v1171, %v1491
      %v1493 = vpop.f32.mrb[0].mxu0
      %1494 = vmatprep.mubr.bf16.mxu0 0
      %1495 = vmatmul.mubr.bf16.gmra.mrb[0].mxu0 %v1025
      %v1496 = vpop.f32.mrb[0].mxu0
      %v1497 = vadd.f32 %v1176, %v1496
      %v1498 = vpop.f32.mrb[0].mxu0
      %v1499 = vpop.f32.mrb[0].mxu0
      %v1500 = vadd.f32 %v1179, %v1499
      %v1501 = vpop.f32.mrb[0].mxu0
      %1502 = vmatprep.mubr.bf16.mxu0 0
      %1503 = vmatmul.mubr.bf16.gmra.mrb[0].mxu0 %v1028
      %v1504 = vpop.f32.mrb[0].mxu0
      %v1505 = vadd.f32 %v1184, %v1504
      %v1506 = vpop.f32.mrb[0].mxu0
      %v1507 = vpop.f32.mrb[0].mxu0
      %v1508 = vadd.f32 %v1187, %v1507
      %v1509 = vpop.f32.mrb[0].mxu0
      %1510 = vmatprep.mubr.bf16.mxu0 0
      %1511 = vmatmul.mubr.bf16.gmra.mrb[0].mxu0 %v1031
      %v1512 = vpop.f32.mrb[0].mxu0
      %v1513 = vadd.f32 %v1192, %v1512
      %v1514 = vpop.f32.mrb[0].mxu0
      %v1515 = vpop.f32.mrb[0].mxu0
      %v1516 = vadd.f32 %v1195, %v1515
      %v1517 = vpop.f32.mrb[0].mxu0
      %1518 = vmatprep.mubr.bf16.mxu0 0
      %1519 = vmatmul.mubr.bf16.gmra.mrb[0].mxu0 %v1034
      %v1520 = vpop.f32.mrb[0].mxu0
      %v1521 = vadd.f32 %v1200, %v1520
      %v1522 = vpop.f32.mrb[0].mxu0
      %v1523 = vpop.f32.mrb[0].mxu0
      %v1524 = vadd.f32 %v1203, %v1523
      %v1525 = vpop.f32.mrb[0].mxu0
      %1526 = vmatprep.mubr.bf16.mxu0 0
      %1527 = vmatmul.mubr.bf16.gmra.mrb[0].mxu0 %v1037
      %v1528 = vpop.f32.mrb[0].mxu0
      %v1529 = vadd.f32 %v1208, %v1528
      %v1530 = vpop.f32.mrb[0].mxu0
      %v1531 = vpop.f32.mrb[0].mxu0
      %v1532 = vadd.f32 %v1211, %v1531
      %v1533 = vpop.f32.mrb[0].mxu0
      %1534 = vmatprep.mubr.bf16.mxu0 0
      %1535 = vmatmul.mubr.bf16.gmra.mrb[0].mxu0 %v1040
      %v1536 = vpop.f32.mrb[0].mxu0
      %v1537 = vadd.f32 %v1216, %v1536
      %v1538 = vpop.f32.mrb[0].mxu0
      %v1539 = vpop.f32.mrb[0].mxu0
      %v1540 = vadd.f32 %v1219, %v1539
      %v1541 = vpop.f32.mrb[0].mxu0
      %1542 = vmatprep.mubr.bf16.mxu0 0
      %1543 = vmatmul.mubr.bf16.gmra.mrb[0].mxu0 %v1043
      %v1544 = vpop.f32.mrb[0].mxu0
      %v1545 = vadd.f32 %v1224, %v1544
      %v1546 = vpop.f32.mrb[0].mxu0
      %v1547 = vpop.f32.mrb[0].mxu0
      %v1548 = vadd.f32 %v1227, %v1547
      %v1549 = vpop.f32.mrb[0].mxu0
      %1550 = vmatprep.mubr.bf16.mxu0 0
      %1551 = vmatmul.mubr.bf16.gmra.mrb[0].mxu0 %v1046
      %v1552 = vpop.f32.mrb[0].mxu0
      %v1553 = vadd.f32 %v1232, %v1552
      %v1554 = vpop.f32.mrb[0].mxu0
      %v1555 = vpop.f32.mrb[0].mxu0
      %v1556 = vadd.f32 %v1235, %v1555
      %v1557 = vpop.f32.mrb[0].mxu0
      %1558 = vmatprep.mubr.bf16.mxu0 0
      %1559 = vmatmul.mubr.bf16.gmra.mrb[0].mxu0 %v1049
      %v1560 = vpop.f32.mrb[0].mxu0
      %v1561 = vadd.f32 %v1240, %v1560
      %v1562 = vpop.f32.mrb[0].mxu0
      %v1563 = vpop.f32.mrb[0].mxu0
      %v1564 = vadd.f32 %v1243, %v1563
      %v1565 = vpop.f32.mrb[0].mxu0
      %1566 = vmatprep.mubr.bf16.mxu0 0
      %1567 = vmatmul.mubr.bf16.gmra.mrb[0].mxu0 %v1052
      %v1568 = vpop.f32.mrb[0].mxu0
      %v1569 = vadd.f32 %v1248, %v1568
      %v1570 = vpop.f32.mrb[0].mxu0
      %v1571 = vpop.f32.mrb[0].mxu0
      %v1572 = vadd.f32 %v1251, %v1571
      %v1573 = vpop.f32.mrb[0].mxu0
      %1574 = vmatprep.mubr.bf16.mxu0 0
      %1575 = vmatmul.mubr.bf16.gmra.mrb[0].mxu0 %v1055
      %v1576 = vpop.f32.mrb[0].mxu0
      %v1577 = vadd.f32 %v1256, %v1576
      %v1578 = vpop.f32.mrb[0].mxu0
      %v1579 = vpop.f32.mrb[0].mxu0
      %v1580 = vadd.f32 %v1259, %v1579
      %v1581 = vpop.f32.mrb[0].mxu0
      %1582 = vmatprep.mubr.bf16.mxu0 0
      %1583 = vmatmul.mubr.bf16.gmra.mrb[0].mxu0 %v1058
      %v1584 = vpop.f32.mrb[0].mxu0
      %v1585 = vadd.f32 %v1264, %v1584
      %v1586 = vpop.f32.mrb[0].mxu0
      %v1587 = vpop.f32.mrb[0].mxu0
      %v1588 = vadd.f32 %v1267, %v1587
      %v1589 = vpop.f32.mrb[0].mxu0
      %1590 = vmatprep.mubr.bf16.mxu0 0
      %1591 = vmatmul.mubr.bf16.gmra.mrb[0].mxu0 %v1061
      %v1592 = vpop.f32.mrb[0].mxu0
      %v1593 = vadd.f32 %v1272, %v1592
      %v1594 = vpop.f32.mrb[0].mxu0
      %v1595 = vpop.f32.mrb[0].mxu0
      %v1596 = vadd.f32 %v1275, %v1595
      %v1597 = vpop.f32.mrb[0].mxu0
      %1598 = vmatprep.mubr.bf16.mxu0 0
      %1599 = vmatmul.mubr.bf16.gmra.mrb[0].mxu0 %v1064
      %v1600 = vpop.f32.mrb[0].mxu0
      %v1601 = vadd.f32 %v1280, %v1600
      %v1602 = vpop.f32.mrb[0].mxu0
      %v1603 = vpop.f32.mrb[0].mxu0
      %v1604 = vadd.f32 %v1283, %v1603
      %v1605 = vpop.f32.mrb[0].mxu0
      %1606 = vmatprep.mubr.bf16.mxu0 0
      %1607 = vmatmul.mubr.bf16.gmra.mrb[0].mxu0 %v1067
      %v1608 = vpop.f32.mrb[0].mxu0
      %v1609 = vadd.f32 %v1288, %v1608
      %v1610 = vpop.f32.mrb[0].mxu0
      %v1611 = vpop.f32.mrb[0].mxu0
      %v1612 = vadd.f32 %v1291, %v1611
      %v1613 = vpop.f32.mrb[0].mxu0
      %1614 = vmatprep.mubr.bf16.mxu0 0
      %1615 = vmatmul.mubr.bf16.gmra.mrb[0].mxu0 %v1070
      %v1616 = vpop.f32.mrb[0].mxu0
      %v1617 = vadd.f32 %v1296, %v1616
      %v1618 = vpop.f32.mrb[0].mxu0
      %v1619 = vpop.f32.mrb[0].mxu0
      %v1620 = vadd.f32 %v1299, %v1619
      %v1621 = vpop.f32.mrb[0].mxu0
      %1622 = vmatprep.mubr.bf16.mxu0 0
      %1623 = vmatmul.mubr.bf16.gmra.mrb[0].mxu0 %v1073
      %v1624 = vpop.f32.mrb[0].mxu0
      %v1625 = vadd.f32 %v1304, %v1624
      %v1626 = vpop.f32.mrb[0].mxu0
      %v1627 = vpop.f32.mrb[0].mxu0
      %v1628 = vadd.f32 %v1307, %v1627
      %v1629 = vpop.f32.mrb[0].mxu0
      %1630 = vmatprep.mubr.bf16.mxu0 0
      %1631 = vmatmul.mubr.bf16.gmra.mrb[0].mxu0 %v1076
      %v1632 = vpop.f32.mrb[0].mxu0
      %v1633 = vadd.f32 %v1312, %v1632
      %v1634 = vpop.f32.mrb[0].mxu0
      %v1635 = vpop.f32.mrb[0].mxu0
      %v1636 = vadd.f32 %v1315, %v1635
      %v1637 = vpop.f32.mrb[0].mxu0
      %1638 = vmatprep.mubr.bf16.mxu0 0
      %1639 = vmatmul.mubr.bf16.gmra.mrb[0].mxu0 %v1079
      %v1640 = vpop.f32.mrb[0].mxu0
      %v1641 = vadd.f32 %v1320, %v1640
      %v1642 = vpop.f32.mrb[0].mxu0
      %v1643 = vpop.f32.mrb[0].mxu0
      %v1644 = vadd.f32 %v1323, %v1643
      %v1645 = vpop.f32.mrb[0].mxu0
      %1646 = vmatprep.mubr.bf16.mxu0 0
      %1647 = vmatmul.mubr.bf16.gmra.mrb[0].mxu0 %v1082
      %v1648 = vpop.f32.mrb[0].mxu0
      %v1649 = vadd.f32 %v1328, %v1648
      %v1650 = vpop.f32.mrb[0].mxu0
      %v1651 = vpop.f32.mrb[0].mxu0
      %v1652 = vadd.f32 %v1331, %v1651
      %v1653 = vpop.f32.mrb[0].mxu0
      %1654 = vmatprep.mubr.bf16.mxu0 0
      %1655 = vmatmul.mubr.bf16.gmra.mrb[0].mxu0 %v1085
      %v1656 = vpop.f32.mrb[0].mxu0
      %v1657 = vadd.f32 %v1336, %v1656
      %v1658 = vpop.f32.mrb[0].mxu0
      %v1659 = vpop.f32.mrb[0].mxu0
      %v1660 = vadd.f32 %v1339, %v1659
      %v1661 = vpop.f32.mrb[0].mxu0
      %1662 = vmatprep.mubr.bf16.mxu0 0
      %1663 = vmatmul.mubr.bf16.gmra.mrb[0].mxu0 %v1088
      %v1664 = vpop.f32.mrb[0].mxu0
      %v1665 = vadd.f32 %v1344, %v1664
      %v1666 = vpop.f32.mrb[0].mxu0
      %v1667 = vpop.f32.mrb[0].mxu0
      %v1668 = vadd.f32 %v1347, %v1667
      %v1669 = vpop.f32.mrb[0].mxu0
      %1670 = vmatprep.mubr.bf16.mxu0 0
      %1671 = vmatmul.mubr.bf16.gmra.mrb[0].mxu0 %v1091
      %v1672 = vpop.f32.mrb[0].mxu0
      %v1673 = vadd.f32 %v1352, %v1672
      %v1674 = vpop.f32.mrb[0].mxu0
      %v1675 = vpop.f32.mrb[0].mxu0
      %v1676 = vadd.f32 %v1355, %v1675
      %v1677 = vpop.f32.mrb[0].mxu0
      %1678 = vmatprep.mubr.bf16.mxu0 0
      %1679 = vmatmul.mubr.bf16.gmra.mrb[0].mxu0 %v1094
      %v1680 = vpop.f32.mrb[0].mxu0
      %v1681 = vadd.f32 %v1360, %v1680
      %v1682 = vpop.f32.mrb[0].mxu0
      %v1683 = vpop.f32.mrb[0].mxu0
      %v1684 = vadd.f32 %v1363, %v1683
      %v1685 = vpop.f32.mrb[0].mxu0
      %1686 = vmatprep.mubr.bf16.mxu0 0
      %1687 = vmatmul.mubr.bf16.gmra.mrb[0].mxu0 %v1097
      %v1688 = vpop.f32.mrb[0].mxu0
      %v1689 = vadd.f32 %v1368, %v1688
      %v1690 = vpop.f32.mrb[0].mxu0
      %v1691 = vpop.f32.mrb[0].mxu0
      %v1692 = vadd.f32 %v1371, %v1691
      %v1693 = vpop.f32.mrb[0].mxu0
      %1694 = vmatprep.mubr.bf16.mxu0 0
      %1695 = vmatmul.mubr.bf16.gmra.mrb[0].mxu0 %v1100
      %v1696 = vpop.f32.mrb[0].mxu0
      %v1697 = vadd.f32 %v1376, %v1696
      %v1698 = vpop.f32.mrb[0].mxu0
      %v1699 = vpop.f32.mrb[0].mxu0
      %v1700 = vadd.f32 %v1379, %v1699
      %v1701 = vpop.f32.mrb[0].mxu0
      %1702 = vmatprep.mubr.bf16.mxu0 0
      %1703 = vmatmul.mubr.bf16.gmra.mrb[0].mxu0 %v1103
      %v1704 = vpop.f32.mrb[0].mxu0
      %v1705 = vadd.f32 %v1384, %v1704
      %v1706 = vpop.f32.mrb[0].mxu0
      %v1707 = vpop.f32.mrb[0].mxu0
      %v1708 = vadd.f32 %v1387, %v1707
      %v1709 = vpop.f32.mrb[0].mxu0
      %1710 = vmatprep.mubr.bf16.mxu0 0
      %1711 = vmatmul.mubr.bf16.gmra.mrb[0].mxu0 %v1106
      %v1712 = vpop.f32.mrb[0].mxu0
      %v1713 = vadd.f32 %v1392, %v1712
      %v1714 = vpop.f32.mrb[0].mxu0
      %v1715 = vpop.f32.mrb[0].mxu0
      %v1716 = vadd.f32 %v1395, %v1715
      %v1717 = vpop.f32.mrb[0].mxu0
      %1718 = vmatprep.mubr.bf16.mxu0 0
      %1719 = vmatmul.mubr.bf16.gmra.mrb[0].mxu0 %v1109
      %v1720 = vpop.f32.mrb[0].mxu0
      %v1721 = vadd.f32 %v1400, %v1720
      %v1722 = vpop.f32.mrb[0].mxu0
      %v1723 = vpop.f32.mrb[0].mxu0
      %v1724 = vadd.f32 %v1403, %v1723
      %v1725 = vpop.f32.mrb[0].mxu0
      %1726 = vmatprep.mubr.bf16.mxu0 0
      %1727 = vmatmul.mubr.bf16.gmra.mrb[0].mxu0 %v1112
      %v1728 = vpop.f32.mrb[0].mxu0
      %v1729 = vadd.f32 %v1408, %v1728
      %v1730 = vpop.f32.mrb[0].mxu0
      %v1731 = vpop.f32.mrb[0].mxu0
      %v1732 = vadd.f32 %v1411, %v1731
      %v1733 = vpop.f32.mrb[0].mxu0
      %1734 = vmatprep.mubr.bf16.mxu0 0
      %1735 = vmatmul.mubr.bf16.gmra.mrb[0].mxu0 %v1115
      %v1736 = vpop.f32.mrb[0].mxu0
      %v1737 = vadd.f32 %v1416, %v1736
      %v1738 = vpop.f32.mrb[0].mxu0
      %v1739 = vpop.f32.mrb[0].mxu0
      %v1740 = vadd.f32 %v1419, %v1739
      %v1741 = vpop.f32.mrb[0].mxu0
      %1742 = vmatprep.mubr.bf16.mxu0 0
      %1743 = vmatmul.mubr.bf16.gmra.mrb[0].mxu0 %v1118
      %v1744 = vpop.f32.mrb[0].mxu0
      %v1745 = vadd.f32 %v1424, %v1744
      %v1746 = vpop.f32.mrb[0].mxu0
      %v1747 = vpop.f32.mrb[0].mxu0
      %v1748 = vadd.f32 %v1427, %v1747
      %v1749 = vpop.f32.mrb[0].mxu0
      %1750 = vmatprep.mubr.bf16.mxu0 0
      %1751 = vmatmul.mubr.bf16.gmra.mrb[0].mxu0 %v1121
      %v1752 = vpop.f32.mrb[0].mxu0
      %v1753 = vadd.f32 %v1432, %v1752
      %v1754 = vpop.f32.mrb[0].mxu0
      %v1755 = vpop.f32.mrb[0].mxu0
      %v1756 = vadd.f32 %v1435, %v1755
      %v1757 = vpop.f32.mrb[0].mxu0
      %1758 = vmatprep.mubr.bf16.mxu0 0
      %1759 = vmatmul.mubr.bf16.gmra.mrb[0].mxu0 %v1124
      %v1760 = vpop.f32.mrb[0].mxu0
      %v1761 = vadd.f32 %v1440, %v1760
      %v1762 = vpop.f32.mrb[0].mxu0
      %v1763 = vpop.f32.mrb[0].mxu0
      %v1764 = vadd.f32 %v1443, %v1763
      %v1765 = vpop.f32.mrb[0].mxu0
      %1766 = vmatprep.mubr.bf16.mxu0 0
      %1767 = vmatmul.mubr.bf16.gmra.mrb[0].mxu0 %v1127
      %v1768 = vpop.f32.mrb[0].mxu0
      %v1769 = vadd.f32 %v1448, %v1768
      %v1770 = vpop.f32.mrb[0].mxu0
      %v1771 = vpop.f32.mrb[0].mxu0
      %v1772 = vadd.f32 %v1451, %v1771
      %v1773 = vpop.f32.mrb[0].mxu0
      %1774 = vdwg.mxu0
      %vm1775 = vcmp.ge.f32.partialorder %v1489, 0.0
      %vm1776 = vcmp.ge.f32.partialorder %v1492, 0.0
      %vm1777 = vcmp.ge.f32.partialorder %v1497, 0.0
      %vm1778 = vcmp.ge.f32.partialorder %v1500, 0.0
      %vm1779 = vcmp.ge.f32.partialorder %v1505, 0.0
      %vm1780 = vcmp.ge.f32.partialorder %v1508, 0.0
      %vm1781 = vcmp.ge.f32.partialorder %v1513, 0.0
      %vm1782 = vcmp.ge.f32.partialorder %v1516, 0.0
      %vm1783 = vcmp.ge.f32.partialorder %v1521, 0.0
      %vm1784 = vcmp.ge.f32.partialorder %v1524, 0.0
      %vm1785 = vcmp.ge.f32.partialorder %v1529, 0.0
      %vm1786 = vcmp.ge.f32.partialorder %v1532, 0.0
      %vm1787 = vcmp.ge.f32.partialorder %v1537, 0.0
      %vm1788 = vcmp.ge.f32.partialorder %v1540, 0.0
      %vm1789 = vcmp.ge.f32.partialorder %v1545, 0.0
      %vm1790 = vcmp.ge.f32.partialorder %v1548, 0.0
      %vm1791 = vcmp.ge.f32.partialorder %v1553, 0.0
      %vm1792 = vcmp.ge.f32.partialorder %v1556, 0.0
      %vm1793 = vcmp.ge.f32.partialorder %v1561, 0.0
      %vm1794 = vcmp.ge.f32.partialorder %v1564, 0.0
      %vm1795 = vcmp.ge.f32.partialorder %v1569, 0.0
      %vm1796 = vcmp.ge.f32.partialorder %v1572, 0.0
      %vm1797 = vcmp.ge.f32.partialorder %v1577, 0.0
      %vm1798 = vcmp.ge.f32.partialorder %v1580, 0.0
      %vm1799 = vcmp.ge.f32.partialorder %v1585, 0.0
      %vm1800 = vcmp.ge.f32.partialorder %v1588, 0.0
      %vm1801 = vcmp.ge.f32.partialorder %v1593, 0.0
      %vm1802 = vcmp.ge.f32.partialorder %v1596, 0.0
      %vm1803 = vcmp.ge.f32.partialorder %v1601, 0.0
      %vm1804 = vcmp.ge.f32.partialorder %v1604, 0.0
      %vm1805 = vcmp.ge.f32.partialorder %v1609, 0.0
      %vm1806 = vcmp.ge.f32.partialorder %v1612, 0.0
      %vm1807 = vcmp.ge.f32.partialorder %v1617, 0.0
      %vm1808 = vcmp.ge.f32.partialorder %v1620, 0.0
      %vm1809 = vcmp.ge.f32.partialorder %v1625, 0.0
      %vm1810 = vcmp.ge.f32.partialorder %v1628, 0.0
      %vm1811 = vcmp.ge.f32.partialorder %v1633, 0.0
      %vm1812 = vcmp.ge.f32.partialorder %v1636, 0.0
      %vm1813 = vcmp.ge.f32.partialorder %v1641, 0.0
      %vm1814 = vcmp.ge.f32.partialorder %v1644, 0.0
      %vm1815 = vcmp.ge.f32.partialorder %v1649, 0.0
      %vm1816 = vcmp.ge.f32.partialorder %v1652, 0.0
      %vm1817 = vcmp.ge.f32.partialorder %v1657, 0.0
      %vm1818 = vcmp.ge.f32.partialorder %v1660, 0.0
      %vm1819 = vcmp.ge.f32.partialorder %v1665, 0.0
      %vm1820 = vcmp.ge.f32.partialorder %v1668, 0.0
      %vm1821 = vcmp.ge.f32.partialorder %v1673, 0.0
      %vm1822 = vcmp.ge.f32.partialorder %v1676, 0.0
      %vm1823 = vcmp.ge.f32.partialorder %v1681, 0.0
      %vm1824 = vcmp.ge.f32.partialorder %v1684, 0.0
      %vm1825 = vcmp.ge.f32.partialorder %v1689, 0.0
      %vm1826 = vcmp.ge.f32.partialorder %v1692, 0.0
      %vm1827 = vcmp.ge.f32.partialorder %v1697, 0.0
      %vm1828 = vcmp.ge.f32.partialorder %v1700, 0.0
      %vm1829 = vcmp.ge.f32.partialorder %v1705, 0.0
      %vm1830 = vcmp.ge.f32.partialorder %v1708, 0.0
      %vm1831 = vcmp.ge.f32.partialorder %v1713, 0.0
      %vm1832 = vcmp.ge.f32.partialorder %v1716, 0.0
      %vm1833 = vcmp.ge.f32.partialorder %v1721, 0.0
      %vm1834 = vcmp.ge.f32.partialorder %v1724, 0.0
      %vm1835 = vcmp.ge.f32.partialorder %v1729, 0.0
      %vm1836 = vcmp.ge.f32.partialorder %v1732, 0.0
      %vm1837 = vcmp.ge.f32.partialorder %v1737, 0.0
      %vm1838 = vcmp.ge.f32.partialorder %v1740, 0.0
      %vm1839 = vcmp.ge.f32.partialorder %v1745, 0.0
      %vm1840 = vcmp.ge.f32.partialorder %v1748, 0.0
      %vm1841 = vcmp.ge.f32.partialorder %v1753, 0.0
      %vm1842 = vcmp.ge.f32.partialorder %v1756, 0.0
      %vm1843 = vcmp.ge.f32.partialorder %v1761, 0.0
      %vm1844 = vcmp.ge.f32.partialorder %v1764, 0.0
      %vm1845 = vcmp.ge.f32.partialorder %v1769, 0.0
      %vm1846 = vcmp.ge.f32.partialorder %v1772, 0.0
      %v1847 = vmul.f32 %v1489, 0.01
      %v1848 = vmul.f32 %v1492, 0.01
      %v1849 = vmul.f32 %v1497, 0.01
      %v1850 = vmul.f32 %v1500, 0.01
      %v1851 = vmul.f32 %v1505, 0.01
      %v1852 = vmul.f32 %v1508, 0.01
      %v1853 = vmul.f32 %v1513, 0.01
      %v1854 = vmul.f32 %v1516, 0.01
      %v1855 = vmul.f32 %v1521, 0.01
      %v1856 = vmul.f32 %v1524, 0.01
      %v1857 = vmul.f32 %v1529, 0.01
      %v1858 = vmul.f32 %v1532, 0.01
      %v1859 = vmul.f32 %v1537, 0.01
      %v1860 = vmul.f32 %v1540, 0.01
      %v1861 = vmul.f32 %v1545, 0.01
      %v1862 = vmul.f32 %v1548, 0.01
      %v1863 = vmul.f32 %v1553, 0.01
      %v1864 = vmul.f32 %v1556, 0.01
      %v1865 = vmul.f32 %v1561, 0.01
      %v1866 = vmul.f32 %v1564, 0.01
      %v1867 = vmul.f32 %v1569, 0.01
      %v1868 = vmul.f32 %v1572, 0.01
      %v1869 = vmul.f32 %v1577, 0.01
      %v1870 = vmul.f32 %v1580, 0.01
      %v1871 = vmul.f32 %v1585, 0.01
      %v1872 = vmul.f32 %v1588, 0.01
      %v1873 = vmul.f32 %v1593, 0.01
      %v1874 = vmul.f32 %v1596, 0.01
      %v1875 = vmul.f32 %v1601, 0.01
      %v1876 = vmul.f32 %v1604, 0.01
      %v1877 = vmul.f32 %v1609, 0.01
      %v1878 = vmul.f32 %v1612, 0.01
      %v1879 = vmul.f32 %v1617, 0.01
      %v1880 = vmul.f32 %v1620, 0.01
      %v1881 = vmul.f32 %v1625, 0.01
      %v1882 = vmul.f32 %v1628, 0.01
      %v1883 = vmul.f32 %v1633, 0.01
      %v1884 = vmul.f32 %v1636, 0.01
      %v1885 = vmul.f32 %v1641, 0.01
      %v1886 = vmul.f32 %v1644, 0.01
      %v1887 = vmul.f32 %v1649, 0.01
      %v1888 = vmul.f32 %v1652, 0.01
      %v1889 = vmul.f32 %v1657, 0.01
      %v1890 = vmul.f32 %v1660, 0.01
      %v1891 = vmul.f32 %v1665, 0.01
      %v1892 = vmul.f32 %v1668, 0.01
      %v1893 = vmul.f32 %v1673, 0.01
      %v1894 = vmul.f32 %v1676, 0.01
      %v1895 = vmul.f32 %v1681, 0.01
      %v1896 = vmul.f32 %v1684, 0.01
      %v1897 = vmul.f32 %v1689, 0.01
      %v1898 = vmul.f32 %v1692, 0.01
      %v1899 = vmul.f32 %v1697, 0.01
      %v1900 = vmul.f32 %v1700, 0.01
      %v1901 = vmul.f32 %v1705, 0.01
      %v1902 = vmul.f32 %v1708, 0.01
      %v1903 = vmul.f32 %v1713, 0.01
      %v1904 = vmul.f32 %v1716, 0.01
      %v1905 = vmul.f32 %v1721, 0.01
      %v1906 = vmul.f32 %v1724, 0.01
      %v1907 = vmul.f32 %v1729, 0.01
      %v1908 = vmul.f32 %v1732, 0.01
      %v1909 = vmul.f32 %v1737, 0.01
      %v1910 = vmul.f32 %v1740, 0.01
      %v1911 = vmul.f32 %v1745, 0.01
      %v1912 = vmul.f32 %v1748, 0.01
      %v1913 = vmul.f32 %v1753, 0.01
      %v1914 = vmul.f32 %v1756, 0.01
      %v1915 = vmul.f32 %v1761, 0.01
      %v1916 = vmul.f32 %v1764, 0.01
      %v1917 = vmul.f32 %v1769, 0.01
      %v1918 = vmul.f32 %v1772, 0.01
      %v1919 = vsel %vm1775, %v1489, %v1847
      %v1920 = vsel %vm1776, %v1492, %v1848
      %v1921 = vsel %vm1777, %v1497, %v1849
      %v1922 = vsel %vm1778, %v1500, %v1850
      %v1923 = vsel %vm1779, %v1505, %v1851
      %v1924 = vsel %vm1780, %v1508, %v1852
      %v1925 = vsel %vm1781, %v1513, %v1853
      %v1926 = vsel %vm1782, %v1516, %v1854
      %v1927 = vsel %vm1783, %v1521, %v1855
      %v1928 = vsel %vm1784, %v1524, %v1856
      %v1929 = vsel %vm1785, %v1529, %v1857
      %v1930 = vsel %vm1786, %v1532, %v1858
      %v1931 = vsel %vm1787, %v1537, %v1859
      %v1932 = vsel %vm1788, %v1540, %v1860
      %v1933 = vsel %vm1789, %v1545, %v1861
      %v1934 = vsel %vm1790, %v1548, %v1862
      %v1935 = vsel %vm1791, %v1553, %v1863
      %v1936 = vsel %vm1792, %v1556, %v1864
      %v1937 = vsel %vm1793, %v1561, %v1865
      %v1938 = vsel %vm1794, %v1564, %v1866
      %v1939 = vsel %vm1795, %v1569, %v1867
      %v1940 = vsel %vm1796, %v1572, %v1868
      %v1941 = vsel %vm1797, %v1577, %v1869
      %v1942 = vsel %vm1798, %v1580, %v1870
      %v1943 = vsel %vm1799, %v1585, %v1871
      %v1944 = vsel %vm1800, %v1588, %v1872
      %v1945 = vsel %vm1801, %v1593, %v1873
      %v1946 = vsel %vm1802, %v1596, %v1874
      %v1947 = vsel %vm1803, %v1601, %v1875
      %v1948 = vsel %vm1804, %v1604, %v1876
      %v1949 = vsel %vm1805, %v1609, %v1877
      %v1950 = vsel %vm1806, %v1612, %v1878
      %v1951 = vsel %vm1807, %v1617, %v1879
      %v1952 = vsel %vm1808, %v1620, %v1880
      %v1953 = vsel %vm1809, %v1625, %v1881
      %v1954 = vsel %vm1810, %v1628, %v1882
      %v1955 = vsel %vm1811, %v1633, %v1883
      %v1956 = vsel %vm1812, %v1636, %v1884
      %v1957 = vsel %vm1813, %v1641, %v1885
      %v1958 = vsel %vm1814, %v1644, %v1886
      %v1959 = vsel %vm1815, %v1649, %v1887
      %v1960 = vsel %vm1816, %v1652, %v1888
      %v1961 = vsel %vm1817, %v1657, %v1889
      %v1962 = vsel %vm1818, %v1660, %v1890
      %v1963 = vsel %vm1819, %v1665, %v1891
      %v1964 = vsel %vm1820, %v1668, %v1892
      %v1965 = vsel %vm1821, %v1673, %v1893
      %v1966 = vsel %vm1822, %v1676, %v1894
      %v1967 = vsel %vm1823, %v1681, %v1895
      %v1968 = vsel %vm1824, %v1684, %v1896
      %v1969 = vsel %vm1825, %v1689, %v1897
      %v1970 = vsel %vm1826, %v1692, %v1898
      %v1971 = vsel %vm1827, %v1697, %v1899
      %v1972 = vsel %vm1828, %v1700, %v1900
      %v1973 = vsel %vm1829, %v1705, %v1901
      %v1974 = vsel %vm1830, %v1708, %v1902
      %v1975 = vsel %vm1831, %v1713, %v1903
      %v1976 = vsel %vm1832, %v1716, %v1904
      %v1977 = vsel %vm1833, %v1721, %v1905
      %v1978 = vsel %vm1834, %v1724, %v1906
      %v1979 = vsel %vm1835, %v1729, %v1907
      %v1980 = vsel %vm1836, %v1732, %v1908
      %v1981 = vsel %vm1837, %v1737, %v1909
      %v1982 = vsel %vm1838, %v1740, %v1910
      %v1983 = vsel %vm1839, %v1745, %v1911
      %v1984 = vsel %vm1840, %v1748, %v1912
      %v1985 = vsel %vm1841, %v1753, %v1913
      %v1986 = vsel %vm1842, %v1756, %v1914
      %v1987 = vsel %vm1843, %v1761, %v1915
      %v1988 = vsel %vm1844, %v1764, %v1916
      %v1989 = vsel %vm1845, %v1769, %v1917
      %v1990 = vsel %vm1846, %v1772, %v1918
      %1991 = vst [vmem:[%s175] sm:$0xff] %v1919
      %1992 = vst [vmem:[%s175 + $0x8] sm:$0xff] %v1920
      %1993 = vst [vmem:[%s175 + $0x10] sm:$0xff] %v1921
      %1994 = vst [vmem:[%s175 + $0x18] sm:$0xff] %v1922
      %1995 = vst [vmem:[%s175 + $0x20] sm:$0xff] %v1923
      %1996 = vst [vmem:[%s175 + $0x28] sm:$0xff] %v1924
      %1997 = vst [vmem:[%s175 + $0x30] sm:$0xff] %v1925
      %1998 = vst [vmem:[%s175 + $0x38] sm:$0xff] %v1926
      %1999 = vst [vmem:[%s175 + $0x40] sm:$0xff] %v1927
      %2000 = vst [vmem:[%s175 + $0x48] sm:$0xff] %v1928
      %2001 = vst [vmem:[%s175 + $0x50] sm:$0xff] %v1929
      %2002 = vst [vmem:[%s175 + $0x58] sm:$0xff] %v1930
      %2003 = vst [vmem:[%s175 + $0x60] sm:$0xff] %v1931
      %2004 = vst [vmem:[%s175 + $0x68] sm:$0xff] %v1932
      %2005 = vst [vmem:[%s175 + $0x70] sm:$0xff] %v1933
      %2006 = vst [vmem:[%s175 + $0x78] sm:$0xff] %v1934
      %2007 = vst [vmem:[%s175 + $0x80] sm:$0xff] %v1935
      %2008 = vst [vmem:[%s175 + $0x88] sm:$0xff] %v1936
      %2009 = vst [vmem:[%s175 + $0x90] sm:$0xff] %v1937
      %2010 = vst [vmem:[%s175 + $0x98] sm:$0xff] %v1938
      %2011 = vst [vmem:[%s175 + $0xa0] sm:$0xff] %v1939
      %2012 = vst [vmem:[%s175 + $0xa8] sm:$0xff] %v1940
      %2013 = vst [vmem:[%s175 + $0xb0] sm:$0xff] %v1941
      %2014 = vst [vmem:[%s175 + $0xb8] sm:$0xff] %v1942
      %2015 = vst [vmem:[%s175 + $0xc0] sm:$0xff] %v1943
      %2016 = vst [vmem:[%s175 + $0xc8] sm:$0xff] %v1944
      %2017 = vst [vmem:[%s175 + $0xd0] sm:$0xff] %v1945
      %2018 = vst [vmem:[%s175 + $0xd8] sm:$0xff] %v1946
      %2019 = vst [vmem:[%s175 + $0xe0] sm:$0xff] %v1947
      %2020 = vst [vmem:[%s175 + $0xe8] sm:$0xff] %v1948
      %2021 = vst [vmem:[%s175 + $0xf0] sm:$0xff] %v1949
      %2022 = vst [vmem:[%s175 + $0xf8] sm:$0xff] %v1950
      %2023 = vst [vmem:[%s175 + $0x100] sm:$0xff] %v1951
      %2024 = vst [vmem:[%s175 + $0x108] sm:$0xff] %v1952
      %2025 = vst [vmem:[%s175 + $0x110] sm:$0xff] %v1953
      %2026 = vst [vmem:[%s175 + $0x118] sm:$0xff] %v1954
      %2027 = vst [vmem:[%s175 + $0x120] sm:$0xff] %v1955
      %2028 = vst [vmem:[%s175 + $0x128] sm:$0xff] %v1956
      %2029 = vst [vmem:[%s175 + $0x130] sm:$0xff] %v1957
      %2030 = vst [vmem:[%s175 + $0x138] sm:$0xff] %v1958
      %2031 = vst [vmem:[%s175 + $0x140] sm:$0xff] %v1959
      %2032 = vst [vmem:[%s175 + $0x148] sm:$0xff] %v1960
      %2033 = vst [vmem:[%s175 + $0x150] sm:$0xff] %v1961
      %2034 = vst [vmem:[%s175 + $0x158] sm:$0xff] %v1962
      %2035 = vst [vmem:[%s175 + $0x160] sm:$0xff] %v1963
      %2036 = vst [vmem:[%s175 + $0x168] sm:$0xff] %v1964
      %2037 = vst [vmem:[%s175 + $0x170] sm:$0xff] %v1965
      %2038 = vst [vmem:[%s175 + $0x178] sm:$0xff] %v1966
      %2039 = vst [vmem:[%s175 + $0x180] sm:$0xff] %v1967
      %2040 = vst [vmem:[%s175 + $0x188] sm:$0xff] %v1968
      %2041 = vst [vmem:[%s175 + $0x190] sm:$0xff] %v1969
      %2042 = vst [vmem:[%s175 + $0x198] sm:$0xff] %v1970
      %2043 = vst [vmem:[%s175 + $0x1a0] sm:$0xff] %v1971
      %2044 = vst [vmem:[%s175 + $0x1a8] sm:$0xff] %v1972
      %2045 = vst [vmem:[%s175 + $0x1b0] sm:$0xff] %v1973
      %2046 = vst [vmem:[%s175 + $0x1b8] sm:$0xff] %v1974
      %2047 = vst [vmem:[%s175 + $0x1c0] sm:$0xff] %v1975
      %2048 = vst [vmem:[%s175 + $0x1c8] sm:$0xff] %v1976
      %2049 = vst [vmem:[%s175 + $0x1d0] sm:$0xff] %v1977
      %2050 = vst [vmem:[%s175 + $0x1d8] sm:$0xff] %v1978
      %2051 = vst [vmem:[%s175 + $0x1e0] sm:$0xff] %v1979
      %2052 = vst [vmem:[%s175 + $0x1e8] sm:$0xff] %v1980
      %2053 = vst [vmem:[%s175 + $0x1f0] sm:$0xff] %v1981
      %2054 = vst [vmem:[%s175 + $0x1f8] sm:$0xff] %v1982
      %2055 = vst [vmem:[%s175 + $0x200] sm:$0xff] %v1983
      %2056 = vst [vmem:[%s175 + $0x208] sm:$0xff] %v1984
      %2057 = vst [vmem:[%s175 + $0x210] sm:$0xff] %v1985
      %2058 = vst [vmem:[%s175 + $0x218] sm:$0xff] %v1986
      %2059 = vst [vmem:[%s175 + $0x220] sm:$0xff] %v1987
      %2060 = vst [vmem:[%s175 + $0x228] sm:$0xff] %v1988
      %2061 = vst [vmem:[%s175 + $0x230] sm:$0xff] %v1989
      %2062 = vst [vmem:[%s175 + $0x238] sm:$0xff] %v1990
      %s2063 = smul.u32 72, %s14
      %p2064 = scmp.lt.s32.totalorder %s2063, 143
      %s2065 = scalar_select %p2064, %s2063, 143
      %s2066 = smul.addr %s2065, 8
      %s2067 = scalar_lea.vmem %s3, %s2066
      // Predicated region
      $region33: #{other_net_forward.6} parent=31 // pred_check
        %p2068 = pneg %p100
      $region34: #{other_net_forward.6} parent=31 // pred_check_branch
        %2070 = sbr.rel (%p2068) target = $region36
      $region35: #{other_net_forward.6} parent=31 // pred_region
        %s2071 = smul.u32 72, %s14
      $region36: #{other_net_forward.6} parent=31 // pred_fallthru
        _
    $region32: #{other_net_forward.6} parent=5 // pred_fallthru
      _
    %p2072 = scmp.le.s32.totalorder 2, %s9
    // Predicated region
    $region37: #{other_net_forward.6} parent=5 // pred_check
      %p2073 = pneg %p2072
    $region38: #{other_net_forward.6} parent=5 // pred_check_branch
      %2075 = sbr.rel (%p2073) target = $region40
    $region39: #{other_net_forward.6} parent=5 // pred_region
      %s2076 = ssub.s32 %s9, 2
      // Predicated region
      $region41: #{other_net_forward.6} parent=39 // pred_check
        %p2077 = pneg %p106
      $region42: #{other_net_forward.6} parent=39 // pred_check_branch
        %2079 = sbr.rel (%p2077) target = $region44
      $region43: #{other_net_forward.6} parent=39 // pred_region
        %s2080 = smul.u32 72, %s15
        %p2081 = scmp.lt.s32.totalorder %s2080, 143
        %s2082 = scalar_select %p2081, %s2080, 143
        %s2083 = smul.addr %s2082, 8
        %s2084 = scalar_lea.vmem %s3, %s2083
      $region44: #{other_net_forward.6} parent=39 // pred_fallthru
        _
    $region40: #{other_net_forward.6} parent=5 // pred_fallthru
      _
  $region6: #{other_net_forward.6} parent=0 // loop_footer
    %s13 = sadd.s32 1, %s9
  $region7: #{other_net_forward.6} parent=0 // loop_footer_branch
    %8 = sbr.rel target = $region3
  $region8: #{other_net_forward.6} parent=0 // loop_exit
    _

// kernel: other_net_forward.7
$region0: #{other_net_forward.7}
  #allocation0 [shape = 'u32[]', space=smem, size = 0x4, offset = 0x4, fixed_abs, tag = 'smem constant byte address 0x4 - core index']
  #allocation1 [shape = 'u32[144,128]{1,0:T(1,128)}', space=vmem, size = 0x12000, scoped, tag = 'internal scratch']
  %s0 = inlined_call_operand.vmem [shape: bf16[200,540], index: 0, kind: input, shape index: {}]
  %s1 = inlined_call_operand.vmem [shape: bf16[540,128], index: 1, kind: input, shape index: {}]
  %s2 = inlined_call_operand.vmem [shape: f32[1,128], index: 2, kind: input, shape index: {}]
  %s3 = inlined_call_operand.vmem [shape: f32[200,128], index: 3, kind: output, shape index: {}]
  %s4 = sld [smem:[#allocation0]]
  $region22: #{other_net_forward.7} parent=0
    _
  %s6 = ssub.s32 1, %s4
  %s7 = scalar_select 0, %s6, %s4
  // Predicated region
  $region2: #{other_net_forward.7} parent=0 // pred_check
    _
  $region3: #{other_net_forward.7} parent=0 // pred_check_branch
    %9 = sbr.rel (0) target = $region5
  $region4: #{other_net_forward.7} parent=0 // pred_region
    _
  $region5: #{other_net_forward.7} parent=0 // pred_fallthru
    _
  // Predicated region
  $region6: #{other_net_forward.7} parent=0 // pred_check
    _
  $region7: #{other_net_forward.7} parent=0 // pred_check_branch
    %11 = sbr.rel (0) target = $region9
  $region8: #{other_net_forward.7} parent=0 // pred_region
    _
  $region9: #{other_net_forward.7} parent=0 // pred_fallthru
    _
  // Predicated region
  $region10: #{other_net_forward.7} parent=0 // pred_check
    _
  $region11: #{other_net_forward.7} parent=0 // pred_check_branch
    %13 = sbr.rel (0) target = $region13
  $region12: #{other_net_forward.7} parent=0 // pred_region
    _
  $region13: #{other_net_forward.7} parent=0 // pred_fallthru
    _
  %v15 = vld [vmem:[%s0] sm:$0xff]
  %v16 = vld [vmem:[%s0 + $0x8] sm:$0xff]
  %v17 = vld [vmem:[%s0 + $0x10] sm:$0xf]
  %v18 = vld [vmem:[%s0 + $0x14] sm:$0xff]
  %v19 = vld [vmem:[%s0 + $0x1c] sm:$0xff]
  %v20 = vld [vmem:[%s0 + $0x24] sm:$0xf]
  %v21 = vld [vmem:[%s0 + $0x28] sm:$0xff]
  %v22 = vld [vmem:[%s0 + $0x30] sm:$0xff]
  %v23 = vld [vmem:[%s0 + $0x38] sm:$0xf]
  %v24 = vld [vmem:[%s0 + $0x3c] sm:$0xff]
  %v25 = vld [vmem:[%s0 + $0x44] sm:$0xff]
  %v26 = vld [vmem:[%s0 + $0x4c] sm:$0xf]
  %v27 = vld [vmem:[%s0 + $0x50] sm:$0xff]
  %v28 = vld [vmem:[%s0 + $0x58] sm:$0xff]
  %v29 = vld [vmem:[%s0 + $0x60] sm:$0xf]
  %v30 = vld [vmem:[%s0 + $0x64] sm:$0xff]
  %v31 = vld [vmem:[%s0 + $0x6c] sm:$0xff]
  %v32 = vld [vmem:[%s0 + $0x74] sm:$0xf]
  %v33 = vld [vmem:[%s0 + $0x78] sm:$0xff]
  %v34 = vld [vmem:[%s0 + $0x80] sm:$0xff]
  %v35 = vld [vmem:[%s0 + $0x88] sm:$0xf]
  %v36 = vld [vmem:[%s0 + $0x8c] sm:$0xff]
  %v37 = vld [vmem:[%s0 + $0x94] sm:$0xff]
  %v38 = vld [vmem:[%s0 + $0x9c] sm:$0xf]
  %v39 = vld [vmem:[%s0 + $0xa0] sm:$0xff]
  %v40 = vld [vmem:[%s0 + $0xa8] sm:$0xff]
  %v41 = vld [vmem:[%s0 + $0xb0] sm:$0xf]
  %v42 = vld [vmem:[%s0 + $0xb4] sm:$0xff]
  %v43 = vld [vmem:[%s0 + $0xbc] sm:$0xff]
  %v44 = vld [vmem:[%s0 + $0xc4] sm:$0xf]
  %v45 = vld [vmem:[%s0 + $0xc8] sm:$0xff]
  %v46 = vld [vmem:[%s0 + $0xd0] sm:$0xff]
  %v47 = vld [vmem:[%s0 + $0xd8] sm:$0xf]
  %v48 = vld [vmem:[%s0 + $0xdc] sm:$0xff]
  %v49 = vld [vmem:[%s0 + $0xe4] sm:$0xff]
  %v50 = vld [vmem:[%s0 + $0xec] sm:$0xf]
  %v51 = vld [vmem:[%s0 + $0xf0] sm:$0xff]
  %v52 = vld [vmem:[%s0 + $0xf8] sm:$0xff]
  %v53 = vld [vmem:[%s0 + $0x100] sm:$0xf]
  %v54 = vld [vmem:[%s0 + $0x104] sm:$0xff]
  %v55 = vld [vmem:[%s0 + $0x10c] sm:$0xff]
  %v56 = vld [vmem:[%s0 + $0x114] sm:$0xf]
  %v57 = vld [vmem:[%s0 + $0x118] sm:$0xff]
  %v58 = vld [vmem:[%s0 + $0x120] sm:$0xff]
  %v59 = vld [vmem:[%s0 + $0x128] sm:$0xf]
  %v60 = vld [vmem:[%s0 + $0x12c] sm:$0xff]
  %v61 = vld [vmem:[%s0 + $0x134] sm:$0xff]
  %v62 = vld [vmem:[%s0 + $0x13c] sm:$0xf]
  %v63 = vld [vmem:[%s0 + $0x140] sm:$0xff]
  %v64 = vld [vmem:[%s0 + $0x148] sm:$0xff]
  %v65 = vld [vmem:[%s0 + $0x150] sm:$0xf]
  %v66 = vld [vmem:[%s0 + $0x154] sm:$0xff]
  %v67 = vld [vmem:[%s0 + $0x15c] sm:$0xff]
  %v68 = vld [vmem:[%s0 + $0x164] sm:$0xf]
  %v69 = vld [vmem:[%s0 + $0x168] sm:$0xff]
  %v70 = vld [vmem:[%s0 + $0x170] sm:$0xff]
  %v71 = vld [vmem:[%s0 + $0x178] sm:$0xf]
  %v72 = vld [vmem:[%s0 + $0x17c] sm:$0xff]
  %v73 = vld [vmem:[%s0 + $0x184] sm:$0xff]
  %v74 = vld [vmem:[%s0 + $0x18c] sm:$0xf]
  %v75 = vld [vmem:[%s0 + $0x190] sm:$0xff]
  %v76 = vld [vmem:[%s0 + $0x198] sm:$0xff]
  %v77 = vld [vmem:[%s0 + $0x1a0] sm:$0xf]
  %v78 = vld [vmem:[%s0 + $0x1a4] sm:$0xff]
  %v79 = vld [vmem:[%s0 + $0x1ac] sm:$0xff]
  %v80 = vld [vmem:[%s0 + $0x1b4] sm:$0xf]
  %v81 = vld [vmem:[%s0 + $0x1b8] sm:$0xff]
  %v82 = vld [vmem:[%s0 + $0x1c0] sm:$0xff]
  %v83 = vld [vmem:[%s0 + $0x1c8] sm:$0xf]
  %v84 = vld [vmem:[%s0 + $0x1cc] sm:$0xff]
  %v85 = vld [vmem:[%s0 + $0x1d4] sm:$0xff]
  %v86 = vld [vmem:[%s0 + $0x1dc] sm:$0xf]
  %v87 = vld [vmem:[%s0 + $0x1e0] sm:$0xff]
  %v88 = vld [vmem:[%s0 + $0x1e8] sm:$0xff]
  %v89 = vld [vmem:[%s0 + $0x1f0] sm:$0xf]
  %v90 = vld [vmem:[%s1] sm:$0xf]
  %v91 = vld [vmem:[%s1 + $0x4] sm:$0xf]
  %v92 = vld [vmem:[%s1 + $0x8] sm:$0xf]
  %v93 = vld [vmem:[%s1 + $0xc] sm:$0xf]
  %v94 = vld [vmem:[%s1 + $0x10] sm:$0xf]
  %v95 = vld [vmem:[%s1 + $0x14] sm:$0xf]
  %v96 = vld [vmem:[%s1 + $0x18] sm:$0xf]
  %v97 = vld [vmem:[%s1 + $0x1c] sm:$0xf]
  %v98 = vld [vmem:[%s1 + $0x20] sm:$0xf]
  %v99 = vld [vmem:[%s1 + $0x24] sm:$0xf]
  %v100 = vld [vmem:[%s1 + $0x28] sm:$0xf]
  %v101 = vld [vmem:[%s1 + $0x2c] sm:$0xf]
  %v102 = vld [vmem:[%s1 + $0x30] sm:$0xf]
  %v103 = vld [vmem:[%s1 + $0x34] sm:$0xf]
  %v104 = vld [vmem:[%s1 + $0x38] sm:$0xf]
  %v105 = vld [vmem:[%s1 + $0x3c] sm:$0xf]
  %v106 = vld [vmem:[%s1 + $0x40] sm:$0xf]
  %v107 = vld [vmem:[%s1 + $0x44] sm:$0xf]
  %v108 = vld [vmem:[%s1 + $0x48] sm:$0xf]
  %v109 = vld [vmem:[%s1 + $0x4c] sm:$0xf]
  %v110 = vld [vmem:[%s1 + $0x50] sm:$0xf]
  %v111 = vld [vmem:[%s1 + $0x54] sm:$0xf]
  %v112 = vld [vmem:[%s1 + $0x58] sm:$0xf]
  %v113 = vld [vmem:[%s1 + $0x5c] sm:$0xf]
  %v114 = vld [vmem:[%s1 + $0x60] sm:$0xf]
  %v115 = vld [vmem:[%s1 + $0x64] sm:$0xf]
  %v116 = vld [vmem:[%s1 + $0x68] sm:$0xf]
  %v117 = vld [vmem:[%s1 + $0x6c] sm:$0xf]
  %v118 = vld [vmem:[%s1 + $0x70] sm:$0xf]
  %v119 = vld [vmem:[%s1 + $0x74] sm:$0xf]
  %v120 = vld [vmem:[%s1 + $0x78] sm:$0xf]
  %v121 = vld [vmem:[%s1 + $0x7c] sm:$0xf]
  %v122 = vld [vmem:[%s1 + $0x80] sm:$0xf]
  %v123 = vld [vmem:[%s1 + $0x84] sm:$0xf]
  %v124 = vld [vmem:[%s1 + $0x88] sm:$0xf]
  %v125 = vld [vmem:[%s1 + $0x8c] sm:$0xf]
  %v126 = vld [vmem:[%s1 + $0x90] sm:$0xf]
  %v127 = vld [vmem:[%s1 + $0x94] sm:$0xf]
  %v128 = vld [vmem:[%s1 + $0x98] sm:$0xf]
  %v129 = vld [vmem:[%s1 + $0x9c] sm:$0xf]
  %v130 = vld [vmem:[%s1 + $0xa0] sm:$0xf]
  %v131 = vld [vmem:[%s1 + $0xa4] sm:$0xf]
  %v132 = vld [vmem:[%s1 + $0xa8] sm:$0xf]
  %v133 = vld [vmem:[%s1 + $0xac] sm:$0xf]
  %v134 = vld [vmem:[%s1 + $0xb0] sm:$0xf]
  %v135 = vld [vmem:[%s1 + $0xb4] sm:$0xf]
  %v136 = vld [vmem:[%s1 + $0xb8] sm:$0xf]
  %v137 = vld [vmem:[%s1 + $0xbc] sm:$0xf]
  %v138 = vld [vmem:[%s1 + $0xc0] sm:$0xf]
  %v139 = vld [vmem:[%s1 + $0xc4] sm:$0xf]
  %v140 = vld [vmem:[%s1 + $0xc8] sm:$0xf]
  %v141 = vld [vmem:[%s1 + $0xcc] sm:$0xf]
  %v142 = vld [vmem:[%s1 + $0xd0] sm:$0xf]
  %v143 = vld [vmem:[%s1 + $0xd4] sm:$0xf]
  %v144 = vld [vmem:[%s1 + $0xd8] sm:$0xf]
  %v145 = vld [vmem:[%s1 + $0xdc] sm:$0xf]
  %v146 = vld [vmem:[%s1 + $0xe0] sm:$0xf]
  %v147 = vld [vmem:[%s1 + $0xe4] sm:$0xf]
  %v148 = vld [vmem:[%s1 + $0xe8] sm:$0xf]
  %v149 = vld [vmem:[%s1 + $0xec] sm:$0xf]
  %v150 = vld [vmem:[%s1 + $0xf0] sm:$0xf]
  %v151 = vld [vmem:[%s1 + $0xf4] sm:$0xf]
  %v152 = vld [vmem:[%s1 + $0xf8] sm:$0xf]
  %v153 = vld [vmem:[%s1 + $0xfc] sm:$0xf]
  %v154 = vld [vmem:[%s1 + $0x100] sm:$0xf]
  %v155 = vld [vmem:[%s1 + $0x104] sm:$0xf]
  %v156 = vld [vmem:[%s1 + $0x108] sm:$0xf]
  %v157 = vld [vmem:[%s1 + $0x10c] sm:$0x3]
  %v158 = vld [vmem:[%s2] sm:$0x1]
  %v160 = vlaneseq
  %v161 = vshrl.u32 %v160, 7
  %v162 = vsub.s32 0, %v161
  %v163 = vrot.slane %v158, %v162
  %v240 = vunpack.c.l.b16 %v15
  %v241 = vunpack.c.h.b16 %v15
  %v242 = vunpack.c.l.b16 %v16
  %v243 = vunpack.c.h.b16 %v16
  %v244 = vunpack.c.l.b16 %v17
  %v245 = vunpack.c.l.b16 %v18
  %v246 = vunpack.c.h.b16 %v18
  %v247 = vunpack.c.l.b16 %v19
  %v248 = vunpack.c.h.b16 %v19
  %v249 = vunpack.c.l.b16 %v20
  %v250 = vunpack.c.l.b16 %v21
  %v251 = vunpack.c.h.b16 %v21
  %v252 = vunpack.c.l.b16 %v22
  %v253 = vunpack.c.h.b16 %v22
  %v254 = vunpack.c.l.b16 %v23
  %v255 = vunpack.c.l.b16 %v24
  %v256 = vunpack.c.h.b16 %v24
  %v257 = vunpack.c.l.b16 %v25
  %v258 = vunpack.c.h.b16 %v25
  %v259 = vunpack.c.l.b16 %v26
  %v260 = vunpack.c.l.b16 %v27
  %v261 = vunpack.c.h.b16 %v27
  %v262 = vunpack.c.l.b16 %v28
  %v263 = vunpack.c.h.b16 %v28
  %v264 = vunpack.c.l.b16 %v29
  %v265 = vunpack.c.l.b16 %v30
  %v266 = vunpack.c.h.b16 %v30
  %v267 = vunpack.c.l.b16 %v31
  %v268 = vunpack.c.h.b16 %v31
  %v269 = vunpack.c.l.b16 %v32
  %v270 = vunpack.c.l.b16 %v33
  %v271 = vunpack.c.h.b16 %v33
  %v272 = vunpack.c.l.b16 %v34
  %v273 = vunpack.c.h.b16 %v34
  %v274 = vunpack.c.l.b16 %v35
  %v275 = vunpack.c.l.b16 %v36
  %v276 = vunpack.c.h.b16 %v36
  %v277 = vunpack.c.l.b16 %v37
  %v278 = vunpack.c.h.b16 %v37
  %v279 = vunpack.c.l.b16 %v38
  %v280 = vunpack.c.l.b16 %v39
  %v281 = vunpack.c.h.b16 %v39
  %v282 = vunpack.c.l.b16 %v40
  %v283 = vunpack.c.h.b16 %v40
  %v284 = vunpack.c.l.b16 %v41
  %v285 = vunpack.c.l.b16 %v42
  %v286 = vunpack.c.h.b16 %v42
  %v287 = vunpack.c.l.b16 %v43
  %v288 = vunpack.c.h.b16 %v43
  %v289 = vunpack.c.l.b16 %v44
  %v290 = vunpack.c.l.b16 %v45
  %v291 = vunpack.c.h.b16 %v45
  %v292 = vunpack.c.l.b16 %v46
  %v293 = vunpack.c.h.b16 %v46
  %v294 = vunpack.c.l.b16 %v47
  %v295 = vunpack.c.l.b16 %v48
  %v296 = vunpack.c.h.b16 %v48
  %v297 = vunpack.c.l.b16 %v49
  %v298 = vunpack.c.h.b16 %v49
  %v299 = vunpack.c.l.b16 %v50
  %v300 = vunpack.c.l.b16 %v51
  %v301 = vunpack.c.h.b16 %v51
  %v302 = vunpack.c.l.b16 %v52
  %v303 = vunpack.c.h.b16 %v52
  %v304 = vunpack.c.l.b16 %v53
  %v305 = vunpack.c.l.b16 %v54
  %v306 = vunpack.c.h.b16 %v54
  %v307 = vunpack.c.l.b16 %v55
  %v308 = vunpack.c.h.b16 %v55
  %v309 = vunpack.c.l.b16 %v56
  %v310 = vunpack.c.l.b16 %v57
  %v311 = vunpack.c.h.b16 %v57
  %v312 = vunpack.c.l.b16 %v58
  %v313 = vunpack.c.h.b16 %v58
  %v314 = vunpack.c.l.b16 %v59
  %v315 = vunpack.c.l.b16 %v60
  %v316 = vunpack.c.h.b16 %v60
  %v317 = vunpack.c.l.b16 %v61
  %v318 = vunpack.c.h.b16 %v61
  %v319 = vunpack.c.l.b16 %v62
  %v320 = vunpack.c.l.b16 %v63
  %v321 = vunpack.c.h.b16 %v63
  %v322 = vunpack.c.l.b16 %v64
  %v323 = vunpack.c.h.b16 %v64
  %v324 = vunpack.c.l.b16 %v65
  %v325 = vunpack.c.l.b16 %v66
  %v326 = vunpack.c.h.b16 %v66
  %v327 = vunpack.c.l.b16 %v67
  %v328 = vunpack.c.h.b16 %v67
  %v329 = vunpack.c.l.b16 %v68
  %v330 = vunpack.c.l.b16 %v69
  %v331 = vunpack.c.h.b16 %v69
  %v332 = vunpack.c.l.b16 %v70
  %v333 = vunpack.c.h.b16 %v70
  %v334 = vunpack.c.l.b16 %v71
  %v335 = vunpack.c.l.b16 %v72
  %v336 = vunpack.c.h.b16 %v72
  %v337 = vunpack.c.l.b16 %v73
  %v338 = vunpack.c.h.b16 %v73
  %v339 = vunpack.c.l.b16 %v74
  %v340 = vunpack.c.l.b16 %v75
  %v341 = vunpack.c.h.b16 %v75
  %v342 = vunpack.c.l.b16 %v76
  %v343 = vunpack.c.h.b16 %v76
  %v344 = vunpack.c.l.b16 %v77
  %v345 = vunpack.c.l.b16 %v78
  %v346 = vunpack.c.h.b16 %v78
  %v347 = vunpack.c.l.b16 %v79
  %v348 = vunpack.c.h.b16 %v79
  %v349 = vunpack.c.l.b16 %v80
  %v350 = vunpack.c.l.b16 %v81
  %v351 = vunpack.c.h.b16 %v81
  %v352 = vunpack.c.l.b16 %v82
  %v353 = vunpack.c.h.b16 %v82
  %v354 = vunpack.c.l.b16 %v83
  %v355 = vunpack.c.l.b16 %v84
  %v356 = vunpack.c.h.b16 %v84
  %v357 = vunpack.c.l.b16 %v85
  %v358 = vunpack.c.h.b16 %v85
  %v359 = vunpack.c.l.b16 %v86
  %v360 = vunpack.c.l.b16 %v87
  %v361 = vunpack.c.h.b16 %v87
  %v362 = vunpack.c.l.b16 %v88
  %v363 = vunpack.c.h.b16 %v88
  %v364 = vunpack.c.l.b16 %v89
  %v365 = vpack.c.b16 %v245, %v240
  %v366 = vpack.c.b16 %v246, %v241
  %v367 = vpack.c.b16 %v247, %v242
  %v368 = vpack.c.b16 %v248, %v243
  %v369 = vpack.c.b16 %v249, %v244
  %v370 = vpack.c.b16 %v255, %v250
  %v371 = vpack.c.b16 %v256, %v251
  %v372 = vpack.c.b16 %v257, %v252
  %v373 = vpack.c.b16 %v258, %v253
  %v374 = vpack.c.b16 %v259, %v254
  %v375 = vpack.c.b16 %v265, %v260
  %v376 = vpack.c.b16 %v266, %v261
  %v377 = vpack.c.b16 %v267, %v262
  %v378 = vpack.c.b16 %v268, %v263
  %v379 = vpack.c.b16 %v269, %v264
  %v380 = vpack.c.b16 %v275, %v270
  %v381 = vpack.c.b16 %v276, %v271
  %v382 = vpack.c.b16 %v277, %v272
  %v383 = vpack.c.b16 %v278, %v273
  %v384 = vpack.c.b16 %v279, %v274
  %v385 = vpack.c.b16 %v285, %v280
  %v386 = vpack.c.b16 %v286, %v281
  %v387 = vpack.c.b16 %v287, %v282
  %v388 = vpack.c.b16 %v288, %v283
  %v389 = vpack.c.b16 %v289, %v284
  %v390 = vpack.c.b16 %v295, %v290
  %v391 = vpack.c.b16 %v296, %v291
  %v392 = vpack.c.b16 %v297, %v292
  %v393 = vpack.c.b16 %v298, %v293
  %v394 = vpack.c.b16 %v299, %v294
  %v395 = vpack.c.b16 %v305, %v300
  %v396 = vpack.c.b16 %v306, %v301
  %v397 = vpack.c.b16 %v307, %v302
  %v398 = vpack.c.b16 %v308, %v303
  %v399 = vpack.c.b16 %v309, %v304
  %v400 = vpack.c.b16 %v315, %v310
  %v401 = vpack.c.b16 %v316, %v311
  %v402 = vpack.c.b16 %v317, %v312
  %v403 = vpack.c.b16 %v318, %v313
  %v404 = vpack.c.b16 %v319, %v314
  %v405 = vpack.c.b16 %v325, %v320
  %v406 = vpack.c.b16 %v326, %v321
  %v407 = vpack.c.b16 %v327, %v322
  %v408 = vpack.c.b16 %v328, %v323
  %v409 = vpack.c.b16 %v329, %v324
  %v410 = vpack.c.b16 %v335, %v330
  %v411 = vpack.c.b16 %v336, %v331
  %v412 = vpack.c.b16 %v337, %v332
  %v413 = vpack.c.b16 %v338, %v333
  %v414 = vpack.c.b16 %v339, %v334
  %v415 = vpack.c.b16 %v345, %v340
  %v416 = vpack.c.b16 %v346, %v341
  %v417 = vpack.c.b16 %v347, %v342
  %v418 = vpack.c.b16 %v348, %v343
  %v419 = vpack.c.b16 %v349, %v344
  %v420 = vpack.c.b16 %v355, %v350
  %v421 = vpack.c.b16 %v356, %v351
  %v422 = vpack.c.b16 %v357, %v352
  %v423 = vpack.c.b16 %v358, %v353
  %v424 = vpack.c.b16 %v359, %v354
  %v425 = vpack.c.b16 %v360, %v360
  %v426 = vpack.c.b16 %v361, %v361
  %v427 = vpack.c.b16 %v362, %v362
  %v428 = vpack.c.b16 %v363, %v363
  %v429 = vpack.c.b16 %v364, %v364
  %v550 = vunpack.c.l.b16 %v90
  %v551 = vunpack.c.l.b16 %v91
  %v552 = vunpack.c.l.b16 %v92
  %v553 = vunpack.c.l.b16 %v93
  %v554 = vunpack.c.l.b16 %v94
  %v555 = vunpack.c.l.b16 %v95
  %v556 = vunpack.c.l.b16 %v96
  %v557 = vunpack.c.l.b16 %v97
  %v558 = vunpack.c.l.b16 %v98
  %v559 = vunpack.c.l.b16 %v99
  %v560 = vunpack.c.l.b16 %v100
  %v561 = vunpack.c.l.b16 %v101
  %v562 = vunpack.c.l.b16 %v102
  %v563 = vunpack.c.l.b16 %v103
  %v564 = vunpack.c.l.b16 %v104
  %v565 = vunpack.c.l.b16 %v105
  %v566 = vunpack.c.l.b16 %v106
  %v567 = vunpack.c.l.b16 %v107
  %v568 = vunpack.c.l.b16 %v108
  %v569 = vunpack.c.l.b16 %v109
  %v570 = vunpack.c.l.b16 %v110
  %v571 = vunpack.c.l.b16 %v111
  %v572 = vunpack.c.l.b16 %v112
  %v573 = vunpack.c.l.b16 %v113
  %v574 = vunpack.c.l.b16 %v114
  %v575 = vunpack.c.l.b16 %v115
  %v576 = vunpack.c.l.b16 %v116
  %v577 = vunpack.c.l.b16 %v117
  %v578 = vunpack.c.l.b16 %v118
  %v579 = vunpack.c.l.b16 %v119
  %v580 = vunpack.c.l.b16 %v120
  %v581 = vunpack.c.l.b16 %v121
  %v582 = vunpack.c.l.b16 %v122
  %v583 = vunpack.c.l.b16 %v123
  %v584 = vunpack.c.l.b16 %v124
  %v585 = vunpack.c.l.b16 %v125
  %v586 = vunpack.c.l.b16 %v126
  %v587 = vunpack.c.l.b16 %v127
  %v588 = vunpack.c.l.b16 %v128
  %v589 = vunpack.c.l.b16 %v129
  %v590 = vunpack.c.l.b16 %v130
  %v591 = vunpack.c.l.b16 %v131
  %v592 = vunpack.c.l.b16 %v132
  %v593 = vunpack.c.l.b16 %v133
  %v594 = vunpack.c.l.b16 %v134
  %v595 = vunpack.c.l.b16 %v135
  %v596 = vunpack.c.l.b16 %v136
  %v597 = vunpack.c.l.b16 %v137
  %v598 = vunpack.c.l.b16 %v138
  %v599 = vunpack.c.l.b16 %v139
  %v600 = vunpack.c.l.b16 %v140
  %v601 = vunpack.c.l.b16 %v141
  %v602 = vunpack.c.l.b16 %v142
  %v603 = vunpack.c.l.b16 %v143
  %v604 = vunpack.c.l.b16 %v144
  %v605 = vunpack.c.l.b16 %v145
  %v606 = vunpack.c.l.b16 %v146
  %v607 = vunpack.c.l.b16 %v147
  %v608 = vunpack.c.l.b16 %v148
  %v609 = vunpack.c.l.b16 %v149
  %v610 = vunpack.c.l.b16 %v150
  %v611 = vunpack.c.l.b16 %v151
  %v612 = vunpack.c.l.b16 %v152
  %v613 = vunpack.c.l.b16 %v153
  %v614 = vunpack.c.l.b16 %v154
  %v615 = vunpack.c.l.b16 %v155
  %v616 = vunpack.c.l.b16 %v156
  %v617 = vunpack.c.l.b16 %v157
  %v618 = vpack.c.b16 %v551, %v550
  %v619 = vpack.c.b16 %v553, %v552
  %v620 = vpack.c.b16 %v555, %v554
  %v621 = vpack.c.b16 %v557, %v556
  %v622 = vpack.c.b16 %v559, %v558
  %v623 = vpack.c.b16 %v561, %v560
  %v624 = vpack.c.b16 %v563, %v562
  %v625 = vpack.c.b16 %v565, %v564
  %v626 = vpack.c.b16 %v567, %v566
  %v627 = vpack.c.b16 %v569, %v568
  %v628 = vpack.c.b16 %v571, %v570
  %v629 = vpack.c.b16 %v573, %v572
  %v630 = vpack.c.b16 %v575, %v574
  %v631 = vpack.c.b16 %v577, %v576
  %v632 = vpack.c.b16 %v579, %v578
  %v633 = vpack.c.b16 %v581, %v580
  %v634 = vpack.c.b16 %v583, %v582
  %v635 = vpack.c.b16 %v585, %v584
  %v636 = vpack.c.b16 %v587, %v586
  %v637 = vpack.c.b16 %v589, %v588
  %v638 = vpack.c.b16 %v591, %v590
  %v639 = vpack.c.b16 %v593, %v592
  %v640 = vpack.c.b16 %v595, %v594
  %v641 = vpack.c.b16 %v597, %v596
  %v642 = vpack.c.b16 %v599, %v598
  %v643 = vpack.c.b16 %v601, %v600
  %v644 = vpack.c.b16 %v603, %v602
  %v645 = vpack.c.b16 %v605, %v604
  %v646 = vpack.c.b16 %v607, %v606
  %v647 = vpack.c.b16 %v609, %v608
  %v648 = vpack.c.b16 %v611, %v610
  %v649 = vpack.c.b16 %v613, %v612
  %v650 = vpack.c.b16 %v615, %v614
  %v651 = vpack.c.b16 %v617, %v616
  %vm685 = vcmask 228352
  %v687 = vsel %vm685, %v369, 0
  %v690 = vsel %vm685, %v374, 0
  %v693 = vsel %vm685, %v379, 0
  %v696 = vsel %vm685, %v384, 0
  %v699 = vsel %vm685, %v389, 0
  %v702 = vsel %vm685, %v394, 0
  %v705 = vsel %vm685, %v399, 0
  %v708 = vsel %vm685, %v404, 0
  %v711 = vsel %vm685, %v409, 0
  %v714 = vsel %vm685, %v414, 0
  %v717 = vsel %vm685, %v419, 0
  %v720 = vsel %vm685, %v424, 0
  %v723 = vsel %vm685, %v429, 0
  %vm725 = vcmask 1045504
  %v727 = vsel %vm725, %v651, 0
  %729 = vmatprep.subr.bf16.mxu0 0
  %730 = vmatpush1.bf16.msra.mxu0 %v618
  %731 = vmatprep.subr.bf16.mxu0 0
  %732 = vmatpush1.bf16.msra.mxu0 %v619
  %733 = vmatprep.subr.bf16.mxu0 0
  %734 = vmatpush1.bf16.msra.mxu0 %v620
  %735 = vmatprep.subr.bf16.mxu0 0
  %736 = vmatpush1.bf16.msra.mxu0 %v621
  %737 = vmatprep.subr.bf16.mxu0 0
  %738 = vmatpush1.bf16.msra.mxu0 %v622
  %739 = vmatprep.subr.bf16.mxu0 0
  %740 = vmatpush1.bf16.msra.mxu0 %v623
  %741 = vmatprep.subr.bf16.mxu0 0
  %742 = vmatpush1.bf16.msra.mxu0 %v624
  %743 = vmatprep.subr.bf16.mxu0 0
  %744 = vmatpush1.bf16.msra.mxu0 %v625
  %745 = vmatprep.subr.bf16.mxu0 0
  %746 = vmatpush1.bf16.msra.mxu0 %v626
  %747 = vmatprep.subr.bf16.mxu0 0
  %748 = vmatpush1.bf16.msra.mxu0 %v627
  %749 = vmatprep.subr.bf16.mxu0 0
  %750 = vmatpush1.bf16.msra.mxu0 %v628
  %751 = vmatprep.subr.bf16.mxu0 0
  %752 = vmatpush1.bf16.msra.mxu0 %v629
  %753 = vmatprep.subr.bf16.mxu0 0
  %754 = vmatpush1.bf16.msra.mxu0 %v630
  %755 = vmatprep.subr.bf16.mxu0 0
  %756 = vmatpush1.bf16.msra.mxu0 %v631
  %757 = vmatprep.subr.bf16.mxu0 0
  %758 = vmatpush1.bf16.msra.mxu0 %v632
  %759 = vmatprep.subr.bf16.mxu0 0
  %760 = vmatpush1.bf16.msra.mxu0 %v633
  %761 = vmatprep.mubr.bf16.mxu0 %v366
  %762 = vmatmul.mubr.bf16.gmra.mrb[0].mxu0 %v365
  %v763 = vpop.f32.mrb[0].mxu0
  %v764 = vadd.f32 %v163, %v763
  %v765 = vpop.f32.mrb[0].mxu0
  %v766 = vpop.f32.mrb[0].mxu0
  %v767 = vadd.f32 %v163, %v766
  %v768 = vpop.f32.mrb[0].mxu0
  %769 = vmatprep.mubr.bf16.mxu0 %v371
  %770 = vmatmul.mubr.bf16.gmra.mrb[0].mxu0 %v370
  %v771 = vpop.f32.mrb[0].mxu0
  %v772 = vadd.f32 %v163, %v771
  %v773 = vpop.f32.mrb[0].mxu0
  %v774 = vpop.f32.mrb[0].mxu0
  %v775 = vadd.f32 %v163, %v774
  %v776 = vpop.f32.mrb[0].mxu0
  %777 = vmatprep.mubr.bf16.mxu0 %v376
  %778 = vmatmul.mubr.bf16.gmra.mrb[0].mxu0 %v375
  %v779 = vpop.f32.mrb[0].mxu0
  %v780 = vadd.f32 %v163, %v779
  %v781 = vpop.f32.mrb[0].mxu0
  %v782 = vpop.f32.mrb[0].mxu0
  %v783 = vadd.f32 %v163, %v782
  %v784 = vpop.f32.mrb[0].mxu0
  %785 = vmatprep.mubr.bf16.mxu0 %v381
  %786 = vmatmul.mubr.bf16.gmra.mrb[0].mxu0 %v380
  %v787 = vpop.f32.mrb[0].mxu0
  %v788 = vadd.f32 %v163, %v787
  %v789 = vpop.f32.mrb[0].mxu0
  %v790 = vpop.f32.mrb[0].mxu0
  %v791 = vadd.f32 %v163, %v790
  %v792 = vpop.f32.mrb[0].mxu0
  %793 = vmatprep.mubr.bf16.mxu0 %v386
  %794 = vmatmul.mubr.bf16.gmra.mrb[0].mxu0 %v385
  %v795 = vpop.f32.mrb[0].mxu0
  %v796 = vadd.f32 %v163, %v795
  %v797 = vpop.f32.mrb[0].mxu0
  %v798 = vpop.f32.mrb[0].mxu0
  %v799 = vadd.f32 %v163, %v798
  %v800 = vpop.f32.mrb[0].mxu0
  %801 = vmatprep.mubr.bf16.mxu0 %v391
  %802 = vmatmul.mubr.bf16.gmra.mrb[0].mxu0 %v390
  %v803 = vpop.f32.mrb[0].mxu0
  %v804 = vadd.f32 %v163, %v803
  %v805 = vpop.f32.mrb[0].mxu0
  %v806 = vpop.f32.mrb[0].mxu0
  %v807 = vadd.f32 %v163, %v806
  %v808 = vpop.f32.mrb[0].mxu0
  %809 = vmatprep.mubr.bf16.mxu0 %v396
  %810 = vmatmul.mubr.bf16.gmra.mrb[0].mxu0 %v395
  %v811 = vpop.f32.mrb[0].mxu0
  %v812 = vadd.f32 %v163, %v811
  %v813 = vpop.f32.mrb[0].mxu0
  %v814 = vpop.f32.mrb[0].mxu0
  %v815 = vadd.f32 %v163, %v814
  %v816 = vpop.f32.mrb[0].mxu0
  %817 = vmatprep.mubr.bf16.mxu0 %v401
  %818 = vmatmul.mubr.bf16.gmra.mrb[0].mxu0 %v400
  %v819 = vpop.f32.mrb[0].mxu0
  %v820 = vadd.f32 %v163, %v819
  %v821 = vpop.f32.mrb[0].mxu0
  %v822 = vpop.f32.mrb[0].mxu0
  %v823 = vadd.f32 %v163, %v822
  %v824 = vpop.f32.mrb[0].mxu0
  %825 = vmatprep.mubr.bf16.mxu0 %v406
  %826 = vmatmul.mubr.bf16.gmra.mrb[0].mxu0 %v405
  %v827 = vpop.f32.mrb[0].mxu0
  %v828 = vadd.f32 %v163, %v827
  %v829 = vpop.f32.mrb[0].mxu0
  %v830 = vpop.f32.mrb[0].mxu0
  %v831 = vadd.f32 %v163, %v830
  %v832 = vpop.f32.mrb[0].mxu0
  %833 = vmatprep.mubr.bf16.mxu0 %v411
  %834 = vmatmul.mubr.bf16.gmra.mrb[0].mxu0 %v410
  %v835 = vpop.f32.mrb[0].mxu0
  %v836 = vadd.f32 %v163, %v835
  %v837 = vpop.f32.mrb[0].mxu0
  %v838 = vpop.f32.mrb[0].mxu0
  %v839 = vadd.f32 %v163, %v838
  %v840 = vpop.f32.mrb[0].mxu0
  %841 = vmatprep.mubr.bf16.mxu0 %v416
  %842 = vmatmul.mubr.bf16.gmra.mrb[0].mxu0 %v415
  %v843 = vpop.f32.mrb[0].mxu0
  %v844 = vadd.f32 %v163, %v843
  %v845 = vpop.f32.mrb[0].mxu0
  %v846 = vpop.f32.mrb[0].mxu0
  %v847 = vadd.f32 %v163, %v846
  %v848 = vpop.f32.mrb[0].mxu0
  %849 = vmatprep.mubr.bf16.mxu0 %v421
  %850 = vmatmul.mubr.bf16.gmra.mrb[0].mxu0 %v420
  %v851 = vpop.f32.mrb[0].mxu0
  %v852 = vadd.f32 %v163, %v851
  %v853 = vpop.f32.mrb[0].mxu0
  %v854 = vpop.f32.mrb[0].mxu0
  %v855 = vadd.f32 %v163, %v854
  %v856 = vpop.f32.mrb[0].mxu0
  %857 = vmatprep.mubr.bf16.mxu0 %v426
  %858 = vmatmul.mubr.bf16.gmra.mrb[0].mxu0 %v425
  %v859 = vpop.f32.mrb[0].mxu0
  %v860 = vadd.f32 %v163, %v859
  %v861 = vpop.f32.mrb[0].mxu0
  %v862 = vpop.f32.mrb[0].mxu0
  %v863 = vpop.f32.mrb[0].mxu0
  %864 = vdwg.mxu0
  %865 = vmatprep.subr.bf16.mxu0 0
  %866 = vmatpush1.bf16.msra.mxu0 %v634
  %867 = vmatprep.subr.bf16.mxu0 0
  %868 = vmatpush1.bf16.msra.mxu0 %v635
  %869 = vmatprep.subr.bf16.mxu0 0
  %870 = vmatpush1.bf16.msra.mxu0 %v636
  %871 = vmatprep.subr.bf16.mxu0 0
  %872 = vmatpush1.bf16.msra.mxu0 %v637
  %873 = vmatprep.subr.bf16.mxu0 0
  %874 = vmatpush1.bf16.msra.mxu0 %v638
  %875 = vmatprep.subr.bf16.mxu0 0
  %876 = vmatpush1.bf16.msra.mxu0 %v639
  %877 = vmatprep.subr.bf16.mxu0 0
  %878 = vmatpush1.bf16.msra.mxu0 %v640
  %879 = vmatprep.subr.bf16.mxu0 0
  %880 = vmatpush1.bf16.msra.mxu0 %v641
  %881 = vmatprep.subr.bf16.mxu0 0
  %882 = vmatpush1.bf16.msra.mxu0 %v642
  %883 = vmatprep.subr.bf16.mxu0 0
  %884 = vmatpush1.bf16.msra.mxu0 %v643
  %885 = vmatprep.subr.bf16.mxu0 0
  %886 = vmatpush1.bf16.msra.mxu0 %v644
  %887 = vmatprep.subr.bf16.mxu0 0
  %888 = vmatpush1.bf16.msra.mxu0 %v645
  %889 = vmatprep.subr.bf16.mxu0 0
  %890 = vmatpush1.bf16.msra.mxu0 %v646
  %891 = vmatprep.subr.bf16.mxu0 0
  %892 = vmatpush1.bf16.msra.mxu0 %v647
  %893 = vmatprep.subr.bf16.mxu0 0
  %894 = vmatpush1.bf16.msra.mxu0 %v648
  %895 = vmatprep.subr.bf16.mxu0 0
  %896 = vmatpush1.bf16.msra.mxu0 %v649
  %897 = vmatprep.mubr.bf16.mxu0 %v368
  %898 = vmatmul.mubr.bf16.gmra.mrb[0].mxu0 %v367
  %v899 = vpop.f32.mrb[0].mxu0
  %v900 = vadd.f32 %v764, %v899
  %v901 = vpop.f32.mrb[0].mxu0
  %v902 = vpop.f32.mrb[0].mxu0
  %v903 = vadd.f32 %v767, %v902
  %v904 = vpop.f32.mrb[0].mxu0
  %905 = vmatprep.mubr.bf16.mxu0 %v373
  %906 = vmatmul.mubr.bf16.gmra.mrb[0].mxu0 %v372
  %v907 = vpop.f32.mrb[0].mxu0
  %v908 = vadd.f32 %v772, %v907
  %v909 = vpop.f32.mrb[0].mxu0
  %v910 = vpop.f32.mrb[0].mxu0
  %v911 = vadd.f32 %v775, %v910
  %v912 = vpop.f32.mrb[0].mxu0
  %913 = vmatprep.mubr.bf16.mxu0 %v378
  %914 = vmatmul.mubr.bf16.gmra.mrb[0].mxu0 %v377
  %v915 = vpop.f32.mrb[0].mxu0
  %v916 = vadd.f32 %v780, %v915
  %v917 = vpop.f32.mrb[0].mxu0
  %v918 = vpop.f32.mrb[0].mxu0
  %v919 = vadd.f32 %v783, %v918
  %v920 = vpop.f32.mrb[0].mxu0
  %921 = vmatprep.mubr.bf16.mxu0 %v383
  %922 = vmatmul.mubr.bf16.gmra.mrb[0].mxu0 %v382
  %v923 = vpop.f32.mrb[0].mxu0
  %v924 = vadd.f32 %v788, %v923
  %v925 = vpop.f32.mrb[0].mxu0
  %v926 = vpop.f32.mrb[0].mxu0
  %v927 = vadd.f32 %v791, %v926
  %v928 = vpop.f32.mrb[0].mxu0
  %929 = vmatprep.mubr.bf16.mxu0 %v388
  %930 = vmatmul.mubr.bf16.gmra.mrb[0].mxu0 %v387
  %v931 = vpop.f32.mrb[0].mxu0
  %v932 = vadd.f32 %v796, %v931
  %v933 = vpop.f32.mrb[0].mxu0
  %v934 = vpop.f32.mrb[0].mxu0
  %v935 = vadd.f32 %v799, %v934
  %v936 = vpop.f32.mrb[0].mxu0
  %937 = vmatprep.mubr.bf16.mxu0 %v393
  %938 = vmatmul.mubr.bf16.gmra.mrb[0].mxu0 %v392
  %v939 = vpop.f32.mrb[0].mxu0
  %v940 = vadd.f32 %v804, %v939
  %v941 = vpop.f32.mrb[0].mxu0
  %v942 = vpop.f32.mrb[0].mxu0
  %v943 = vadd.f32 %v807, %v942
  %v944 = vpop.f32.mrb[0].mxu0
  %945 = vmatprep.mubr.bf16.mxu0 %v398
  %946 = vmatmul.mubr.bf16.gmra.mrb[0].mxu0 %v397
  %v947 = vpop.f32.mrb[0].mxu0
  %v948 = vadd.f32 %v812, %v947
  %v949 = vpop.f32.mrb[0].mxu0
  %v950 = vpop.f32.mrb[0].mxu0
  %v951 = vadd.f32 %v815, %v950
  %v952 = vpop.f32.mrb[0].mxu0
  %953 = vmatprep.mubr.bf16.mxu0 %v403
  %954 = vmatmul.mubr.bf16.gmra.mrb[0].mxu0 %v402
  %v955 = vpop.f32.mrb[0].mxu0
  %v956 = vadd.f32 %v820, %v955
  %v957 = vpop.f32.mrb[0].mxu0
  %v958 = vpop.f32.mrb[0].mxu0
  %v959 = vadd.f32 %v823, %v958
  %v960 = vpop.f32.mrb[0].mxu0
  %961 = vmatprep.mubr.bf16.mxu0 %v408
  %962 = vmatmul.mubr.bf16.gmra.mrb[0].mxu0 %v407
  %v963 = vpop.f32.mrb[0].mxu0
  %v964 = vadd.f32 %v828, %v963
  %v965 = vpop.f32.mrb[0].mxu0
  %v966 = vpop.f32.mrb[0].mxu0
  %v967 = vadd.f32 %v831, %v966
  %v968 = vpop.f32.mrb[0].mxu0
  %969 = vmatprep.mubr.bf16.mxu0 %v413
  %970 = vmatmul.mubr.bf16.gmra.mrb[0].mxu0 %v412
  %v971 = vpop.f32.mrb[0].mxu0
  %v972 = vadd.f32 %v836, %v971
  %v973 = vpop.f32.mrb[0].mxu0
  %v974 = vpop.f32.mrb[0].mxu0
  %v975 = vadd.f32 %v839, %v974
  %v976 = vpop.f32.mrb[0].mxu0
  %977 = vmatprep.mubr.bf16.mxu0 %v418
  %978 = vmatmul.mubr.bf16.gmra.mrb[0].mxu0 %v417
  %v979 = vpop.f32.mrb[0].mxu0
  %v980 = vadd.f32 %v844, %v979
  %v981 = vpop.f32.mrb[0].mxu0
  %v982 = vpop.f32.mrb[0].mxu0
  %v983 = vadd.f32 %v847, %v982
  %v984 = vpop.f32.mrb[0].mxu0
  %985 = vmatprep.mubr.bf16.mxu0 %v423
  %986 = vmatmul.mubr.bf16.gmra.mrb[0].mxu0 %v422
  %v987 = vpop.f32.mrb[0].mxu0
  %v988 = vadd.f32 %v852, %v987
  %v989 = vpop.f32.mrb[0].mxu0
  %v990 = vpop.f32.mrb[0].mxu0
  %v991 = vadd.f32 %v855, %v990
  %v992 = vpop.f32.mrb[0].mxu0
  %993 = vmatprep.mubr.bf16.mxu0 %v428
  %994 = vmatmul.mubr.bf16.gmra.mrb[0].mxu0 %v427
  %v995 = vpop.f32.mrb[0].mxu0
  %v996 = vadd.f32 %v860, %v995
  %v997 = vpop.f32.mrb[0].mxu0
  %v998 = vpop.f32.mrb[0].mxu0
  %v999 = vpop.f32.mrb[0].mxu0
  %1000 = vdwg.mxu0
  %1001 = vmatprep.subr.bf16.mxu0 0
  %1002 = vmatpush1.bf16.msra.mxu0 %v650
  %1003 = vmatprep.subr.bf16.mxu0 0
  %1004 = vmatpush1.bf16.msra.mxu0 %v727
  %1005 = vmatprep.subr.bf16.mxu0 0
  %1006 = vmatpush1.bf16.msra.mxu0 0
  %1007 = vmatprep.subr.bf16.mxu0 0
  %1008 = vmatpush1.bf16.msra.mxu0 0
  %1009 = vmatprep.subr.bf16.mxu0 0
  %1010 = vmatpush1.bf16.msra.mxu0 0
  %1011 = vmatprep.subr.bf16.mxu0 0
  %1012 = vmatpush1.bf16.msra.mxu0 0
  %1013 = vmatprep.subr.bf16.mxu0 0
  %1014 = vmatpush1.bf16.msra.mxu0 0
  %1015 = vmatprep.subr.bf16.mxu0 0
  %1016 = vmatpush1.bf16.msra.mxu0 0
  %1017 = vmatprep.subr.bf16.mxu0 0
  %1018 = vmatpush1.bf16.msra.mxu0 0
  %1019 = vmatprep.subr.bf16.mxu0 0
  %1020 = vmatpush1.bf16.msra.mxu0 0
  %1021 = vmatprep.subr.bf16.mxu0 0
  %1022 = vmatpush1.bf16.msra.mxu0 0
  %1023 = vmatprep.subr.bf16.mxu0 0
  %1024 = vmatpush1.bf16.msra.mxu0 0
  %1025 = vmatprep.subr.bf16.mxu0 0
  %1026 = vmatpush1.bf16.msra.mxu0 0
  %1027 = vmatprep.subr.bf16.mxu0 0
  %1028 = vmatpush1.bf16.msra.mxu0 0
  %1029 = vmatprep.subr.bf16.mxu0 0
  %1030 = vmatpush1.bf16.msra.mxu0 0
  %1031 = vmatprep.subr.bf16.mxu0 0
  %1032 = vmatpush1.bf16.msra.mxu0 0
  %1033 = vmatprep.mubr.bf16.mxu0 0
  %1034 = vmatmul.mubr.bf16.gmra.mrb[0].mxu0 %v687
  %v1035 = vpop.f32.mrb[0].mxu0
  %v1036 = vadd.f32 %v900, %v1035
  %v1037 = vpop.f32.mrb[0].mxu0
  %v1038 = vpop.f32.mrb[0].mxu0
  %v1039 = vadd.f32 %v903, %v1038
  %v1040 = vpop.f32.mrb[0].mxu0
  %1041 = vmatprep.mubr.bf16.mxu0 0
  %1042 = vmatmul.mubr.bf16.gmra.mrb[0].mxu0 %v690
  %v1043 = vpop.f32.mrb[0].mxu0
  %v1044 = vadd.f32 %v908, %v1043
  %v1045 = vpop.f32.mrb[0].mxu0
  %v1046 = vpop.f32.mrb[0].mxu0
  %v1047 = vadd.f32 %v911, %v1046
  %v1048 = vpop.f32.mrb[0].mxu0
  %1049 = vmatprep.mubr.bf16.mxu0 0
  %1050 = vmatmul.mubr.bf16.gmra.mrb[0].mxu0 %v693
  %v1051 = vpop.f32.mrb[0].mxu0
  %v1052 = vadd.f32 %v916, %v1051
  %v1053 = vpop.f32.mrb[0].mxu0
  %v1054 = vpop.f32.mrb[0].mxu0
  %v1055 = vadd.f32 %v919, %v1054
  %v1056 = vpop.f32.mrb[0].mxu0
  %1057 = vmatprep.mubr.bf16.mxu0 0
  %1058 = vmatmul.mubr.bf16.gmra.mrb[0].mxu0 %v696
  %v1059 = vpop.f32.mrb[0].mxu0
  %v1060 = vadd.f32 %v924, %v1059
  %v1061 = vpop.f32.mrb[0].mxu0
  %v1062 = vpop.f32.mrb[0].mxu0
  %v1063 = vadd.f32 %v927, %v1062
  %v1064 = vpop.f32.mrb[0].mxu0
  %1065 = vmatprep.mubr.bf16.mxu0 0
  %1066 = vmatmul.mubr.bf16.gmra.mrb[0].mxu0 %v699
  %v1067 = vpop.f32.mrb[0].mxu0
  %v1068 = vadd.f32 %v932, %v1067
  %v1069 = vpop.f32.mrb[0].mxu0
  %v1070 = vpop.f32.mrb[0].mxu0
  %v1071 = vadd.f32 %v935, %v1070
  %v1072 = vpop.f32.mrb[0].mxu0
  %1073 = vmatprep.mubr.bf16.mxu0 0
  %1074 = vmatmul.mubr.bf16.gmra.mrb[0].mxu0 %v702
  %v1075 = vpop.f32.mrb[0].mxu0
  %v1076 = vadd.f32 %v940, %v1075
  %v1077 = vpop.f32.mrb[0].mxu0
  %v1078 = vpop.f32.mrb[0].mxu0
  %v1079 = vadd.f32 %v943, %v1078
  %v1080 = vpop.f32.mrb[0].mxu0
  %1081 = vmatprep.mubr.bf16.mxu0 0
  %1082 = vmatmul.mubr.bf16.gmra.mrb[0].mxu0 %v705
  %v1083 = vpop.f32.mrb[0].mxu0
  %v1084 = vadd.f32 %v948, %v1083
  %v1085 = vpop.f32.mrb[0].mxu0
  %v1086 = vpop.f32.mrb[0].mxu0
  %v1087 = vadd.f32 %v951, %v1086
  %v1088 = vpop.f32.mrb[0].mxu0
  %1089 = vmatprep.mubr.bf16.mxu0 0
  %1090 = vmatmul.mubr.bf16.gmra.mrb[0].mxu0 %v708
  %v1091 = vpop.f32.mrb[0].mxu0
  %v1092 = vadd.f32 %v956, %v1091
  %v1093 = vpop.f32.mrb[0].mxu0
  %v1094 = vpop.f32.mrb[0].mxu0
  %v1095 = vadd.f32 %v959, %v1094
  %v1096 = vpop.f32.mrb[0].mxu0
  %1097 = vmatprep.mubr.bf16.mxu0 0
  %1098 = vmatmul.mubr.bf16.gmra.mrb[0].mxu0 %v711
  %v1099 = vpop.f32.mrb[0].mxu0
  %v1100 = vadd.f32 %v964, %v1099
  %v1101 = vpop.f32.mrb[0].mxu0
  %v1102 = vpop.f32.mrb[0].mxu0
  %v1103 = vadd.f32 %v967, %v1102
  %v1104 = vpop.f32.mrb[0].mxu0
  %1105 = vmatprep.mubr.bf16.mxu0 0
  %1106 = vmatmul.mubr.bf16.gmra.mrb[0].mxu0 %v714
  %v1107 = vpop.f32.mrb[0].mxu0
  %v1108 = vadd.f32 %v972, %v1107
  %v1109 = vpop.f32.mrb[0].mxu0
  %v1110 = vpop.f32.mrb[0].mxu0
  %v1111 = vadd.f32 %v975, %v1110
  %v1112 = vpop.f32.mrb[0].mxu0
  %1113 = vmatprep.mubr.bf16.mxu0 0
  %1114 = vmatmul.mubr.bf16.gmra.mrb[0].mxu0 %v717
  %v1115 = vpop.f32.mrb[0].mxu0
  %v1116 = vadd.f32 %v980, %v1115
  %v1117 = vpop.f32.mrb[0].mxu0
  %v1118 = vpop.f32.mrb[0].mxu0
  %v1119 = vadd.f32 %v983, %v1118
  %v1120 = vpop.f32.mrb[0].mxu0
  %1121 = vmatprep.mubr.bf16.mxu0 0
  %1122 = vmatmul.mubr.bf16.gmra.mrb[0].mxu0 %v720
  %v1123 = vpop.f32.mrb[0].mxu0
  %v1124 = vadd.f32 %v988, %v1123
  %v1125 = vpop.f32.mrb[0].mxu0
  %v1126 = vpop.f32.mrb[0].mxu0
  %v1127 = vadd.f32 %v991, %v1126
  %v1128 = vpop.f32.mrb[0].mxu0
  %1129 = vmatprep.mubr.bf16.mxu0 0
  %1130 = vmatmul.mubr.bf16.gmra.mrb[0].mxu0 %v723
  %v1131 = vpop.f32.mrb[0].mxu0
  %v1132 = vadd.f32 %v996, %v1131
  %v1133 = vpop.f32.mrb[0].mxu0
  %v1134 = vpop.f32.mrb[0].mxu0
  %v1135 = vpop.f32.mrb[0].mxu0
  %1136 = vdwg.mxu0
  %vm1137 = vcmp.ge.f32.partialorder %v1036, 0.0
  %vm1138 = vcmp.ge.f32.partialorder %v1039, 0.0
  %vm1139 = vcmp.ge.f32.partialorder %v1044, 0.0
  %vm1140 = vcmp.ge.f32.partialorder %v1047, 0.0
  %vm1141 = vcmp.ge.f32.partialorder %v1052, 0.0
  %vm1142 = vcmp.ge.f32.partialorder %v1055, 0.0
  %vm1143 = vcmp.ge.f32.partialorder %v1060, 0.0
  %vm1144 = vcmp.ge.f32.partialorder %v1063, 0.0
  %vm1145 = vcmp.ge.f32.partialorder %v1068, 0.0
  %vm1146 = vcmp.ge.f32.partialorder %v1071, 0.0
  %vm1147 = vcmp.ge.f32.partialorder %v1076, 0.0
  %vm1148 = vcmp.ge.f32.partialorder %v1079, 0.0
  %vm1149 = vcmp.ge.f32.partialorder %v1084, 0.0
  %vm1150 = vcmp.ge.f32.partialorder %v1087, 0.0
  %vm1151 = vcmp.ge.f32.partialorder %v1092, 0.0
  %vm1152 = vcmp.ge.f32.partialorder %v1095, 0.0
  %vm1153 = vcmp.ge.f32.partialorder %v1100, 0.0
  %vm1154 = vcmp.ge.f32.partialorder %v1103, 0.0
  %vm1155 = vcmp.ge.f32.partialorder %v1108, 0.0
  %vm1156 = vcmp.ge.f32.partialorder %v1111, 0.0
  %vm1157 = vcmp.ge.f32.partialorder %v1116, 0.0
  %vm1158 = vcmp.ge.f32.partialorder %v1119, 0.0
  %vm1159 = vcmp.ge.f32.partialorder %v1124, 0.0
  %vm1160 = vcmp.ge.f32.partialorder %v1127, 0.0
  %vm1161 = vcmp.ge.f32.partialorder %v1132, 0.0
  %v1162 = vmul.f32 %v1036, 0.01
  %v1163 = vmul.f32 %v1039, 0.01
  %v1164 = vmul.f32 %v1044, 0.01
  %v1165 = vmul.f32 %v1047, 0.01
  %v1166 = vmul.f32 %v1052, 0.01
  %v1167 = vmul.f32 %v1055, 0.01
  %v1168 = vmul.f32 %v1060, 0.01
  %v1169 = vmul.f32 %v1063, 0.01
  %v1170 = vmul.f32 %v1068, 0.01
  %v1171 = vmul.f32 %v1071, 0.01
  %v1172 = vmul.f32 %v1076, 0.01
  %v1173 = vmul.f32 %v1079, 0.01
  %v1174 = vmul.f32 %v1084, 0.01
  %v1175 = vmul.f32 %v1087, 0.01
  %v1176 = vmul.f32 %v1092, 0.01
  %v1177 = vmul.f32 %v1095, 0.01
  %v1178 = vmul.f32 %v1100, 0.01
  %v1179 = vmul.f32 %v1103, 0.01
  %v1180 = vmul.f32 %v1108, 0.01
  %v1181 = vmul.f32 %v1111, 0.01
  %v1182 = vmul.f32 %v1116, 0.01
  %v1183 = vmul.f32 %v1119, 0.01
  %v1184 = vmul.f32 %v1124, 0.01
  %v1185 = vmul.f32 %v1127, 0.01
  %v1186 = vmul.f32 %v1132, 0.01
  %v1187 = vsel %vm1137, %v1036, %v1162
  %v1188 = vsel %vm1138, %v1039, %v1163
  %v1189 = vsel %vm1139, %v1044, %v1164
  %v1190 = vsel %vm1140, %v1047, %v1165
  %v1191 = vsel %vm1141, %v1052, %v1166
  %v1192 = vsel %vm1142, %v1055, %v1167
  %v1193 = vsel %vm1143, %v1060, %v1168
  %v1194 = vsel %vm1144, %v1063, %v1169
  %v1195 = vsel %vm1145, %v1068, %v1170
  %v1196 = vsel %vm1146, %v1071, %v1171
  %v1197 = vsel %vm1147, %v1076, %v1172
  %v1198 = vsel %vm1148, %v1079, %v1173
  %v1199 = vsel %vm1149, %v1084, %v1174
  %v1200 = vsel %vm1150, %v1087, %v1175
  %v1201 = vsel %vm1151, %v1092, %v1176
  %v1202 = vsel %vm1152, %v1095, %v1177
  %v1203 = vsel %vm1153, %v1100, %v1178
  %v1204 = vsel %vm1154, %v1103, %v1179
  %v1205 = vsel %vm1155, %v1108, %v1180
  %v1206 = vsel %vm1156, %v1111, %v1181
  %v1207 = vsel %vm1157, %v1116, %v1182
  %v1208 = vsel %vm1158, %v1119, %v1183
  %v1209 = vsel %vm1159, %v1124, %v1184
  %v1210 = vsel %vm1160, %v1127, %v1185
  %v1211 = vsel %vm1161, %v1132, %v1186
  %1212 = vst [vmem:[%s3] sm:$0xff] %v1187
  %1213 = vst [vmem:[%s3 + $0x8] sm:$0xff] %v1188
  %1214 = vst [vmem:[%s3 + $0x10] sm:$0xff] %v1189
  %1215 = vst [vmem:[%s3 + $0x18] sm:$0xff] %v1190
  %1216 = vst [vmem:[%s3 + $0x20] sm:$0xff] %v1191
  %1217 = vst [vmem:[%s3 + $0x28] sm:$0xff] %v1192
  %1218 = vst [vmem:[%s3 + $0x30] sm:$0xff] %v1193
  %1219 = vst [vmem:[%s3 + $0x38] sm:$0xff] %v1194
  %1220 = vst [vmem:[%s3 + $0x40] sm:$0xff] %v1195
  %1221 = vst [vmem:[%s3 + $0x48] sm:$0xff] %v1196
  %1222 = vst [vmem:[%s3 + $0x50] sm:$0xff] %v1197
  %1223 = vst [vmem:[%s3 + $0x58] sm:$0xff] %v1198
  %1224 = vst [vmem:[%s3 + $0x60] sm:$0xff] %v1199
  %1225 = vst [vmem:[%s3 + $0x68] sm:$0xff] %v1200
  %1226 = vst [vmem:[%s3 + $0x70] sm:$0xff] %v1201
  %1227 = vst [vmem:[%s3 + $0x78] sm:$0xff] %v1202
  %1228 = vst [vmem:[%s3 + $0x80] sm:$0xff] %v1203
  %1229 = vst [vmem:[%s3 + $0x88] sm:$0xff] %v1204
  %1230 = vst [vmem:[%s3 + $0x90] sm:$0xff] %v1205
  %1231 = vst [vmem:[%s3 + $0x98] sm:$0xff] %v1206
  %1232 = vst [vmem:[%s3 + $0xa0] sm:$0xff] %v1207
  %1233 = vst [vmem:[%s3 + $0xa8] sm:$0xff] %v1208
  %1234 = vst [vmem:[%s3 + $0xb0] sm:$0xff] %v1209
  %1235 = vst [vmem:[%s3 + $0xb8] sm:$0xff] %v1210
  %1236 = vst [vmem:[%s3 + $0xc0] sm:$0xff] %v1211
  // Predicated region
  $region14: #{other_net_forward.7} parent=0 // pred_check
    _
  $region15: #{other_net_forward.7} parent=0 // pred_check_branch
    %1238 = sbr.rel (0) target = $region17
  $region16: #{other_net_forward.7} parent=0 // pred_region
    _
  $region17: #{other_net_forward.7} parent=0 // pred_fallthru
    _
  // Predicated region
  $region18: #{other_net_forward.7} parent=0 // pred_check
    _
  $region19: #{other_net_forward.7} parent=0 // pred_check_branch
    %1240 = sbr.rel (0) target = $region21
  $region20: #{other_net_forward.7} parent=0 // pred_region
    _
  $region21: #{other_net_forward.7} parent=0 // pred_fallthru
    _

// kernel: other_net_forward.8
$region0: #{other_net_forward.8}
  #allocation0 [shape = 'u32[]', space=smem, size = 0x4, offset = 0x4, fixed_abs, tag = 'smem constant byte address 0x4 - core index']
  #allocation1 [shape = 'u32[144,128]{1,0:T(1,128)}', space=vmem, size = 0x12000, scoped, tag = 'internal scratch']
  %s0 = inlined_call_operand.vmem [shape: bf16[128,720], index: 0, kind: input, shape index: {}]
  %s1 = inlined_call_operand.vmem [shape: bf16[720,128], index: 1, kind: input, shape index: {}]
  %s2 = inlined_call_operand.vmem [shape: f32[1,128], index: 2, kind: input, shape index: {}]
  %s3 = inlined_call_operand.vmem [shape: f32[128,128], index: 3, kind: output, shape index: {}]
  %s4 = sld [smem:[#allocation0]]
  $region22: #{other_net_forward.8} parent=0
    _
  %s6 = ssub.s32 1, %s4
  %s7 = scalar_select 0, %s6, %s4
  // Predicated region
  $region2: #{other_net_forward.8} parent=0 // pred_check
    _
  $region3: #{other_net_forward.8} parent=0 // pred_check_branch
    %9 = sbr.rel (0) target = $region5
  $region4: #{other_net_forward.8} parent=0 // pred_region
    _
  $region5: #{other_net_forward.8} parent=0 // pred_fallthru
    _
  // Predicated region
  $region6: #{other_net_forward.8} parent=0 // pred_check
    _
  $region7: #{other_net_forward.8} parent=0 // pred_check_branch
    %11 = sbr.rel (0) target = $region9
  $region8: #{other_net_forward.8} parent=0 // pred_region
    _
  $region9: #{other_net_forward.8} parent=0 // pred_fallthru
    _
  // Predicated region
  $region10: #{other_net_forward.8} parent=0 // pred_check
    _
  $region11: #{other_net_forward.8} parent=0 // pred_check_branch
    %13 = sbr.rel (0) target = $region13
  $region12: #{other_net_forward.8} parent=0 // pred_region
    _
  $region13: #{other_net_forward.8} parent=0 // pred_fallthru
    _
  %v15 = vld [vmem:[%s0] sm:$0xff]
  %v16 = vld [vmem:[%s0 + $0x8] sm:$0xff]
  %v17 = vld [vmem:[%s0 + $0x10] sm:$0xff]
  %v18 = vld [vmem:[%s0 + $0x18] sm:$0xff]
  %v19 = vld [vmem:[%s0 + $0x20] sm:$0xff]
  %v20 = vld [vmem:[%s0 + $0x28] sm:$0xff]
  %v21 = vld [vmem:[%s0 + $0x30] sm:$0xff]
  %v22 = vld [vmem:[%s0 + $0x38] sm:$0xff]
  %v23 = vld [vmem:[%s0 + $0x40] sm:$0xff]
  %v24 = vld [vmem:[%s0 + $0x48] sm:$0xff]
  %v25 = vld [vmem:[%s0 + $0x50] sm:$0xff]
  %v26 = vld [vmem:[%s0 + $0x58] sm:$0xff]
  %v27 = vld [vmem:[%s0 + $0x60] sm:$0xff]
  %v28 = vld [vmem:[%s0 + $0x68] sm:$0xff]
  %v29 = vld [vmem:[%s0 + $0x70] sm:$0xff]
  %v30 = vld [vmem:[%s0 + $0x78] sm:$0xff]
  %v31 = vld [vmem:[%s0 + $0x80] sm:$0xff]
  %v32 = vld [vmem:[%s0 + $0x88] sm:$0xff]
  %v33 = vld [vmem:[%s0 + $0x90] sm:$0xff]
  %v34 = vld [vmem:[%s0 + $0x98] sm:$0xff]
  %v35 = vld [vmem:[%s0 + $0xa0] sm:$0xff]
  %v36 = vld [vmem:[%s0 + $0xa8] sm:$0xff]
  %v37 = vld [vmem:[%s0 + $0xb0] sm:$0xff]
  %v38 = vld [vmem:[%s0 + $0xb8] sm:$0xff]
  %v39 = vld [vmem:[%s0 + $0xc0] sm:$0xff]
  %v40 = vld [vmem:[%s0 + $0xc8] sm:$0xff]
  %v41 = vld [vmem:[%s0 + $0xd0] sm:$0xff]
  %v42 = vld [vmem:[%s0 + $0xd8] sm:$0xff]
  %v43 = vld [vmem:[%s0 + $0xe0] sm:$0xff]
  %v44 = vld [vmem:[%s0 + $0xe8] sm:$0xff]
  %v45 = vld [vmem:[%s0 + $0xf0] sm:$0xff]
  %v46 = vld [vmem:[%s0 + $0xf8] sm:$0xff]
  %v47 = vld [vmem:[%s0 + $0x100] sm:$0xff]
  %v48 = vld [vmem:[%s0 + $0x108] sm:$0xff]
  %v49 = vld [vmem:[%s0 + $0x110] sm:$0xff]
  %v50 = vld [vmem:[%s0 + $0x118] sm:$0xff]
  %v51 = vld [vmem:[%s0 + $0x120] sm:$0xff]
  %v52 = vld [vmem:[%s0 + $0x128] sm:$0xff]
  %v53 = vld [vmem:[%s0 + $0x130] sm:$0xff]
  %v54 = vld [vmem:[%s0 + $0x138] sm:$0xff]
  %v55 = vld [vmem:[%s0 + $0x140] sm:$0xff]
  %v56 = vld [vmem:[%s0 + $0x148] sm:$0xff]
  %v57 = vld [vmem:[%s0 + $0x150] sm:$0xff]
  %v58 = vld [vmem:[%s0 + $0x158] sm:$0xff]
  %v59 = vld [vmem:[%s0 + $0x160] sm:$0xff]
  %v60 = vld [vmem:[%s0 + $0x168] sm:$0xff]
  %v61 = vld [vmem:[%s0 + $0x170] sm:$0xff]
  %v62 = vld [vmem:[%s0 + $0x178] sm:$0xff]
  %v63 = vld [vmem:[%s1] sm:$0xf]
  %v64 = vld [vmem:[%s1 + $0x4] sm:$0xf]
  %v65 = vld [vmem:[%s1 + $0x8] sm:$0xf]
  %v66 = vld [vmem:[%s1 + $0xc] sm:$0xf]
  %v67 = vld [vmem:[%s1 + $0x10] sm:$0xf]
  %v68 = vld [vmem:[%s1 + $0x14] sm:$0xf]
  %v69 = vld [vmem:[%s1 + $0x18] sm:$0xf]
  %v70 = vld [vmem:[%s1 + $0x1c] sm:$0xf]
  %v71 = vld [vmem:[%s1 + $0x20] sm:$0xf]
  %v72 = vld [vmem:[%s1 + $0x24] sm:$0xf]
  %v73 = vld [vmem:[%s1 + $0x28] sm:$0xf]
  %v74 = vld [vmem:[%s1 + $0x2c] sm:$0xf]
  %v75 = vld [vmem:[%s1 + $0x30] sm:$0xf]
  %v76 = vld [vmem:[%s1 + $0x34] sm:$0xf]
  %v77 = vld [vmem:[%s1 + $0x38] sm:$0xf]
  %v78 = vld [vmem:[%s1 + $0x3c] sm:$0xf]
  %v79 = vld [vmem:[%s1 + $0x40] sm:$0xf]
  %v80 = vld [vmem:[%s1 + $0x44] sm:$0xf]
  %v81 = vld [vmem:[%s1 + $0x48] sm:$0xf]
  %v82 = vld [vmem:[%s1 + $0x4c] sm:$0xf]
  %v83 = vld [vmem:[%s1 + $0x50] sm:$0xf]
  %v84 = vld [vmem:[%s1 + $0x54] sm:$0xf]
  %v85 = vld [vmem:[%s1 + $0x58] sm:$0xf]
  %v86 = vld [vmem:[%s1 + $0x5c] sm:$0xf]
  %v87 = vld [vmem:[%s1 + $0x60] sm:$0xf]
  %v88 = vld [vmem:[%s1 + $0x64] sm:$0xf]
  %v89 = vld [vmem:[%s1 + $0x68] sm:$0xf]
  %v90 = vld [vmem:[%s1 + $0x6c] sm:$0xf]
  %v91 = vld [vmem:[%s1 + $0x70] sm:$0xf]
  %v92 = vld [vmem:[%s1 + $0x74] sm:$0xf]
  %v93 = vld [vmem:[%s1 + $0x78] sm:$0xf]
  %v94 = vld [vmem:[%s1 + $0x7c] sm:$0xf]
  %v95 = vld [vmem:[%s1 + $0x80] sm:$0xf]
  %v96 = vld [vmem:[%s1 + $0x84] sm:$0xf]
  %v97 = vld [vmem:[%s1 + $0x88] sm:$0xf]
  %v98 = vld [vmem:[%s1 + $0x8c] sm:$0xf]
  %v99 = vld [vmem:[%s1 + $0x90] sm:$0xf]
  %v100 = vld [vmem:[%s1 + $0x94] sm:$0xf]
  %v101 = vld [vmem:[%s1 + $0x98] sm:$0xf]
  %v102 = vld [vmem:[%s1 + $0x9c] sm:$0xf]
  %v103 = vld [vmem:[%s1 + $0xa0] sm:$0xf]
  %v104 = vld [vmem:[%s1 + $0xa4] sm:$0xf]
  %v105 = vld [vmem:[%s1 + $0xa8] sm:$0xf]
  %v106 = vld [vmem:[%s1 + $0xac] sm:$0xf]
  %v107 = vld [vmem:[%s1 + $0xb0] sm:$0xf]
  %v108 = vld [vmem:[%s1 + $0xb4] sm:$0xf]
  %v109 = vld [vmem:[%s1 + $0xb8] sm:$0xf]
  %v110 = vld [vmem:[%s1 + $0xbc] sm:$0xf]
  %v111 = vld [vmem:[%s1 + $0xc0] sm:$0xf]
  %v112 = vld [vmem:[%s1 + $0xc4] sm:$0xf]
  %v113 = vld [vmem:[%s1 + $0xc8] sm:$0xf]
  %v114 = vld [vmem:[%s1 + $0xcc] sm:$0xf]
  %v115 = vld [vmem:[%s1 + $0xd0] sm:$0xf]
  %v116 = vld [vmem:[%s1 + $0xd4] sm:$0xf]
  %v117 = vld [vmem:[%s1 + $0xd8] sm:$0xf]
  %v118 = vld [vmem:[%s1 + $0xdc] sm:$0xf]
  %v119 = vld [vmem:[%s1 + $0xe0] sm:$0xf]
  %v120 = vld [vmem:[%s1 + $0xe4] sm:$0xf]
  %v121 = vld [vmem:[%s1 + $0xe8] sm:$0xf]
  %v122 = vld [vmem:[%s1 + $0xec] sm:$0xf]
  %v123 = vld [vmem:[%s1 + $0xf0] sm:$0xf]
  %v124 = vld [vmem:[%s1 + $0xf4] sm:$0xf]
  %v125 = vld [vmem:[%s1 + $0xf8] sm:$0xf]
  %v126 = vld [vmem:[%s1 + $0xfc] sm:$0xf]
  %v127 = vld [vmem:[%s1 + $0x100] sm:$0xf]
  %v128 = vld [vmem:[%s1 + $0x104] sm:$0xf]
  %v129 = vld [vmem:[%s1 + $0x108] sm:$0xf]
  %v130 = vld [vmem:[%s1 + $0x10c] sm:$0xf]
  %v131 = vld [vmem:[%s1 + $0x110] sm:$0xf]
  %v132 = vld [vmem:[%s1 + $0x114] sm:$0xf]
  %v133 = vld [vmem:[%s1 + $0x118] sm:$0xf]
  %v134 = vld [vmem:[%s1 + $0x11c] sm:$0xf]
  %v135 = vld [vmem:[%s1 + $0x120] sm:$0xf]
  %v136 = vld [vmem:[%s1 + $0x124] sm:$0xf]
  %v137 = vld [vmem:[%s1 + $0x128] sm:$0xf]
  %v138 = vld [vmem:[%s1 + $0x12c] sm:$0xf]
  %v139 = vld [vmem:[%s1 + $0x130] sm:$0xf]
  %v140 = vld [vmem:[%s1 + $0x134] sm:$0xf]
  %v141 = vld [vmem:[%s1 + $0x138] sm:$0xf]
  %v142 = vld [vmem:[%s1 + $0x13c] sm:$0xf]
  %v143 = vld [vmem:[%s1 + $0x140] sm:$0xf]
  %v144 = vld [vmem:[%s1 + $0x144] sm:$0xf]
  %v145 = vld [vmem:[%s1 + $0x148] sm:$0xf]
  %v146 = vld [vmem:[%s1 + $0x14c] sm:$0xf]
  %v147 = vld [vmem:[%s1 + $0x150] sm:$0xf]
  %v148 = vld [vmem:[%s1 + $0x154] sm:$0xf]
  %v149 = vld [vmem:[%s1 + $0x158] sm:$0xf]
  %v150 = vld [vmem:[%s1 + $0x15c] sm:$0xf]
  %v151 = vld [vmem:[%s1 + $0x160] sm:$0xf]
  %v152 = vld [vmem:[%s1 + $0x164] sm:$0xf]
  %v153 = vld [vmem:[%s2] sm:$0x1]
  %v155 = vlaneseq
  %v156 = vshrl.u32 %v155, 7
  %v157 = vsub.s32 0, %v156
  %v158 = vrot.slane %v153, %v157
  %v208 = vunpack.c.l.b16 %v15
  %v209 = vunpack.c.h.b16 %v15
  %v210 = vunpack.c.l.b16 %v16
  %v211 = vunpack.c.h.b16 %v16
  %v212 = vunpack.c.l.b16 %v17
  %v213 = vunpack.c.h.b16 %v17
  %v214 = vunpack.c.l.b16 %v18
  %v215 = vunpack.c.h.b16 %v18
  %v216 = vunpack.c.l.b16 %v19
  %v217 = vunpack.c.h.b16 %v19
  %v218 = vunpack.c.l.b16 %v20
  %v219 = vunpack.c.h.b16 %v20
  %v220 = vunpack.c.l.b16 %v21
  %v221 = vunpack.c.h.b16 %v21
  %v222 = vunpack.c.l.b16 %v22
  %v223 = vunpack.c.h.b16 %v22
  %v224 = vunpack.c.l.b16 %v23
  %v225 = vunpack.c.h.b16 %v23
  %v226 = vunpack.c.l.b16 %v24
  %v227 = vunpack.c.h.b16 %v24
  %v228 = vunpack.c.l.b16 %v25
  %v229 = vunpack.c.h.b16 %v25
  %v230 = vunpack.c.l.b16 %v26
  %v231 = vunpack.c.h.b16 %v26
  %v232 = vunpack.c.l.b16 %v27
  %v233 = vunpack.c.h.b16 %v27
  %v234 = vunpack.c.l.b16 %v28
  %v235 = vunpack.c.h.b16 %v28
  %v236 = vunpack.c.l.b16 %v29
  %v237 = vunpack.c.h.b16 %v29
  %v238 = vunpack.c.l.b16 %v30
  %v239 = vunpack.c.h.b16 %v30
  %v240 = vunpack.c.l.b16 %v31
  %v241 = vunpack.c.h.b16 %v31
  %v242 = vunpack.c.l.b16 %v32
  %v243 = vunpack.c.h.b16 %v32
  %v244 = vunpack.c.l.b16 %v33
  %v245 = vunpack.c.h.b16 %v33
  %v246 = vunpack.c.l.b16 %v34
  %v247 = vunpack.c.h.b16 %v34
  %v248 = vunpack.c.l.b16 %v35
  %v249 = vunpack.c.h.b16 %v35
  %v250 = vunpack.c.l.b16 %v36
  %v251 = vunpack.c.h.b16 %v36
  %v252 = vunpack.c.l.b16 %v37
  %v253 = vunpack.c.h.b16 %v37
  %v254 = vunpack.c.l.b16 %v38
  %v255 = vunpack.c.h.b16 %v38
  %v256 = vunpack.c.l.b16 %v39
  %v257 = vunpack.c.h.b16 %v39
  %v258 = vunpack.c.l.b16 %v40
  %v259 = vunpack.c.h.b16 %v40
  %v260 = vunpack.c.l.b16 %v41
  %v261 = vunpack.c.h.b16 %v41
  %v262 = vunpack.c.l.b16 %v42
  %v263 = vunpack.c.h.b16 %v42
  %v264 = vunpack.c.l.b16 %v43
  %v265 = vunpack.c.h.b16 %v43
  %v266 = vunpack.c.l.b16 %v44
  %v267 = vunpack.c.h.b16 %v44
  %v268 = vunpack.c.l.b16 %v45
  %v269 = vunpack.c.h.b16 %v45
  %v270 = vunpack.c.l.b16 %v46
  %v271 = vunpack.c.h.b16 %v46
  %v272 = vunpack.c.l.b16 %v47
  %v273 = vunpack.c.h.b16 %v47
  %v274 = vunpack.c.l.b16 %v48
  %v275 = vunpack.c.h.b16 %v48
  %v276 = vunpack.c.l.b16 %v49
  %v277 = vunpack.c.h.b16 %v49
  %v278 = vunpack.c.l.b16 %v50
  %v279 = vunpack.c.h.b16 %v50
  %v280 = vunpack.c.l.b16 %v51
  %v281 = vunpack.c.h.b16 %v51
  %v282 = vunpack.c.l.b16 %v52
  %v283 = vunpack.c.h.b16 %v52
  %v284 = vunpack.c.l.b16 %v53
  %v285 = vunpack.c.h.b16 %v53
  %v286 = vunpack.c.l.b16 %v54
  %v287 = vunpack.c.h.b16 %v54
  %v288 = vunpack.c.l.b16 %v55
  %v289 = vunpack.c.h.b16 %v55
  %v290 = vunpack.c.l.b16 %v56
  %v291 = vunpack.c.h.b16 %v56
  %v292 = vunpack.c.l.b16 %v57
  %v293 = vunpack.c.h.b16 %v57
  %v294 = vunpack.c.l.b16 %v58
  %v295 = vunpack.c.h.b16 %v58
  %v296 = vunpack.c.l.b16 %v59
  %v297 = vunpack.c.h.b16 %v59
  %v298 = vunpack.c.l.b16 %v60
  %v299 = vunpack.c.h.b16 %v60
  %v300 = vunpack.c.l.b16 %v61
  %v301 = vunpack.c.h.b16 %v61
  %v302 = vunpack.c.l.b16 %v62
  %v303 = vunpack.c.h.b16 %v62
  %v304 = vpack.c.b16 %v214, %v208
  %v305 = vpack.c.b16 %v215, %v209
  %v306 = vpack.c.b16 %v216, %v210
  %v307 = vpack.c.b16 %v217, %v211
  %v308 = vpack.c.b16 %v218, %v212
  %v309 = vpack.c.b16 %v219, %v213
  %v310 = vpack.c.b16 %v226, %v220
  %v311 = vpack.c.b16 %v227, %v221
  %v312 = vpack.c.b16 %v228, %v222
  %v313 = vpack.c.b16 %v229, %v223
  %v314 = vpack.c.b16 %v230, %v224
  %v315 = vpack.c.b16 %v231, %v225
  %v316 = vpack.c.b16 %v238, %v232
  %v317 = vpack.c.b16 %v239, %v233
  %v318 = vpack.c.b16 %v240, %v234
  %v319 = vpack.c.b16 %v241, %v235
  %v320 = vpack.c.b16 %v242, %v236
  %v321 = vpack.c.b16 %v243, %v237
  %v322 = vpack.c.b16 %v250, %v244
  %v323 = vpack.c.b16 %v251, %v245
  %v324 = vpack.c.b16 %v252, %v246
  %v325 = vpack.c.b16 %v253, %v247
  %v326 = vpack.c.b16 %v254, %v248
  %v327 = vpack.c.b16 %v255, %v249
  %v328 = vpack.c.b16 %v262, %v256
  %v329 = vpack.c.b16 %v263, %v257
  %v330 = vpack.c.b16 %v264, %v258
  %v331 = vpack.c.b16 %v265, %v259
  %v332 = vpack.c.b16 %v266, %v260
  %v333 = vpack.c.b16 %v267, %v261
  %v334 = vpack.c.b16 %v274, %v268
  %v335 = vpack.c.b16 %v275, %v269
  %v336 = vpack.c.b16 %v276, %v270
  %v337 = vpack.c.b16 %v277, %v271
  %v338 = vpack.c.b16 %v278, %v272
  %v339 = vpack.c.b16 %v279, %v273
  %v340 = vpack.c.b16 %v286, %v280
  %v341 = vpack.c.b16 %v287, %v281
  %v342 = vpack.c.b16 %v288, %v282
  %v343 = vpack.c.b16 %v289, %v283
  %v344 = vpack.c.b16 %v290, %v284
  %v345 = vpack.c.b16 %v291, %v285
  %v346 = vpack.c.b16 %v298, %v292
  %v347 = vpack.c.b16 %v299, %v293
  %v348 = vpack.c.b16 %v300, %v294
  %v349 = vpack.c.b16 %v301, %v295
  %v350 = vpack.c.b16 %v302, %v296
  %v351 = vpack.c.b16 %v303, %v297
  %v482 = vunpack.c.l.b16 %v63
  %v483 = vunpack.c.l.b16 %v64
  %v484 = vunpack.c.l.b16 %v65
  %v485 = vunpack.c.l.b16 %v66
  %v486 = vunpack.c.l.b16 %v67
  %v487 = vunpack.c.l.b16 %v68
  %v488 = vunpack.c.l.b16 %v69
  %v489 = vunpack.c.l.b16 %v70
  %v490 = vunpack.c.l.b16 %v71
  %v491 = vunpack.c.l.b16 %v72
  %v492 = vunpack.c.l.b16 %v73
  %v493 = vunpack.c.l.b16 %v74
  %v494 = vunpack.c.l.b16 %v75
  %v495 = vunpack.c.l.b16 %v76
  %v496 = vunpack.c.l.b16 %v77
  %v497 = vunpack.c.l.b16 %v78
  %v498 = vunpack.c.l.b16 %v79
  %v499 = vunpack.c.l.b16 %v80
  %v500 = vunpack.c.l.b16 %v81
  %v501 = vunpack.c.l.b16 %v82
  %v502 = vunpack.c.l.b16 %v83
  %v503 = vunpack.c.l.b16 %v84
  %v504 = vunpack.c.l.b16 %v85
  %v505 = vunpack.c.l.b16 %v86
  %v506 = vunpack.c.l.b16 %v87
  %v507 = vunpack.c.l.b16 %v88
  %v508 = vunpack.c.l.b16 %v89
  %v509 = vunpack.c.l.b16 %v90
  %v510 = vunpack.c.l.b16 %v91
  %v511 = vunpack.c.l.b16 %v92
  %v512 = vunpack.c.l.b16 %v93
  %v513 = vunpack.c.l.b16 %v94
  %v514 = vunpack.c.l.b16 %v95
  %v515 = vunpack.c.l.b16 %v96
  %v516 = vunpack.c.l.b16 %v97
  %v517 = vunpack.c.l.b16 %v98
  %v518 = vunpack.c.l.b16 %v99
  %v519 = vunpack.c.l.b16 %v100
  %v520 = vunpack.c.l.b16 %v101
  %v521 = vunpack.c.l.b16 %v102
  %v522 = vunpack.c.l.b16 %v103
  %v523 = vunpack.c.l.b16 %v104
  %v524 = vunpack.c.l.b16 %v105
  %v525 = vunpack.c.l.b16 %v106
  %v526 = vunpack.c.l.b16 %v107
  %v527 = vunpack.c.l.b16 %v108
  %v528 = vunpack.c.l.b16 %v109
  %v529 = vunpack.c.l.b16 %v110
  %v530 = vunpack.c.l.b16 %v111
  %v531 = vunpack.c.l.b16 %v112
  %v532 = vunpack.c.l.b16 %v113
  %v533 = vunpack.c.l.b16 %v114
  %v534 = vunpack.c.l.b16 %v115
  %v535 = vunpack.c.l.b16 %v116
  %v536 = vunpack.c.l.b16 %v117
  %v537 = vunpack.c.l.b16 %v118
  %v538 = vunpack.c.l.b16 %v119
  %v539 = vunpack.c.l.b16 %v120
  %v540 = vunpack.c.l.b16 %v121
  %v541 = vunpack.c.l.b16 %v122
  %v542 = vunpack.c.l.b16 %v123
  %v543 = vunpack.c.l.b16 %v124
  %v544 = vunpack.c.l.b16 %v125
  %v545 = vunpack.c.l.b16 %v126
  %v546 = vunpack.c.l.b16 %v127
  %v547 = vunpack.c.l.b16 %v128
  %v548 = vunpack.c.l.b16 %v129
  %v549 = vunpack.c.l.b16 %v130
  %v550 = vunpack.c.l.b16 %v131
  %v551 = vunpack.c.l.b16 %v132
  %v552 = vunpack.c.l.b16 %v133
  %v553 = vunpack.c.l.b16 %v134
  %v554 = vunpack.c.l.b16 %v135
  %v555 = vunpack.c.l.b16 %v136
  %v556 = vunpack.c.l.b16 %v137
  %v557 = vunpack.c.l.b16 %v138
  %v558 = vunpack.c.l.b16 %v139
  %v559 = vunpack.c.l.b16 %v140
  %v560 = vunpack.c.l.b16 %v141
  %v561 = vunpack.c.l.b16 %v142
  %v562 = vunpack.c.l.b16 %v143
  %v563 = vunpack.c.l.b16 %v144
  %v564 = vunpack.c.l.b16 %v145
  %v565 = vunpack.c.l.b16 %v146
  %v566 = vunpack.c.l.b16 %v147
  %v567 = vunpack.c.l.b16 %v148
  %v568 = vunpack.c.l.b16 %v149
  %v569 = vunpack.c.l.b16 %v150
  %v570 = vunpack.c.l.b16 %v151
  %v571 = vunpack.c.l.b16 %v152
  %v572 = vpack.c.b16 %v483, %v482
  %v573 = vpack.c.b16 %v485, %v484
  %v574 = vpack.c.b16 %v487, %v486
  %v575 = vpack.c.b16 %v489, %v488
  %v576 = vpack.c.b16 %v491, %v490
  %v577 = vpack.c.b16 %v493, %v492
  %v578 = vpack.c.b16 %v495, %v494
  %v579 = vpack.c.b16 %v497, %v496
  %v580 = vpack.c.b16 %v499, %v498
  %v581 = vpack.c.b16 %v501, %v500
  %v582 = vpack.c.b16 %v503, %v502
  %v583 = vpack.c.b16 %v505, %v504
  %v584 = vpack.c.b16 %v507, %v506
  %v585 = vpack.c.b16 %v509, %v508
  %v586 = vpack.c.b16 %v511, %v510
  %v587 = vpack.c.b16 %v513, %v512
  %v588 = vpack.c.b16 %v515, %v514
  %v589 = vpack.c.b16 %v517, %v516
  %v590 = vpack.c.b16 %v519, %v518
  %v591 = vpack.c.b16 %v521, %v520
  %v592 = vpack.c.b16 %v523, %v522
  %v593 = vpack.c.b16 %v525, %v524
  %v594 = vpack.c.b16 %v527, %v526
  %v595 = vpack.c.b16 %v529, %v528
  %v596 = vpack.c.b16 %v531, %v530
  %v597 = vpack.c.b16 %v533, %v532
  %v598 = vpack.c.b16 %v535, %v534
  %v599 = vpack.c.b16 %v537, %v536
  %v600 = vpack.c.b16 %v539, %v538
  %v601 = vpack.c.b16 %v541, %v540
  %v602 = vpack.c.b16 %v543, %v542
  %v603 = vpack.c.b16 %v545, %v544
  %v604 = vpack.c.b16 %v547, %v546
  %v605 = vpack.c.b16 %v549, %v548
  %v606 = vpack.c.b16 %v551, %v550
  %v607 = vpack.c.b16 %v553, %v552
  %v608 = vpack.c.b16 %v555, %v554
  %v609 = vpack.c.b16 %v557, %v556
  %v610 = vpack.c.b16 %v559, %v558
  %v611 = vpack.c.b16 %v561, %v560
  %v612 = vpack.c.b16 %v563, %v562
  %v613 = vpack.c.b16 %v565, %v564
  %v614 = vpack.c.b16 %v567, %v566
  %v615 = vpack.c.b16 %v569, %v568
  %v616 = vpack.c.b16 %v571, %v570
  %vm662 = vcmask 654336
  %v664 = vsel %vm662, %v309, 0
  %v667 = vsel %vm662, %v315, 0
  %v670 = vsel %vm662, %v321, 0
  %v673 = vsel %vm662, %v327, 0
  %v676 = vsel %vm662, %v333, 0
  %v679 = vsel %vm662, %v339, 0
  %v682 = vsel %vm662, %v345, 0
  %v685 = vsel %vm662, %v351, 0
  %687 = vmatprep.subr.bf16.mxu0 0
  %688 = vmatpush1.bf16.msra.mxu0 %v572
  %689 = vmatprep.subr.bf16.mxu0 0
  %690 = vmatpush1.bf16.msra.mxu0 %v573
  %691 = vmatprep.subr.bf16.mxu0 0
  %692 = vmatpush1.bf16.msra.mxu0 %v574
  %693 = vmatprep.subr.bf16.mxu0 0
  %694 = vmatpush1.bf16.msra.mxu0 %v575
  %695 = vmatprep.subr.bf16.mxu0 0
  %696 = vmatpush1.bf16.msra.mxu0 %v576
  %697 = vmatprep.subr.bf16.mxu0 0
  %698 = vmatpush1.bf16.msra.mxu0 %v577
  %699 = vmatprep.subr.bf16.mxu0 0
  %700 = vmatpush1.bf16.msra.mxu0 %v578
  %701 = vmatprep.subr.bf16.mxu0 0
  %702 = vmatpush1.bf16.msra.mxu0 %v579
  %703 = vmatprep.subr.bf16.mxu0 0
  %704 = vmatpush1.bf16.msra.mxu0 %v580
  %705 = vmatprep.subr.bf16.mxu0 0
  %706 = vmatpush1.bf16.msra.mxu0 %v581
  %707 = vmatprep.subr.bf16.mxu0 0
  %708 = vmatpush1.bf16.msra.mxu0 %v582
  %709 = vmatprep.subr.bf16.mxu0 0
  %710 = vmatpush1.bf16.msra.mxu0 %v583
  %711 = vmatprep.subr.bf16.mxu0 0
  %712 = vmatpush1.bf16.msra.mxu0 %v584
  %713 = vmatprep.subr.bf16.mxu0 0
  %714 = vmatpush1.bf16.msra.mxu0 %v585
  %715 = vmatprep.subr.bf16.mxu0 0
  %716 = vmatpush1.bf16.msra.mxu0 %v586
  %717 = vmatprep.subr.bf16.mxu0 0
  %718 = vmatpush1.bf16.msra.mxu0 %v587
  %719 = vmatprep.mubr.bf16.mxu0 %v305
  %720 = vmatmul.mubr.bf16.gmra.mrb[0].mxu0 %v304
  %v721 = vpop.f32.mrb[0].mxu0
  %v722 = vadd.f32 %v158, %v721
  %v723 = vpop.f32.mrb[0].mxu0
  %v724 = vpop.f32.mrb[0].mxu0
  %v725 = vadd.f32 %v158, %v724
  %v726 = vpop.f32.mrb[0].mxu0
  %727 = vmatprep.mubr.bf16.mxu0 %v311
  %728 = vmatmul.mubr.bf16.gmra.mrb[0].mxu0 %v310
  %v729 = vpop.f32.mrb[0].mxu0
  %v730 = vadd.f32 %v158, %v729
  %v731 = vpop.f32.mrb[0].mxu0
  %v732 = vpop.f32.mrb[0].mxu0
  %v733 = vadd.f32 %v158, %v732
  %v734 = vpop.f32.mrb[0].mxu0
  %735 = vmatprep.mubr.bf16.mxu0 %v317
  %736 = vmatmul.mubr.bf16.gmra.mrb[0].mxu0 %v316
  %v737 = vpop.f32.mrb[0].mxu0
  %v738 = vadd.f32 %v158, %v737
  %v739 = vpop.f32.mrb[0].mxu0
  %v740 = vpop.f32.mrb[0].mxu0
  %v741 = vadd.f32 %v158, %v740
  %v742 = vpop.f32.mrb[0].mxu0
  %743 = vmatprep.mubr.bf16.mxu0 %v323
  %744 = vmatmul.mubr.bf16.gmra.mrb[0].mxu0 %v322
  %v745 = vpop.f32.mrb[0].mxu0
  %v746 = vadd.f32 %v158, %v745
  %v747 = vpop.f32.mrb[0].mxu0
  %v748 = vpop.f32.mrb[0].mxu0
  %v749 = vadd.f32 %v158, %v748
  %v750 = vpop.f32.mrb[0].mxu0
  %751 = vmatprep.mubr.bf16.mxu0 %v329
  %752 = vmatmul.mubr.bf16.gmra.mrb[0].mxu0 %v328
  %v753 = vpop.f32.mrb[0].mxu0
  %v754 = vadd.f32 %v158, %v753
  %v755 = vpop.f32.mrb[0].mxu0
  %v756 = vpop.f32.mrb[0].mxu0
  %v757 = vadd.f32 %v158, %v756
  %v758 = vpop.f32.mrb[0].mxu0
  %759 = vmatprep.mubr.bf16.mxu0 %v335
  %760 = vmatmul.mubr.bf16.gmra.mrb[0].mxu0 %v334
  %v761 = vpop.f32.mrb[0].mxu0
  %v762 = vadd.f32 %v158, %v761
  %v763 = vpop.f32.mrb[0].mxu0
  %v764 = vpop.f32.mrb[0].mxu0
  %v765 = vadd.f32 %v158, %v764
  %v766 = vpop.f32.mrb[0].mxu0
  %767 = vmatprep.mubr.bf16.mxu0 %v341
  %768 = vmatmul.mubr.bf16.gmra.mrb[0].mxu0 %v340
  %v769 = vpop.f32.mrb[0].mxu0
  %v770 = vadd.f32 %v158, %v769
  %v771 = vpop.f32.mrb[0].mxu0
  %v772 = vpop.f32.mrb[0].mxu0
  %v773 = vadd.f32 %v158, %v772
  %v774 = vpop.f32.mrb[0].mxu0
  %775 = vmatprep.mubr.bf16.mxu0 %v347
  %776 = vmatmul.mubr.bf16.gmra.mrb[0].mxu0 %v346
  %v777 = vpop.f32.mrb[0].mxu0
  %v778 = vadd.f32 %v158, %v777
  %v779 = vpop.f32.mrb[0].mxu0
  %v780 = vpop.f32.mrb[0].mxu0
  %v781 = vadd.f32 %v158, %v780
  %v782 = vpop.f32.mrb[0].mxu0
  %783 = vdwg.mxu0
  %784 = vmatprep.subr.bf16.mxu0 0
  %785 = vmatpush1.bf16.msra.mxu0 %v588
  %786 = vmatprep.subr.bf16.mxu0 0
  %787 = vmatpush1.bf16.msra.mxu0 %v589
  %788 = vmatprep.subr.bf16.mxu0 0
  %789 = vmatpush1.bf16.msra.mxu0 %v590
  %790 = vmatprep.subr.bf16.mxu0 0
  %791 = vmatpush1.bf16.msra.mxu0 %v591
  %792 = vmatprep.subr.bf16.mxu0 0
  %793 = vmatpush1.bf16.msra.mxu0 %v592
  %794 = vmatprep.subr.bf16.mxu0 0
  %795 = vmatpush1.bf16.msra.mxu0 %v593
  %796 = vmatprep.subr.bf16.mxu0 0
  %797 = vmatpush1.bf16.msra.mxu0 %v594
  %798 = vmatprep.subr.bf16.mxu0 0
  %799 = vmatpush1.bf16.msra.mxu0 %v595
  %800 = vmatprep.subr.bf16.mxu0 0
  %801 = vmatpush1.bf16.msra.mxu0 %v596
  %802 = vmatprep.subr.bf16.mxu0 0
  %803 = vmatpush1.bf16.msra.mxu0 %v597
  %804 = vmatprep.subr.bf16.mxu0 0
  %805 = vmatpush1.bf16.msra.mxu0 %v598
  %806 = vmatprep.subr.bf16.mxu0 0
  %807 = vmatpush1.bf16.msra.mxu0 %v599
  %808 = vmatprep.subr.bf16.mxu0 0
  %809 = vmatpush1.bf16.msra.mxu0 %v600
  %810 = vmatprep.subr.bf16.mxu0 0
  %811 = vmatpush1.bf16.msra.mxu0 %v601
  %812 = vmatprep.subr.bf16.mxu0 0
  %813 = vmatpush1.bf16.msra.mxu0 %v602
  %814 = vmatprep.subr.bf16.mxu0 0
  %815 = vmatpush1.bf16.msra.mxu0 %v603
  %816 = vmatprep.mubr.bf16.mxu0 %v307
  %817 = vmatmul.mubr.bf16.gmra.mrb[0].mxu0 %v306
  %v818 = vpop.f32.mrb[0].mxu0
  %v819 = vadd.f32 %v722, %v818
  %v820 = vpop.f32.mrb[0].mxu0
  %v821 = vpop.f32.mrb[0].mxu0
  %v822 = vadd.f32 %v725, %v821
  %v823 = vpop.f32.mrb[0].mxu0
  %824 = vmatprep.mubr.bf16.mxu0 %v313
  %825 = vmatmul.mubr.bf16.gmra.mrb[0].mxu0 %v312
  %v826 = vpop.f32.mrb[0].mxu0
  %v827 = vadd.f32 %v730, %v826
  %v828 = vpop.f32.mrb[0].mxu0
  %v829 = vpop.f32.mrb[0].mxu0
  %v830 = vadd.f32 %v733, %v829
  %v831 = vpop.f32.mrb[0].mxu0
  %832 = vmatprep.mubr.bf16.mxu0 %v319
  %833 = vmatmul.mubr.bf16.gmra.mrb[0].mxu0 %v318
  %v834 = vpop.f32.mrb[0].mxu0
  %v835 = vadd.f32 %v738, %v834
  %v836 = vpop.f32.mrb[0].mxu0
  %v837 = vpop.f32.mrb[0].mxu0
  %v838 = vadd.f32 %v741, %v837
  %v839 = vpop.f32.mrb[0].mxu0
  %840 = vmatprep.mubr.bf16.mxu0 %v325
  %841 = vmatmul.mubr.bf16.gmra.mrb[0].mxu0 %v324
  %v842 = vpop.f32.mrb[0].mxu0
  %v843 = vadd.f32 %v746, %v842
  %v844 = vpop.f32.mrb[0].mxu0
  %v845 = vpop.f32.mrb[0].mxu0
  %v846 = vadd.f32 %v749, %v845
  %v847 = vpop.f32.mrb[0].mxu0
  %848 = vmatprep.mubr.bf16.mxu0 %v331
  %849 = vmatmul.mubr.bf16.gmra.mrb[0].mxu0 %v330
  %v850 = vpop.f32.mrb[0].mxu0
  %v851 = vadd.f32 %v754, %v850
  %v852 = vpop.f32.mrb[0].mxu0
  %v853 = vpop.f32.mrb[0].mxu0
  %v854 = vadd.f32 %v757, %v853
  %v855 = vpop.f32.mrb[0].mxu0
  %856 = vmatprep.mubr.bf16.mxu0 %v337
  %857 = vmatmul.mubr.bf16.gmra.mrb[0].mxu0 %v336
  %v858 = vpop.f32.mrb[0].mxu0
  %v859 = vadd.f32 %v762, %v858
  %v860 = vpop.f32.mrb[0].mxu0
  %v861 = vpop.f32.mrb[0].mxu0
  %v862 = vadd.f32 %v765, %v861
  %v863 = vpop.f32.mrb[0].mxu0
  %864 = vmatprep.mubr.bf16.mxu0 %v343
  %865 = vmatmul.mubr.bf16.gmra.mrb[0].mxu0 %v342
  %v866 = vpop.f32.mrb[0].mxu0
  %v867 = vadd.f32 %v770, %v866
  %v868 = vpop.f32.mrb[0].mxu0
  %v869 = vpop.f32.mrb[0].mxu0
  %v870 = vadd.f32 %v773, %v869
  %v871 = vpop.f32.mrb[0].mxu0
  %872 = vmatprep.mubr.bf16.mxu0 %v349
  %873 = vmatmul.mubr.bf16.gmra.mrb[0].mxu0 %v348
  %v874 = vpop.f32.mrb[0].mxu0
  %v875 = vadd.f32 %v778, %v874
  %v876 = vpop.f32.mrb[0].mxu0
  %v877 = vpop.f32.mrb[0].mxu0
  %v878 = vadd.f32 %v781, %v877
  %v879 = vpop.f32.mrb[0].mxu0
  %880 = vdwg.mxu0
  %881 = vmatprep.subr.bf16.mxu0 0
  %882 = vmatpush1.bf16.msra.mxu0 %v604
  %883 = vmatprep.subr.bf16.mxu0 0
  %884 = vmatpush1.bf16.msra.mxu0 %v605
  %885 = vmatprep.subr.bf16.mxu0 0
  %886 = vmatpush1.bf16.msra.mxu0 %v606
  %887 = vmatprep.subr.bf16.mxu0 0
  %888 = vmatpush1.bf16.msra.mxu0 %v607
  %889 = vmatprep.subr.bf16.mxu0 0
  %890 = vmatpush1.bf16.msra.mxu0 %v608
  %891 = vmatprep.subr.bf16.mxu0 0
  %892 = vmatpush1.bf16.msra.mxu0 %v609
  %893 = vmatprep.subr.bf16.mxu0 0
  %894 = vmatpush1.bf16.msra.mxu0 %v610
  %895 = vmatprep.subr.bf16.mxu0 0
  %896 = vmatpush1.bf16.msra.mxu0 %v611
  %897 = vmatprep.subr.bf16.mxu0 0
  %898 = vmatpush1.bf16.msra.mxu0 %v612
  %899 = vmatprep.subr.bf16.mxu0 0
  %900 = vmatpush1.bf16.msra.mxu0 %v613
  %901 = vmatprep.subr.bf16.mxu0 0
  %902 = vmatpush1.bf16.msra.mxu0 %v614
  %903 = vmatprep.subr.bf16.mxu0 0
  %904 = vmatpush1.bf16.msra.mxu0 %v615
  %905 = vmatprep.subr.bf16.mxu0 0
  %906 = vmatpush1.bf16.msra.mxu0 %v616
  %907 = vmatprep.subr.bf16.mxu0 0
  %908 = vmatpush1.bf16.msra.mxu0 0
  %909 = vmatprep.subr.bf16.mxu0 0
  %910 = vmatpush1.bf16.msra.mxu0 0
  %911 = vmatprep.subr.bf16.mxu0 0
  %912 = vmatpush1.bf16.msra.mxu0 0
  %913 = vmatprep.mubr.bf16.mxu0 %v664
  %914 = vmatmul.mubr.bf16.gmra.mrb[0].mxu0 %v308
  %v915 = vpop.f32.mrb[0].mxu0
  %v916 = vadd.f32 %v819, %v915
  %v917 = vpop.f32.mrb[0].mxu0
  %v918 = vpop.f32.mrb[0].mxu0
  %v919 = vadd.f32 %v822, %v918
  %v920 = vpop.f32.mrb[0].mxu0
  %921 = vmatprep.mubr.bf16.mxu0 %v667
  %922 = vmatmul.mubr.bf16.gmra.mrb[0].mxu0 %v314
  %v923 = vpop.f32.mrb[0].mxu0
  %v924 = vadd.f32 %v827, %v923
  %v925 = vpop.f32.mrb[0].mxu0
  %v926 = vpop.f32.mrb[0].mxu0
  %v927 = vadd.f32 %v830, %v926
  %v928 = vpop.f32.mrb[0].mxu0
  %929 = vmatprep.mubr.bf16.mxu0 %v670
  %930 = vmatmul.mubr.bf16.gmra.mrb[0].mxu0 %v320
  %v931 = vpop.f32.mrb[0].mxu0
  %v932 = vadd.f32 %v835, %v931
  %v933 = vpop.f32.mrb[0].mxu0
  %v934 = vpop.f32.mrb[0].mxu0
  %v935 = vadd.f32 %v838, %v934
  %v936 = vpop.f32.mrb[0].mxu0
  %937 = vmatprep.mubr.bf16.mxu0 %v673
  %938 = vmatmul.mubr.bf16.gmra.mrb[0].mxu0 %v326
  %v939 = vpop.f32.mrb[0].mxu0
  %v940 = vadd.f32 %v843, %v939
  %v941 = vpop.f32.mrb[0].mxu0
  %v942 = vpop.f32.mrb[0].mxu0
  %v943 = vadd.f32 %v846, %v942
  %v944 = vpop.f32.mrb[0].mxu0
  %945 = vmatprep.mubr.bf16.mxu0 %v676
  %946 = vmatmul.mubr.bf16.gmra.mrb[0].mxu0 %v332
  %v947 = vpop.f32.mrb[0].mxu0
  %v948 = vadd.f32 %v851, %v947
  %v949 = vpop.f32.mrb[0].mxu0
  %v950 = vpop.f32.mrb[0].mxu0
  %v951 = vadd.f32 %v854, %v950
  %v952 = vpop.f32.mrb[0].mxu0
  %953 = vmatprep.mubr.bf16.mxu0 %v679
  %954 = vmatmul.mubr.bf16.gmra.mrb[0].mxu0 %v338
  %v955 = vpop.f32.mrb[0].mxu0
  %v956 = vadd.f32 %v859, %v955
  %v957 = vpop.f32.mrb[0].mxu0
  %v958 = vpop.f32.mrb[0].mxu0
  %v959 = vadd.f32 %v862, %v958
  %v960 = vpop.f32.mrb[0].mxu0
  %961 = vmatprep.mubr.bf16.mxu0 %v682
  %962 = vmatmul.mubr.bf16.gmra.mrb[0].mxu0 %v344
  %v963 = vpop.f32.mrb[0].mxu0
  %v964 = vadd.f32 %v867, %v963
  %v965 = vpop.f32.mrb[0].mxu0
  %v966 = vpop.f32.mrb[0].mxu0
  %v967 = vadd.f32 %v870, %v966
  %v968 = vpop.f32.mrb[0].mxu0
  %969 = vmatprep.mubr.bf16.mxu0 %v685
  %970 = vmatmul.mubr.bf16.gmra.mrb[0].mxu0 %v350
  %v971 = vpop.f32.mrb[0].mxu0
  %v972 = vadd.f32 %v875, %v971
  %v973 = vpop.f32.mrb[0].mxu0
  %v974 = vpop.f32.mrb[0].mxu0
  %v975 = vadd.f32 %v878, %v974
  %v976 = vpop.f32.mrb[0].mxu0
  %977 = vdwg.mxu0
  %vm978 = vcmp.ge.f32.partialorder %v916, 0.0
  %vm979 = vcmp.ge.f32.partialorder %v919, 0.0
  %vm980 = vcmp.ge.f32.partialorder %v924, 0.0
  %vm981 = vcmp.ge.f32.partialorder %v927, 0.0
  %vm982 = vcmp.ge.f32.partialorder %v932, 0.0
  %vm983 = vcmp.ge.f32.partialorder %v935, 0.0
  %vm984 = vcmp.ge.f32.partialorder %v940, 0.0
  %vm985 = vcmp.ge.f32.partialorder %v943, 0.0
  %vm986 = vcmp.ge.f32.partialorder %v948, 0.0
  %vm987 = vcmp.ge.f32.partialorder %v951, 0.0
  %vm988 = vcmp.ge.f32.partialorder %v956, 0.0
  %vm989 = vcmp.ge.f32.partialorder %v959, 0.0
  %vm990 = vcmp.ge.f32.partialorder %v964, 0.0
  %vm991 = vcmp.ge.f32.partialorder %v967, 0.0
  %vm992 = vcmp.ge.f32.partialorder %v972, 0.0
  %vm993 = vcmp.ge.f32.partialorder %v975, 0.0
  %v994 = vmul.f32 %v916, 0.01
  %v995 = vmul.f32 %v919, 0.01
  %v996 = vmul.f32 %v924, 0.01
  %v997 = vmul.f32 %v927, 0.01
  %v998 = vmul.f32 %v932, 0.01
  %v999 = vmul.f32 %v935, 0.01
  %v1000 = vmul.f32 %v940, 0.01
  %v1001 = vmul.f32 %v943, 0.01
  %v1002 = vmul.f32 %v948, 0.01
  %v1003 = vmul.f32 %v951, 0.01
  %v1004 = vmul.f32 %v956, 0.01
  %v1005 = vmul.f32 %v959, 0.01
  %v1006 = vmul.f32 %v964, 0.01
  %v1007 = vmul.f32 %v967, 0.01
  %v1008 = vmul.f32 %v972, 0.01
  %v1009 = vmul.f32 %v975, 0.01
  %v1010 = vsel %vm978, %v916, %v994
  %v1011 = vsel %vm979, %v919, %v995
  %v1012 = vsel %vm980, %v924, %v996
  %v1013 = vsel %vm981, %v927, %v997
  %v1014 = vsel %vm982, %v932, %v998
  %v1015 = vsel %vm983, %v935, %v999
  %v1016 = vsel %vm984, %v940, %v1000
  %v1017 = vsel %vm985, %v943, %v1001
  %v1018 = vsel %vm986, %v948, %v1002
  %v1019 = vsel %vm987, %v951, %v1003
  %v1020 = vsel %vm988, %v956, %v1004
  %v1021 = vsel %vm989, %v959, %v1005
  %v1022 = vsel %vm990, %v964, %v1006
  %v1023 = vsel %vm991, %v967, %v1007
  %v1024 = vsel %vm992, %v972, %v1008
  %v1025 = vsel %vm993, %v975, %v1009
  %1026 = vst [vmem:[%s3] sm:$0xff] %v1010
  %1027 = vst [vmem:[%s3 + $0x8] sm:$0xff] %v1011
  %1028 = vst [vmem:[%s3 + $0x10] sm:$0xff] %v1012
  %1029 = vst [vmem:[%s3 + $0x18] sm:$0xff] %v1013
  %1030 = vst [vmem:[%s3 + $0x20] sm:$0xff] %v1014
  %1031 = vst [vmem:[%s3 + $0x28] sm:$0xff] %v1015
  %1032 = vst [vmem:[%s3 + $0x30] sm:$0xff] %v1016
  %1033 = vst [vmem:[%s3 + $0x38] sm:$0xff] %v1017
  %1034 = vst [vmem:[%s3 + $0x40] sm:$0xff] %v1018
  %1035 = vst [vmem:[%s3 + $0x48] sm:$0xff] %v1019
  %1036 = vst [vmem:[%s3 + $0x50] sm:$0xff] %v1020
  %1037 = vst [vmem:[%s3 + $0x58] sm:$0xff] %v1021
  %1038 = vst [vmem:[%s3 + $0x60] sm:$0xff] %v1022
  %1039 = vst [vmem:[%s3 + $0x68] sm:$0xff] %v1023
  %1040 = vst [vmem:[%s3 + $0x70] sm:$0xff] %v1024
  %1041 = vst [vmem:[%s3 + $0x78] sm:$0xff] %v1025
  // Predicated region
  $region14: #{other_net_forward.8} parent=0 // pred_check
    _
  $region15: #{other_net_forward.8} parent=0 // pred_check_branch
    %1043 = sbr.rel (0) target = $region17
  $region16: #{other_net_forward.8} parent=0 // pred_region
    _
  $region17: #{other_net_forward.8} parent=0 // pred_fallthru
    _
  // Predicated region
  $region18: #{other_net_forward.8} parent=0 // pred_check
    _
  $region19: #{other_net_forward.8} parent=0 // pred_check_branch
    %1045 = sbr.rel (0) target = $region21
  $region20: #{other_net_forward.8} parent=0 // pred_region
    _
  $region21: #{other_net_forward.8} parent=0 // pred_fallthru
    _

// kernel: other_net_forward.9
$region0: #{other_net_forward.9}
  #allocation0 [shape = 'u32[]', space=smem, size = 0x4, offset = 0x4, fixed_abs, tag = 'smem constant byte address 0x4 - core index']
  #allocation1 [shape = 'u32[144,128]{1,0:T(1,128)}', space=vmem, size = 0x12000, scoped, tag = 'internal scratch']
  %s0 = inlined_call_operand.vmem [shape: bf16[2,1920], index: 0, kind: input, shape index: {}]
  %s1 = inlined_call_operand.vmem [shape: bf16[1920,128], index: 1, kind: input, shape index: {}]
  %s2 = inlined_call_operand.vmem [shape: f32[1,128], index: 2, kind: input, shape index: {}]
  %s3 = inlined_call_operand.hbm [shape: f32[2,128], index: 3, kind: output, shape index: {}]
  %s4 = sld [smem:[#allocation0]]
  $region22: #{other_net_forward.9} parent=0
    _
  %s6 = ssub.s32 1, %s4
  %s7 = scalar_select 0, %s6, %s4
  $region1: #{other_net_forward.9} parent=0
    #allocation2 [shape = 'u8[1024]{0}', space=vmem, size = 0x400, scoped, tag = 'output window, operand 0, single buffered']
    #allocation3 [shape = 's32[1]{0}', space=sflag, size = 0x4, scoped, tag = 'scoped memory for other_net_forward.9']
    %8 = vsyncpa [#allocation3], 0
    // Predicated region
    $region2: #{other_net_forward.9} parent=1 // pred_check
      _
    $region3: #{other_net_forward.9} parent=1 // pred_check_branch
      %10 = sbr.rel (0) target = $region5
    $region4: #{other_net_forward.9} parent=1 // pred_region
      _
    $region5: #{other_net_forward.9} parent=1 // pred_fallthru
      _
    // Predicated region
    $region6: #{other_net_forward.9} parent=1 // pred_check
      _
    $region7: #{other_net_forward.9} parent=1 // pred_check_branch
      %12 = sbr.rel (0) target = $region9
    $region8: #{other_net_forward.9} parent=1 // pred_region
      _
    $region9: #{other_net_forward.9} parent=1 // pred_fallthru
      _
    // Predicated region
    $region10: #{other_net_forward.9} parent=1 // pred_check
      _
    $region11: #{other_net_forward.9} parent=1 // pred_check_branch
      %14 = sbr.rel (0) target = $region13
    $region12: #{other_net_forward.9} parent=1 // pred_region
      _
    $region13: #{other_net_forward.9} parent=1 // pred_fallthru
      _
    %v16 = vld [vmem:[%s0] sm:$0xff]
    %v17 = vld [vmem:[%s0 + $0x8] sm:$0x7f]
    %v18 = vld [vmem:[%s1] sm:$0xf]
    %v19 = vld [vmem:[%s1 + $0x4] sm:$0xf]
    %v20 = vld [vmem:[%s1 + $0x8] sm:$0xf]
    %v21 = vld [vmem:[%s1 + $0xc] sm:$0xf]
    %v22 = vld [vmem:[%s1 + $0x10] sm:$0xf]
    %v23 = vld [vmem:[%s1 + $0x14] sm:$0xf]
    %v24 = vld [vmem:[%s1 + $0x18] sm:$0xf]
    %v25 = vld [vmem:[%s1 + $0x1c] sm:$0xf]
    %v26 = vld [vmem:[%s1 + $0x20] sm:$0xf]
    %v27 = vld [vmem:[%s1 + $0x24] sm:$0xf]
    %v28 = vld [vmem:[%s1 + $0x28] sm:$0xf]
    %v29 = vld [vmem:[%s1 + $0x2c] sm:$0xf]
    %v30 = vld [vmem:[%s1 + $0x30] sm:$0xf]
    %v31 = vld [vmem:[%s1 + $0x34] sm:$0xf]
    %v32 = vld [vmem:[%s1 + $0x38] sm:$0xf]
    %v33 = vld [vmem:[%s1 + $0x3c] sm:$0xf]
    %v34 = vld [vmem:[%s1 + $0x40] sm:$0xf]
    %v35 = vld [vmem:[%s1 + $0x44] sm:$0xf]
    %v36 = vld [vmem:[%s1 + $0x48] sm:$0xf]
    %v37 = vld [vmem:[%s1 + $0x4c] sm:$0xf]
    %v38 = vld [vmem:[%s1 + $0x50] sm:$0xf]
    %v39 = vld [vmem:[%s1 + $0x54] sm:$0xf]
    %v40 = vld [vmem:[%s1 + $0x58] sm:$0xf]
    %v41 = vld [vmem:[%s1 + $0x5c] sm:$0xf]
    %v42 = vld [vmem:[%s1 + $0x60] sm:$0xf]
    %v43 = vld [vmem:[%s1 + $0x64] sm:$0xf]
    %v44 = vld [vmem:[%s1 + $0x68] sm:$0xf]
    %v45 = vld [vmem:[%s1 + $0x6c] sm:$0xf]
    %v46 = vld [vmem:[%s1 + $0x70] sm:$0xf]
    %v47 = vld [vmem:[%s1 + $0x74] sm:$0xf]
    %v48 = vld [vmem:[%s1 + $0x78] sm:$0xf]
    %v49 = vld [vmem:[%s1 + $0x7c] sm:$0xf]
    %v50 = vld [vmem:[%s1 + $0x80] sm:$0xf]
    %v51 = vld [vmem:[%s1 + $0x84] sm:$0xf]
    %v52 = vld [vmem:[%s1 + $0x88] sm:$0xf]
    %v53 = vld [vmem:[%s1 + $0x8c] sm:$0xf]
    %v54 = vld [vmem:[%s1 + $0x90] sm:$0xf]
    %v55 = vld [vmem:[%s1 + $0x94] sm:$0xf]
    %v56 = vld [vmem:[%s1 + $0x98] sm:$0xf]
    %v57 = vld [vmem:[%s1 + $0x9c] sm:$0xf]
    %v58 = vld [vmem:[%s1 + $0xa0] sm:$0xf]
    %v59 = vld [vmem:[%s1 + $0xa4] sm:$0xf]
    %v60 = vld [vmem:[%s1 + $0xa8] sm:$0xf]
    %v61 = vld [vmem:[%s1 + $0xac] sm:$0xf]
    %v62 = vld [vmem:[%s1 + $0xb0] sm:$0xf]
    %v63 = vld [vmem:[%s1 + $0xb4] sm:$0xf]
    %v64 = vld [vmem:[%s1 + $0xb8] sm:$0xf]
    %v65 = vld [vmem:[%s1 + $0xbc] sm:$0xf]
    %v66 = vld [vmem:[%s1 + $0xc0] sm:$0xf]
    %v67 = vld [vmem:[%s1 + $0xc4] sm:$0xf]
    %v68 = vld [vmem:[%s1 + $0xc8] sm:$0xf]
    %v69 = vld [vmem:[%s1 + $0xcc] sm:$0xf]
    %v70 = vld [vmem:[%s1 + $0xd0] sm:$0xf]
    %v71 = vld [vmem:[%s1 + $0xd4] sm:$0xf]
    %v72 = vld [vmem:[%s1 + $0xd8] sm:$0xf]
    %v73 = vld [vmem:[%s1 + $0xdc] sm:$0xf]
    %v74 = vld [vmem:[%s1 + $0xe0] sm:$0xf]
    %v75 = vld [vmem:[%s1 + $0xe4] sm:$0xf]
    %v76 = vld [vmem:[%s1 + $0xe8] sm:$0xf]
    %v77 = vld [vmem:[%s1 + $0xec] sm:$0xf]
    %v78 = vld [vmem:[%s1 + $0xf0] sm:$0xf]
    %v79 = vld [vmem:[%s1 + $0xf4] sm:$0xf]
    %v80 = vld [vmem:[%s1 + $0xf8] sm:$0xf]
    %v81 = vld [vmem:[%s1 + $0xfc] sm:$0xf]
    %v82 = vld [vmem:[%s1 + $0x100] sm:$0xf]
    %v83 = vld [vmem:[%s1 + $0x104] sm:$0xf]
    %v84 = vld [vmem:[%s1 + $0x108] sm:$0xf]
    %v85 = vld [vmem:[%s1 + $0x10c] sm:$0xf]
    %v86 = vld [vmem:[%s1 + $0x110] sm:$0xf]
    %v87 = vld [vmem:[%s1 + $0x114] sm:$0xf]
    %v88 = vld [vmem:[%s1 + $0x118] sm:$0xf]
    %v89 = vld [vmem:[%s1 + $0x11c] sm:$0xf]
    %v90 = vld [vmem:[%s1 + $0x120] sm:$0xf]
    %v91 = vld [vmem:[%s1 + $0x124] sm:$0xf]
    %v92 = vld [vmem:[%s1 + $0x128] sm:$0xf]
    %v93 = vld [vmem:[%s1 + $0x12c] sm:$0xf]
    %v94 = vld [vmem:[%s1 + $0x130] sm:$0xf]
    %v95 = vld [vmem:[%s1 + $0x134] sm:$0xf]
    %v96 = vld [vmem:[%s1 + $0x138] sm:$0xf]
    %v97 = vld [vmem:[%s1 + $0x13c] sm:$0xf]
    %v98 = vld [vmem:[%s1 + $0x140] sm:$0xf]
    %v99 = vld [vmem:[%s1 + $0x144] sm:$0xf]
    %v100 = vld [vmem:[%s1 + $0x148] sm:$0xf]
    %v101 = vld [vmem:[%s1 + $0x14c] sm:$0xf]
    %v102 = vld [vmem:[%s1 + $0x150] sm:$0xf]
    %v103 = vld [vmem:[%s1 + $0x154] sm:$0xf]
    %v104 = vld [vmem:[%s1 + $0x158] sm:$0xf]
    %v105 = vld [vmem:[%s1 + $0x15c] sm:$0xf]
    %v106 = vld [vmem:[%s1 + $0x160] sm:$0xf]
    %v107 = vld [vmem:[%s1 + $0x164] sm:$0xf]
    %v108 = vld [vmem:[%s1 + $0x168] sm:$0xf]
    %v109 = vld [vmem:[%s1 + $0x16c] sm:$0xf]
    %v110 = vld [vmem:[%s1 + $0x170] sm:$0xf]
    %v111 = vld [vmem:[%s1 + $0x174] sm:$0xf]
    %v112 = vld [vmem:[%s1 + $0x178] sm:$0xf]
    %v113 = vld [vmem:[%s1 + $0x17c] sm:$0xf]
    %v114 = vld [vmem:[%s1 + $0x180] sm:$0xf]
    %v115 = vld [vmem:[%s1 + $0x184] sm:$0xf]
    %v116 = vld [vmem:[%s1 + $0x188] sm:$0xf]
    %v117 = vld [vmem:[%s1 + $0x18c] sm:$0xf]
    %v118 = vld [vmem:[%s1 + $0x190] sm:$0xf]
    %v119 = vld [vmem:[%s1 + $0x194] sm:$0xf]
    %v120 = vld [vmem:[%s1 + $0x198] sm:$0xf]
    %v121 = vld [vmem:[%s1 + $0x19c] sm:$0xf]
    %v122 = vld [vmem:[%s1 + $0x1a0] sm:$0xf]
    %v123 = vld [vmem:[%s1 + $0x1a4] sm:$0xf]
    %v124 = vld [vmem:[%s1 + $0x1a8] sm:$0xf]
    %v125 = vld [vmem:[%s1 + $0x1ac] sm:$0xf]
    %v126 = vld [vmem:[%s1 + $0x1b0] sm:$0xf]
    %v127 = vld [vmem:[%s1 + $0x1b4] sm:$0xf]
    %v128 = vld [vmem:[%s1 + $0x1b8] sm:$0xf]
    %v129 = vld [vmem:[%s1 + $0x1bc] sm:$0xf]
    %v130 = vld [vmem:[%s1 + $0x1c0] sm:$0xf]
    %v131 = vld [vmem:[%s1 + $0x1c4] sm:$0xf]
    %v132 = vld [vmem:[%s1 + $0x1c8] sm:$0xf]
    %v133 = vld [vmem:[%s1 + $0x1cc] sm:$0xf]
    %v134 = vld [vmem:[%s1 + $0x1d0] sm:$0xf]
    %v135 = vld [vmem:[%s1 + $0x1d4] sm:$0xf]
    %v136 = vld [vmem:[%s1 + $0x1d8] sm:$0xf]
    %v137 = vld [vmem:[%s1 + $0x1dc] sm:$0xf]
    %v138 = vld [vmem:[%s1 + $0x1e0] sm:$0xf]
    %v139 = vld [vmem:[%s1 + $0x1e4] sm:$0xf]
    %v140 = vld [vmem:[%s1 + $0x1e8] sm:$0xf]
    %v141 = vld [vmem:[%s1 + $0x1ec] sm:$0xf]
    %v142 = vld [vmem:[%s1 + $0x1f0] sm:$0xf]
    %v143 = vld [vmem:[%s1 + $0x1f4] sm:$0xf]
    %v144 = vld [vmem:[%s1 + $0x1f8] sm:$0xf]
    %v145 = vld [vmem:[%s1 + $0x1fc] sm:$0xf]
    %v146 = vld [vmem:[%s1 + $0x200] sm:$0xf]
    %v147 = vld [vmem:[%s1 + $0x204] sm:$0xf]
    %v148 = vld [vmem:[%s1 + $0x208] sm:$0xf]
    %v149 = vld [vmem:[%s1 + $0x20c] sm:$0xf]
    %v150 = vld [vmem:[%s1 + $0x210] sm:$0xf]
    %v151 = vld [vmem:[%s1 + $0x214] sm:$0xf]
    %v152 = vld [vmem:[%s1 + $0x218] sm:$0xf]
    %v153 = vld [vmem:[%s1 + $0x21c] sm:$0xf]
    %v154 = vld [vmem:[%s1 + $0x220] sm:$0xf]
    %v155 = vld [vmem:[%s1 + $0x224] sm:$0xf]
    %v156 = vld [vmem:[%s1 + $0x228] sm:$0xf]
    %v157 = vld [vmem:[%s1 + $0x22c] sm:$0xf]
    %v158 = vld [vmem:[%s1 + $0x230] sm:$0xf]
    %v159 = vld [vmem:[%s1 + $0x234] sm:$0xf]
    %v160 = vld [vmem:[%s1 + $0x238] sm:$0xf]
    %v161 = vld [vmem:[%s1 + $0x23c] sm:$0xf]
    %v162 = vld [vmem:[%s1 + $0x240] sm:$0xf]
    %v163 = vld [vmem:[%s1 + $0x244] sm:$0xf]
    %v164 = vld [vmem:[%s1 + $0x248] sm:$0xf]
    %v165 = vld [vmem:[%s1 + $0x24c] sm:$0xf]
    %v166 = vld [vmem:[%s1 + $0x250] sm:$0xf]
    %v167 = vld [vmem:[%s1 + $0x254] sm:$0xf]
    %v168 = vld [vmem:[%s1 + $0x258] sm:$0xf]
    %v169 = vld [vmem:[%s1 + $0x25c] sm:$0xf]
    %v170 = vld [vmem:[%s1 + $0x260] sm:$0xf]
    %v171 = vld [vmem:[%s1 + $0x264] sm:$0xf]
    %v172 = vld [vmem:[%s1 + $0x268] sm:$0xf]
    %v173 = vld [vmem:[%s1 + $0x26c] sm:$0xf]
    %v174 = vld [vmem:[%s1 + $0x270] sm:$0xf]
    %v175 = vld [vmem:[%s1 + $0x274] sm:$0xf]
    %v176 = vld [vmem:[%s1 + $0x278] sm:$0xf]
    %v177 = vld [vmem:[%s1 + $0x27c] sm:$0xf]
    %v178 = vld [vmem:[%s1 + $0x280] sm:$0xf]
    %v179 = vld [vmem:[%s1 + $0x284] sm:$0xf]
    %v180 = vld [vmem:[%s1 + $0x288] sm:$0xf]
    %v181 = vld [vmem:[%s1 + $0x28c] sm:$0xf]
    %v182 = vld [vmem:[%s1 + $0x290] sm:$0xf]
    %v183 = vld [vmem:[%s1 + $0x294] sm:$0xf]
    %v184 = vld [vmem:[%s1 + $0x298] sm:$0xf]
    %v185 = vld [vmem:[%s1 + $0x29c] sm:$0xf]
    %v186 = vld [vmem:[%s1 + $0x2a0] sm:$0xf]
    %v187 = vld [vmem:[%s1 + $0x2a4] sm:$0xf]
    %v188 = vld [vmem:[%s1 + $0x2a8] sm:$0xf]
    %v189 = vld [vmem:[%s1 + $0x2ac] sm:$0xf]
    %v190 = vld [vmem:[%s1 + $0x2b0] sm:$0xf]
    %v191 = vld [vmem:[%s1 + $0x2b4] sm:$0xf]
    %v192 = vld [vmem:[%s1 + $0x2b8] sm:$0xf]
    %v193 = vld [vmem:[%s1 + $0x2bc] sm:$0xf]
    %v194 = vld [vmem:[%s1 + $0x2c0] sm:$0xf]
    %v195 = vld [vmem:[%s1 + $0x2c4] sm:$0xf]
    %v196 = vld [vmem:[%s1 + $0x2c8] sm:$0xf]
    %v197 = vld [vmem:[%s1 + $0x2cc] sm:$0xf]
    %v198 = vld [vmem:[%s1 + $0x2d0] sm:$0xf]
    %v199 = vld [vmem:[%s1 + $0x2d4] sm:$0xf]
    %v200 = vld [vmem:[%s1 + $0x2d8] sm:$0xf]
    %v201 = vld [vmem:[%s1 + $0x2dc] sm:$0xf]
    %v202 = vld [vmem:[%s1 + $0x2e0] sm:$0xf]
    %v203 = vld [vmem:[%s1 + $0x2e4] sm:$0xf]
    %v204 = vld [vmem:[%s1 + $0x2e8] sm:$0xf]
    %v205 = vld [vmem:[%s1 + $0x2ec] sm:$0xf]
    %v206 = vld [vmem:[%s1 + $0x2f0] sm:$0xf]
    %v207 = vld [vmem:[%s1 + $0x2f4] sm:$0xf]
    %v208 = vld [vmem:[%s1 + $0x2f8] sm:$0xf]
    %v209 = vld [vmem:[%s1 + $0x2fc] sm:$0xf]
    %v210 = vld [vmem:[%s1 + $0x300] sm:$0xf]
    %v211 = vld [vmem:[%s1 + $0x304] sm:$0xf]
    %v212 = vld [vmem:[%s1 + $0x308] sm:$0xf]
    %v213 = vld [vmem:[%s1 + $0x30c] sm:$0xf]
    %v214 = vld [vmem:[%s1 + $0x310] sm:$0xf]
    %v215 = vld [vmem:[%s1 + $0x314] sm:$0xf]
    %v216 = vld [vmem:[%s1 + $0x318] sm:$0xf]
    %v217 = vld [vmem:[%s1 + $0x31c] sm:$0xf]
    %v218 = vld [vmem:[%s1 + $0x320] sm:$0xf]
    %v219 = vld [vmem:[%s1 + $0x324] sm:$0xf]
    %v220 = vld [vmem:[%s1 + $0x328] sm:$0xf]
    %v221 = vld [vmem:[%s1 + $0x32c] sm:$0xf]
    %v222 = vld [vmem:[%s1 + $0x330] sm:$0xf]
    %v223 = vld [vmem:[%s1 + $0x334] sm:$0xf]
    %v224 = vld [vmem:[%s1 + $0x338] sm:$0xf]
    %v225 = vld [vmem:[%s1 + $0x33c] sm:$0xf]
    %v226 = vld [vmem:[%s1 + $0x340] sm:$0xf]
    %v227 = vld [vmem:[%s1 + $0x344] sm:$0xf]
    %v228 = vld [vmem:[%s1 + $0x348] sm:$0xf]
    %v229 = vld [vmem:[%s1 + $0x34c] sm:$0xf]
    %v230 = vld [vmem:[%s1 + $0x350] sm:$0xf]
    %v231 = vld [vmem:[%s1 + $0x354] sm:$0xf]
    %v232 = vld [vmem:[%s1 + $0x358] sm:$0xf]
    %v233 = vld [vmem:[%s1 + $0x35c] sm:$0xf]
    %v234 = vld [vmem:[%s1 + $0x360] sm:$0xf]
    %v235 = vld [vmem:[%s1 + $0x364] sm:$0xf]
    %v236 = vld [vmem:[%s1 + $0x368] sm:$0xf]
    %v237 = vld [vmem:[%s1 + $0x36c] sm:$0xf]
    %v238 = vld [vmem:[%s1 + $0x370] sm:$0xf]
    %v239 = vld [vmem:[%s1 + $0x374] sm:$0xf]
    %v240 = vld [vmem:[%s1 + $0x378] sm:$0xf]
    %v241 = vld [vmem:[%s1 + $0x37c] sm:$0xf]
    %v242 = vld [vmem:[%s1 + $0x380] sm:$0xf]
    %v243 = vld [vmem:[%s1 + $0x384] sm:$0xf]
    %v244 = vld [vmem:[%s1 + $0x388] sm:$0xf]
    %v245 = vld [vmem:[%s1 + $0x38c] sm:$0xf]
    %v246 = vld [vmem:[%s1 + $0x390] sm:$0xf]
    %v247 = vld [vmem:[%s1 + $0x394] sm:$0xf]
    %v248 = vld [vmem:[%s1 + $0x398] sm:$0xf]
    %v249 = vld [vmem:[%s1 + $0x39c] sm:$0xf]
    %v250 = vld [vmem:[%s1 + $0x3a0] sm:$0xf]
    %v251 = vld [vmem:[%s1 + $0x3a4] sm:$0xf]
    %v252 = vld [vmem:[%s1 + $0x3a8] sm:$0xf]
    %v253 = vld [vmem:[%s1 + $0x3ac] sm:$0xf]
    %v254 = vld [vmem:[%s1 + $0x3b0] sm:$0xf]
    %v255 = vld [vmem:[%s1 + $0x3b4] sm:$0xf]
    %v256 = vld [vmem:[%s1 + $0x3b8] sm:$0xf]
    %v257 = vld [vmem:[%s1 + $0x3bc] sm:$0xf]
    %v258 = vld [vmem:[%s2] sm:$0x1]
    %v260 = vlaneseq
    %v261 = vshrl.u32 %v260, 7
    %v262 = vsub.s32 0, %v261
    %v263 = vrot.slane %v258, %v262
    %v267 = vcombine.high %v16, %v16
    %v269 = vunpack.c.l.s4 1966171168
    %v270 = vunpack.c.0.s8 %v269
    %v271 = vlaneseq
    %v272 = vshrl.u32 %v271, 7
    %v273 = vsub.s32 %v270, %v272
    %v274 = vrot.slane %v16, %v273
    %v276 = vunpack.c.l.s4 1966171168
    %v277 = vunpack.c.0.s8 %v276
    %v278 = vlaneseq
    %v279 = vshrl.u32 %v278, 7
    %v280 = vsub.s32 %v277, %v279
    %v281 = vrot.slane %v267, %v280
    %v282 = vcombine.high %v274, %v274
    %v283 = vcombine.high %v281, %v281
    %v285 = vunpack.c.l.s4 1966171168
    %v286 = vunpack.c.0.s8 %v285
    %v287 = vlaneseq
    %v288 = vshrl.u32 %v287, 7
    %v289 = vsub.s32 %v286, %v288
    %v290 = vrot.slane %v274, %v289
    %v292 = vunpack.c.l.s4 1966171168
    %v293 = vunpack.c.0.s8 %v292
    %v294 = vlaneseq
    %v295 = vshrl.u32 %v294, 7
    %v296 = vsub.s32 %v293, %v295
    %v297 = vrot.slane %v281, %v296
    %v299 = vunpack.c.l.s4 1966171168
    %v300 = vunpack.c.0.s8 %v299
    %v301 = vlaneseq
    %v302 = vshrl.u32 %v301, 7
    %v303 = vsub.s32 %v300, %v302
    %v304 = vrot.slane %v282, %v303
    %v306 = vunpack.c.l.s4 1966171168
    %v307 = vunpack.c.0.s8 %v306
    %v308 = vlaneseq
    %v309 = vshrl.u32 %v308, 7
    %v310 = vsub.s32 %v307, %v309
    %v311 = vrot.slane %v283, %v310
    %v312 = vcombine.high %v290, %v290
    %v313 = vcombine.high %v297, %v297
    %v314 = vcombine.high %v304, %v304
    %v315 = vcombine.high %v311, %v311
    %v316 = vcombine.high %v17, %v17
    %v318 = vunpack.c.l.s4 1966171168
    %v319 = vunpack.c.0.s8 %v318
    %v320 = vlaneseq
    %v321 = vshrl.u32 %v320, 7
    %v322 = vsub.s32 %v319, %v321
    %v323 = vrot.slane %v17, %v322
    %v325 = vunpack.c.l.s4 1966171168
    %v326 = vunpack.c.0.s8 %v325
    %v327 = vlaneseq
    %v328 = vshrl.u32 %v327, 7
    %v329 = vsub.s32 %v326, %v328
    %v330 = vrot.slane %v316, %v329
    %v331 = vcombine.high %v323, %v323
    %v332 = vcombine.high %v330, %v330
    %v334 = vunpack.c.l.s4 1966171168
    %v335 = vunpack.c.0.s8 %v334
    %v336 = vlaneseq
    %v337 = vshrl.u32 %v336, 7
    %v338 = vsub.s32 %v335, %v337
    %v339 = vrot.slane %v323, %v338
    %v341 = vunpack.c.l.s4 1966171168
    %v342 = vunpack.c.0.s8 %v341
    %v343 = vlaneseq
    %v344 = vshrl.u32 %v343, 7
    %v345 = vsub.s32 %v342, %v344
    %v346 = vrot.slane %v330, %v345
    %v348 = vunpack.c.l.s4 1966171168
    %v349 = vunpack.c.0.s8 %v348
    %v350 = vlaneseq
    %v351 = vshrl.u32 %v350, 7
    %v352 = vsub.s32 %v349, %v351
    %v353 = vrot.slane %v331, %v352
    %v355 = vunpack.c.l.s4 1966171168
    %v356 = vunpack.c.0.s8 %v355
    %v357 = vlaneseq
    %v358 = vshrl.u32 %v357, 7
    %v359 = vsub.s32 %v356, %v358
    %v360 = vrot.slane %v332, %v359
    %v361 = vcombine.high %v339, %v339
    %v362 = vcombine.high %v346, %v346
    %v363 = vcombine.high %v353, %v353
    %v619 = vunpack.c.l.b16 %v18
    %v620 = vunpack.c.l.b16 %v19
    %v621 = vunpack.c.l.b16 %v20
    %v622 = vunpack.c.l.b16 %v21
    %v623 = vunpack.c.l.b16 %v22
    %v624 = vunpack.c.l.b16 %v23
    %v625 = vunpack.c.l.b16 %v24
    %v626 = vunpack.c.l.b16 %v25
    %v627 = vunpack.c.l.b16 %v26
    %v628 = vunpack.c.l.b16 %v27
    %v629 = vunpack.c.l.b16 %v28
    %v630 = vunpack.c.l.b16 %v29
    %v631 = vunpack.c.l.b16 %v30
    %v632 = vunpack.c.l.b16 %v31
    %v633 = vunpack.c.l.b16 %v32
    %v634 = vunpack.c.l.b16 %v33
    %v635 = vunpack.c.l.b16 %v34
    %v636 = vunpack.c.l.b16 %v35
    %v637 = vunpack.c.l.b16 %v36
    %v638 = vunpack.c.l.b16 %v37
    %v639 = vunpack.c.l.b16 %v38
    %v640 = vunpack.c.l.b16 %v39
    %v641 = vunpack.c.l.b16 %v40
    %v642 = vunpack.c.l.b16 %v41
    %v643 = vunpack.c.l.b16 %v42
    %v644 = vunpack.c.l.b16 %v43
    %v645 = vunpack.c.l.b16 %v44
    %v646 = vunpack.c.l.b16 %v45
    %v647 = vunpack.c.l.b16 %v46
    %v648 = vunpack.c.l.b16 %v47
    %v649 = vunpack.c.l.b16 %v48
    %v650 = vunpack.c.l.b16 %v49
    %v651 = vunpack.c.l.b16 %v50
    %v652 = vunpack.c.l.b16 %v51
    %v653 = vunpack.c.l.b16 %v52
    %v654 = vunpack.c.l.b16 %v53
    %v655 = vunpack.c.l.b16 %v54
    %v656 = vunpack.c.l.b16 %v55
    %v657 = vunpack.c.l.b16 %v56
    %v658 = vunpack.c.l.b16 %v57
    %v659 = vunpack.c.l.b16 %v58
    %v660 = vunpack.c.l.b16 %v59
    %v661 = vunpack.c.l.b16 %v60
    %v662 = vunpack.c.l.b16 %v61
    %v663 = vunpack.c.l.b16 %v62
    %v664 = vunpack.c.l.b16 %v63
    %v665 = vunpack.c.l.b16 %v64
    %v666 = vunpack.c.l.b16 %v65
    %v667 = vunpack.c.l.b16 %v66
    %v668 = vunpack.c.l.b16 %v67
    %v669 = vunpack.c.l.b16 %v68
    %v670 = vunpack.c.l.b16 %v69
    %v671 = vunpack.c.l.b16 %v70
    %v672 = vunpack.c.l.b16 %v71
    %v673 = vunpack.c.l.b16 %v72
    %v674 = vunpack.c.l.b16 %v73
    %v675 = vunpack.c.l.b16 %v74
    %v676 = vunpack.c.l.b16 %v75
    %v677 = vunpack.c.l.b16 %v76
    %v678 = vunpack.c.l.b16 %v77
    %v679 = vunpack.c.l.b16 %v78
    %v680 = vunpack.c.l.b16 %v79
    %v681 = vunpack.c.l.b16 %v80
    %v682 = vunpack.c.l.b16 %v81
    %v683 = vunpack.c.l.b16 %v82
    %v684 = vunpack.c.l.b16 %v83
    %v685 = vunpack.c.l.b16 %v84
    %v686 = vunpack.c.l.b16 %v85
    %v687 = vunpack.c.l.b16 %v86
    %v688 = vunpack.c.l.b16 %v87
    %v689 = vunpack.c.l.b16 %v88
    %v690 = vunpack.c.l.b16 %v89
    %v691 = vunpack.c.l.b16 %v90
    %v692 = vunpack.c.l.b16 %v91
    %v693 = vunpack.c.l.b16 %v92
    %v694 = vunpack.c.l.b16 %v93
    %v695 = vunpack.c.l.b16 %v94
    %v696 = vunpack.c.l.b16 %v95
    %v697 = vunpack.c.l.b16 %v96
    %v698 = vunpack.c.l.b16 %v97
    %v699 = vunpack.c.l.b16 %v98
    %v700 = vunpack.c.l.b16 %v99
    %v701 = vunpack.c.l.b16 %v100
    %v702 = vunpack.c.l.b16 %v101
    %v703 = vunpack.c.l.b16 %v102
    %v704 = vunpack.c.l.b16 %v103
    %v705 = vunpack.c.l.b16 %v104
    %v706 = vunpack.c.l.b16 %v105
    %v707 = vunpack.c.l.b16 %v106
    %v708 = vunpack.c.l.b16 %v107
    %v709 = vunpack.c.l.b16 %v108
    %v710 = vunpack.c.l.b16 %v109
    %v711 = vunpack.c.l.b16 %v110
    %v712 = vunpack.c.l.b16 %v111
    %v713 = vunpack.c.l.b16 %v112
    %v714 = vunpack.c.l.b16 %v113
    %v715 = vunpack.c.l.b16 %v114
    %v716 = vunpack.c.l.b16 %v115
    %v717 = vunpack.c.l.b16 %v116
    %v718 = vunpack.c.l.b16 %v117
    %v719 = vunpack.c.l.b16 %v118
    %v720 = vunpack.c.l.b16 %v119
    %v721 = vunpack.c.l.b16 %v120
    %v722 = vunpack.c.l.b16 %v121
    %v723 = vunpack.c.l.b16 %v122
    %v724 = vunpack.c.l.b16 %v123
    %v725 = vunpack.c.l.b16 %v124
    %v726 = vunpack.c.l.b16 %v125
    %v727 = vunpack.c.l.b16 %v126
    %v728 = vunpack.c.l.b16 %v127
    %v729 = vunpack.c.l.b16 %v128
    %v730 = vunpack.c.l.b16 %v129
    %v731 = vunpack.c.l.b16 %v130
    %v732 = vunpack.c.l.b16 %v131
    %v733 = vunpack.c.l.b16 %v132
    %v734 = vunpack.c.l.b16 %v133
    %v735 = vunpack.c.l.b16 %v134
    %v736 = vunpack.c.l.b16 %v135
    %v737 = vunpack.c.l.b16 %v136
    %v738 = vunpack.c.l.b16 %v137
    %v739 = vunpack.c.l.b16 %v138
    %v740 = vunpack.c.l.b16 %v139
    %v741 = vunpack.c.l.b16 %v140
    %v742 = vunpack.c.l.b16 %v141
    %v743 = vunpack.c.l.b16 %v142
    %v744 = vunpack.c.l.b16 %v143
    %v745 = vunpack.c.l.b16 %v144
    %v746 = vunpack.c.l.b16 %v145
    %v747 = vunpack.c.l.b16 %v146
    %v748 = vunpack.c.l.b16 %v147
    %v749 = vunpack.c.l.b16 %v148
    %v750 = vunpack.c.l.b16 %v149
    %v751 = vunpack.c.l.b16 %v150
    %v752 = vunpack.c.l.b16 %v151
    %v753 = vunpack.c.l.b16 %v152
    %v754 = vunpack.c.l.b16 %v153
    %v755 = vunpack.c.l.b16 %v154
    %v756 = vunpack.c.l.b16 %v155
    %v757 = vunpack.c.l.b16 %v156
    %v758 = vunpack.c.l.b16 %v157
    %v759 = vunpack.c.l.b16 %v158
    %v760 = vunpack.c.l.b16 %v159
    %v761 = vunpack.c.l.b16 %v160
    %v762 = vunpack.c.l.b16 %v161
    %v763 = vunpack.c.l.b16 %v162
    %v764 = vunpack.c.l.b16 %v163
    %v765 = vunpack.c.l.b16 %v164
    %v766 = vunpack.c.l.b16 %v165
    %v767 = vunpack.c.l.b16 %v166
    %v768 = vunpack.c.l.b16 %v167
    %v769 = vunpack.c.l.b16 %v168
    %v770 = vunpack.c.l.b16 %v169
    %v771 = vunpack.c.l.b16 %v170
    %v772 = vunpack.c.l.b16 %v171
    %v773 = vunpack.c.l.b16 %v172
    %v774 = vunpack.c.l.b16 %v173
    %v775 = vunpack.c.l.b16 %v174
    %v776 = vunpack.c.l.b16 %v175
    %v777 = vunpack.c.l.b16 %v176
    %v778 = vunpack.c.l.b16 %v177
    %v779 = vunpack.c.l.b16 %v178
    %v780 = vunpack.c.l.b16 %v179
    %v781 = vunpack.c.l.b16 %v180
    %v782 = vunpack.c.l.b16 %v181
    %v783 = vunpack.c.l.b16 %v182
    %v784 = vunpack.c.l.b16 %v183
    %v785 = vunpack.c.l.b16 %v184
    %v786 = vunpack.c.l.b16 %v185
    %v787 = vunpack.c.l.b16 %v186
    %v788 = vunpack.c.l.b16 %v187
    %v789 = vunpack.c.l.b16 %v188
    %v790 = vunpack.c.l.b16 %v189
    %v791 = vunpack.c.l.b16 %v190
    %v792 = vunpack.c.l.b16 %v191
    %v793 = vunpack.c.l.b16 %v192
    %v794 = vunpack.c.l.b16 %v193
    %v795 = vunpack.c.l.b16 %v194
    %v796 = vunpack.c.l.b16 %v195
    %v797 = vunpack.c.l.b16 %v196
    %v798 = vunpack.c.l.b16 %v197
    %v799 = vunpack.c.l.b16 %v198
    %v800 = vunpack.c.l.b16 %v199
    %v801 = vunpack.c.l.b16 %v200
    %v802 = vunpack.c.l.b16 %v201
    %v803 = vunpack.c.l.b16 %v202
    %v804 = vunpack.c.l.b16 %v203
    %v805 = vunpack.c.l.b16 %v204
    %v806 = vunpack.c.l.b16 %v205
    %v807 = vunpack.c.l.b16 %v206
    %v808 = vunpack.c.l.b16 %v207
    %v809 = vunpack.c.l.b16 %v208
    %v810 = vunpack.c.l.b16 %v209
    %v811 = vunpack.c.l.b16 %v210
    %v812 = vunpack.c.l.b16 %v211
    %v813 = vunpack.c.l.b16 %v212
    %v814 = vunpack.c.l.b16 %v213
    %v815 = vunpack.c.l.b16 %v214
    %v816 = vunpack.c.l.b16 %v215
    %v817 = vunpack.c.l.b16 %v216
    %v818 = vunpack.c.l.b16 %v217
    %v819 = vunpack.c.l.b16 %v218
    %v820 = vunpack.c.l.b16 %v219
    %v821 = vunpack.c.l.b16 %v220
    %v822 = vunpack.c.l.b16 %v221
    %v823 = vunpack.c.l.b16 %v222
    %v824 = vunpack.c.l.b16 %v223
    %v825 = vunpack.c.l.b16 %v224
    %v826 = vunpack.c.l.b16 %v225
    %v827 = vunpack.c.l.b16 %v226
    %v828 = vunpack.c.l.b16 %v227
    %v829 = vunpack.c.l.b16 %v228
    %v830 = vunpack.c.l.b16 %v229
    %v831 = vunpack.c.l.b16 %v230
    %v832 = vunpack.c.l.b16 %v231
    %v833 = vunpack.c.l.b16 %v232
    %v834 = vunpack.c.l.b16 %v233
    %v835 = vunpack.c.l.b16 %v234
    %v836 = vunpack.c.l.b16 %v235
    %v837 = vunpack.c.l.b16 %v236
    %v838 = vunpack.c.l.b16 %v237
    %v839 = vunpack.c.l.b16 %v238
    %v840 = vunpack.c.l.b16 %v239
    %v841 = vunpack.c.l.b16 %v240
    %v842 = vunpack.c.l.b16 %v241
    %v843 = vunpack.c.l.b16 %v242
    %v844 = vunpack.c.l.b16 %v243
    %v845 = vunpack.c.l.b16 %v244
    %v846 = vunpack.c.l.b16 %v245
    %v847 = vunpack.c.l.b16 %v246
    %v848 = vunpack.c.l.b16 %v247
    %v849 = vunpack.c.l.b16 %v248
    %v850 = vunpack.c.l.b16 %v249
    %v851 = vunpack.c.l.b16 %v250
    %v852 = vunpack.c.l.b16 %v251
    %v853 = vunpack.c.l.b16 %v252
    %v854 = vunpack.c.l.b16 %v253
    %v855 = vunpack.c.l.b16 %v254
    %v856 = vunpack.c.l.b16 %v255
    %v857 = vunpack.c.l.b16 %v256
    %v858 = vunpack.c.l.b16 %v257
    %v859 = vpack.c.b16 %v620, %v619
    %v860 = vpack.c.b16 %v622, %v621
    %v861 = vpack.c.b16 %v624, %v623
    %v862 = vpack.c.b16 %v626, %v625
    %v863 = vpack.c.b16 %v628, %v627
    %v864 = vpack.c.b16 %v630, %v629
    %v865 = vpack.c.b16 %v632, %v631
    %v866 = vpack.c.b16 %v634, %v633
    %v867 = vpack.c.b16 %v636, %v635
    %v868 = vpack.c.b16 %v638, %v637
    %v869 = vpack.c.b16 %v640, %v639
    %v870 = vpack.c.b16 %v642, %v641
    %v871 = vpack.c.b16 %v644, %v643
    %v872 = vpack.c.b16 %v646, %v645
    %v873 = vpack.c.b16 %v648, %v647
    %v874 = vpack.c.b16 %v650, %v649
    %v875 = vpack.c.b16 %v652, %v651
    %v876 = vpack.c.b16 %v654, %v653
    %v877 = vpack.c.b16 %v656, %v655
    %v878 = vpack.c.b16 %v658, %v657
    %v879 = vpack.c.b16 %v660, %v659
    %v880 = vpack.c.b16 %v662, %v661
    %v881 = vpack.c.b16 %v664, %v663
    %v882 = vpack.c.b16 %v666, %v665
    %v883 = vpack.c.b16 %v668, %v667
    %v884 = vpack.c.b16 %v670, %v669
    %v885 = vpack.c.b16 %v672, %v671
    %v886 = vpack.c.b16 %v674, %v673
    %v887 = vpack.c.b16 %v676, %v675
    %v888 = vpack.c.b16 %v678, %v677
    %v889 = vpack.c.b16 %v680, %v679
    %v890 = vpack.c.b16 %v682, %v681
    %v891 = vpack.c.b16 %v684, %v683
    %v892 = vpack.c.b16 %v686, %v685
    %v893 = vpack.c.b16 %v688, %v687
    %v894 = vpack.c.b16 %v690, %v689
    %v895 = vpack.c.b16 %v692, %v691
    %v896 = vpack.c.b16 %v694, %v693
    %v897 = vpack.c.b16 %v696, %v695
    %v898 = vpack.c.b16 %v698, %v697
    %v899 = vpack.c.b16 %v700, %v699
    %v900 = vpack.c.b16 %v702, %v701
    %v901 = vpack.c.b16 %v704, %v703
    %v902 = vpack.c.b16 %v706, %v705
    %v903 = vpack.c.b16 %v708, %v707
    %v904 = vpack.c.b16 %v710, %v709
    %v905 = vpack.c.b16 %v712, %v711
    %v906 = vpack.c.b16 %v714, %v713
    %v907 = vpack.c.b16 %v716, %v715
    %v908 = vpack.c.b16 %v718, %v717
    %v909 = vpack.c.b16 %v720, %v719
    %v910 = vpack.c.b16 %v722, %v721
    %v911 = vpack.c.b16 %v724, %v723
    %v912 = vpack.c.b16 %v726, %v725
    %v913 = vpack.c.b16 %v728, %v727
    %v914 = vpack.c.b16 %v730, %v729
    %v915 = vpack.c.b16 %v732, %v731
    %v916 = vpack.c.b16 %v734, %v733
    %v917 = vpack.c.b16 %v736, %v735
    %v918 = vpack.c.b16 %v738, %v737
    %v919 = vpack.c.b16 %v740, %v739
    %v920 = vpack.c.b16 %v742, %v741
    %v921 = vpack.c.b16 %v744, %v743
    %v922 = vpack.c.b16 %v746, %v745
    %v923 = vpack.c.b16 %v748, %v747
    %v924 = vpack.c.b16 %v750, %v749
    %v925 = vpack.c.b16 %v752, %v751
    %v926 = vpack.c.b16 %v754, %v753
    %v927 = vpack.c.b16 %v756, %v755
    %v928 = vpack.c.b16 %v758, %v757
    %v929 = vpack.c.b16 %v760, %v759
    %v930 = vpack.c.b16 %v762, %v761
    %v931 = vpack.c.b16 %v764, %v763
    %v932 = vpack.c.b16 %v766, %v765
    %v933 = vpack.c.b16 %v768, %v767
    %v934 = vpack.c.b16 %v770, %v769
    %v935 = vpack.c.b16 %v772, %v771
    %v936 = vpack.c.b16 %v774, %v773
    %v937 = vpack.c.b16 %v776, %v775
    %v938 = vpack.c.b16 %v778, %v777
    %v939 = vpack.c.b16 %v780, %v779
    %v940 = vpack.c.b16 %v782, %v781
    %v941 = vpack.c.b16 %v784, %v783
    %v942 = vpack.c.b16 %v786, %v785
    %v943 = vpack.c.b16 %v788, %v787
    %v944 = vpack.c.b16 %v790, %v789
    %v945 = vpack.c.b16 %v792, %v791
    %v946 = vpack.c.b16 %v794, %v793
    %v947 = vpack.c.b16 %v796, %v795
    %v948 = vpack.c.b16 %v798, %v797
    %v949 = vpack.c.b16 %v800, %v799
    %v950 = vpack.c.b16 %v802, %v801
    %v951 = vpack.c.b16 %v804, %v803
    %v952 = vpack.c.b16 %v806, %v805
    %v953 = vpack.c.b16 %v808, %v807
    %v954 = vpack.c.b16 %v810, %v809
    %v955 = vpack.c.b16 %v812, %v811
    %v956 = vpack.c.b16 %v814, %v813
    %v957 = vpack.c.b16 %v816, %v815
    %v958 = vpack.c.b16 %v818, %v817
    %v959 = vpack.c.b16 %v820, %v819
    %v960 = vpack.c.b16 %v822, %v821
    %v961 = vpack.c.b16 %v824, %v823
    %v962 = vpack.c.b16 %v826, %v825
    %v963 = vpack.c.b16 %v828, %v827
    %v964 = vpack.c.b16 %v830, %v829
    %v965 = vpack.c.b16 %v832, %v831
    %v966 = vpack.c.b16 %v834, %v833
    %v967 = vpack.c.b16 %v836, %v835
    %v968 = vpack.c.b16 %v838, %v837
    %v969 = vpack.c.b16 %v840, %v839
    %v970 = vpack.c.b16 %v842, %v841
    %v971 = vpack.c.b16 %v844, %v843
    %v972 = vpack.c.b16 %v846, %v845
    %v973 = vpack.c.b16 %v848, %v847
    %v974 = vpack.c.b16 %v850, %v849
    %v975 = vpack.c.b16 %v852, %v851
    %v976 = vpack.c.b16 %v854, %v853
    %v977 = vpack.c.b16 %v856, %v855
    %v978 = vpack.c.b16 %v858, %v857
    %1099 = vmatprep.subr.bf16.mxu0 0
    %1100 = vmatpush1.bf16.msra.mxu0 %v859
    %1101 = vmatprep.subr.bf16.mxu0 0
    %1102 = vmatpush1.bf16.msra.mxu0 %v860
    %1103 = vmatprep.subr.bf16.mxu0 0
    %1104 = vmatpush1.bf16.msra.mxu0 %v861
    %1105 = vmatprep.subr.bf16.mxu0 0
    %1106 = vmatpush1.bf16.msra.mxu0 %v862
    %1107 = vmatprep.subr.bf16.mxu0 0
    %1108 = vmatpush1.bf16.msra.mxu0 %v863
    %1109 = vmatprep.subr.bf16.mxu0 0
    %1110 = vmatpush1.bf16.msra.mxu0 %v864
    %1111 = vmatprep.subr.bf16.mxu0 0
    %1112 = vmatpush1.bf16.msra.mxu0 %v865
    %1113 = vmatprep.subr.bf16.mxu0 0
    %1114 = vmatpush1.bf16.msra.mxu0 %v866
    %1115 = vmatprep.subr.bf16.mxu0 0
    %1116 = vmatpush1.bf16.msra.mxu0 %v867
    %1117 = vmatprep.subr.bf16.mxu0 0
    %1118 = vmatpush1.bf16.msra.mxu0 %v868
    %1119 = vmatprep.subr.bf16.mxu0 0
    %1120 = vmatpush1.bf16.msra.mxu0 %v869
    %1121 = vmatprep.subr.bf16.mxu0 0
    %1122 = vmatpush1.bf16.msra.mxu0 %v870
    %1123 = vmatprep.subr.bf16.mxu0 0
    %1124 = vmatpush1.bf16.msra.mxu0 %v871
    %1125 = vmatprep.subr.bf16.mxu0 0
    %1126 = vmatpush1.bf16.msra.mxu0 %v872
    %1127 = vmatprep.subr.bf16.mxu0 0
    %1128 = vmatpush1.bf16.msra.mxu0 %v873
    %1129 = vmatprep.subr.bf16.mxu0 0
    %1130 = vmatpush1.bf16.msra.mxu0 %v874
    %1131 = vmatprep.mubr.bf16.mxu0 %v304
    %1132 = vmatmul.mubr.bf16.gmra.mrb[0].mxu0 %v290
    %v1133 = vpop.f32.mrb[0].mxu0
    %v1134 = vadd.f32 %v263, %v1133
    %v1135 = vpop.f32.mrb[0].mxu0
    %v1136 = vpop.f32.mrb[0].mxu0
    %v1137 = vpop.f32.mrb[0].mxu0
    %1138 = vdwg.mxu0
    %1139 = vmatprep.subr.bf16.mxu0 0
    %1140 = vmatpush1.bf16.msra.mxu0 %v875
    %1141 = vmatprep.subr.bf16.mxu0 0
    %1142 = vmatpush1.bf16.msra.mxu0 %v876
    %1143 = vmatprep.subr.bf16.mxu0 0
    %1144 = vmatpush1.bf16.msra.mxu0 %v877
    %1145 = vmatprep.subr.bf16.mxu0 0
    %1146 = vmatpush1.bf16.msra.mxu0 %v878
    %1147 = vmatprep.subr.bf16.mxu0 0
    %1148 = vmatpush1.bf16.msra.mxu0 %v879
    %1149 = vmatprep.subr.bf16.mxu0 0
    %1150 = vmatpush1.bf16.msra.mxu0 %v880
    %1151 = vmatprep.subr.bf16.mxu0 0
    %1152 = vmatpush1.bf16.msra.mxu0 %v881
    %1153 = vmatprep.subr.bf16.mxu0 0
    %1154 = vmatpush1.bf16.msra.mxu0 %v882
    %1155 = vmatprep.subr.bf16.mxu0 0
    %1156 = vmatpush1.bf16.msra.mxu0 %v883
    %1157 = vmatprep.subr.bf16.mxu0 0
    %1158 = vmatpush1.bf16.msra.mxu0 %v884
    %1159 = vmatprep.subr.bf16.mxu0 0
    %1160 = vmatpush1.bf16.msra.mxu0 %v885
    %1161 = vmatprep.subr.bf16.mxu0 0
    %1162 = vmatpush1.bf16.msra.mxu0 %v886
    %1163 = vmatprep.subr.bf16.mxu0 0
    %1164 = vmatpush1.bf16.msra.mxu0 %v887
    %1165 = vmatprep.subr.bf16.mxu0 0
    %1166 = vmatpush1.bf16.msra.mxu0 %v888
    %1167 = vmatprep.subr.bf16.mxu0 0
    %1168 = vmatpush1.bf16.msra.mxu0 %v889
    %1169 = vmatprep.subr.bf16.mxu0 0
    %1170 = vmatpush1.bf16.msra.mxu0 %v890
    %1171 = vmatprep.mubr.bf16.mxu0 %v314
    %1172 = vmatmul.mubr.bf16.gmra.mrb[0].mxu0 %v312
    %v1173 = vpop.f32.mrb[0].mxu0
    %v1174 = vadd.f32 %v1134, %v1173
    %v1175 = vpop.f32.mrb[0].mxu0
    %v1176 = vpop.f32.mrb[0].mxu0
    %v1177 = vpop.f32.mrb[0].mxu0
    %1178 = vdwg.mxu0
    %1179 = vmatprep.subr.bf16.mxu0 0
    %1180 = vmatpush1.bf16.msra.mxu0 %v891
    %1181 = vmatprep.subr.bf16.mxu0 0
    %1182 = vmatpush1.bf16.msra.mxu0 %v892
    %1183 = vmatprep.subr.bf16.mxu0 0
    %1184 = vmatpush1.bf16.msra.mxu0 %v893
    %1185 = vmatprep.subr.bf16.mxu0 0
    %1186 = vmatpush1.bf16.msra.mxu0 %v894
    %1187 = vmatprep.subr.bf16.mxu0 0
    %1188 = vmatpush1.bf16.msra.mxu0 %v895
    %1189 = vmatprep.subr.bf16.mxu0 0
    %1190 = vmatpush1.bf16.msra.mxu0 %v896
    %1191 = vmatprep.subr.bf16.mxu0 0
    %1192 = vmatpush1.bf16.msra.mxu0 %v897
    %1193 = vmatprep.subr.bf16.mxu0 0
    %1194 = vmatpush1.bf16.msra.mxu0 %v898
    %1195 = vmatprep.subr.bf16.mxu0 0
    %1196 = vmatpush1.bf16.msra.mxu0 %v899
    %1197 = vmatprep.subr.bf16.mxu0 0
    %1198 = vmatpush1.bf16.msra.mxu0 %v900
    %1199 = vmatprep.subr.bf16.mxu0 0
    %1200 = vmatpush1.bf16.msra.mxu0 %v901
    %1201 = vmatprep.subr.bf16.mxu0 0
    %1202 = vmatpush1.bf16.msra.mxu0 %v902
    %1203 = vmatprep.subr.bf16.mxu0 0
    %1204 = vmatpush1.bf16.msra.mxu0 %v903
    %1205 = vmatprep.subr.bf16.mxu0 0
    %1206 = vmatpush1.bf16.msra.mxu0 %v904
    %1207 = vmatprep.subr.bf16.mxu0 0
    %1208 = vmatpush1.bf16.msra.mxu0 %v905
    %1209 = vmatprep.subr.bf16.mxu0 0
    %1210 = vmatpush1.bf16.msra.mxu0 %v906
    %1211 = vmatprep.mubr.bf16.mxu0 %v311
    %1212 = vmatmul.mubr.bf16.gmra.mrb[0].mxu0 %v297
    %v1213 = vpop.f32.mrb[0].mxu0
    %v1214 = vadd.f32 %v1174, %v1213
    %v1215 = vpop.f32.mrb[0].mxu0
    %v1216 = vpop.f32.mrb[0].mxu0
    %v1217 = vpop.f32.mrb[0].mxu0
    %1218 = vdwg.mxu0
    %1219 = vmatprep.subr.bf16.mxu0 0
    %1220 = vmatpush1.bf16.msra.mxu0 %v907
    %1221 = vmatprep.subr.bf16.mxu0 0
    %1222 = vmatpush1.bf16.msra.mxu0 %v908
    %1223 = vmatprep.subr.bf16.mxu0 0
    %1224 = vmatpush1.bf16.msra.mxu0 %v909
    %1225 = vmatprep.subr.bf16.mxu0 0
    %1226 = vmatpush1.bf16.msra.mxu0 %v910
    %1227 = vmatprep.subr.bf16.mxu0 0
    %1228 = vmatpush1.bf16.msra.mxu0 %v911
    %1229 = vmatprep.subr.bf16.mxu0 0
    %1230 = vmatpush1.bf16.msra.mxu0 %v912
    %1231 = vmatprep.subr.bf16.mxu0 0
    %1232 = vmatpush1.bf16.msra.mxu0 %v913
    %1233 = vmatprep.subr.bf16.mxu0 0
    %1234 = vmatpush1.bf16.msra.mxu0 %v914
    %1235 = vmatprep.subr.bf16.mxu0 0
    %1236 = vmatpush1.bf16.msra.mxu0 %v915
    %1237 = vmatprep.subr.bf16.mxu0 0
    %1238 = vmatpush1.bf16.msra.mxu0 %v916
    %1239 = vmatprep.subr.bf16.mxu0 0
    %1240 = vmatpush1.bf16.msra.mxu0 %v917
    %1241 = vmatprep.subr.bf16.mxu0 0
    %1242 = vmatpush1.bf16.msra.mxu0 %v918
    %1243 = vmatprep.subr.bf16.mxu0 0
    %1244 = vmatpush1.bf16.msra.mxu0 %v919
    %1245 = vmatprep.subr.bf16.mxu0 0
    %1246 = vmatpush1.bf16.msra.mxu0 %v920
    %1247 = vmatprep.subr.bf16.mxu0 0
    %1248 = vmatpush1.bf16.msra.mxu0 %v921
    %1249 = vmatprep.subr.bf16.mxu0 0
    %1250 = vmatpush1.bf16.msra.mxu0 %v922
    %1251 = vmatprep.mubr.bf16.mxu0 %v315
    %1252 = vmatmul.mubr.bf16.gmra.mrb[0].mxu0 %v313
    %v1253 = vpop.f32.mrb[0].mxu0
    %v1254 = vadd.f32 %v1214, %v1253
    %v1255 = vpop.f32.mrb[0].mxu0
    %v1256 = vpop.f32.mrb[0].mxu0
    %v1257 = vpop.f32.mrb[0].mxu0
    %1258 = vdwg.mxu0
    %1259 = vmatprep.subr.bf16.mxu0 0
    %1260 = vmatpush1.bf16.msra.mxu0 %v923
    %1261 = vmatprep.subr.bf16.mxu0 0
    %1262 = vmatpush1.bf16.msra.mxu0 %v924
    %1263 = vmatprep.subr.bf16.mxu0 0
    %1264 = vmatpush1.bf16.msra.mxu0 %v925
    %1265 = vmatprep.subr.bf16.mxu0 0
    %1266 = vmatpush1.bf16.msra.mxu0 %v926
    %1267 = vmatprep.subr.bf16.mxu0 0
    %1268 = vmatpush1.bf16.msra.mxu0 %v927
    %1269 = vmatprep.subr.bf16.mxu0 0
    %1270 = vmatpush1.bf16.msra.mxu0 %v928
    %1271 = vmatprep.subr.bf16.mxu0 0
    %1272 = vmatpush1.bf16.msra.mxu0 %v929
    %1273 = vmatprep.subr.bf16.mxu0 0
    %1274 = vmatpush1.bf16.msra.mxu0 %v930
    %1275 = vmatprep.subr.bf16.mxu0 0
    %1276 = vmatpush1.bf16.msra.mxu0 %v931
    %1277 = vmatprep.subr.bf16.mxu0 0
    %1278 = vmatpush1.bf16.msra.mxu0 %v932
    %1279 = vmatprep.subr.bf16.mxu0 0
    %1280 = vmatpush1.bf16.msra.mxu0 %v933
    %1281 = vmatprep.subr.bf16.mxu0 0
    %1282 = vmatpush1.bf16.msra.mxu0 %v934
    %1283 = vmatprep.subr.bf16.mxu0 0
    %1284 = vmatpush1.bf16.msra.mxu0 %v935
    %1285 = vmatprep.subr.bf16.mxu0 0
    %1286 = vmatpush1.bf16.msra.mxu0 %v936
    %1287 = vmatprep.subr.bf16.mxu0 0
    %1288 = vmatpush1.bf16.msra.mxu0 %v937
    %1289 = vmatprep.subr.bf16.mxu0 0
    %1290 = vmatpush1.bf16.msra.mxu0 %v938
    %1291 = vmatprep.mubr.bf16.mxu0 %v353
    %1292 = vmatmul.mubr.bf16.gmra.mrb[0].mxu0 %v339
    %v1293 = vpop.f32.mrb[0].mxu0
    %v1294 = vadd.f32 %v1254, %v1293
    %v1295 = vpop.f32.mrb[0].mxu0
    %v1296 = vpop.f32.mrb[0].mxu0
    %v1297 = vpop.f32.mrb[0].mxu0
    %1298 = vdwg.mxu0
    %1299 = vmatprep.subr.bf16.mxu0 0
    %1300 = vmatpush1.bf16.msra.mxu0 %v939
    %1301 = vmatprep.subr.bf16.mxu0 0
    %1302 = vmatpush1.bf16.msra.mxu0 %v940
    %1303 = vmatprep.subr.bf16.mxu0 0
    %1304 = vmatpush1.bf16.msra.mxu0 %v941
    %1305 = vmatprep.subr.bf16.mxu0 0
    %1306 = vmatpush1.bf16.msra.mxu0 %v942
    %1307 = vmatprep.subr.bf16.mxu0 0
    %1308 = vmatpush1.bf16.msra.mxu0 %v943
    %1309 = vmatprep.subr.bf16.mxu0 0
    %1310 = vmatpush1.bf16.msra.mxu0 %v944
    %1311 = vmatprep.subr.bf16.mxu0 0
    %1312 = vmatpush1.bf16.msra.mxu0 %v945
    %1313 = vmatprep.subr.bf16.mxu0 0
    %1314 = vmatpush1.bf16.msra.mxu0 %v946
    %1315 = vmatprep.subr.bf16.mxu0 0
    %1316 = vmatpush1.bf16.msra.mxu0 %v947
    %1317 = vmatprep.subr.bf16.mxu0 0
    %1318 = vmatpush1.bf16.msra.mxu0 %v948
    %1319 = vmatprep.subr.bf16.mxu0 0
    %1320 = vmatpush1.bf16.msra.mxu0 %v949
    %1321 = vmatprep.subr.bf16.mxu0 0
    %1322 = vmatpush1.bf16.msra.mxu0 %v950
    %1323 = vmatprep.subr.bf16.mxu0 0
    %1324 = vmatpush1.bf16.msra.mxu0 %v951
    %1325 = vmatprep.subr.bf16.mxu0 0
    %1326 = vmatpush1.bf16.msra.mxu0 %v952
    %1327 = vmatprep.subr.bf16.mxu0 0
    %1328 = vmatpush1.bf16.msra.mxu0 %v953
    %1329 = vmatprep.subr.bf16.mxu0 0
    %1330 = vmatpush1.bf16.msra.mxu0 %v954
    %1331 = vmatprep.mubr.bf16.mxu0 %v363
    %1332 = vmatmul.mubr.bf16.gmra.mrb[0].mxu0 %v361
    %v1333 = vpop.f32.mrb[0].mxu0
    %v1334 = vadd.f32 %v1294, %v1333
    %v1335 = vpop.f32.mrb[0].mxu0
    %v1336 = vpop.f32.mrb[0].mxu0
    %v1337 = vpop.f32.mrb[0].mxu0
    %1338 = vdwg.mxu0
    %1339 = vmatprep.subr.bf16.mxu0 0
    %1340 = vmatpush1.bf16.msra.mxu0 %v955
    %1341 = vmatprep.subr.bf16.mxu0 0
    %1342 = vmatpush1.bf16.msra.mxu0 %v956
    %1343 = vmatprep.subr.bf16.mxu0 0
    %1344 = vmatpush1.bf16.msra.mxu0 %v957
    %1345 = vmatprep.subr.bf16.mxu0 0
    %1346 = vmatpush1.bf16.msra.mxu0 %v958
    %1347 = vmatprep.subr.bf16.mxu0 0
    %1348 = vmatpush1.bf16.msra.mxu0 %v959
    %1349 = vmatprep.subr.bf16.mxu0 0
    %1350 = vmatpush1.bf16.msra.mxu0 %v960
    %1351 = vmatprep.subr.bf16.mxu0 0
    %1352 = vmatpush1.bf16.msra.mxu0 %v961
    %1353 = vmatprep.subr.bf16.mxu0 0
    %1354 = vmatpush1.bf16.msra.mxu0 %v962
    %1355 = vmatprep.subr.bf16.mxu0 0
    %1356 = vmatpush1.bf16.msra.mxu0 %v963
    %1357 = vmatprep.subr.bf16.mxu0 0
    %1358 = vmatpush1.bf16.msra.mxu0 %v964
    %1359 = vmatprep.subr.bf16.mxu0 0
    %1360 = vmatpush1.bf16.msra.mxu0 %v965
    %1361 = vmatprep.subr.bf16.mxu0 0
    %1362 = vmatpush1.bf16.msra.mxu0 %v966
    %1363 = vmatprep.subr.bf16.mxu0 0
    %1364 = vmatpush1.bf16.msra.mxu0 %v967
    %1365 = vmatprep.subr.bf16.mxu0 0
    %1366 = vmatpush1.bf16.msra.mxu0 %v968
    %1367 = vmatprep.subr.bf16.mxu0 0
    %1368 = vmatpush1.bf16.msra.mxu0 %v969
    %1369 = vmatprep.subr.bf16.mxu0 0
    %1370 = vmatpush1.bf16.msra.mxu0 %v970
    %1371 = vmatprep.mubr.bf16.mxu0 %v360
    %1372 = vmatmul.mubr.bf16.gmra.mrb[0].mxu0 %v346
    %v1373 = vpop.f32.mrb[0].mxu0
    %v1374 = vadd.f32 %v1334, %v1373
    %v1375 = vpop.f32.mrb[0].mxu0
    %v1376 = vpop.f32.mrb[0].mxu0
    %v1377 = vpop.f32.mrb[0].mxu0
    %1378 = vdwg.mxu0
    %1379 = vmatprep.subr.bf16.mxu0 0
    %1380 = vmatpush1.bf16.msra.mxu0 %v971
    %1381 = vmatprep.subr.bf16.mxu0 0
    %1382 = vmatpush1.bf16.msra.mxu0 %v972
    %1383 = vmatprep.subr.bf16.mxu0 0
    %1384 = vmatpush1.bf16.msra.mxu0 %v973
    %1385 = vmatprep.subr.bf16.mxu0 0
    %1386 = vmatpush1.bf16.msra.mxu0 %v974
    %1387 = vmatprep.subr.bf16.mxu0 0
    %1388 = vmatpush1.bf16.msra.mxu0 %v975
    %1389 = vmatprep.subr.bf16.mxu0 0
    %1390 = vmatpush1.bf16.msra.mxu0 %v976
    %1391 = vmatprep.subr.bf16.mxu0 0
    %1392 = vmatpush1.bf16.msra.mxu0 %v977
    %1393 = vmatprep.subr.bf16.mxu0 0
    %1394 = vmatpush1.bf16.msra.mxu0 %v978
    %1395 = vmatprep.subr.bf16.mxu0 0
    %1396 = vmatpush1.bf16.msra.mxu0 0
    %1397 = vmatprep.subr.bf16.mxu0 0
    %1398 = vmatpush1.bf16.msra.mxu0 0
    %1399 = vmatprep.subr.bf16.mxu0 0
    %1400 = vmatpush1.bf16.msra.mxu0 0
    %1401 = vmatprep.subr.bf16.mxu0 0
    %1402 = vmatpush1.bf16.msra.mxu0 0
    %1403 = vmatprep.subr.bf16.mxu0 0
    %1404 = vmatpush1.bf16.msra.mxu0 0
    %1405 = vmatprep.subr.bf16.mxu0 0
    %1406 = vmatpush1.bf16.msra.mxu0 0
    %1407 = vmatprep.subr.bf16.mxu0 0
    %1408 = vmatpush1.bf16.msra.mxu0 0
    %1409 = vmatprep.subr.bf16.mxu0 0
    %1410 = vmatpush1.bf16.msra.mxu0 0
    %1411 = vmatprep.mubr.bf16.mxu0 0
    %1412 = vmatmul.mubr.bf16.gmra.mrb[0].mxu0 %v362
    %v1413 = vpop.f32.mrb[0].mxu0
    %v1414 = vadd.f32 %v1374, %v1413
    %v1415 = vpop.f32.mrb[0].mxu0
    %v1416 = vpop.f32.mrb[0].mxu0
    %v1417 = vpop.f32.mrb[0].mxu0
    %1418 = vdwg.mxu0
    %1419 = vst [vmem:[#allocation2] sm:$0x3] %v1414
    // Predicated region
    $region14: #{other_net_forward.9} parent=1 // pred_check
      _
    $region15: #{other_net_forward.9} parent=1 // pred_check_branch
      %1421 = sbr.rel (0) target = $region17
    $region16: #{other_net_forward.9} parent=1 // pred_region
      %s1423 = ssub.s32 32, 32
      %1424 = vsyncadd [#allocation3], %s1423
      %s1426 = sshll.u32 [#allocation2], 4
      %s1427 = int_to_ptr.vmem [resolvable:$true] %s1426
      %1429 = dma.vmem_to_hbm [thread:$0]  %s1427, 32, %s3, [#allocation3]
    $region17: #{other_net_forward.9} parent=1 // pred_fallthru
      _
    // Predicated region
    $region18: #{other_net_forward.9} parent=1 // pred_check
      _
    $region19: #{other_net_forward.9} parent=1 // pred_check_branch
      %1431 = sbr.rel (0) target = $region21
    $region20: #{other_net_forward.9} parent=1 // pred_region
      %1432 = dma.done [#allocation3], 32
    $region21: #{other_net_forward.9} parent=1 // pred_fallthru
      _
    %1433 = vsyncpa [#allocation3], 1

</llo_original>
